<compile_context>
chip_gen: v7x
topology: tpu7x:2x2x1
jax: 0.10.0
libtpu: 0.0.40
codegen_flags: <defaults>
</compile_context>

<pallas_src>
import jax
import jax.numpy as jnp
from jax import lax
from jax.experimental import pallas as pl
from jax.experimental.pallas import tpu as pltpu
import numpy as np

# bf16 MXU operands for the two recurrent matmuls (native on v5e/v6e/v7x).
USE_BF16_MXU = True


def _round_up(x, m):
    return ((x + m - 1) // m) * m


# ----------------------------- Pallas kernel ---------------------------------
def char_rnn_kernel(lens_ref, xg_ref,
                    whh0_ref, wih1_ref, whh1_ref, b1_ref,
                    wout_ref, bout_ref,
                    logits_ref, hn_ref, cn_ref,
                    h0_scr, c0_scr, h1_scr, c1_scr, out_scr):
    BC = lens_ref.shape[0]          # batch-chunk rows (multiple of 8 sublanes)
    Hp = h0_scr.shape[-1]           # padded hidden (multiple of 128 lanes)
    TC = xg_ref.shape[0]            # timesteps in this chunk (static)
    Vp = logits_ref.shape[-1]       # padded vocab (multiple of 128 lanes)

    t_chunk = pl.program_id(1)

    # h/c live in persistent VMEM scratch across the "arbitrary" T-chunk axis;
    # (re)initialize at the first chunk of every batch chunk.
    @pl.when(t_chunk == 0)
    def _init():
        zeros = jnp.zeros((BC, Hp), jnp.float32)
        h0_scr[...] = zeros
        c0_scr[...] = zeros
        h1_scr[...] = zeros
        c1_scr[...] = zeros

    # hoisted loop-invariant loads / broadcasts
    lens = lens_ref[...]                                   # (BC, 1) int32
    b1 = jnp.broadcast_to(b1_ref[...], (BC, 4 * Hp))       # hoisted (no per-step bcast)
    t_base = t_chunk * TC
    mxu_dtype = whh0_ref.dtype                             # bf16 (or f32 fallback)

    def lstm_cell(gates, c_prev):
        # each gate block is a full lane tile (Hp is a multiple of 128)
        i_g = jax.nn.sigmoid(gates[:, 0 * Hp:1 * Hp])
        f_g = jax.nn.sigmoid(gates[:, 1 * Hp:2 * Hp])
        g_g = jnp.tanh(gates[:, 2 * Hp:3 * Hp])
        o_g = jax.nn.sigmoid(gates[:, 3 * Hp:4 * Hp])
        c_new = f_g * c_prev + i_g * g_g
        h_new = o_g * jnp.tanh(c_new)
        return h_new, c_new

    def step(lt, carry):
        h0, c0, h1, c1 = carry
        # one mask broadcast per step, reused by all five selects
        mask = jnp.broadcast_to(lens > (t_base + lt), (BC, Hp))

        # layer 0: input+bias term comes pre-gathered from the folded gate
        # table; only the recurrent matmul sits on the serial chain.
        g0 = xg_ref[lt] + jnp.dot(h0.astype(mxu_dtype), whh0_ref[...],
                                  preferred_element_type=jnp.float32)
        h0n, c0n = lstm_cell(g0, c0)
        h0 = jnp.where(mask, h0n, h0)        # packed-seq: no update when padded
        c0 = jnp.where(mask, c0n, c0)

        # layer 1: two dots sharing one f32 accumulator (no per-step concat)
        g1 = (jnp.dot(h0.astype(mxu_dtype), wih1_ref[...],
                      preferred_element_type=jnp.float32)
              + jnp.dot(h1.astype(mxu_dtype), whh1_ref[...],
                        preferred_element_type=jnp.float32)
              + b1)
        h1n, c1n = lstm_cell(g1, c1)
        h1 = jnp.where(mask, h1n, h1)
        c1 = jnp.where(mask, c1n, c1)

        # pad_packed_sequence semantics: padded timesteps output zeros
        row = pl.multiple_of(lt * BC, BC)
        out_scr[pl.ds(row, BC), :] = jnp.where(mask, h1, 0.0)
        return h0, c0, h1, c1

    init = (h0_scr[...], c0_scr[...], h1_scr[...], c1_scr[...])
    h0, c0, h1, c1 = lax.fori_loop(0, TC, step, init, unroll=True)

    # persist state for the next T chunk
    h0_scr[...] = h0
    c0_scr[...] = c0
    h1_scr[...] = h1
    c1_scr[...] = c1

    # per-chunk output projection: one lane-dense matmul off the per-step chain;
    # the resulting logits block is pipelined out while the next chunk computes.
    proj = (jnp.dot(out_scr[...], wout_ref[...],
                    preferred_element_type=jnp.float32)
            + bout_ref[...])
    logits_ref[...] = proj.reshape(TC, BC, Vp)

    # final states: resident output block (constant index over t), written back
    # to HBM when the batch-chunk / grid finishes.
    hn_ref[0] = h0
    hn_ref[1] = h1
    cn_ref[0] = c0
    cn_ref[1] = c1


# ------------------------------ JAX wrapper -----------------------------------
def char_rnn_forward(tokens, lengths, params, hiddens=None, *,
                     t_chunk=8, use_bf16=USE_BF16_MXU):
    """tokens: (B, T) int32; lengths: (B,) int32 (sorted descending, max == T).
    Returns (logits (B, T, V) batch_first, lengths, (h_n, c_n) each (L, B, H))."""
    if hiddens is not None:
        raise NotImplementedError("zero initial state only")  # TODO(synk)

    B, T = tokens.shape
    V = params["emb"].shape[0]
    H = params["whh0"].shape[1]            # whh0 is (4H, H)
    L = 2

    # hardware-friendly padded sizes: 8 sublanes / 128 lanes
    Bp = _round_up(B, 8)
    Hp = _round_up(H, 128)
    Vp = _round_up(V, 128)
    BC = 8                                  # batch rows per grid point (sublane tile)
    NB = Bp // BC
    TC = min(t_chunk, T)                    # timesteps per grid point
    Tp = _round_up(T, TC)
    NT = Tp // TC

    # ---- per-gate zero padding so every gate block is a full lane tile ----
    def pad_gate_cols(w):   # (in, 4H) -> (in, 4Hp)
        blocks = [jnp.pad(w[:, k * H:(k + 1) * H], ((0, 0), (0, Hp - H)))
                  for k in range(4)]
        return jnp.concatenate(blocks, axis=1)

    def pad_gate_bias(b):   # (4H,) -> (1, 4Hp)
        blocks = [jnp.pad(b[k * H:(k + 1) * H], (0, Hp - H)) for k in range(4)]
        return jnp.concatenate(blocks).reshape(1, 4 * Hp)

    # ---- embedding folded into a per-token layer-0 gate table (V, 4Hp) ----
    gate_w0 = pad_gate_cols(params["wih0"].T)                              # (V, 4Hp)
    b0 = pad_gate_bias(params["bih0"] + params["bhh0"])                    # (1, 4Hp)
    gate_table = jnp.dot(params["emb"], gate_w0,
                         precision=lax.Precision.HIGHEST) + b0             # (V, 4Hp)

    # pad batch (token 0, length 0 -> fully masked) and time (masked), gather
    tok_p = jnp.pad(tokens.astype(jnp.int32), ((0, Bp - B), (0, Tp - T)))
    len_p = jnp.pad(lengths.astype(jnp.int32), (0, Bp - B)).reshape(Bp, 1)
    xg = jnp.take(gate_table, tok_p, axis=0)                               # (Bp, Tp, 4Hp)
    xg_tm = jnp.transpose(xg, (1, 0, 2))                                   # (Tp, Bp, 4Hp)

    # ---- recurrent / output weights (bf16 RHS for the serial-path matmuls) ----
    mxu_dtype = jnp.bfloat16 if use_bf16 else jnp.float32
    whh0 = jnp.pad(pad_gate_cols(params["whh0"].T),
                   ((0, Hp - H), (0, 0))).astype(mxu_dtype)                # (Hp, 4Hp)
    wih1 = jnp.pad(pad_gate_cols(params["wih1"].T),
                   ((0, Hp - H), (0, 0))).astype(mxu_dtype)                # (Hp, 4Hp)
    whh1 = jnp.pad(pad_gate_cols(params["whh1"].T),
                   ((0, Hp - H), (0, 0))).astype(mxu_dtype)                # (Hp, 4Hp)
    b1 = pad_gate_bias(params["bih1"] + params["bhh1"])                    # (1, 4Hp)
    wout = jnp.pad(params["wout"].T, ((0, Hp - H), (0, Vp - V)))           # (Hp, Vp)
    bout = jnp.pad(params["bout"], (0, Vp - V)).reshape(1, Vp)             # (1, Vp)

    args = (len_p, xg_tm, whh0, wih1, whh1, b1, wout, bout)

    logits_p, h_n_p, c_n_p = pl.pallas_call(
        char_rnn_kernel,
        out_shape=(
            jax.ShapeDtypeStruct((Tp, Bp, Vp), jnp.float32),
            jax.ShapeDtypeStruct((L, Bp, Hp), jnp.float32),
            jax.ShapeDtypeStruct((L, Bp, Hp), jnp.float32),
        ),
        grid_spec=pltpu.PrefetchScalarGridSpec(
            num_scalar_prefetch=0,
            grid=(NB, NT),   # batch chunks (parallel/megacore) x T chunks (serial)
            in_specs=[
                pl.BlockSpec((BC, 1), lambda b, t: (b, 0)),                # lengths
                pl.BlockSpec((TC, BC, 4 * Hp), lambda b, t: (t, b, 0)),    # gate slab
                pl.BlockSpec((Hp, 4 * Hp), lambda b, t: (0, 0)),           # whh0
                pl.BlockSpec((Hp, 4 * Hp), lambda b, t: (0, 0)),           # wih1
                pl.BlockSpec((Hp, 4 * Hp), lambda b, t: (0, 0)),           # whh1
                pl.BlockSpec((1, 4 * Hp), lambda b, t: (0, 0)),            # b1
                pl.BlockSpec((Hp, Vp), lambda b, t: (0, 0)),               # wout
                pl.BlockSpec((1, Vp), lambda b, t: (0, 0)),                # bout
            ],
            out_specs=[
                pl.BlockSpec((TC, BC, Vp), lambda b, t: (t, b, 0)),        # logits
                pl.BlockSpec((L, BC, Hp), lambda b, t: (0, b, 0)),         # h_n
                pl.BlockSpec((L, BC, Hp), lambda b, t: (0, b, 0)),         # c_n
            ],
            scratch_shapes=[
                pltpu.VMEM((BC, Hp), jnp.float32),       # h0 (persists across T chunks)
                pltpu.VMEM((BC, Hp), jnp.float32),       # c0
                pltpu.VMEM((BC, Hp), jnp.float32),       # h1
                pltpu.VMEM((BC, Hp), jnp.float32),       # c1
                pltpu.VMEM((TC * BC, Hp), jnp.float32),  # masked LSTM outputs (chunk)
            ],
        ),
        compiler_params=pltpu.CompilerParams(
            dimension_semantics=("parallel", "arbitrary"),
            vmem_limit_bytes=32 * 1024 * 1024,
        ),
    )(*args)

    # strip padding, back to batch_first
    logits = jnp.transpose(logits_p[:T, :B, :V], (1, 0, 2))   # (B, T, V)
    h_n = h_n_p[:, :B, :H]
    c_n = c_n_p[:, :B, :H]
    return logits, lengths, (h_n, c_n)


# ----------------------- pure-JAX reference (for checking) --------------------
def char_rnn_reference(tokens, lengths, params):
    B, T = tokens.shape
    H = params["whh0"].shape[1]
    x_emb = params["emb"][tokens]                       # (B, T, V)
    wih = [params["wih0"], params["wih1"]]
    whh = [params["whh0"], params["whh1"]]
    bih = [params["bih0"], params["bih1"]]
    bhh = [params["bhh0"], params["bhh1"]]

    def cell(x, h, c, l):
        g = x @ wih[l].T + h @ whh[l].T + bih[l] + bhh[l]
        i = jax.nn.sigmoid(g[:, :H]); f = jax.nn.sigmoid(g[:, H:2 * H])
        gg = jnp.tanh(g[:, 2 * H:3 * H]); o = jax.nn.sigmoid(g[:, 3 * H:])
        c2 = f * c + i * gg
        return o * jnp.tanh(c2), c2

    def step(carry, xt_t):
        (h, c) = carry
        xt, t = xt_t
        mask = (lengths > t)[:, None]
        inp = xt
        hs, cs = [], []
        for l in range(2):
            hn, cn = cell(inp, h[l], c[l], l)
            hn = jnp.where(mask, hn, h[l]); cn = jnp.where(mask, cn, c[l])
            hs.append(hn); cs.append(cn); inp = hn
        out = jnp.where(mask, inp, 0.0)
        return (jnp.stack(hs), jnp.stack(cs)), out

    h0 = jnp.zeros((2, B, H), jnp.float32)
    (h_n, c_n), outs = lax.scan(step, (h0, h0),
                                (jnp.transpose(x_emb, (1, 0, 2)), jnp.arange(T)))
    logits = jnp.einsum("tbh,vh->tbv", outs, params["wout"]) + params["bout"]
    return jnp.transpose(logits, (1, 0, 2)), (h_n, c_n)


# ------------------------------ parameter init --------------------------------
def init_params(key, vocab_size, hidden, pad_idx=0):
    V, H = vocab_size, hidden
    ks = jax.random.split(key, 12)
    bound = 1.0 / np.sqrt(H)

    emb = jax.random.normal(ks[0], (V, V), jnp.float32)
    emb = emb.at[pad_idx].set(0.0)                      # padding_idx row zeroed

    def u(k, shape, b):
        return jax.random.uniform(k, shape, jnp.float32, -b, b)

    params = dict(
        emb=emb,
        # layer 0: input size V
        wih0=u(ks[1], (4 * H, V), bound), whh0=u(ks[2], (4 * H, H), bound),
        bih0=u(ks[3], (4 * H,), bound),   bhh0=u(ks[4], (4 * H,), bound),
        # layer 1: input size H
        wih1=u(ks[5], (4 * H, H), bound), whh1=u(ks[6], (4 * H, H), bound),
        bih1=u(ks[7], (4 * H,), bound),   bhh1=u(ks[8], (4 * H,), bound),
        # output linear: hidden -> vocab
        wout=u(ks[9], (V, H), bound),     bout=u(ks[10], (V,), bound),
    )
    return params


# ----------------------------------- main --------------------------------------
if __name__ == "__main__":
    VOCAB, HIDDEN, B, T = 32, 32, 2, 8
    PAD = 0

    key = jax.random.PRNGKey(0)
    pkey, tkey = jax.random.split(key)
    params = init_params(pkey, VOCAB, HIDDEN, pad_idx=PAD)

    # lengths sorted descending (pack_padded_sequence requirement); max length == T
    lengths = jnp.array([8, 5], dtype=jnp.int32)
    tokens = jax.random.randint(tkey, (B, T), 3, VOCAB, dtype=jnp.int32)
    pos = jnp.arange(T)[None, :]
    tokens = jnp.where(pos < lengths[:, None], tokens, PAD)

    logits, lens_out, (h_n, c_n) = char_rnn_forward(tokens, lengths, params)
    jax.block_until_ready((logits, h_n, c_n))

    # sanity check against a pure-JAX reference of the same math
    # (tolerance relaxed when the recurrent matmuls run in bf16 on the MXU)
    tol = 2e-2 if USE_BF16_MXU else 1e-4
    ref_logits, (ref_h, ref_c) = char_rnn_reference(tokens, lengths, params)
    np.testing.assert_allclose(np.asarray(logits), np.asarray(ref_logits),
                               rtol=tol, atol=tol)
    np.testing.assert_allclose(np.asarray(h_n), np.asarray(ref_h), rtol=tol, atol=tol)
    np.testing.assert_allclose(np.asarray(c_n), np.asarray(ref_c), rtol=tol, atol=tol)

    print("KERNEL_OK")
</pallas_src>

<mosaic_0001>
module attributes {stable_mosaic.version = 11 : i64} {
  func.func @char_rnn_kernel(%arg0: i32, %arg1: i32, %arg2: memref<8x1xi32, #tpu.memory_space<vmem>>, %arg3: memref<8x8x512xf32, #tpu.memory_space<vmem>>, %arg4: memref<128x512xbf16, #tpu.memory_space<vmem>>, %arg5: memref<128x512xbf16, #tpu.memory_space<vmem>>, %arg6: memref<128x512xbf16, #tpu.memory_space<vmem>>, %arg7: memref<1x512xf32, #tpu.memory_space<vmem>>, %arg8: memref<128x128xf32, #tpu.memory_space<vmem>>, %arg9: memref<1x128xf32, #tpu.memory_space<vmem>>, %arg10: memref<8x8x128xf32, #tpu.memory_space<vmem>>, %arg11: memref<2x8x128xf32, #tpu.memory_space<vmem>>, %arg12: memref<2x8x128xf32, #tpu.memory_space<vmem>>, %arg13: memref<8x128xf32, #tpu.memory_space<vmem>>, %arg14: memref<8x128xf32, #tpu.memory_space<vmem>>, %arg15: memref<8x128xf32, #tpu.memory_space<vmem>>, %arg16: memref<8x128xf32, #tpu.memory_space<vmem>>, %arg17: memref<64x128xf32, #tpu.memory_space<vmem>>) attributes {dimension_semantics = [#tpu.dimension_semantics<parallel>, #tpu.dimension_semantics<arbitrary>], iteration_bounds = array<i64: 1, 1>, scalar_prefetch = 0 : i64, scratch_operands = 5 : i64, tpu.core_type = #tpu.core_type<tc>, window_params = [{transform_indices = @transform_0, window_bounds = array<i64: 8, 1>}, {transform_indices = @transform_1, window_bounds = array<i64: 8, 8, 512>}, {pipeline_mode = #tpu.pipeline_mode<synchronous>, transform_indices = @transform_2, window_bounds = array<i64: 128, 512>}, {pipeline_mode = #tpu.pipeline_mode<synchronous>, transform_indices = @transform_3, window_bounds = array<i64: 128, 512>}, {pipeline_mode = #tpu.pipeline_mode<synchronous>, transform_indices = @transform_4, window_bounds = array<i64: 128, 512>}, {pipeline_mode = #tpu.pipeline_mode<synchronous>, transform_indices = @transform_5, window_bounds = array<i64: 1, 512>}, {pipeline_mode = #tpu.pipeline_mode<synchronous>, transform_indices = @transform_6, window_bounds = array<i64: 128, 128>}, {pipeline_mode = #tpu.pipeline_mode<synchronous>, transform_indices = @transform_7, window_bounds = array<i64: 1, 128>}, {transform_indices = @transform_8, window_bounds = array<i64: 8, 8, 128>}, {transform_indices = @transform_9, window_bounds = array<i64: 2, 8, 128>}, {transform_indices = @transform_10, window_bounds = array<i64: 2, 8, 128>}]} {
    %c0_i32 = arith.constant 0 : i32
    %0 = arith.cmpi eq, %arg1, %c0_i32 : i32
    %1 = arith.extui %0 : i1 to i32
    %c0_i32_0 = arith.constant 0 : i32
    %2 = arith.cmpi ne, %1, %c0_i32_0 : i32
    scf.if %2 {
      %cst_202 = arith.constant 0.000000e+00 : f32
      %676 = vector.broadcast %cst_202 : f32 to vector<8x128xf32>
      %c0_203 = arith.constant 0 : index
      %c0_204 = arith.constant 0 : index
      %677 = vector.load %arg13[%c0_203, %c0_204] : memref<8x128xf32, #tpu.memory_space<vmem>>, vector<8x128xf32>
      tpu.vector_store %arg13[%c0_203, %c0_204], %676 {strides = array<i32>} : memref<8x128xf32, #tpu.memory_space<vmem>>, vector<8x128xf32>,
      %c0_205 = arith.constant 0 : index
      %c0_206 = arith.constant 0 : index
      %678 = vector.load %arg14[%c0_205, %c0_206] : memref<8x128xf32, #tpu.memory_space<vmem>>, vector<8x128xf32>
      tpu.vector_store %arg14[%c0_205, %c0_206], %676 {strides = array<i32>} : memref<8x128xf32, #tpu.memory_space<vmem>>, vector<8x128xf32>,
      %c0_207 = arith.constant 0 : index
      %c0_208 = arith.constant 0 : index
      %679 = vector.load %arg15[%c0_207, %c0_208] : memref<8x128xf32, #tpu.memory_space<vmem>>, vector<8x128xf32>
      tpu.vector_store %arg15[%c0_207, %c0_208], %676 {strides = array<i32>} : memref<8x128xf32, #tpu.memory_space<vmem>>, vector<8x128xf32>,
      %c0_209 = arith.constant 0 : index
      %c0_210 = arith.constant 0 : index
      %680 = vector.load %arg16[%c0_209, %c0_210] : memref<8x128xf32, #tpu.memory_space<vmem>>, vector<8x128xf32>
      tpu.vector_store %arg16[%c0_209, %c0_210], %676 {strides = array<i32>} : memref<8x128xf32, #tpu.memory_space<vmem>>, vector<8x128xf32>,
    } else {
    }
    %c0 = arith.constant 0 : index
    %c0_1 = arith.constant 0 : index
    %3 = vector.load %arg2[%c0, %c0_1] : memref<8x1xi32, #tpu.memory_space<vmem>>, vector<8x1xi32>
    %c0_2 = arith.constant 0 : index
    %c0_3 = arith.constant 0 : index
    %4 = vector.load %arg7[%c0_2, %c0_3] : memref<1x512xf32, #tpu.memory_space<vmem>>, vector<1x512xf32>
    %5 = vector.shape_cast %4 : vector<1x512xf32> to vector<1x512xf32>
    %6 = vector.broadcast %5 : vector<1x512xf32> to vector<8x512xf32>
    %c8_i32 = arith.constant 8 : i32
    %7 = arith.muli %arg1, %c8_i32 : i32
    %c0_4 = arith.constant 0 : index
    %c0_5 = arith.constant 0 : index
    %8 = vector.load %arg13[%c0_4, %c0_5] : memref<8x128xf32, #tpu.memory_space<vmem>>, vector<8x128xf32>
    %c0_6 = arith.constant 0 : index
    %c0_7 = arith.constant 0 : index
    %9 = vector.load %arg14[%c0_6, %c0_7] : memref<8x128xf32, #tpu.memory_space<vmem>>, vector<8x128xf32>
    %c0_8 = arith.constant 0 : index
    %c0_9 = arith.constant 0 : index
    %10 = vector.load %arg15[%c0_8, %c0_9] : memref<8x128xf32, #tpu.memory_space<vmem>>, vector<8x128xf32>
    %c0_10 = arith.constant 0 : index
    %c0_11 = arith.constant 0 : index
    %11 = vector.load %arg16[%c0_10, %c0_11] : memref<8x128xf32, #tpu.memory_space<vmem>>, vector<8x128xf32>
    %c0_i32_12 = arith.constant 0 : i32
    %12 = arith.addi %7, %c0_i32_12 : i32
    %13 = vector.broadcast %12 : i32 to vector<8x1xi32>
    %14 = arith.cmpi sgt, %3, %13 : vector<8x1xi32>
    %15 = vector.shape_cast %14 : vector<8x1xi1> to vector<8x1xi1>
    %16 = vector.broadcast %15 : vector<8x1xi1> to vector<8x128xi1>
    %17 = arith.index_cast %c0_i32_12 : i32 to index
    %c0_13 = arith.constant 0 : index
    %c0_14 = arith.constant 0 : index
    %18 = vector.load %arg3[%17, %c0_13, %c0_14] : memref<8x8x512xf32, #tpu.memory_space<vmem>>, vector<1x8x512xf32>
    %19 = vector.shape_cast %18 : vector<1x8x512xf32> to vector<8x512xf32>
    %20 = arith.truncf %8 : vector<8x128xf32> to vector<8x128xbf16>
    %c0_15 = arith.constant 0 : index
    %c0_16 = arith.constant 0 : index
    %21 = vector.load %arg4[%c0_15, %c0_16] : memref<128x512xbf16, #tpu.memory_space<vmem>>, vector<128x512xbf16>
    %cst = arith.constant dense<0.000000e+00> : vector<8x512xf32>
    %22 = tpu.matmul %20, %21, %cst {dimension_numbers = #tpu.dot_dimension_numbers<[1], [0], [0], [1], [0, 0, 1, 1], [], []>} : vector<8x128xbf16>, vector<128x512xbf16>, vector<8x512xf32> -> vector<8x512xf32>
    %23 = arith.addf %19, %22 : vector<8x512xf32>
    %24 = vector.extract_strided_slice %23 {offsets = [0, 0], sizes = [8, 128], strides = [1, 1]} : vector<8x512xf32> to vector<8x128xf32>
    %25 = arith.negf %24 : vector<8x128xf32>
    %26 = math.exp %25 : vector<8x128xf32>
    %cst_17 = arith.constant 1.000000e+00 : f32
    %27 = vector.broadcast %cst_17 : f32 to vector<8x128xf32>
    %28 = arith.addf %27, %26 : vector<8x128xf32>
    %29 = arith.divf %27, %28 : vector<8x128xf32>
    %30 = vector.extract_strided_slice %23 {offsets = [0, 128], sizes = [8, 128], strides = [1, 1]} : vector<8x512xf32> to vector<8x128xf32>
    %31 = arith.negf %30 : vector<8x128xf32>
    %32 = math.exp %31 : vector<8x128xf32>
    %cst_18 = arith.constant 1.000000e+00 : f32
    %33 = vector.broadcast %cst_18 : f32 to vector<8x128xf32>
    %34 = arith.addf %33, %32 : vector<8x128xf32>
    %35 = arith.divf %33, %34 : vector<8x128xf32>
    %36 = vector.extract_strided_slice %23 {offsets = [0, 256], sizes = [8, 128], strides = [1, 1]} : vector<8x512xf32> to vector<8x128xf32>
    %37 = math.tanh %36 : vector<8x128xf32>
    %38 = vector.extract_strided_slice %23 {offsets = [0, 384], sizes = [8, 128], strides = [1, 1]} : vector<8x512xf32> to vector<8x128xf32>
    %39 = arith.negf %38 : vector<8x128xf32>
    %40 = math.exp %39 : vector<8x128xf32>
    %cst_19 = arith.constant 1.000000e+00 : f32
    %41 = vector.broadcast %cst_19 : f32 to vector<8x128xf32>
    %42 = arith.addf %41, %40 : vector<8x128xf32>
    %43 = arith.divf %41, %42 : vector<8x128xf32>
    %44 = arith.mulf %35, %9 : vector<8x128xf32>
    %45 = arith.mulf %29, %37 : vector<8x128xf32>
    %46 = arith.addf %44, %45 : vector<8x128xf32>
    %47 = math.tanh %46 : vector<8x128xf32>
    %48 = arith.mulf %43, %47 : vector<8x128xf32>
    %49 = arith.select %16, %48, %8 : vector<8x128xi1>, vector<8x128xf32>
    %50 = arith.select %16, %46, %9 : vector<8x128xi1>, vector<8x128xf32>
    %51 = arith.truncf %49 : vector<8x128xf32> to vector<8x128xbf16>
    %c0_20 = arith.constant 0 : index
    %c0_21 = arith.constant 0 : index
    %52 = vector.load %arg5[%c0_20, %c0_21] : memref<128x512xbf16, #tpu.memory_space<vmem>>, vector<128x512xbf16>
    %cst_22 = arith.constant dense<0.000000e+00> : vector<8x512xf32>
    %53 = tpu.matmul %51, %52, %cst_22 {dimension_numbers = #tpu.dot_dimension_numbers<[1], [0], [0], [1], [0, 0, 1, 1], [], []>} : vector<8x128xbf16>, vector<128x512xbf16>, vector<8x512xf32> -> vector<8x512xf32>
    %54 = arith.truncf %10 : vector<8x128xf32> to vector<8x128xbf16>
    %c0_23 = arith.constant 0 : index
    %c0_24 = arith.constant 0 : index
    %55 = vector.load %arg6[%c0_23, %c0_24] : memref<128x512xbf16, #tpu.memory_space<vmem>>, vector<128x512xbf16>
    %cst_25 = arith.constant dense<0.000000e+00> : vector<8x512xf32>
    %56 = tpu.matmul %54, %55, %cst_25 {dimension_numbers = #tpu.dot_dimension_numbers<[1], [0], [0], [1], [0, 0, 1, 1], [], []>} : vector<8x128xbf16>, vector<128x512xbf16>, vector<8x512xf32> -> vector<8x512xf32>
    %57 = arith.addf %53, %56 : vector<8x512xf32>
    %58 = arith.addf %57, %6 : vector<8x512xf32>
    %59 = vector.extract_strided_slice %58 {offsets = [0, 0], sizes = [8, 128], strides = [1, 1]} : vector<8x512xf32> to vector<8x128xf32>
    %60 = arith.negf %59 : vector<8x128xf32>
    %61 = math.exp %60 : vector<8x128xf32>
    %cst_26 = arith.constant 1.000000e+00 : f32
    %62 = vector.broadcast %cst_26 : f32 to vector<8x128xf32>
    %63 = arith.addf %62, %61 : vector<8x128xf32>
    %64 = arith.divf %62, %63 : vector<8x128xf32>
    %65 = vector.extract_strided_slice %58 {offsets = [0, 128], sizes = [8, 128], strides = [1, 1]} : vector<8x512xf32> to vector<8x128xf32>
    %66 = arith.negf %65 : vector<8x128xf32>
    %67 = math.exp %66 : vector<8x128xf32>
    %cst_27 = arith.constant 1.000000e+00 : f32
    %68 = vector.broadcast %cst_27 : f32 to vector<8x128xf32>
    %69 = arith.addf %68, %67 : vector<8x128xf32>
    %70 = arith.divf %68, %69 : vector<8x128xf32>
    %71 = vector.extract_strided_slice %58 {offsets = [0, 256], sizes = [8, 128], strides = [1, 1]} : vector<8x512xf32> to vector<8x128xf32>
    %72 = math.tanh %71 : vector<8x128xf32>
    %73 = vector.extract_strided_slice %58 {offsets = [0, 384], sizes = [8, 128], strides = [1, 1]} : vector<8x512xf32> to vector<8x128xf32>
    %74 = arith.negf %73 : vector<8x128xf32>
    %75 = math.exp %74 : vector<8x128xf32>
    %cst_28 = arith.constant 1.000000e+00 : f32
    %76 = vector.broadcast %cst_28 : f32 to vector<8x128xf32>
    %77 = arith.addf %76, %75 : vector<8x128xf32>
    %78 = arith.divf %76, %77 : vector<8x128xf32>
    %79 = arith.mulf %70, %11 : vector<8x128xf32>
    %80 = arith.mulf %64, %72 : vector<8x128xf32>
    %81 = arith.addf %79, %80 : vector<8x128xf32>
    %82 = math.tanh %81 : vector<8x128xf32>
    %83 = arith.mulf %78, %82 : vector<8x128xf32>
    %84 = arith.select %16, %83, %10 : vector<8x128xi1>, vector<8x128xf32>
    %85 = arith.select %16, %81, %11 : vector<8x128xi1>, vector<8x128xf32>
    %c8_i32_29 = arith.constant 8 : i32
    %86 = arith.muli %c0_i32_12, %c8_i32_29 : i32
    %87 = tpu.assume_multiple %86, 8 : i32
    %cst_30 = arith.constant 0.000000e+00 : f32
    %88 = vector.broadcast %cst_30 : f32 to vector<8x128xf32>
    %89 = arith.select %16, %84, %88 : vector<8x128xi1>, vector<8x128xf32>
    %90 = arith.index_cast %87 : i32 to index
    %c0_31 = arith.constant 0 : index
    %91 = vector.load %arg17[%90, %c0_31] : memref<64x128xf32, #tpu.memory_space<vmem>>, vector<8x128xf32>
    tpu.vector_store %arg17[%90, %c0_31], %89 {strides = array<i32>} : memref<64x128xf32, #tpu.memory_space<vmem>>, vector<8x128xf32>,
    %c1_i32 = arith.constant 1 : i32
    %92 = arith.addi %7, %c1_i32 : i32
    %93 = vector.broadcast %92 : i32 to vector<8x1xi32>
    %94 = arith.cmpi sgt, %3, %93 : vector<8x1xi32>
    %95 = vector.shape_cast %94 : vector<8x1xi1> to vector<8x1xi1>
    %96 = vector.broadcast %95 : vector<8x1xi1> to vector<8x128xi1>
    %97 = arith.index_cast %c1_i32 : i32 to index
    %c0_32 = arith.constant 0 : index
    %c0_33 = arith.constant 0 : index
    %98 = vector.load %arg3[%97, %c0_32, %c0_33] : memref<8x8x512xf32, #tpu.memory_space<vmem>>, vector<1x8x512xf32>
    %99 = vector.shape_cast %98 : vector<1x8x512xf32> to vector<8x512xf32>
    %100 = arith.truncf %49 : vector<8x128xf32> to vector<8x128xbf16>
    %c0_34 = arith.constant 0 : index
    %c0_35 = arith.constant 0 : index
    %101 = vector.load %arg4[%c0_34, %c0_35] : memref<128x512xbf16, #tpu.memory_space<vmem>>, vector<128x512xbf16>
    %cst_36 = arith.constant dense<0.000000e+00> : vector<8x512xf32>
    %102 = tpu.matmul %100, %101, %cst_36 {dimension_numbers = #tpu.dot_dimension_numbers<[1], [0], [0], [1], [0, 0, 1, 1], [], []>} : vector<8x128xbf16>, vector<128x512xbf16>, vector<8x512xf32> -> vector<8x512xf32>
    %103 = arith.addf %99, %102 : vector<8x512xf32>
    %104 = vector.extract_strided_slice %103 {offsets = [0, 0], sizes = [8, 128], strides = [1, 1]} : vector<8x512xf32> to vector<8x128xf32>
    %105 = arith.negf %104 : vector<8x128xf32>
    %106 = math.exp %105 : vector<8x128xf32>
    %cst_37 = arith.constant 1.000000e+00 : f32
    %107 = vector.broadcast %cst_37 : f32 to vector<8x128xf32>
    %108 = arith.addf %107, %106 : vector<8x128xf32>
    %109 = arith.divf %107, %108 : vector<8x128xf32>
    %110 = vector.extract_strided_slice %103 {offsets = [0, 128], sizes = [8, 128], strides = [1, 1]} : vector<8x512xf32> to vector<8x128xf32>
    %111 = arith.negf %110 : vector<8x128xf32>
    %112 = math.exp %111 : vector<8x128xf32>
    %cst_38 = arith.constant 1.000000e+00 : f32
    %113 = vector.broadcast %cst_38 : f32 to vector<8x128xf32>
    %114 = arith.addf %113, %112 : vector<8x128xf32>
    %115 = arith.divf %113, %114 : vector<8x128xf32>
    %116 = vector.extract_strided_slice %103 {offsets = [0, 256], sizes = [8, 128], strides = [1, 1]} : vector<8x512xf32> to vector<8x128xf32>
    %117 = math.tanh %116 : vector<8x128xf32>
    %118 = vector.extract_strided_slice %103 {offsets = [0, 384], sizes = [8, 128], strides = [1, 1]} : vector<8x512xf32> to vector<8x128xf32>
    %119 = arith.negf %118 : vector<8x128xf32>
    %120 = math.exp %119 : vector<8x128xf32>
    %cst_39 = arith.constant 1.000000e+00 : f32
    %121 = vector.broadcast %cst_39 : f32 to vector<8x128xf32>
    %122 = arith.addf %121, %120 : vector<8x128xf32>
    %123 = arith.divf %121, %122 : vector<8x128xf32>
    %124 = arith.mulf %115, %50 : vector<8x128xf32>
    %125 = arith.mulf %109, %117 : vector<8x128xf32>
    %126 = arith.addf %124, %125 : vector<8x128xf32>
    %127 = math.tanh %126 : vector<8x128xf32>
    %128 = arith.mulf %123, %127 : vector<8x128xf32>
    %129 = arith.select %96, %128, %49 : vector<8x128xi1>, vector<8x128xf32>
    %130 = arith.select %96, %126, %50 : vector<8x128xi1>, vector<8x128xf32>
    %131 = arith.truncf %129 : vector<8x128xf32> to vector<8x128xbf16>
    %c0_40 = arith.constant 0 : index
    %c0_41 = arith.constant 0 : index
    %132 = vector.load %arg5[%c0_40, %c0_41] : memref<128x512xbf16, #tpu.memory_space<vmem>>, vector<128x512xbf16>
    %cst_42 = arith.constant dense<0.000000e+00> : vector<8x512xf32>
    %133 = tpu.matmul %131, %132, %cst_42 {dimension_numbers = #tpu.dot_dimension_numbers<[1], [0], [0], [1], [0, 0, 1, 1], [], []>} : vector<8x128xbf16>, vector<128x512xbf16>, vector<8x512xf32> -> vector<8x512xf32>
    %134 = arith.truncf %84 : vector<8x128xf32> to vector<8x128xbf16>
    %c0_43 = arith.constant 0 : index
    %c0_44 = arith.constant 0 : index
    %135 = vector.load %arg6[%c0_43, %c0_44] : memref<128x512xbf16, #tpu.memory_space<vmem>>, vector<128x512xbf16>
    %cst_45 = arith.constant dense<0.000000e+00> : vector<8x512xf32>
    %136 = tpu.matmul %134, %135, %cst_45 {dimension_numbers = #tpu.dot_dimension_numbers<[1], [0], [0], [1], [0, 0, 1, 1], [], []>} : vector<8x128xbf16>, vector<128x512xbf16>, vector<8x512xf32> -> vector<8x512xf32>
    %137 = arith.addf %133, %136 : vector<8x512xf32>
    %138 = arith.addf %137, %6 : vector<8x512xf32>
    %139 = vector.extract_strided_slice %138 {offsets = [0, 0], sizes = [8, 128], strides = [1, 1]} : vector<8x512xf32> to vector<8x128xf32>
    %140 = arith.negf %139 : vector<8x128xf32>
    %141 = math.exp %140 : vector<8x128xf32>
    %cst_46 = arith.constant 1.000000e+00 : f32
    %142 = vector.broadcast %cst_46 : f32 to vector<8x128xf32>
    %143 = arith.addf %142, %141 : vector<8x128xf32>
    %144 = arith.divf %142, %143 : vector<8x128xf32>
    %145 = vector.extract_strided_slice %138 {offsets = [0, 128], sizes = [8, 128], strides = [1, 1]} : vector<8x512xf32> to vector<8x128xf32>
    %146 = arith.negf %145 : vector<8x128xf32>
    %147 = math.exp %146 : vector<8x128xf32>
    %cst_47 = arith.constant 1.000000e+00 : f32
    %148 = vector.broadcast %cst_47 : f32 to vector<8x128xf32>
    %149 = arith.addf %148, %147 : vector<8x128xf32>
    %150 = arith.divf %148, %149 : vector<8x128xf32>
    %151 = vector.extract_strided_slice %138 {offsets = [0, 256], sizes = [8, 128], strides = [1, 1]} : vector<8x512xf32> to vector<8x128xf32>
    %152 = math.tanh %151 : vector<8x128xf32>
    %153 = vector.extract_strided_slice %138 {offsets = [0, 384], sizes = [8, 128], strides = [1, 1]} : vector<8x512xf32> to vector<8x128xf32>
    %154 = arith.negf %153 : vector<8x128xf32>
    %155 = math.exp %154 : vector<8x128xf32>
    %cst_48 = arith.constant 1.000000e+00 : f32
    %156 = vector.broadcast %cst_48 : f32 to vector<8x128xf32>
    %157 = arith.addf %156, %155 : vector<8x128xf32>
    %158 = arith.divf %156, %157 : vector<8x128xf32>
    %159 = arith.mulf %150, %85 : vector<8x128xf32>
    %160 = arith.mulf %144, %152 : vector<8x128xf32>
    %161 = arith.addf %159, %160 : vector<8x128xf32>
    %162 = math.tanh %161 : vector<8x128xf32>
    %163 = arith.mulf %158, %162 : vector<8x128xf32>
    %164 = arith.select %96, %163, %84 : vector<8x128xi1>, vector<8x128xf32>
    %165 = arith.select %96, %161, %85 : vector<8x128xi1>, vector<8x128xf32>
    %c8_i32_49 = arith.constant 8 : i32
    %166 = arith.muli %c1_i32, %c8_i32_49 : i32
    %167 = tpu.assume_multiple %166, 8 : i32
    %cst_50 = arith.constant 0.000000e+00 : f32
    %168 = vector.broadcast %cst_50 : f32 to vector<8x128xf32>
    %169 = arith.select %96, %164, %168 : vector<8x128xi1>, vector<8x128xf32>
    %170 = arith.index_cast %167 : i32 to index
    %c0_51 = arith.constant 0 : index
    %171 = vector.load %arg17[%170, %c0_51] : memref<64x128xf32, #tpu.memory_space<vmem>>, vector<8x128xf32>
    tpu.vector_store %arg17[%170, %c0_51], %169 {strides = array<i32>} : memref<64x128xf32, #tpu.memory_space<vmem>>, vector<8x128xf32>,
    %c2_i32 = arith.constant 2 : i32
    %172 = arith.addi %7, %c2_i32 : i32
    %173 = vector.broadcast %172 : i32 to vector<8x1xi32>
    %174 = arith.cmpi sgt, %3, %173 : vector<8x1xi32>
    %175 = vector.shape_cast %174 : vector<8x1xi1> to vector<8x1xi1>
    %176 = vector.broadcast %175 : vector<8x1xi1> to vector<8x128xi1>
    %177 = arith.index_cast %c2_i32 : i32 to index
    %c0_52 = arith.constant 0 : index
    %c0_53 = arith.constant 0 : index
    %178 = vector.load %arg3[%177, %c0_52, %c0_53] : memref<8x8x512xf32, #tpu.memory_space<vmem>>, vector<1x8x512xf32>
    %179 = vector.shape_cast %178 : vector<1x8x512xf32> to vector<8x512xf32>
    %180 = arith.truncf %129 : vector<8x128xf32> to vector<8x128xbf16>
    %c0_54 = arith.constant 0 : index
    %c0_55 = arith.constant 0 : index
    %181 = vector.load %arg4[%c0_54, %c0_55] : memref<128x512xbf16, #tpu.memory_space<vmem>>, vector<128x512xbf16>
    %cst_56 = arith.constant dense<0.000000e+00> : vector<8x512xf32>
    %182 = tpu.matmul %180, %181, %cst_56 {dimension_numbers = #tpu.dot_dimension_numbers<[1], [0], [0], [1], [0, 0, 1, 1], [], []>} : vector<8x128xbf16>, vector<128x512xbf16>, vector<8x512xf32> -> vector<8x512xf32>
    %183 = arith.addf %179, %182 : vector<8x512xf32>
    %184 = vector.extract_strided_slice %183 {offsets = [0, 0], sizes = [8, 128], strides = [1, 1]} : vector<8x512xf32> to vector<8x128xf32>
    %185 = arith.negf %184 : vector<8x128xf32>
    %186 = math.exp %185 : vector<8x128xf32>
    %cst_57 = arith.constant 1.000000e+00 : f32
    %187 = vector.broadcast %cst_57 : f32 to vector<8x128xf32>
    %188 = arith.addf %187, %186 : vector<8x128xf32>
    %189 = arith.divf %187, %188 : vector<8x128xf32>
    %190 = vector.extract_strided_slice %183 {offsets = [0, 128], sizes = [8, 128], strides = [1, 1]} : vector<8x512xf32> to vector<8x128xf32>
    %191 = arith.negf %190 : vector<8x128xf32>
    %192 = math.exp %191 : vector<8x128xf32>
    %cst_58 = arith.constant 1.000000e+00 : f32
    %193 = vector.broadcast %cst_58 : f32 to vector<8x128xf32>
    %194 = arith.addf %193, %192 : vector<8x128xf32>
    %195 = arith.divf %193, %194 : vector<8x128xf32>
    %196 = vector.extract_strided_slice %183 {offsets = [0, 256], sizes = [8, 128], strides = [1, 1]} : vector<8x512xf32> to vector<8x128xf32>
    %197 = math.tanh %196 : vector<8x128xf32>
    %198 = vector.extract_strided_slice %183 {offsets = [0, 384], sizes = [8, 128], strides = [1, 1]} : vector<8x512xf32> to vector<8x128xf32>
    %199 = arith.negf %198 : vector<8x128xf32>
    %200 = math.exp %199 : vector<8x128xf32>
    %cst_59 = arith.constant 1.000000e+00 : f32
    %201 = vector.broadcast %cst_59 : f32 to vector<8x128xf32>
    %202 = arith.addf %201, %200 : vector<8x128xf32>
    %203 = arith.divf %201, %202 : vector<8x128xf32>
    %204 = arith.mulf %195, %130 : vector<8x128xf32>
    %205 = arith.mulf %189, %197 : vector<8x128xf32>
    %206 = arith.addf %204, %205 : vector<8x128xf32>
    %207 = math.tanh %206 : vector<8x128xf32>
    %208 = arith.mulf %203, %207 : vector<8x128xf32>
    %209 = arith.select %176, %208, %129 : vector<8x128xi1>, vector<8x128xf32>
    %210 = arith.select %176, %206, %130 : vector<8x128xi1>, vector<8x128xf32>
    %211 = arith.truncf %209 : vector<8x128xf32> to vector<8x128xbf16>
    %c0_60 = arith.constant 0 : index
    %c0_61 = arith.constant 0 : index
    %212 = vector.load %arg5[%c0_60, %c0_61] : memref<128x512xbf16, #tpu.memory_space<vmem>>, vector<128x512xbf16>
    %cst_62 = arith.constant dense<0.000000e+00> : vector<8x512xf32>
    %213 = tpu.matmul %211, %212, %cst_62 {dimension_numbers = #tpu.dot_dimension_numbers<[1], [0], [0], [1], [0, 0, 1, 1], [], []>} : vector<8x128xbf16>, vector<128x512xbf16>, vector<8x512xf32> -> vector<8x512xf32>
    %214 = arith.truncf %164 : vector<8x128xf32> to vector<8x128xbf16>
    %c0_63 = arith.constant 0 : index
    %c0_64 = arith.constant 0 : index
    %215 = vector.load %arg6[%c0_63, %c0_64] : memref<128x512xbf16, #tpu.memory_space<vmem>>, vector<128x512xbf16>
    %cst_65 = arith.constant dense<0.000000e+00> : vector<8x512xf32>
    %216 = tpu.matmul %214, %215, %cst_65 {dimension_numbers = #tpu.dot_dimension_numbers<[1], [0], [0], [1], [0, 0, 1, 1], [], []>} : vector<8x128xbf16>, vector<128x512xbf16>, vector<8x512xf32> -> vector<8x512xf32>
    %217 = arith.addf %213, %216 : vector<8x512xf32>
    %218 = arith.addf %217, %6 : vector<8x512xf32>
    %219 = vector.extract_strided_slice %218 {offsets = [0, 0], sizes = [8, 128], strides = [1, 1]} : vector<8x512xf32> to vector<8x128xf32>
    %220 = arith.negf %219 : vector<8x128xf32>
    %221 = math.exp %220 : vector<8x128xf32>
    %cst_66 = arith.constant 1.000000e+00 : f32
    %222 = vector.broadcast %cst_66 : f32 to vector<8x128xf32>
    %223 = arith.addf %222, %221 : vector<8x128xf32>
    %224 = arith.divf %222, %223 : vector<8x128xf32>
    %225 = vector.extract_strided_slice %218 {offsets = [0, 128], sizes = [8, 128], strides = [1, 1]} : vector<8x512xf32> to vector<8x128xf32>
    %226 = arith.negf %225 : vector<8x128xf32>
    %227 = math.exp %226 : vector<8x128xf32>
    %cst_67 = arith.constant 1.000000e+00 : f32
    %228 = vector.broadcast %cst_67 : f32 to vector<8x128xf32>
    %229 = arith.addf %228, %227 : vector<8x128xf32>
    %230 = arith.divf %228, %229 : vector<8x128xf32>
    %231 = vector.extract_strided_slice %218 {offsets = [0, 256], sizes = [8, 128], strides = [1, 1]} : vector<8x512xf32> to vector<8x128xf32>
    %232 = math.tanh %231 : vector<8x128xf32>
    %233 = vector.extract_strided_slice %218 {offsets = [0, 384], sizes = [8, 128], strides = [1, 1]} : vector<8x512xf32> to vector<8x128xf32>
    %234 = arith.negf %233 : vector<8x128xf32>
    %235 = math.exp %234 : vector<8x128xf32>
    %cst_68 = arith.constant 1.000000e+00 : f32
    %236 = vector.broadcast %cst_68 : f32 to vector<8x128xf32>
    %237 = arith.addf %236, %235 : vector<8x128xf32>
    %238 = arith.divf %236, %237 : vector<8x128xf32>
    %239 = arith.mulf %230, %165 : vector<8x128xf32>
    %240 = arith.mulf %224, %232 : vector<8x128xf32>
    %241 = arith.addf %239, %240 : vector<8x128xf32>
    %242 = math.tanh %241 : vector<8x128xf32>
    %243 = arith.mulf %238, %242 : vector<8x128xf32>
    %244 = arith.select %176, %243, %164 : vector<8x128xi1>, vector<8x128xf32>
    %245 = arith.select %176, %241, %165 : vector<8x128xi1>, vector<8x128xf32>
    %c8_i32_69 = arith.constant 8 : i32
    %246 = arith.muli %c2_i32, %c8_i32_69 : i32
    %247 = tpu.assume_multiple %246, 8 : i32
    %cst_70 = arith.constant 0.000000e+00 : f32
    %248 = vector.broadcast %cst_70 : f32 to vector<8x128xf32>
    %249 = arith.select %176, %244, %248 : vector<8x128xi1>, vector<8x128xf32>
    %250 = arith.index_cast %247 : i32 to index
    %c0_71 = arith.constant 0 : index
    %251 = vector.load %arg17[%250, %c0_71] : memref<64x128xf32, #tpu.memory_space<vmem>>, vector<8x128xf32>
    tpu.vector_store %arg17[%250, %c0_71], %249 {strides = array<i32>} : memref<64x128xf32, #tpu.memory_space<vmem>>, vector<8x128xf32>,
    %c3_i32 = arith.constant 3 : i32
    %252 = arith.addi %7, %c3_i32 : i32
    %253 = vector.broadcast %252 : i32 to vector<8x1xi32>
    %254 = arith.cmpi sgt, %3, %253 : vector<8x1xi32>
    %255 = vector.shape_cast %254 : vector<8x1xi1> to vector<8x1xi1>
    %256 = vector.broadcast %255 : vector<8x1xi1> to vector<8x128xi1>
    %257 = arith.index_cast %c3_i32 : i32 to index
    %c0_72 = arith.constant 0 : index
    %c0_73 = arith.constant 0 : index
    %258 = vector.load %arg3[%257, %c0_72, %c0_73] : memref<8x8x512xf32, #tpu.memory_space<vmem>>, vector<1x8x512xf32>
    %259 = vector.shape_cast %258 : vector<1x8x512xf32> to vector<8x512xf32>
    %260 = arith.truncf %209 : vector<8x128xf32> to vector<8x128xbf16>
    %c0_74 = arith.constant 0 : index
    %c0_75 = arith.constant 0 : index
    %261 = vector.load %arg4[%c0_74, %c0_75] : memref<128x512xbf16, #tpu.memory_space<vmem>>, vector<128x512xbf16>
    %cst_76 = arith.constant dense<0.000000e+00> : vector<8x512xf32>
    %262 = tpu.matmul %260, %261, %cst_76 {dimension_numbers = #tpu.dot_dimension_numbers<[1], [0], [0], [1], [0, 0, 1, 1], [], []>} : vector<8x128xbf16>, vector<128x512xbf16>, vector<8x512xf32> -> vector<8x512xf32>
    %263 = arith.addf %259, %262 : vector<8x512xf32>
    %264 = vector.extract_strided_slice %263 {offsets = [0, 0], sizes = [8, 128], strides = [1, 1]} : vector<8x512xf32> to vector<8x128xf32>
    %265 = arith.negf %264 : vector<8x128xf32>
    %266 = math.exp %265 : vector<8x128xf32>
    %cst_77 = arith.constant 1.000000e+00 : f32
    %267 = vector.broadcast %cst_77 : f32 to vector<8x128xf32>
    %268 = arith.addf %267, %266 : vector<8x128xf32>
    %269 = arith.divf %267, %268 : vector<8x128xf32>
    %270 = vector.extract_strided_slice %263 {offsets = [0, 128], sizes = [8, 128], strides = [1, 1]} : vector<8x512xf32> to vector<8x128xf32>
    %271 = arith.negf %270 : vector<8x128xf32>
    %272 = math.exp %271 : vector<8x128xf32>
    %cst_78 = arith.constant 1.000000e+00 : f32
    %273 = vector.broadcast %cst_78 : f32 to vector<8x128xf32>
    %274 = arith.addf %273, %272 : vector<8x128xf32>
    %275 = arith.divf %273, %274 : vector<8x128xf32>
    %276 = vector.extract_strided_slice %263 {offsets = [0, 256], sizes = [8, 128], strides = [1, 1]} : vector<8x512xf32> to vector<8x128xf32>
    %277 = math.tanh %276 : vector<8x128xf32>
    %278 = vector.extract_strided_slice %263 {offsets = [0, 384], sizes = [8, 128], strides = [1, 1]} : vector<8x512xf32> to vector<8x128xf32>
    %279 = arith.negf %278 : vector<8x128xf32>
    %280 = math.exp %279 : vector<8x128xf32>
    %cst_79 = arith.constant 1.000000e+00 : f32
    %281 = vector.broadcast %cst_79 : f32 to vector<8x128xf32>
    %282 = arith.addf %281, %280 : vector<8x128xf32>
    %283 = arith.divf %281, %282 : vector<8x128xf32>
    %284 = arith.mulf %275, %210 : vector<8x128xf32>
    %285 = arith.mulf %269, %277 : vector<8x128xf32>
    %286 = arith.addf %284, %285 : vector<8x128xf32>
    %287 = math.tanh %286 : vector<8x128xf32>
    %288 = arith.mulf %283, %287 : vector<8x128xf32>
    %289 = arith.select %256, %288, %209 : vector<8x128xi1>, vector<8x128xf32>
    %290 = arith.select %256, %286, %210 : vector<8x128xi1>, vector<8x128xf32>
    %291 = arith.truncf %289 : vector<8x128xf32> to vector<8x128xbf16>
    %c0_80 = arith.constant 0 : index
    %c0_81 = arith.constant 0 : index
    %292 = vector.load %arg5[%c0_80, %c0_81] : memref<128x512xbf16, #tpu.memory_space<vmem>>, vector<128x512xbf16>
    %cst_82 = arith.constant dense<0.000000e+00> : vector<8x512xf32>
    %293 = tpu.matmul %291, %292, %cst_82 {dimension_numbers = #tpu.dot_dimension_numbers<[1], [0], [0], [1], [0, 0, 1, 1], [], []>} : vector<8x128xbf16>, vector<128x512xbf16>, vector<8x512xf32> -> vector<8x512xf32>
    %294 = arith.truncf %244 : vector<8x128xf32> to vector<8x128xbf16>
    %c0_83 = arith.constant 0 : index
    %c0_84 = arith.constant 0 : index
    %295 = vector.load %arg6[%c0_83, %c0_84] : memref<128x512xbf16, #tpu.memory_space<vmem>>, vector<128x512xbf16>
    %cst_85 = arith.constant dense<0.000000e+00> : vector<8x512xf32>
    %296 = tpu.matmul %294, %295, %cst_85 {dimension_numbers = #tpu.dot_dimension_numbers<[1], [0], [0], [1], [0, 0, 1, 1], [], []>} : vector<8x128xbf16>, vector<128x512xbf16>, vector<8x512xf32> -> vector<8x512xf32>
    %297 = arith.addf %293, %296 : vector<8x512xf32>
    %298 = arith.addf %297, %6 : vector<8x512xf32>
    %299 = vector.extract_strided_slice %298 {offsets = [0, 0], sizes = [8, 128], strides = [1, 1]} : vector<8x512xf32> to vector<8x128xf32>
    %300 = arith.negf %299 : vector<8x128xf32>
    %301 = math.exp %300 : vector<8x128xf32>
    %cst_86 = arith.constant 1.000000e+00 : f32
    %302 = vector.broadcast %cst_86 : f32 to vector<8x128xf32>
    %303 = arith.addf %302, %301 : vector<8x128xf32>
    %304 = arith.divf %302, %303 : vector<8x128xf32>
    %305 = vector.extract_strided_slice %298 {offsets = [0, 128], sizes = [8, 128], strides = [1, 1]} : vector<8x512xf32> to vector<8x128xf32>
    %306 = arith.negf %305 : vector<8x128xf32>
    %307 = math.exp %306 : vector<8x128xf32>
    %cst_87 = arith.constant 1.000000e+00 : f32
    %308 = vector.broadcast %cst_87 : f32 to vector<8x128xf32>
    %309 = arith.addf %308, %307 : vector<8x128xf32>
    %310 = arith.divf %308, %309 : vector<8x128xf32>
    %311 = vector.extract_strided_slice %298 {offsets = [0, 256], sizes = [8, 128], strides = [1, 1]} : vector<8x512xf32> to vector<8x128xf32>
    %312 = math.tanh %311 : vector<8x128xf32>
    %313 = vector.extract_strided_slice %298 {offsets = [0, 384], sizes = [8, 128], strides = [1, 1]} : vector<8x512xf32> to vector<8x128xf32>
    %314 = arith.negf %313 : vector<8x128xf32>
    %315 = math.exp %314 : vector<8x128xf32>
    %cst_88 = arith.constant 1.000000e+00 : f32
    %316 = vector.broadcast %cst_88 : f32 to vector<8x128xf32>
    %317 = arith.addf %316, %315 : vector<8x128xf32>
    %318 = arith.divf %316, %317 : vector<8x128xf32>
    %319 = arith.mulf %310, %245 : vector<8x128xf32>
    %320 = arith.mulf %304, %312 : vector<8x128xf32>
    %321 = arith.addf %319, %320 : vector<8x128xf32>
    %322 = math.tanh %321 : vector<8x128xf32>
    %323 = arith.mulf %318, %322 : vector<8x128xf32>
    %324 = arith.select %256, %323, %244 : vector<8x128xi1>, vector<8x128xf32>
    %325 = arith.select %256, %321, %245 : vector<8x128xi1>, vector<8x128xf32>
    %c8_i32_89 = arith.constant 8 : i32
    %326 = arith.muli %c3_i32, %c8_i32_89 : i32
    %327 = tpu.assume_multiple %326, 8 : i32
    %cst_90 = arith.constant 0.000000e+00 : f32
    %328 = vector.broadcast %cst_90 : f32 to vector<8x128xf32>
    %329 = arith.select %256, %324, %328 : vector<8x128xi1>, vector<8x128xf32>
    %330 = arith.index_cast %327 : i32 to index
    %c0_91 = arith.constant 0 : index
    %331 = vector.load %arg17[%330, %c0_91] : memref<64x128xf32, #tpu.memory_space<vmem>>, vector<8x128xf32>
    tpu.vector_store %arg17[%330, %c0_91], %329 {strides = array<i32>} : memref<64x128xf32, #tpu.memory_space<vmem>>, vector<8x128xf32>,
    %c4_i32 = arith.constant 4 : i32
    %332 = arith.addi %7, %c4_i32 : i32
    %333 = vector.broadcast %332 : i32 to vector<8x1xi32>
    %334 = arith.cmpi sgt, %3, %333 : vector<8x1xi32>
    %335 = vector.shape_cast %334 : vector<8x1xi1> to vector<8x1xi1>
    %336 = vector.broadcast %335 : vector<8x1xi1> to vector<8x128xi1>
    %337 = arith.index_cast %c4_i32 : i32 to index
    %c0_92 = arith.constant 0 : index
    %c0_93 = arith.constant 0 : index
    %338 = vector.load %arg3[%337, %c0_92, %c0_93] : memref<8x8x512xf32, #tpu.memory_space<vmem>>, vector<1x8x512xf32>
    %339 = vector.shape_cast %338 : vector<1x8x512xf32> to vector<8x512xf32>
    %340 = arith.truncf %289 : vector<8x128xf32> to vector<8x128xbf16>
    %c0_94 = arith.constant 0 : index
    %c0_95 = arith.constant 0 : index
    %341 = vector.load %arg4[%c0_94, %c0_95] : memref<128x512xbf16, #tpu.memory_space<vmem>>, vector<128x512xbf16>
    %cst_96 = arith.constant dense<0.000000e+00> : vector<8x512xf32>
    %342 = tpu.matmul %340, %341, %cst_96 {dimension_numbers = #tpu.dot_dimension_numbers<[1], [0], [0], [1], [0, 0, 1, 1], [], []>} : vector<8x128xbf16>, vector<128x512xbf16>, vector<8x512xf32> -> vector<8x512xf32>
    %343 = arith.addf %339, %342 : vector<8x512xf32>
    %344 = vector.extract_strided_slice %343 {offsets = [0, 0], sizes = [8, 128], strides = [1, 1]} : vector<8x512xf32> to vector<8x128xf32>
    %345 = arith.negf %344 : vector<8x128xf32>
    %346 = math.exp %345 : vector<8x128xf32>
    %cst_97 = arith.constant 1.000000e+00 : f32
    %347 = vector.broadcast %cst_97 : f32 to vector<8x128xf32>
    %348 = arith.addf %347, %346 : vector<8x128xf32>
    %349 = arith.divf %347, %348 : vector<8x128xf32>
    %350 = vector.extract_strided_slice %343 {offsets = [0, 128], sizes = [8, 128], strides = [1, 1]} : vector<8x512xf32> to vector<8x128xf32>
    %351 = arith.negf %350 : vector<8x128xf32>
    %352 = math.exp %351 : vector<8x128xf32>
    %cst_98 = arith.constant 1.000000e+00 : f32
    %353 = vector.broadcast %cst_98 : f32 to vector<8x128xf32>
    %354 = arith.addf %353, %352 : vector<8x128xf32>
    %355 = arith.divf %353, %354 : vector<8x128xf32>
    %356 = vector.extract_strided_slice %343 {offsets = [0, 256], sizes = [8, 128], strides = [1, 1]} : vector<8x512xf32> to vector<8x128xf32>
    %357 = math.tanh %356 : vector<8x128xf32>
    %358 = vector.extract_strided_slice %343 {offsets = [0, 384], sizes = [8, 128], strides = [1, 1]} : vector<8x512xf32> to vector<8x128xf32>
    %359 = arith.negf %358 : vector<8x128xf32>
    %360 = math.exp %359 : vector<8x128xf32>
    %cst_99 = arith.constant 1.000000e+00 : f32
    %361 = vector.broadcast %cst_99 : f32 to vector<8x128xf32>
    %362 = arith.addf %361, %360 : vector<8x128xf32>
    %363 = arith.divf %361, %362 : vector<8x128xf32>
    %364 = arith.mulf %355, %290 : vector<8x128xf32>
    %365 = arith.mulf %349, %357 : vector<8x128xf32>
    %366 = arith.addf %364, %365 : vector<8x128xf32>
    %367 = math.tanh %366 : vector<8x128xf32>
    %368 = arith.mulf %363, %367 : vector<8x128xf32>
    %369 = arith.select %336, %368, %289 : vector<8x128xi1>, vector<8x128xf32>
    %370 = arith.select %336, %366, %290 : vector<8x128xi1>, vector<8x128xf32>
    %371 = arith.truncf %369 : vector<8x128xf32> to vector<8x128xbf16>
    %c0_100 = arith.constant 0 : index
    %c0_101 = arith.constant 0 : index
    %372 = vector.load %arg5[%c0_100, %c0_101] : memref<128x512xbf16, #tpu.memory_space<vmem>>, vector<128x512xbf16>
    %cst_102 = arith.constant dense<0.000000e+00> : vector<8x512xf32>
    %373 = tpu.matmul %371, %372, %cst_102 {dimension_numbers = #tpu.dot_dimension_numbers<[1], [0], [0], [1], [0, 0, 1, 1], [], []>} : vector<8x128xbf16>, vector<128x512xbf16>, vector<8x512xf32> -> vector<8x512xf32>
    %374 = arith.truncf %324 : vector<8x128xf32> to vector<8x128xbf16>
    %c0_103 = arith.constant 0 : index
    %c0_104 = arith.constant 0 : index
    %375 = vector.load %arg6[%c0_103, %c0_104] : memref<128x512xbf16, #tpu.memory_space<vmem>>, vector<128x512xbf16>
    %cst_105 = arith.constant dense<0.000000e+00> : vector<8x512xf32>
    %376 = tpu.matmul %374, %375, %cst_105 {dimension_numbers = #tpu.dot_dimension_numbers<[1], [0], [0], [1], [0, 0, 1, 1], [], []>} : vector<8x128xbf16>, vector<128x512xbf16>, vector<8x512xf32> -> vector<8x512xf32>
    %377 = arith.addf %373, %376 : vector<8x512xf32>
    %378 = arith.addf %377, %6 : vector<8x512xf32>
    %379 = vector.extract_strided_slice %378 {offsets = [0, 0], sizes = [8, 128], strides = [1, 1]} : vector<8x512xf32> to vector<8x128xf32>
    %380 = arith.negf %379 : vector<8x128xf32>
    %381 = math.exp %380 : vector<8x128xf32>
    %cst_106 = arith.constant 1.000000e+00 : f32
    %382 = vector.broadcast %cst_106 : f32 to vector<8x128xf32>
    %383 = arith.addf %382, %381 : vector<8x128xf32>
    %384 = arith.divf %382, %383 : vector<8x128xf32>
    %385 = vector.extract_strided_slice %378 {offsets = [0, 128], sizes = [8, 128], strides = [1, 1]} : vector<8x512xf32> to vector<8x128xf32>
    %386 = arith.negf %385 : vector<8x128xf32>
    %387 = math.exp %386 : vector<8x128xf32>
    %cst_107 = arith.constant 1.000000e+00 : f32
    %388 = vector.broadcast %cst_107 : f32 to vector<8x128xf32>
    %389 = arith.addf %388, %387 : vector<8x128xf32>
    %390 = arith.divf %388, %389 : vector<8x128xf32>
    %391 = vector.extract_strided_slice %378 {offsets = [0, 256], sizes = [8, 128], strides = [1, 1]} : vector<8x512xf32> to vector<8x128xf32>
    %392 = math.tanh %391 : vector<8x128xf32>
    %393 = vector.extract_strided_slice %378 {offsets = [0, 384], sizes = [8, 128], strides = [1, 1]} : vector<8x512xf32> to vector<8x128xf32>
    %394 = arith.negf %393 : vector<8x128xf32>
    %395 = math.exp %394 : vector<8x128xf32>
    %cst_108 = arith.constant 1.000000e+00 : f32
    %396 = vector.broadcast %cst_108 : f32 to vector<8x128xf32>
    %397 = arith.addf %396, %395 : vector<8x128xf32>
    %398 = arith.divf %396, %397 : vector<8x128xf32>
    %399 = arith.mulf %390, %325 : vector<8x128xf32>
    %400 = arith.mulf %384, %392 : vector<8x128xf32>
    %401 = arith.addf %399, %400 : vector<8x128xf32>
    %402 = math.tanh %401 : vector<8x128xf32>
    %403 = arith.mulf %398, %402 : vector<8x128xf32>
    %404 = arith.select %336, %403, %324 : vector<8x128xi1>, vector<8x128xf32>
    %405 = arith.select %336, %401, %325 : vector<8x128xi1>, vector<8x128xf32>
    %c8_i32_109 = arith.constant 8 : i32
    %406 = arith.muli %c4_i32, %c8_i32_109 : i32
    %407 = tpu.assume_multiple %406, 8 : i32
    %cst_110 = arith.constant 0.000000e+00 : f32
    %408 = vector.broadcast %cst_110 : f32 to vector<8x128xf32>
    %409 = arith.select %336, %404, %408 : vector<8x128xi1>, vector<8x128xf32>
    %410 = arith.index_cast %407 : i32 to index
    %c0_111 = arith.constant 0 : index
    %411 = vector.load %arg17[%410, %c0_111] : memref<64x128xf32, #tpu.memory_space<vmem>>, vector<8x128xf32>
    tpu.vector_store %arg17[%410, %c0_111], %409 {strides = array<i32>} : memref<64x128xf32, #tpu.memory_space<vmem>>, vector<8x128xf32>,
    %c5_i32 = arith.constant 5 : i32
    %412 = arith.addi %7, %c5_i32 : i32
    %413 = vector.broadcast %412 : i32 to vector<8x1xi32>
    %414 = arith.cmpi sgt, %3, %413 : vector<8x1xi32>
    %415 = vector.shape_cast %414 : vector<8x1xi1> to vector<8x1xi1>
    %416 = vector.broadcast %415 : vector<8x1xi1> to vector<8x128xi1>
    %417 = arith.index_cast %c5_i32 : i32 to index
    %c0_112 = arith.constant 0 : index
    %c0_113 = arith.constant 0 : index
    %418 = vector.load %arg3[%417, %c0_112, %c0_113] : memref<8x8x512xf32, #tpu.memory_space<vmem>>, vector<1x8x512xf32>
    %419 = vector.shape_cast %418 : vector<1x8x512xf32> to vector<8x512xf32>
    %420 = arith.truncf %369 : vector<8x128xf32> to vector<8x128xbf16>
    %c0_114 = arith.constant 0 : index
    %c0_115 = arith.constant 0 : index
    %421 = vector.load %arg4[%c0_114, %c0_115] : memref<128x512xbf16, #tpu.memory_space<vmem>>, vector<128x512xbf16>
    %cst_116 = arith.constant dense<0.000000e+00> : vector<8x512xf32>
    %422 = tpu.matmul %420, %421, %cst_116 {dimension_numbers = #tpu.dot_dimension_numbers<[1], [0], [0], [1], [0, 0, 1, 1], [], []>} : vector<8x128xbf16>, vector<128x512xbf16>, vector<8x512xf32> -> vector<8x512xf32>
    %423 = arith.addf %419, %422 : vector<8x512xf32>
    %424 = vector.extract_strided_slice %423 {offsets = [0, 0], sizes = [8, 128], strides = [1, 1]} : vector<8x512xf32> to vector<8x128xf32>
    %425 = arith.negf %424 : vector<8x128xf32>
    %426 = math.exp %425 : vector<8x128xf32>
    %cst_117 = arith.constant 1.000000e+00 : f32
    %427 = vector.broadcast %cst_117 : f32 to vector<8x128xf32>
    %428 = arith.addf %427, %426 : vector<8x128xf32>
    %429 = arith.divf %427, %428 : vector<8x128xf32>
    %430 = vector.extract_strided_slice %423 {offsets = [0, 128], sizes = [8, 128], strides = [1, 1]} : vector<8x512xf32> to vector<8x128xf32>
    %431 = arith.negf %430 : vector<8x128xf32>
    %432 = math.exp %431 : vector<8x128xf32>
    %cst_118 = arith.constant 1.000000e+00 : f32
    %433 = vector.broadcast %cst_118 : f32 to vector<8x128xf32>
    %434 = arith.addf %433, %432 : vector<8x128xf32>
    %435 = arith.divf %433, %434 : vector<8x128xf32>
    %436 = vector.extract_strided_slice %423 {offsets = [0, 256], sizes = [8, 128], strides = [1, 1]} : vector<8x512xf32> to vector<8x128xf32>
    %437 = math.tanh %436 : vector<8x128xf32>
    %438 = vector.extract_strided_slice %423 {offsets = [0, 384], sizes = [8, 128], strides = [1, 1]} : vector<8x512xf32> to vector<8x128xf32>
    %439 = arith.negf %438 : vector<8x128xf32>
    %440 = math.exp %439 : vector<8x128xf32>
    %cst_119 = arith.constant 1.000000e+00 : f32
    %441 = vector.broadcast %cst_119 : f32 to vector<8x128xf32>
    %442 = arith.addf %441, %440 : vector<8x128xf32>
    %443 = arith.divf %441, %442 : vector<8x128xf32>
    %444 = arith.mulf %435, %370 : vector<8x128xf32>
    %445 = arith.mulf %429, %437 : vector<8x128xf32>
    %446 = arith.addf %444, %445 : vector<8x128xf32>
    %447 = math.tanh %446 : vector<8x128xf32>
    %448 = arith.mulf %443, %447 : vector<8x128xf32>
    %449 = arith.select %416, %448, %369 : vector<8x128xi1>, vector<8x128xf32>
    %450 = arith.select %416, %446, %370 : vector<8x128xi1>, vector<8x128xf32>
    %451 = arith.truncf %449 : vector<8x128xf32> to vector<8x128xbf16>
    %c0_120 = arith.constant 0 : index
    %c0_121 = arith.constant 0 : index
    %452 = vector.load %arg5[%c0_120, %c0_121] : memref<128x512xbf16, #tpu.memory_space<vmem>>, vector<128x512xbf16>
    %cst_122 = arith.constant dense<0.000000e+00> : vector<8x512xf32>
    %453 = tpu.matmul %451, %452, %cst_122 {dimension_numbers = #tpu.dot_dimension_numbers<[1], [0], [0], [1], [0, 0, 1, 1], [], []>} : vector<8x128xbf16>, vector<128x512xbf16>, vector<8x512xf32> -> vector<8x512xf32>
    %454 = arith.truncf %404 : vector<8x128xf32> to vector<8x128xbf16>
    %c0_123 = arith.constant 0 : index
    %c0_124 = arith.constant 0 : index
    %455 = vector.load %arg6[%c0_123, %c0_124] : memref<128x512xbf16, #tpu.memory_space<vmem>>, vector<128x512xbf16>
    %cst_125 = arith.constant dense<0.000000e+00> : vector<8x512xf32>
    %456 = tpu.matmul %454, %455, %cst_125 {dimension_numbers = #tpu.dot_dimension_numbers<[1], [0], [0], [1], [0, 0, 1, 1], [], []>} : vector<8x128xbf16>, vector<128x512xbf16>, vector<8x512xf32> -> vector<8x512xf32>
    %457 = arith.addf %453, %456 : vector<8x512xf32>
    %458 = arith.addf %457, %6 : vector<8x512xf32>
    %459 = vector.extract_strided_slice %458 {offsets = [0, 0], sizes = [8, 128], strides = [1, 1]} : vector<8x512xf32> to vector<8x128xf32>
    %460 = arith.negf %459 : vector<8x128xf32>
    %461 = math.exp %460 : vector<8x128xf32>
    %cst_126 = arith.constant 1.000000e+00 : f32
    %462 = vector.broadcast %cst_126 : f32 to vector<8x128xf32>
    %463 = arith.addf %462, %461 : vector<8x128xf32>
    %464 = arith.divf %462, %463 : vector<8x128xf32>
    %465 = vector.extract_strided_slice %458 {offsets = [0, 128], sizes = [8, 128], strides = [1, 1]} : vector<8x512xf32> to vector<8x128xf32>
    %466 = arith.negf %465 : vector<8x128xf32>
    %467 = math.exp %466 : vector<8x128xf32>
    %cst_127 = arith.constant 1.000000e+00 : f32
    %468 = vector.broadcast %cst_127 : f32 to vector<8x128xf32>
    %469 = arith.addf %468, %467 : vector<8x128xf32>
    %470 = arith.divf %468, %469 : vector<8x128xf32>
    %471 = vector.extract_strided_slice %458 {offsets = [0, 256], sizes = [8, 128], strides = [1, 1]} : vector<8x512xf32> to vector<8x128xf32>
    %472 = math.tanh %471 : vector<8x128xf32>
    %473 = vector.extract_strided_slice %458 {offsets = [0, 384], sizes = [8, 128], strides = [1, 1]} : vector<8x512xf32> to vector<8x128xf32>
    %474 = arith.negf %473 : vector<8x128xf32>
    %475 = math.exp %474 : vector<8x128xf32>
    %cst_128 = arith.constant 1.000000e+00 : f32
    %476 = vector.broadcast %cst_128 : f32 to vector<8x128xf32>
    %477 = arith.addf %476, %475 : vector<8x128xf32>
    %478 = arith.divf %476, %477 : vector<8x128xf32>
    %479 = arith.mulf %470, %405 : vector<8x128xf32>
    %480 = arith.mulf %464, %472 : vector<8x128xf32>
    %481 = arith.addf %479, %480 : vector<8x128xf32>
    %482 = math.tanh %481 : vector<8x128xf32>
    %483 = arith.mulf %478, %482 : vector<8x128xf32>
    %484 = arith.select %416, %483, %404 : vector<8x128xi1>, vector<8x128xf32>
    %485 = arith.select %416, %481, %405 : vector<8x128xi1>, vector<8x128xf32>
    %c8_i32_129 = arith.constant 8 : i32
    %486 = arith.muli %c5_i32, %c8_i32_129 : i32
    %487 = tpu.assume_multiple %486, 8 : i32
    %cst_130 = arith.constant 0.000000e+00 : f32
    %488 = vector.broadcast %cst_130 : f32 to vector<8x128xf32>
    %489 = arith.select %416, %484, %488 : vector<8x128xi1>, vector<8x128xf32>
    %490 = arith.index_cast %487 : i32 to index
    %c0_131 = arith.constant 0 : index
    %491 = vector.load %arg17[%490, %c0_131] : memref<64x128xf32, #tpu.memory_space<vmem>>, vector<8x128xf32>
    tpu.vector_store %arg17[%490, %c0_131], %489 {strides = array<i32>} : memref<64x128xf32, #tpu.memory_space<vmem>>, vector<8x128xf32>,
    %c6_i32 = arith.constant 6 : i32
    %492 = arith.addi %7, %c6_i32 : i32
    %493 = vector.broadcast %492 : i32 to vector<8x1xi32>
    %494 = arith.cmpi sgt, %3, %493 : vector<8x1xi32>
    %495 = vector.shape_cast %494 : vector<8x1xi1> to vector<8x1xi1>
    %496 = vector.broadcast %495 : vector<8x1xi1> to vector<8x128xi1>
    %497 = arith.index_cast %c6_i32 : i32 to index
    %c0_132 = arith.constant 0 : index
    %c0_133 = arith.constant 0 : index
    %498 = vector.load %arg3[%497, %c0_132, %c0_133] : memref<8x8x512xf32, #tpu.memory_space<vmem>>, vector<1x8x512xf32>
    %499 = vector.shape_cast %498 : vector<1x8x512xf32> to vector<8x512xf32>
    %500 = arith.truncf %449 : vector<8x128xf32> to vector<8x128xbf16>
    %c0_134 = arith.constant 0 : index
    %c0_135 = arith.constant 0 : index
    %501 = vector.load %arg4[%c0_134, %c0_135] : memref<128x512xbf16, #tpu.memory_space<vmem>>, vector<128x512xbf16>
    %cst_136 = arith.constant dense<0.000000e+00> : vector<8x512xf32>
    %502 = tpu.matmul %500, %501, %cst_136 {dimension_numbers = #tpu.dot_dimension_numbers<[1], [0], [0], [1], [0, 0, 1, 1], [], []>} : vector<8x128xbf16>, vector<128x512xbf16>, vector<8x512xf32> -> vector<8x512xf32>
    %503 = arith.addf %499, %502 : vector<8x512xf32>
    %504 = vector.extract_strided_slice %503 {offsets = [0, 0], sizes = [8, 128], strides = [1, 1]} : vector<8x512xf32> to vector<8x128xf32>
    %505 = arith.negf %504 : vector<8x128xf32>
    %506 = math.exp %505 : vector<8x128xf32>
    %cst_137 = arith.constant 1.000000e+00 : f32
    %507 = vector.broadcast %cst_137 : f32 to vector<8x128xf32>
    %508 = arith.addf %507, %506 : vector<8x128xf32>
    %509 = arith.divf %507, %508 : vector<8x128xf32>
    %510 = vector.extract_strided_slice %503 {offsets = [0, 128], sizes = [8, 128], strides = [1, 1]} : vector<8x512xf32> to vector<8x128xf32>
    %511 = arith.negf %510 : vector<8x128xf32>
    %512 = math.exp %511 : vector<8x128xf32>
    %cst_138 = arith.constant 1.000000e+00 : f32
    %513 = vector.broadcast %cst_138 : f32 to vector<8x128xf32>
    %514 = arith.addf %513, %512 : vector<8x128xf32>
    %515 = arith.divf %513, %514 : vector<8x128xf32>
    %516 = vector.extract_strided_slice %503 {offsets = [0, 256], sizes = [8, 128], strides = [1, 1]} : vector<8x512xf32> to vector<8x128xf32>
    %517 = math.tanh %516 : vector<8x128xf32>
    %518 = vector.extract_strided_slice %503 {offsets = [0, 384], sizes = [8, 128], strides = [1, 1]} : vector<8x512xf32> to vector<8x128xf32>
    %519 = arith.negf %518 : vector<8x128xf32>
    %520 = math.exp %519 : vector<8x128xf32>
    %cst_139 = arith.constant 1.000000e+00 : f32
    %521 = vector.broadcast %cst_139 : f32 to vector<8x128xf32>
    %522 = arith.addf %521, %520 : vector<8x128xf32>
    %523 = arith.divf %521, %522 : vector<8x128xf32>
    %524 = arith.mulf %515, %450 : vector<8x128xf32>
    %525 = arith.mulf %509, %517 : vector<8x128xf32>
    %526 = arith.addf %524, %525 : vector<8x128xf32>
    %527 = math.tanh %526 : vector<8x128xf32>
    %528 = arith.mulf %523, %527 : vector<8x128xf32>
    %529 = arith.select %496, %528, %449 : vector<8x128xi1>, vector<8x128xf32>
    %530 = arith.select %496, %526, %450 : vector<8x128xi1>, vector<8x128xf32>
    %531 = arith.truncf %529 : vector<8x128xf32> to vector<8x128xbf16>
    %c0_140 = arith.constant 0 : index
    %c0_141 = arith.constant 0 : index
    %532 = vector.load %arg5[%c0_140, %c0_141] : memref<128x512xbf16, #tpu.memory_space<vmem>>, vector<128x512xbf16>
    %cst_142 = arith.constant dense<0.000000e+00> : vector<8x512xf32>
    %533 = tpu.matmul %531, %532, %cst_142 {dimension_numbers = #tpu.dot_dimension_numbers<[1], [0], [0], [1], [0, 0, 1, 1], [], []>} : vector<8x128xbf16>, vector<128x512xbf16>, vector<8x512xf32> -> vector<8x512xf32>
    %534 = arith.truncf %484 : vector<8x128xf32> to vector<8x128xbf16>
    %c0_143 = arith.constant 0 : index
    %c0_144 = arith.constant 0 : index
    %535 = vector.load %arg6[%c0_143, %c0_144] : memref<128x512xbf16, #tpu.memory_space<vmem>>, vector<128x512xbf16>
    %cst_145 = arith.constant dense<0.000000e+00> : vector<8x512xf32>
    %536 = tpu.matmul %534, %535, %cst_145 {dimension_numbers = #tpu.dot_dimension_numbers<[1], [0], [0], [1], [0, 0, 1, 1], [], []>} : vector<8x128xbf16>, vector<128x512xbf16>, vector<8x512xf32> -> vector<8x512xf32>
    %537 = arith.addf %533, %536 : vector<8x512xf32>
    %538 = arith.addf %537, %6 : vector<8x512xf32>
    %539 = vector.extract_strided_slice %538 {offsets = [0, 0], sizes = [8, 128], strides = [1, 1]} : vector<8x512xf32> to vector<8x128xf32>
    %540 = arith.negf %539 : vector<8x128xf32>
    %541 = math.exp %540 : vector<8x128xf32>
    %cst_146 = arith.constant 1.000000e+00 : f32
    %542 = vector.broadcast %cst_146 : f32 to vector<8x128xf32>
    %543 = arith.addf %542, %541 : vector<8x128xf32>
    %544 = arith.divf %542, %543 : vector<8x128xf32>
    %545 = vector.extract_strided_slice %538 {offsets = [0, 128], sizes = [8, 128], strides = [1, 1]} : vector<8x512xf32> to vector<8x128xf32>
    %546 = arith.negf %545 : vector<8x128xf32>
    %547 = math.exp %546 : vector<8x128xf32>
    %cst_147 = arith.constant 1.000000e+00 : f32
    %548 = vector.broadcast %cst_147 : f32 to vector<8x128xf32>
    %549 = arith.addf %548, %547 : vector<8x128xf32>
    %550 = arith.divf %548, %549 : vector<8x128xf32>
    %551 = vector.extract_strided_slice %538 {offsets = [0, 256], sizes = [8, 128], strides = [1, 1]} : vector<8x512xf32> to vector<8x128xf32>
    %552 = math.tanh %551 : vector<8x128xf32>
    %553 = vector.extract_strided_slice %538 {offsets = [0, 384], sizes = [8, 128], strides = [1, 1]} : vector<8x512xf32> to vector<8x128xf32>
    %554 = arith.negf %553 : vector<8x128xf32>
    %555 = math.exp %554 : vector<8x128xf32>
    %cst_148 = arith.constant 1.000000e+00 : f32
    %556 = vector.broadcast %cst_148 : f32 to vector<8x128xf32>
    %557 = arith.addf %556, %555 : vector<8x128xf32>
    %558 = arith.divf %556, %557 : vector<8x128xf32>
    %559 = arith.mulf %550, %485 : vector<8x128xf32>
    %560 = arith.mulf %544, %552 : vector<8x128xf32>
    %561 = arith.addf %559, %560 : vector<8x128xf32>
    %562 = math.tanh %561 : vector<8x128xf32>
    %563 = arith.mulf %558, %562 : vector<8x128xf32>
    %564 = arith.select %496, %563, %484 : vector<8x128xi1>, vector<8x128xf32>
    %565 = arith.select %496, %561, %485 : vector<8x128xi1>, vector<8x128xf32>
    %c8_i32_149 = arith.constant 8 : i32
    %566 = arith.muli %c6_i32, %c8_i32_149 : i32
    %567 = tpu.assume_multiple %566, 8 : i32
    %cst_150 = arith.constant 0.000000e+00 : f32
    %568 = vector.broadcast %cst_150 : f32 to vector<8x128xf32>
    %569 = arith.select %496, %564, %568 : vector<8x128xi1>, vector<8x128xf32>
    %570 = arith.index_cast %567 : i32 to index
    %c0_151 = arith.constant 0 : index
    %571 = vector.load %arg17[%570, %c0_151] : memref<64x128xf32, #tpu.memory_space<vmem>>, vector<8x128xf32>
    tpu.vector_store %arg17[%570, %c0_151], %569 {strides = array<i32>} : memref<64x128xf32, #tpu.memory_space<vmem>>, vector<8x128xf32>,
    %c7_i32 = arith.constant 7 : i32
    %572 = arith.addi %7, %c7_i32 : i32
    %573 = vector.broadcast %572 : i32 to vector<8x1xi32>
    %574 = arith.cmpi sgt, %3, %573 : vector<8x1xi32>
    %575 = vector.shape_cast %574 : vector<8x1xi1> to vector<8x1xi1>
    %576 = vector.broadcast %575 : vector<8x1xi1> to vector<8x128xi1>
    %577 = arith.index_cast %c7_i32 : i32 to index
    %c0_152 = arith.constant 0 : index
    %c0_153 = arith.constant 0 : index
    %578 = vector.load %arg3[%577, %c0_152, %c0_153] : memref<8x8x512xf32, #tpu.memory_space<vmem>>, vector<1x8x512xf32>
    %579 = vector.shape_cast %578 : vector<1x8x512xf32> to vector<8x512xf32>
    %580 = arith.truncf %529 : vector<8x128xf32> to vector<8x128xbf16>
    %c0_154 = arith.constant 0 : index
    %c0_155 = arith.constant 0 : index
    %581 = vector.load %arg4[%c0_154, %c0_155] : memref<128x512xbf16, #tpu.memory_space<vmem>>, vector<128x512xbf16>
    %cst_156 = arith.constant dense<0.000000e+00> : vector<8x512xf32>
    %582 = tpu.matmul %580, %581, %cst_156 {dimension_numbers = #tpu.dot_dimension_numbers<[1], [0], [0], [1], [0, 0, 1, 1], [], []>} : vector<8x128xbf16>, vector<128x512xbf16>, vector<8x512xf32> -> vector<8x512xf32>
    %583 = arith.addf %579, %582 : vector<8x512xf32>
    %584 = vector.extract_strided_slice %583 {offsets = [0, 0], sizes = [8, 128], strides = [1, 1]} : vector<8x512xf32> to vector<8x128xf32>
    %585 = arith.negf %584 : vector<8x128xf32>
    %586 = math.exp %585 : vector<8x128xf32>
    %cst_157 = arith.constant 1.000000e+00 : f32
    %587 = vector.broadcast %cst_157 : f32 to vector<8x128xf32>
    %588 = arith.addf %587, %586 : vector<8x128xf32>
    %589 = arith.divf %587, %588 : vector<8x128xf32>
    %590 = vector.extract_strided_slice %583 {offsets = [0, 128], sizes = [8, 128], strides = [1, 1]} : vector<8x512xf32> to vector<8x128xf32>
    %591 = arith.negf %590 : vector<8x128xf32>
    %592 = math.exp %591 : vector<8x128xf32>
    %cst_158 = arith.constant 1.000000e+00 : f32
    %593 = vector.broadcast %cst_158 : f32 to vector<8x128xf32>
    %594 = arith.addf %593, %592 : vector<8x128xf32>
    %595 = arith.divf %593, %594 : vector<8x128xf32>
    %596 = vector.extract_strided_slice %583 {offsets = [0, 256], sizes = [8, 128], strides = [1, 1]} : vector<8x512xf32> to vector<8x128xf32>
    %597 = math.tanh %596 : vector<8x128xf32>
    %598 = vector.extract_strided_slice %583 {offsets = [0, 384], sizes = [8, 128], strides = [1, 1]} : vector<8x512xf32> to vector<8x128xf32>
    %599 = arith.negf %598 : vector<8x128xf32>
    %600 = math.exp %599 : vector<8x128xf32>
    %cst_159 = arith.constant 1.000000e+00 : f32
    %601 = vector.broadcast %cst_159 : f32 to vector<8x128xf32>
    %602 = arith.addf %601, %600 : vector<8x128xf32>
    %603 = arith.divf %601, %602 : vector<8x128xf32>
    %604 = arith.mulf %595, %530 : vector<8x128xf32>
    %605 = arith.mulf %589, %597 : vector<8x128xf32>
    %606 = arith.addf %604, %605 : vector<8x128xf32>
    %607 = math.tanh %606 : vector<8x128xf32>
    %608 = arith.mulf %603, %607 : vector<8x128xf32>
    %609 = arith.select %576, %608, %529 : vector<8x128xi1>, vector<8x128xf32>
    %610 = arith.select %576, %606, %530 : vector<8x128xi1>, vector<8x128xf32>
    %611 = arith.truncf %609 : vector<8x128xf32> to vector<8x128xbf16>
    %c0_160 = arith.constant 0 : index
    %c0_161 = arith.constant 0 : index
    %612 = vector.load %arg5[%c0_160, %c0_161] : memref<128x512xbf16, #tpu.memory_space<vmem>>, vector<128x512xbf16>
    %cst_162 = arith.constant dense<0.000000e+00> : vector<8x512xf32>
    %613 = tpu.matmul %611, %612, %cst_162 {dimension_numbers = #tpu.dot_dimension_numbers<[1], [0], [0], [1], [0, 0, 1, 1], [], []>} : vector<8x128xbf16>, vector<128x512xbf16>, vector<8x512xf32> -> vector<8x512xf32>
    %614 = arith.truncf %564 : vector<8x128xf32> to vector<8x128xbf16>
    %c0_163 = arith.constant 0 : index
    %c0_164 = arith.constant 0 : index
    %615 = vector.load %arg6[%c0_163, %c0_164] : memref<128x512xbf16, #tpu.memory_space<vmem>>, vector<128x512xbf16>
    %cst_165 = arith.constant dense<0.000000e+00> : vector<8x512xf32>
    %616 = tpu.matmul %614, %615, %cst_165 {dimension_numbers = #tpu.dot_dimension_numbers<[1], [0], [0], [1], [0, 0, 1, 1], [], []>} : vector<8x128xbf16>, vector<128x512xbf16>, vector<8x512xf32> -> vector<8x512xf32>
    %617 = arith.addf %613, %616 : vector<8x512xf32>
    %618 = arith.addf %617, %6 : vector<8x512xf32>
    %619 = vector.extract_strided_slice %618 {offsets = [0, 0], sizes = [8, 128], strides = [1, 1]} : vector<8x512xf32> to vector<8x128xf32>
    %620 = arith.negf %619 : vector<8x128xf32>
    %621 = math.exp %620 : vector<8x128xf32>
    %cst_166 = arith.constant 1.000000e+00 : f32
    %622 = vector.broadcast %cst_166 : f32 to vector<8x128xf32>
    %623 = arith.addf %622, %621 : vector<8x128xf32>
    %624 = arith.divf %622, %623 : vector<8x128xf32>
    %625 = vector.extract_strided_slice %618 {offsets = [0, 128], sizes = [8, 128], strides = [1, 1]} : vector<8x512xf32> to vector<8x128xf32>
    %626 = arith.negf %625 : vector<8x128xf32>
    %627 = math.exp %626 : vector<8x128xf32>
    %cst_167 = arith.constant 1.000000e+00 : f32
    %628 = vector.broadcast %cst_167 : f32 to vector<8x128xf32>
    %629 = arith.addf %628, %627 : vector<8x128xf32>
    %630 = arith.divf %628, %629 : vector<8x128xf32>
    %631 = vector.extract_strided_slice %618 {offsets = [0, 256], sizes = [8, 128], strides = [1, 1]} : vector<8x512xf32> to vector<8x128xf32>
    %632 = math.tanh %631 : vector<8x128xf32>
    %633 = vector.extract_strided_slice %618 {offsets = [0, 384], sizes = [8, 128], strides = [1, 1]} : vector<8x512xf32> to vector<8x128xf32>
    %634 = arith.negf %633 : vector<8x128xf32>
    %635 = math.exp %634 : vector<8x128xf32>
    %cst_168 = arith.constant 1.000000e+00 : f32
    %636 = vector.broadcast %cst_168 : f32 to vector<8x128xf32>
    %637 = arith.addf %636, %635 : vector<8x128xf32>
    %638 = arith.divf %636, %637 : vector<8x128xf32>
    %639 = arith.mulf %630, %565 : vector<8x128xf32>
    %640 = arith.mulf %624, %632 : vector<8x128xf32>
    %641 = arith.addf %639, %640 : vector<8x128xf32>
    %642 = math.tanh %641 : vector<8x128xf32>
    %643 = arith.mulf %638, %642 : vector<8x128xf32>
    %644 = arith.select %576, %643, %564 : vector<8x128xi1>, vector<8x128xf32>
    %645 = arith.select %576, %641, %565 : vector<8x128xi1>, vector<8x128xf32>
    %c8_i32_169 = arith.constant 8 : i32
    %646 = arith.muli %c7_i32, %c8_i32_169 : i32
    %647 = tpu.assume_multiple %646, 8 : i32
    %cst_170 = arith.constant 0.000000e+00 : f32
    %648 = vector.broadcast %cst_170 : f32 to vector<8x128xf32>
    %649 = arith.select %576, %644, %648 : vector<8x128xi1>, vector<8x128xf32>
    %650 = arith.index_cast %647 : i32 to index
    %c0_171 = arith.constant 0 : index
    %651 = vector.load %arg17[%650, %c0_171] : memref<64x128xf32, #tpu.memory_space<vmem>>, vector<8x128xf32>
    tpu.vector_store %arg17[%650, %c0_171], %649 {strides = array<i32>} : memref<64x128xf32, #tpu.memory_space<vmem>>, vector<8x128xf32>,
    %c8_i32_172 = arith.constant 8 : i32
    %c0_173 = arith.constant 0 : index
    %c0_174 = arith.constant 0 : index
    %652 = vector.load %arg13[%c0_173, %c0_174] : memref<8x128xf32, #tpu.memory_space<vmem>>, vector<8x128xf32>
    tpu.vector_store %arg13[%c0_173, %c0_174], %609 {strides = array<i32>} : memref<8x128xf32, #tpu.memory_space<vmem>>, vector<8x128xf32>,
    %c0_175 = arith.constant 0 : index
    %c0_176 = arith.constant 0 : index
    %653 = vector.load %arg14[%c0_175, %c0_176] : memref<8x128xf32, #tpu.memory_space<vmem>>, vector<8x128xf32>
    tpu.vector_store %arg14[%c0_175, %c0_176], %610 {strides = array<i32>} : memref<8x128xf32, #tpu.memory_space<vmem>>, vector<8x128xf32>,
    %c0_177 = arith.constant 0 : index
    %c0_178 = arith.constant 0 : index
    %654 = vector.load %arg15[%c0_177, %c0_178] : memref<8x128xf32, #tpu.memory_space<vmem>>, vector<8x128xf32>
    tpu.vector_store %arg15[%c0_177, %c0_178], %644 {strides = array<i32>} : memref<8x128xf32, #tpu.memory_space<vmem>>, vector<8x128xf32>,
    %c0_179 = arith.constant 0 : index
    %c0_180 = arith.constant 0 : index
    %655 = vector.load %arg16[%c0_179, %c0_180] : memref<8x128xf32, #tpu.memory_space<vmem>>, vector<8x128xf32>
    tpu.vector_store %arg16[%c0_179, %c0_180], %645 {strides = array<i32>} : memref<8x128xf32, #tpu.memory_space<vmem>>, vector<8x128xf32>,
    %c0_181 = arith.constant 0 : index
    %c0_182 = arith.constant 0 : index
    %656 = vector.load %arg17[%c0_181, %c0_182] : memref<64x128xf32, #tpu.memory_space<vmem>>, vector<64x128xf32>
    %c0_183 = arith.constant 0 : index
    %c0_184 = arith.constant 0 : index
    %657 = vector.load %arg8[%c0_183, %c0_184] : memref<128x128xf32, #tpu.memory_space<vmem>>, vector<128x128xf32>
    %cst_185 = arith.constant dense<0.000000e+00> : vector<64x128xf32>
    %658 = tpu.matmul %656, %657, %cst_185 {dimension_numbers = #tpu.dot_dimension_numbers<[1], [0], [0], [1], [0, 0, 1, 1], [], []>} : vector<64x128xf32>, vector<128x128xf32>, vector<64x128xf32> -> vector<64x128xf32>
    %c0_186 = arith.constant 0 : index
    %c0_187 = arith.constant 0 : index
    %659 = vector.load %arg9[%c0_186, %c0_187] : memref<1x128xf32, #tpu.memory_space<vmem>>, vector<1x128xf32>
    %660 = vector.broadcast %659 : vector<1x128xf32> to vector<64x128xf32>
    %661 = arith.addf %658, %660 : vector<64x128xf32>
    %662 = vector.shape_cast %661 : vector<64x128xf32> to vector<8x8x128xf32>
    %c0_188 = arith.constant 0 : index
    %c0_189 = arith.constant 0 : index
    %c0_190 = arith.constant 0 : index
    %663 = vector.load %arg10[%c0_188, %c0_189, %c0_190] : memref<8x8x128xf32, #tpu.memory_space<vmem>>, vector<8x8x128xf32>
    tpu.vector_store %arg10[%c0_188, %c0_189, %c0_190], %662 {strides = array<i32>} : memref<8x8x128xf32, #tpu.memory_space<vmem>>, vector<8x8x128xf32>,
    %c0_191 = arith.constant 0 : index
    %c0_192 = arith.constant 0 : index
    %c0_193 = arith.constant 0 : index
    %664 = vector.load %arg11[%c0_191, %c0_192, %c0_193] : memref<2x8x128xf32, #tpu.memory_space<vmem>>, vector<1x8x128xf32>
    %665 = vector.shape_cast %664 : vector<1x8x128xf32> to vector<8x128xf32>
    %666 = vector.shape_cast %609 : vector<8x128xf32> to vector<1x8x128xf32>
    tpu.vector_store %arg11[%c0_191, %c0_192, %c0_193], %666 {strides = array<i32>} : memref<2x8x128xf32, #tpu.memory_space<vmem>>, vector<1x8x128xf32>,
    %c1 = arith.constant 1 : index
    %c0_194 = arith.constant 0 : index
    %c0_195 = arith.constant 0 : index
    %667 = vector.load %arg11[%c1, %c0_194, %c0_195] : memref<2x8x128xf32, #tpu.memory_space<vmem>>, vector<1x8x128xf32>
    %668 = vector.shape_cast %667 : vector<1x8x128xf32> to vector<8x128xf32>
    %669 = vector.shape_cast %644 : vector<8x128xf32> to vector<1x8x128xf32>
    tpu.vector_store %arg11[%c1, %c0_194, %c0_195], %669 {strides = array<i32>} : memref<2x8x128xf32, #tpu.memory_space<vmem>>, vector<1x8x128xf32>,
    %c0_196 = arith.constant 0 : index
    %c0_197 = arith.constant 0 : index
    %c0_198 = arith.constant 0 : index
    %670 = vector.load %arg12[%c0_196, %c0_197, %c0_198] : memref<2x8x128xf32, #tpu.memory_space<vmem>>, vector<1x8x128xf32>
    %671 = vector.shape_cast %670 : vector<1x8x128xf32> to vector<8x128xf32>
    %672 = vector.shape_cast %610 : vector<8x128xf32> to vector<1x8x128xf32>
    tpu.vector_store %arg12[%c0_196, %c0_197, %c0_198], %672 {strides = array<i32>} : memref<2x8x128xf32, #tpu.memory_space<vmem>>, vector<1x8x128xf32>,
    %c1_199 = arith.constant 1 : index
    %c0_200 = arith.constant 0 : index
    %c0_201 = arith.constant 0 : index
    %673 = vector.load %arg12[%c1_199, %c0_200, %c0_201] : memref<2x8x128xf32, #tpu.memory_space<vmem>>, vector<1x8x128xf32>
    %674 = vector.shape_cast %673 : vector<1x8x128xf32> to vector<8x128xf32>
    %675 = vector.shape_cast %645 : vector<8x128xf32> to vector<1x8x128xf32>
    tpu.vector_store %arg12[%c1_199, %c0_200, %c0_201], %675 {strides = array<i32>} : memref<2x8x128xf32, #tpu.memory_space<vmem>>, vector<1x8x128xf32>,
    return
  }
  func.func @transform_0(%arg0: i32, %arg1: i32) -> (i32, i32) {
    %c0_i32 = arith.constant 0 : i32
    %c0_i32_0 = arith.constant 0 : i32
    return %arg0, %c0_i32 : i32, i32
  }
  func.func @transform_1(%arg0: i32, %arg1: i32) -> (i32, i32, i32) {
    %c0_i32 = arith.constant 0 : i32
    %c0_i32_0 = arith.constant 0 : i32
    return %arg1, %arg0, %c0_i32 : i32, i32, i32
  }
  func.func @transform_2(%arg0: i32, %arg1: i32) -> (i32, i32) {
    %c0_i32 = arith.constant 0 : i32
    %c0_i32_0 = arith.constant 0 : i32
    %c0_i32_1 = arith.constant 0 : i32
    return %c0_i32, %c0_i32_0 : i32, i32
  }
  func.func @transform_3(%arg0: i32, %arg1: i32) -> (i32, i32) {
    %c0_i32 = arith.constant 0 : i32
    %c0_i32_0 = arith.constant 0 : i32
    %c0_i32_1 = arith.constant 0 : i32
    return %c0_i32, %c0_i32_0 : i32, i32
  }
  func.func @transform_4(%arg0: i32, %arg1: i32) -> (i32, i32) {
    %c0_i32 = arith.constant 0 : i32
    %c0_i32_0 = arith.constant 0 : i32
    %c0_i32_1 = arith.constant 0 : i32
    return %c0_i32, %c0_i32_0 : i32, i32
  }
  func.func @transform_5(%arg0: i32, %arg1: i32) -> (i32, i32) {
    %c0_i32 = arith.constant 0 : i32
    %c0_i32_0 = arith.constant 0 : i32
    %c0_i32_1 = arith.constant 0 : i32
    return %c0_i32, %c0_i32_0 : i32, i32
  }
  func.func @transform_6(%arg0: i32, %arg1: i32) -> (i32, i32) {
    %c0_i32 = arith.constant 0 : i32
    %c0_i32_0 = arith.constant 0 : i32
    %c0_i32_1 = arith.constant 0 : i32
    return %c0_i32, %c0_i32_0 : i32, i32
  }
  func.func @transform_7(%arg0: i32, %arg1: i32) -> (i32, i32) {
    %c0_i32 = arith.constant 0 : i32
    %c0_i32_0 = arith.constant 0 : i32
    %c0_i32_1 = arith.constant 0 : i32
    return %c0_i32, %c0_i32_0 : i32, i32
  }
  func.func @transform_8(%arg0: i32, %arg1: i32) -> (i32, i32, i32) {
    %c0_i32 = arith.constant 0 : i32
    %c0_i32_0 = arith.constant 0 : i32
    return %arg1, %arg0, %c0_i32 : i32, i32, i32
  }
  func.func @transform_9(%arg0: i32, %arg1: i32) -> (i32, i32, i32) {
    %c0_i32 = arith.constant 0 : i32
    %c0_i32_0 = arith.constant 0 : i32
    %c0_i32_1 = arith.constant 0 : i32
    return %c0_i32, %arg0, %c0_i32_0 : i32, i32, i32
  }
  func.func @transform_10(%arg0: i32, %arg1: i32) -> (i32, i32, i32) {
    %c0_i32 = arith.constant 0 : i32
    %c0_i32_0 = arith.constant 0 : i32
    %c0_i32_1 = arith.constant 0 : i32
    return %c0_i32, %arg0, %c0_i32_0 : i32, i32, i32
  }
}

</mosaic_0001>

<llo_original>
// kernel: tpu_custom_call.1
$region0: #{tpu_custom_call.1}
  #allocation0 [shape = 'u32[]', space=smem, size = 0x4, offset = 0x4, fixed_abs, tag = 'smem constant byte address 0x4 - core index']
  #allocation1 [shape = 'u32[144,128]{1,0:T(1,128)}', space=vmem, size = 0x12000, scoped, tag = 'internal scratch']
  #allocation2 [shape = 'f32[8,128]{1,0:T(8,128)}', space=vmem, size = 0x1000, scoped, tag = 'scratch operand']
  #allocation3 [shape = 'f32[8,128]{1,0:T(8,128)}', space=vmem, size = 0x1000, scoped, tag = 'scratch operand']
  #allocation4 [shape = 'f32[8,128]{1,0:T(8,128)}', space=vmem, size = 0x1000, scoped, tag = 'scratch operand']
  #allocation5 [shape = 'f32[8,128]{1,0:T(8,128)}', space=vmem, size = 0x1000, scoped, tag = 'scratch operand']
  #allocation6 [shape = 'f32[64,128]{1,0:T(8,128)}', space=vmem, size = 0x8000, scoped, tag = 'scratch operand']
  %s0 = inlined_call_operand.vmem [shape: s32[8,1], index: 0, kind: input, shape index: {}]
  %s1 = inlined_call_operand.hbm [shape: f32[8,8,512], index: 1, kind: input, shape index: {}]
  %s2 = inlined_call_operand.hbm [shape: bf16[128,512], index: 2, kind: input, shape index: {}]
  %s3 = inlined_call_operand.hbm [shape: bf16[128,512], index: 3, kind: input, shape index: {}]
  %s4 = inlined_call_operand.hbm [shape: bf16[128,512], index: 4, kind: input, shape index: {}]
  %s5 = inlined_call_operand.vmem [shape: f32[1,512], index: 5, kind: input, shape index: {}]
  %s6 = inlined_call_operand.hbm [shape: f32[128,128], index: 6, kind: input, shape index: {}]
  %s7 = inlined_call_operand.vmem [shape: f32[1,128], index: 7, kind: input, shape index: {}]
  %s8 = inlined_call_operand.hbm [shape: f32[8,8,128], index: 8, kind: output, shape index: {0}]
  %s9 = inlined_call_operand.hbm [shape: f32[2,8,128], index: 9, kind: output, shape index: {1}]
  %s10 = inlined_call_operand.hbm [shape: f32[2,8,128], index: 10, kind: output, shape index: {2}]
  %11 = xla_tuple %s8, %s9, %s10
  %s12 = sld [smem:[#allocation0]]
  $region82: #{tpu_custom_call.1} parent=0
    _
  %s14 = ssub.s32 1, %s12
  %s15 = scalar_select 0, %s14, %s12
  $region1: #{tpu_custom_call.1} parent=0
    #allocation7 [shape = 'u8[131072]{0}', space=vmem, size = 0x20000, scoped, tag = 'input window, operand 1, single buffered']
    #allocation8 [shape = 's32[1]{0}', space=sflag, size = 0x4, scoped, tag = 'scoped memory for tpu_custom_call.1']
    #allocation9 [shape = 's32[1]{0}', space=sflag, size = 0x4, scoped, tag = 'scoped memory for tpu_custom_call.1']
    #allocation10 [shape = 'u8[131072]{0}', space=vmem, size = 0x20000, scoped, tag = 'input window, operand 2, single buffered']
    #allocation11 [shape = 's32[1]{0}', space=sflag, size = 0x4, scoped, tag = 'scoped memory for tpu_custom_call.1']
    #allocation12 [shape = 'u8[131072]{0}', space=vmem, size = 0x20000, scoped, tag = 'input window, operand 3, single buffered']
    #allocation13 [shape = 'u8[131072]{0}', space=vmem, size = 0x20000, scoped, tag = 'input window, operand 4, single buffered']
    #allocation14 [shape = 's32[1]{0}', space=sflag, size = 0x4, scoped, tag = 'scoped memory for tpu_custom_call.1']
    #allocation15 [shape = 'u8[65536]{0}', space=vmem, size = 0x10000, scoped, tag = 'input window, operand 6, single buffered']
    #allocation16 [shape = 'u8[32768]{0}', space=vmem, size = 0x8000, scoped, tag = 'output window, operand 0, single buffered']
    #allocation17 [shape = 'u8[8192]{0}', space=vmem, size = 0x2000, scoped, tag = 'output window, operand 1, single buffered']
    #allocation18 [shape = 's32[1]{0}', space=sflag, size = 0x4, scoped, tag = 'scoped memory for tpu_custom_call.1']
    #allocation19 [shape = 'u8[8192]{0}', space=vmem, size = 0x2000, scoped, tag = 'output window, operand 2, single buffered']
    %16 = vsyncpa [#allocation8], 0
    %17 = vsyncpa [#allocation11], 0
    %18 = vsyncpa [#allocation14], 0
    %19 = vsyncpa [#allocation9], 0
    %20 = vsyncpa [#allocation18], 0
    // Predicated region
    $region2: #{tpu_custom_call.1} parent=1 // pred_check
      _
    $region3: #{tpu_custom_call.1} parent=1 // pred_check_branch
      %22 = sbr.rel (0) target = $region5
    $region4: #{tpu_custom_call.1} parent=1 // pred_region
      _
    $region5: #{tpu_custom_call.1} parent=1 // pred_fallthru
      _
    // Predicated region
    $region6: #{tpu_custom_call.1} parent=1 // pred_check
      _
    $region7: #{tpu_custom_call.1} parent=1 // pred_check_branch
      %24 = sbr.rel (0) target = $region9
    $region8: #{tpu_custom_call.1} parent=1 // pred_region
      %s26 = ssub.s32 4096, 4096
      %27 = vsyncadd [#allocation8], %s26
      %s28 = sshll.u32 [#allocation7], 4
      %s29 = int_to_ptr.vmem [resolvable:$true] %s28
      %34 = dma.hbm_to_vmem [thread:$0]  %s1, 4096, %s29, [#allocation8], 512, 512, 32
    $region9: #{tpu_custom_call.1} parent=1 // pred_fallthru
      _
    // Predicated region
    $region10: #{tpu_custom_call.1} parent=1 // pred_check
      _
    $region11: #{tpu_custom_call.1} parent=1 // pred_check_branch
      %36 = sbr.rel (0) target = $region13
    $region12: #{tpu_custom_call.1} parent=1 // pred_region
      %s38 = ssub.s32 4096, 4096
      %39 = vsyncadd [#allocation11], %s38
      %s40 = sshll.u32 [#allocation10], 4
      %s41 = int_to_ptr.vmem [resolvable:$true] %s40
      %46 = dma.hbm_to_vmem [thread:$0]  %s2, 4096, %s41, [#allocation11], 256, 256, 16
    $region13: #{tpu_custom_call.1} parent=1 // pred_fallthru
      _
    // Predicated region
    $region14: #{tpu_custom_call.1} parent=1 // pred_check
      _
    $region15: #{tpu_custom_call.1} parent=1 // pred_check_branch
      %48 = sbr.rel (0) target = $region17
    $region16: #{tpu_custom_call.1} parent=1 // pred_region
      %s50 = ssub.s32 4096, 4096
      %51 = vsyncadd [#allocation11], %s50
      %s52 = sshll.u32 [#allocation12], 4
      %s53 = int_to_ptr.vmem [resolvable:$true] %s52
      %58 = dma.hbm_to_vmem [thread:$0]  %s3, 4096, %s53, [#allocation11], 256, 256, 16
    $region17: #{tpu_custom_call.1} parent=1 // pred_fallthru
      _
    // Predicated region
    $region18: #{tpu_custom_call.1} parent=1 // pred_check
      _
    $region19: #{tpu_custom_call.1} parent=1 // pred_check_branch
      %60 = sbr.rel (0) target = $region21
    $region20: #{tpu_custom_call.1} parent=1 // pred_region
      %s62 = ssub.s32 4096, 4096
      %63 = vsyncadd [#allocation14], %s62
      %s64 = sshll.u32 [#allocation13], 4
      %s65 = int_to_ptr.vmem [resolvable:$true] %s64
      %70 = dma.hbm_to_vmem [thread:$0]  %s4, 4096, %s65, [#allocation14], 256, 256, 16
    $region21: #{tpu_custom_call.1} parent=1 // pred_fallthru
      _
    // Predicated region
    $region22: #{tpu_custom_call.1} parent=1 // pred_check
      _
    $region23: #{tpu_custom_call.1} parent=1 // pred_check_branch
      %72 = sbr.rel (0) target = $region25
    $region24: #{tpu_custom_call.1} parent=1 // pred_region
      _
    $region25: #{tpu_custom_call.1} parent=1 // pred_fallthru
      _
    // Predicated region
    $region26: #{tpu_custom_call.1} parent=1 // pred_check
      _
    $region27: #{tpu_custom_call.1} parent=1 // pred_check_branch
      %74 = sbr.rel (0) target = $region29
    $region28: #{tpu_custom_call.1} parent=1 // pred_region
      %s76 = ssub.s32 2048, 2048
      %77 = vsyncadd [#allocation14], %s76
      %s78 = sshll.u32 [#allocation15], 4
      %s79 = int_to_ptr.vmem [resolvable:$true] %s78
      %84 = dma.hbm_to_vmem [thread:$0]  %s6, 2048, %s79, [#allocation14], 128, 128, 8
    $region29: #{tpu_custom_call.1} parent=1 // pred_fallthru
      _
    // Predicated region
    $region30: #{tpu_custom_call.1} parent=1 // pred_check
      _
    $region31: #{tpu_custom_call.1} parent=1 // pred_check_branch
      %86 = sbr.rel (0) target = $region33
    $region32: #{tpu_custom_call.1} parent=1 // pred_region
      _
    $region33: #{tpu_custom_call.1} parent=1 // pred_fallthru
      _
    // Predicated region
    $region34: #{tpu_custom_call.1} parent=1 // pred_check
      _
    $region35: #{tpu_custom_call.1} parent=1 // pred_check_branch
      %88 = sbr.rel (0) target = $region37
    $region36: #{tpu_custom_call.1} parent=1 // pred_region
      %89 = dma.done [#allocation8], 4096
    $region37: #{tpu_custom_call.1} parent=1 // pred_fallthru
      _
    // Predicated region
    $region38: #{tpu_custom_call.1} parent=1 // pred_check
      _
    $region39: #{tpu_custom_call.1} parent=1 // pred_check_branch
      %91 = sbr.rel (0) target = $region41
    $region40: #{tpu_custom_call.1} parent=1 // pred_region
      %92 = dma.done [#allocation11], 4096
    $region41: #{tpu_custom_call.1} parent=1 // pred_fallthru
      _
    // Predicated region
    $region42: #{tpu_custom_call.1} parent=1 // pred_check
      _
    $region43: #{tpu_custom_call.1} parent=1 // pred_check_branch
      %94 = sbr.rel (0) target = $region45
    $region44: #{tpu_custom_call.1} parent=1 // pred_region
      %95 = dma.done [#allocation11], 4096
    $region45: #{tpu_custom_call.1} parent=1 // pred_fallthru
      _
    // Predicated region
    $region46: #{tpu_custom_call.1} parent=1 // pred_check
      _
    $region47: #{tpu_custom_call.1} parent=1 // pred_check_branch
      %97 = sbr.rel (0) target = $region49
    $region48: #{tpu_custom_call.1} parent=1 // pred_region
      %98 = dma.done [#allocation14], 4096
    $region49: #{tpu_custom_call.1} parent=1 // pred_fallthru
      _
    // Predicated region
    $region50: #{tpu_custom_call.1} parent=1 // pred_check
      _
    $region51: #{tpu_custom_call.1} parent=1 // pred_check_branch
      %100 = sbr.rel (0) target = $region53
    $region52: #{tpu_custom_call.1} parent=1 // pred_region
      %101 = dma.done [#allocation14], 2048
    $region53: #{tpu_custom_call.1} parent=1 // pred_fallthru
      _
    %p103 = scmp.eq.s32.totalorder 0, 0
    // Predicated region
    $region54: #{tpu_custom_call.1} parent=1 // pred_check
      %p104 = pneg %p103
    $region55: #{tpu_custom_call.1} parent=1 // pred_check_branch
      %106 = sbr.rel (%p104) target = $region57
    $region56: #{tpu_custom_call.1} parent=1 // pred_region
      %107 = vst [vmem:[#allocation2] sm:$0xff] 0.0
      %108 = vst [vmem:[#allocation3] sm:$0xff] 0.0
      %109 = vst [vmem:[#allocation4] sm:$0xff] 0.0
      %110 = vst [vmem:[#allocation5] sm:$0xff] 0.0
    $region57: #{tpu_custom_call.1} parent=1 // pred_fallthru
      _
    %v111 = vld [vmem:[%s0] sm:$0xff]
    %v112 = vld [vmem:[%s5] sm:$0xf]
    %v114 = vlaneseq
    %v115 = vshrl.u32 %v114, 7
    %v116 = vsub.s32 0, %v115
    %v117 = vrot.slane %v112, %v116
    %v118 = vlaneseq
    %v119 = vshrl.u32 %v118, 7
    %v120 = vsub.s32 1, %v119
    %v121 = vrot.slane %v112, %v120
    %v122 = vlaneseq
    %v123 = vshrl.u32 %v122, 7
    %v124 = vsub.s32 2, %v123
    %v125 = vrot.slane %v112, %v124
    %v126 = vlaneseq
    %v127 = vshrl.u32 %v126, 7
    %v128 = vsub.s32 3, %v127
    %v129 = vrot.slane %v112, %v128
    %s134 = smul.u32 0, 8
    %v135 = vld [vmem:[#allocation2] sm:$0xff]
    %v136 = vld [vmem:[#allocation3] sm:$0xff]
    %v137 = vld [vmem:[#allocation4] sm:$0xff]
    %v138 = vld [vmem:[#allocation5] sm:$0xff]
    %v139 = vstv %s134
    %vm140 = vcmp.gt.s32.totalorder %v111, %v139
    %v141 = vsel %vm140, 1, 0
    %142 = vset.pattern.permute.xlu0 0
    %143 = vperm.xlu0 %142, %v141
    %v144 = vpop.permute.xlu0 %143
    %vm145 = vcmp.eq.s32.totalorder %v144, 1
    %v146 = vld [vmem:[#allocation7] sm:$0xff]
    %v147 = vld [vmem:[#allocation7 + $0x8] sm:$0xff]
    %v148 = vld [vmem:[#allocation7 + $0x10] sm:$0xff]
    %v149 = vld [vmem:[#allocation7 + $0x18] sm:$0xff]
    %v150 = vpack.c.bf16 %v135, %v135
    %v151 = vld [vmem:[#allocation10] sm:$0xff]
    %v152 = vld [vmem:[#allocation10 + $0x8] sm:$0xff]
    %v153 = vld [vmem:[#allocation10 + $0x10] sm:$0xff]
    %v154 = vld [vmem:[#allocation10 + $0x18] sm:$0xff]
    %v155 = vld [vmem:[#allocation10 + $0x20] sm:$0xff]
    %v156 = vld [vmem:[#allocation10 + $0x28] sm:$0xff]
    %v157 = vld [vmem:[#allocation10 + $0x30] sm:$0xff]
    %v158 = vld [vmem:[#allocation10 + $0x38] sm:$0xff]
    %v159 = vld [vmem:[#allocation10 + $0x40] sm:$0xff]
    %v160 = vld [vmem:[#allocation10 + $0x48] sm:$0xff]
    %v161 = vld [vmem:[#allocation10 + $0x50] sm:$0xff]
    %v162 = vld [vmem:[#allocation10 + $0x58] sm:$0xff]
    %v163 = vld [vmem:[#allocation10 + $0x60] sm:$0xff]
    %v164 = vld [vmem:[#allocation10 + $0x68] sm:$0xff]
    %v165 = vld [vmem:[#allocation10 + $0x70] sm:$0xff]
    %v166 = vld [vmem:[#allocation10 + $0x78] sm:$0xff]
    %v167 = vld [vmem:[#allocation10 + $0x80] sm:$0xff]
    %v168 = vld [vmem:[#allocation10 + $0x88] sm:$0xff]
    %v169 = vld [vmem:[#allocation10 + $0x90] sm:$0xff]
    %v170 = vld [vmem:[#allocation10 + $0x98] sm:$0xff]
    %v171 = vld [vmem:[#allocation10 + $0xa0] sm:$0xff]
    %v172 = vld [vmem:[#allocation10 + $0xa8] sm:$0xff]
    %v173 = vld [vmem:[#allocation10 + $0xb0] sm:$0xff]
    %v174 = vld [vmem:[#allocation10 + $0xb8] sm:$0xff]
    %v175 = vld [vmem:[#allocation10 + $0xc0] sm:$0xff]
    %v176 = vld [vmem:[#allocation10 + $0xc8] sm:$0xff]
    %v177 = vld [vmem:[#allocation10 + $0xd0] sm:$0xff]
    %v178 = vld [vmem:[#allocation10 + $0xd8] sm:$0xff]
    %v179 = vld [vmem:[#allocation10 + $0xe0] sm:$0xff]
    %v180 = vld [vmem:[#allocation10 + $0xe8] sm:$0xff]
    %v181 = vld [vmem:[#allocation10 + $0xf0] sm:$0xff]
    %v182 = vld [vmem:[#allocation10 + $0xf8] sm:$0xff]
    %v215 = vunpack.c.l.b16 %v151
    %v216 = vunpack.c.h.b16 %v151
    %v217 = vunpack.c.l.b16 %v152
    %v218 = vunpack.c.h.b16 %v152
    %v219 = vunpack.c.l.b16 %v153
    %v220 = vunpack.c.h.b16 %v153
    %v221 = vunpack.c.l.b16 %v154
    %v222 = vunpack.c.h.b16 %v154
    %v223 = vunpack.c.l.b16 %v155
    %v224 = vunpack.c.h.b16 %v155
    %v225 = vunpack.c.l.b16 %v156
    %v226 = vunpack.c.h.b16 %v156
    %v227 = vunpack.c.l.b16 %v157
    %v228 = vunpack.c.h.b16 %v157
    %v229 = vunpack.c.l.b16 %v158
    %v230 = vunpack.c.h.b16 %v158
    %v231 = vunpack.c.l.b16 %v159
    %v232 = vunpack.c.h.b16 %v159
    %v233 = vunpack.c.l.b16 %v160
    %v234 = vunpack.c.h.b16 %v160
    %v235 = vunpack.c.l.b16 %v161
    %v236 = vunpack.c.h.b16 %v161
    %v237 = vunpack.c.l.b16 %v162
    %v238 = vunpack.c.h.b16 %v162
    %v239 = vunpack.c.l.b16 %v163
    %v240 = vunpack.c.h.b16 %v163
    %v241 = vunpack.c.l.b16 %v164
    %v242 = vunpack.c.h.b16 %v164
    %v243 = vunpack.c.l.b16 %v165
    %v244 = vunpack.c.h.b16 %v165
    %v245 = vunpack.c.l.b16 %v166
    %v246 = vunpack.c.h.b16 %v166
    %v247 = vunpack.c.l.b16 %v167
    %v248 = vunpack.c.h.b16 %v167
    %v249 = vunpack.c.l.b16 %v168
    %v250 = vunpack.c.h.b16 %v168
    %v251 = vunpack.c.l.b16 %v169
    %v252 = vunpack.c.h.b16 %v169
    %v253 = vunpack.c.l.b16 %v170
    %v254 = vunpack.c.h.b16 %v170
    %v255 = vunpack.c.l.b16 %v171
    %v256 = vunpack.c.h.b16 %v171
    %v257 = vunpack.c.l.b16 %v172
    %v258 = vunpack.c.h.b16 %v172
    %v259 = vunpack.c.l.b16 %v173
    %v260 = vunpack.c.h.b16 %v173
    %v261 = vunpack.c.l.b16 %v174
    %v262 = vunpack.c.h.b16 %v174
    %v263 = vunpack.c.l.b16 %v175
    %v264 = vunpack.c.h.b16 %v175
    %v265 = vunpack.c.l.b16 %v176
    %v266 = vunpack.c.h.b16 %v176
    %v267 = vunpack.c.l.b16 %v177
    %v268 = vunpack.c.h.b16 %v177
    %v269 = vunpack.c.l.b16 %v178
    %v270 = vunpack.c.h.b16 %v178
    %v271 = vunpack.c.l.b16 %v179
    %v272 = vunpack.c.h.b16 %v179
    %v273 = vunpack.c.l.b16 %v180
    %v274 = vunpack.c.h.b16 %v180
    %v275 = vunpack.c.l.b16 %v181
    %v276 = vunpack.c.h.b16 %v181
    %v277 = vunpack.c.l.b16 %v182
    %v278 = vunpack.c.h.b16 %v182
    %v279 = vpack.c.b16 %v219, %v215
    %v280 = vpack.c.b16 %v220, %v216
    %v281 = vpack.c.b16 %v221, %v217
    %v282 = vpack.c.b16 %v222, %v218
    %v283 = vpack.c.b16 %v227, %v223
    %v284 = vpack.c.b16 %v228, %v224
    %v285 = vpack.c.b16 %v229, %v225
    %v286 = vpack.c.b16 %v230, %v226
    %v287 = vpack.c.b16 %v235, %v231
    %v288 = vpack.c.b16 %v236, %v232
    %v289 = vpack.c.b16 %v237, %v233
    %v290 = vpack.c.b16 %v238, %v234
    %v291 = vpack.c.b16 %v243, %v239
    %v292 = vpack.c.b16 %v244, %v240
    %v293 = vpack.c.b16 %v245, %v241
    %v294 = vpack.c.b16 %v246, %v242
    %v295 = vpack.c.b16 %v251, %v247
    %v296 = vpack.c.b16 %v252, %v248
    %v297 = vpack.c.b16 %v253, %v249
    %v298 = vpack.c.b16 %v254, %v250
    %v299 = vpack.c.b16 %v259, %v255
    %v300 = vpack.c.b16 %v260, %v256
    %v301 = vpack.c.b16 %v261, %v257
    %v302 = vpack.c.b16 %v262, %v258
    %v303 = vpack.c.b16 %v267, %v263
    %v304 = vpack.c.b16 %v268, %v264
    %v305 = vpack.c.b16 %v269, %v265
    %v306 = vpack.c.b16 %v270, %v266
    %v307 = vpack.c.b16 %v275, %v271
    %v308 = vpack.c.b16 %v276, %v272
    %v309 = vpack.c.b16 %v277, %v273
    %v310 = vpack.c.b16 %v278, %v274
    %343 = vmatprep.subr.bf16.mxu0 %v280
    %344 = vmatpush1.bf16.msra.mxu0 %v279
    %345 = vmatprep.subr.bf16.mxu0 %v284
    %346 = vmatpush1.bf16.msra.mxu0 %v283
    %347 = vmatprep.subr.bf16.mxu0 %v288
    %348 = vmatpush1.bf16.msra.mxu0 %v287
    %349 = vmatprep.subr.bf16.mxu0 %v292
    %350 = vmatpush1.bf16.msra.mxu0 %v291
    %351 = vmatprep.subr.bf16.mxu0 %v296
    %352 = vmatpush1.bf16.msra.mxu0 %v295
    %353 = vmatprep.subr.bf16.mxu0 %v300
    %354 = vmatpush1.bf16.msra.mxu0 %v299
    %355 = vmatprep.subr.bf16.mxu0 %v304
    %356 = vmatpush1.bf16.msra.mxu0 %v303
    %357 = vmatprep.subr.bf16.mxu0 %v308
    %358 = vmatpush1.bf16.msra.mxu0 %v307
    %359 = vmatprep.subr.bf16.mxu0 0
    %360 = vmatpush1.bf16.msra.mxu0 0
    %361 = vmatprep.subr.bf16.mxu0 0
    %362 = vmatpush1.bf16.msra.mxu0 0
    %363 = vmatprep.subr.bf16.mxu0 0
    %364 = vmatpush1.bf16.msra.mxu0 0
    %365 = vmatprep.subr.bf16.mxu0 0
    %366 = vmatpush1.bf16.msra.mxu0 0
    %367 = vmatprep.subr.bf16.mxu0 0
    %368 = vmatpush1.bf16.msra.mxu0 0
    %369 = vmatprep.subr.bf16.mxu0 0
    %370 = vmatpush1.bf16.msra.mxu0 0
    %371 = vmatprep.subr.bf16.mxu0 0
    %372 = vmatpush1.bf16.msra.mxu0 0
    %373 = vmatprep.subr.bf16.mxu0 0
    %374 = vmatpush1.bf16.msra.mxu0 0
    %375 = vmatprep.mubr.bf16.mxu0 0
    %376 = vmatmul.mubr.bf16.gmra.mrb[0].mxu0 %v150
    %v377 = vpop.f32.mrb[0].mxu0
    %v378 = vadd.f32 0.0, %v377
    %v379 = vpop.f32.mrb[0].mxu0
    %v380 = vadd.f32 0.0, %v379
    %v381 = vpop.f32.mrb[0].mxu0
    %v382 = vpop.f32.mrb[0].mxu0
    %383 = vdwg.mxu0
    %384 = vmatprep.subr.bf16.mxu0 %v282
    %385 = vmatpush1.bf16.msra.mxu0 %v281
    %386 = vmatprep.subr.bf16.mxu0 %v286
    %387 = vmatpush1.bf16.msra.mxu0 %v285
    %388 = vmatprep.subr.bf16.mxu0 %v290
    %389 = vmatpush1.bf16.msra.mxu0 %v289
    %390 = vmatprep.subr.bf16.mxu0 %v294
    %391 = vmatpush1.bf16.msra.mxu0 %v293
    %392 = vmatprep.subr.bf16.mxu0 %v298
    %393 = vmatpush1.bf16.msra.mxu0 %v297
    %394 = vmatprep.subr.bf16.mxu0 %v302
    %395 = vmatpush1.bf16.msra.mxu0 %v301
    %396 = vmatprep.subr.bf16.mxu0 %v306
    %397 = vmatpush1.bf16.msra.mxu0 %v305
    %398 = vmatprep.subr.bf16.mxu0 %v310
    %399 = vmatpush1.bf16.msra.mxu0 %v309
    %400 = vmatprep.subr.bf16.mxu0 0
    %401 = vmatpush1.bf16.msra.mxu0 0
    %402 = vmatprep.subr.bf16.mxu0 0
    %403 = vmatpush1.bf16.msra.mxu0 0
    %404 = vmatprep.subr.bf16.mxu0 0
    %405 = vmatpush1.bf16.msra.mxu0 0
    %406 = vmatprep.subr.bf16.mxu0 0
    %407 = vmatpush1.bf16.msra.mxu0 0
    %408 = vmatprep.subr.bf16.mxu0 0
    %409 = vmatpush1.bf16.msra.mxu0 0
    %410 = vmatprep.subr.bf16.mxu0 0
    %411 = vmatpush1.bf16.msra.mxu0 0
    %412 = vmatprep.subr.bf16.mxu0 0
    %413 = vmatpush1.bf16.msra.mxu0 0
    %414 = vmatprep.subr.bf16.mxu0 0
    %415 = vmatpush1.bf16.msra.mxu0 0
    %416 = vmatprep.mubr.bf16.mxu0 0
    %417 = vmatmul.mubr.bf16.gmra.mrb[0].mxu0 %v150
    %v418 = vpop.f32.mrb[0].mxu0
    %v419 = vadd.f32 0.0, %v418
    %v420 = vpop.f32.mrb[0].mxu0
    %v421 = vadd.f32 0.0, %v420
    %v422 = vpop.f32.mrb[0].mxu0
    %v423 = vpop.f32.mrb[0].mxu0
    %424 = vdwg.mxu0
    %v425 = vadd.f32 %v146, %v378
    %v426 = vadd.f32 %v147, %v380
    %v427 = vadd.f32 %v148, %v419
    %v428 = vadd.f32 %v149, %v421
    %v429 = vxor.u32 %v425, 2147483648
    %v430 = vmul.f32 %v429, 1.442695
    %v431 = vpow.pop %v430
    %v432 = vadd.f32 %v431, 1.0
    %v433 = vrcp.pop %v432
    %v434 = vmul.f32 1.0, %v433
    %v435 = vxor.u32 %v426, 2147483648
    %v436 = vmul.f32 %v435, 1.442695
    %v437 = vpow.pop %v436
    %v438 = vadd.f32 %v437, 1.0
    %v439 = vrcp.pop %v438
    %v440 = vmul.f32 1.0, %v439
    %v441 = vtanh.pop %v427
    %v442 = vxor.u32 %v428, 2147483648
    %v443 = vmul.f32 %v442, 1.442695
    %v444 = vpow.pop %v443
    %v445 = vadd.f32 %v444, 1.0
    %v446 = vrcp.pop %v445
    %v447 = vmul.f32 1.0, %v446
    %v448 = vmul.f32 %v440, %v136
    %v449 = vmul.f32 %v434, %v441
    %v450 = vadd.f32 %v448, %v449
    %v451 = vtanh.pop %v450
    %v452 = vmul.f32 %v447, %v451
    %v453 = vsel %vm145, %v452, %v135
    %v454 = vsel %vm145, %v450, %v136
    %v455 = vpack.c.bf16 %v453, %v453
    %v456 = vld [vmem:[#allocation12] sm:$0xff]
    %v457 = vld [vmem:[#allocation12 + $0x8] sm:$0xff]
    %v458 = vld [vmem:[#allocation12 + $0x10] sm:$0xff]
    %v459 = vld [vmem:[#allocation12 + $0x18] sm:$0xff]
    %v460 = vld [vmem:[#allocation12 + $0x20] sm:$0xff]
    %v461 = vld [vmem:[#allocation12 + $0x28] sm:$0xff]
    %v462 = vld [vmem:[#allocation12 + $0x30] sm:$0xff]
    %v463 = vld [vmem:[#allocation12 + $0x38] sm:$0xff]
    %v464 = vld [vmem:[#allocation12 + $0x40] sm:$0xff]
    %v465 = vld [vmem:[#allocation12 + $0x48] sm:$0xff]
    %v466 = vld [vmem:[#allocation12 + $0x50] sm:$0xff]
    %v467 = vld [vmem:[#allocation12 + $0x58] sm:$0xff]
    %v468 = vld [vmem:[#allocation12 + $0x60] sm:$0xff]
    %v469 = vld [vmem:[#allocation12 + $0x68] sm:$0xff]
    %v470 = vld [vmem:[#allocation12 + $0x70] sm:$0xff]
    %v471 = vld [vmem:[#allocation12 + $0x78] sm:$0xff]
    %v472 = vld [vmem:[#allocation12 + $0x80] sm:$0xff]
    %v473 = vld [vmem:[#allocation12 + $0x88] sm:$0xff]
    %v474 = vld [vmem:[#allocation12 + $0x90] sm:$0xff]
    %v475 = vld [vmem:[#allocation12 + $0x98] sm:$0xff]
    %v476 = vld [vmem:[#allocation12 + $0xa0] sm:$0xff]
    %v477 = vld [vmem:[#allocation12 + $0xa8] sm:$0xff]
    %v478 = vld [vmem:[#allocation12 + $0xb0] sm:$0xff]
    %v479 = vld [vmem:[#allocation12 + $0xb8] sm:$0xff]
    %v480 = vld [vmem:[#allocation12 + $0xc0] sm:$0xff]
    %v481 = vld [vmem:[#allocation12 + $0xc8] sm:$0xff]
    %v482 = vld [vmem:[#allocation12 + $0xd0] sm:$0xff]
    %v483 = vld [vmem:[#allocation12 + $0xd8] sm:$0xff]
    %v484 = vld [vmem:[#allocation12 + $0xe0] sm:$0xff]
    %v485 = vld [vmem:[#allocation12 + $0xe8] sm:$0xff]
    %v486 = vld [vmem:[#allocation12 + $0xf0] sm:$0xff]
    %v487 = vld [vmem:[#allocation12 + $0xf8] sm:$0xff]
    %v488 = vpack.c.bf16 %v137, %v137
    %v489 = vld [vmem:[#allocation13] sm:$0xff]
    %v490 = vld [vmem:[#allocation13 + $0x8] sm:$0xff]
    %v491 = vld [vmem:[#allocation13 + $0x10] sm:$0xff]
    %v492 = vld [vmem:[#allocation13 + $0x18] sm:$0xff]
    %v493 = vld [vmem:[#allocation13 + $0x20] sm:$0xff]
    %v494 = vld [vmem:[#allocation13 + $0x28] sm:$0xff]
    %v495 = vld [vmem:[#allocation13 + $0x30] sm:$0xff]
    %v496 = vld [vmem:[#allocation13 + $0x38] sm:$0xff]
    %v497 = vld [vmem:[#allocation13 + $0x40] sm:$0xff]
    %v498 = vld [vmem:[#allocation13 + $0x48] sm:$0xff]
    %v499 = vld [vmem:[#allocation13 + $0x50] sm:$0xff]
    %v500 = vld [vmem:[#allocation13 + $0x58] sm:$0xff]
    %v501 = vld [vmem:[#allocation13 + $0x60] sm:$0xff]
    %v502 = vld [vmem:[#allocation13 + $0x68] sm:$0xff]
    %v503 = vld [vmem:[#allocation13 + $0x70] sm:$0xff]
    %v504 = vld [vmem:[#allocation13 + $0x78] sm:$0xff]
    %v505 = vld [vmem:[#allocation13 + $0x80] sm:$0xff]
    %v506 = vld [vmem:[#allocation13 + $0x88] sm:$0xff]
    %v507 = vld [vmem:[#allocation13 + $0x90] sm:$0xff]
    %v508 = vld [vmem:[#allocation13 + $0x98] sm:$0xff]
    %v509 = vld [vmem:[#allocation13 + $0xa0] sm:$0xff]
    %v510 = vld [vmem:[#allocation13 + $0xa8] sm:$0xff]
    %v511 = vld [vmem:[#allocation13 + $0xb0] sm:$0xff]
    %v512 = vld [vmem:[#allocation13 + $0xb8] sm:$0xff]
    %v513 = vld [vmem:[#allocation13 + $0xc0] sm:$0xff]
    %v514 = vld [vmem:[#allocation13 + $0xc8] sm:$0xff]
    %v515 = vld [vmem:[#allocation13 + $0xd0] sm:$0xff]
    %v516 = vld [vmem:[#allocation13 + $0xd8] sm:$0xff]
    %v517 = vld [vmem:[#allocation13 + $0xe0] sm:$0xff]
    %v518 = vld [vmem:[#allocation13 + $0xe8] sm:$0xff]
    %v519 = vld [vmem:[#allocation13 + $0xf0] sm:$0xff]
    %v520 = vld [vmem:[#allocation13 + $0xf8] sm:$0xff]
    %v553 = vunpack.c.l.b16 %v489
    %v554 = vunpack.c.h.b16 %v489
    %v555 = vunpack.c.l.b16 %v490
    %v556 = vunpack.c.h.b16 %v490
    %v557 = vunpack.c.l.b16 %v491
    %v558 = vunpack.c.h.b16 %v491
    %v559 = vunpack.c.l.b16 %v492
    %v560 = vunpack.c.h.b16 %v492
    %v561 = vunpack.c.l.b16 %v493
    %v562 = vunpack.c.h.b16 %v493
    %v563 = vunpack.c.l.b16 %v494
    %v564 = vunpack.c.h.b16 %v494
    %v565 = vunpack.c.l.b16 %v495
    %v566 = vunpack.c.h.b16 %v495
    %v567 = vunpack.c.l.b16 %v496
    %v568 = vunpack.c.h.b16 %v496
    %v569 = vunpack.c.l.b16 %v497
    %v570 = vunpack.c.h.b16 %v497
    %v571 = vunpack.c.l.b16 %v498
    %v572 = vunpack.c.h.b16 %v498
    %v573 = vunpack.c.l.b16 %v499
    %v574 = vunpack.c.h.b16 %v499
    %v575 = vunpack.c.l.b16 %v500
    %v576 = vunpack.c.h.b16 %v500
    %v577 = vunpack.c.l.b16 %v501
    %v578 = vunpack.c.h.b16 %v501
    %v579 = vunpack.c.l.b16 %v502
    %v580 = vunpack.c.h.b16 %v502
    %v581 = vunpack.c.l.b16 %v503
    %v582 = vunpack.c.h.b16 %v503
    %v583 = vunpack.c.l.b16 %v504
    %v584 = vunpack.c.h.b16 %v504
    %v585 = vunpack.c.l.b16 %v505
    %v586 = vunpack.c.h.b16 %v505
    %v587 = vunpack.c.l.b16 %v506
    %v588 = vunpack.c.h.b16 %v506
    %v589 = vunpack.c.l.b16 %v507
    %v590 = vunpack.c.h.b16 %v507
    %v591 = vunpack.c.l.b16 %v508
    %v592 = vunpack.c.h.b16 %v508
    %v593 = vunpack.c.l.b16 %v509
    %v594 = vunpack.c.h.b16 %v509
    %v595 = vunpack.c.l.b16 %v510
    %v596 = vunpack.c.h.b16 %v510
    %v597 = vunpack.c.l.b16 %v511
    %v598 = vunpack.c.h.b16 %v511
    %v599 = vunpack.c.l.b16 %v512
    %v600 = vunpack.c.h.b16 %v512
    %v601 = vunpack.c.l.b16 %v513
    %v602 = vunpack.c.h.b16 %v513
    %v603 = vunpack.c.l.b16 %v514
    %v604 = vunpack.c.h.b16 %v514
    %v605 = vunpack.c.l.b16 %v515
    %v606 = vunpack.c.h.b16 %v515
    %v607 = vunpack.c.l.b16 %v516
    %v608 = vunpack.c.h.b16 %v516
    %v609 = vunpack.c.l.b16 %v517
    %v610 = vunpack.c.h.b16 %v517
    %v611 = vunpack.c.l.b16 %v518
    %v612 = vunpack.c.h.b16 %v518
    %v613 = vunpack.c.l.b16 %v519
    %v614 = vunpack.c.h.b16 %v519
    %v615 = vunpack.c.l.b16 %v520
    %v616 = vunpack.c.h.b16 %v520
    %v617 = vpack.c.b16 %v557, %v553
    %v618 = vpack.c.b16 %v558, %v554
    %v619 = vpack.c.b16 %v559, %v555
    %v620 = vpack.c.b16 %v560, %v556
    %v621 = vpack.c.b16 %v565, %v561
    %v622 = vpack.c.b16 %v566, %v562
    %v623 = vpack.c.b16 %v567, %v563
    %v624 = vpack.c.b16 %v568, %v564
    %v625 = vpack.c.b16 %v573, %v569
    %v626 = vpack.c.b16 %v574, %v570
    %v627 = vpack.c.b16 %v575, %v571
    %v628 = vpack.c.b16 %v576, %v572
    %v629 = vpack.c.b16 %v581, %v577
    %v630 = vpack.c.b16 %v582, %v578
    %v631 = vpack.c.b16 %v583, %v579
    %v632 = vpack.c.b16 %v584, %v580
    %v633 = vpack.c.b16 %v589, %v585
    %v634 = vpack.c.b16 %v590, %v586
    %v635 = vpack.c.b16 %v591, %v587
    %v636 = vpack.c.b16 %v592, %v588
    %v637 = vpack.c.b16 %v597, %v593
    %v638 = vpack.c.b16 %v598, %v594
    %v639 = vpack.c.b16 %v599, %v595
    %v640 = vpack.c.b16 %v600, %v596
    %v641 = vpack.c.b16 %v605, %v601
    %v642 = vpack.c.b16 %v606, %v602
    %v643 = vpack.c.b16 %v607, %v603
    %v644 = vpack.c.b16 %v608, %v604
    %v645 = vpack.c.b16 %v613, %v609
    %v646 = vpack.c.b16 %v614, %v610
    %v647 = vpack.c.b16 %v615, %v611
    %v648 = vpack.c.b16 %v616, %v612
    %681 = vmatprep.subr.bf16.mxu0 %v618
    %682 = vmatpush1.bf16.msra.mxu0 %v617
    %683 = vmatprep.subr.bf16.mxu0 %v622
    %684 = vmatpush1.bf16.msra.mxu0 %v621
    %685 = vmatprep.subr.bf16.mxu0 %v626
    %686 = vmatpush1.bf16.msra.mxu0 %v625
    %687 = vmatprep.subr.bf16.mxu0 %v630
    %688 = vmatpush1.bf16.msra.mxu0 %v629
    %689 = vmatprep.subr.bf16.mxu0 %v634
    %690 = vmatpush1.bf16.msra.mxu0 %v633
    %691 = vmatprep.subr.bf16.mxu0 %v638
    %692 = vmatpush1.bf16.msra.mxu0 %v637
    %693 = vmatprep.subr.bf16.mxu0 %v642
    %694 = vmatpush1.bf16.msra.mxu0 %v641
    %695 = vmatprep.subr.bf16.mxu0 %v646
    %696 = vmatpush1.bf16.msra.mxu0 %v645
    %697 = vmatprep.subr.bf16.mxu0 0
    %698 = vmatpush1.bf16.msra.mxu0 0
    %699 = vmatprep.subr.bf16.mxu0 0
    %700 = vmatpush1.bf16.msra.mxu0 0
    %701 = vmatprep.subr.bf16.mxu0 0
    %702 = vmatpush1.bf16.msra.mxu0 0
    %703 = vmatprep.subr.bf16.mxu0 0
    %704 = vmatpush1.bf16.msra.mxu0 0
    %705 = vmatprep.subr.bf16.mxu0 0
    %706 = vmatpush1.bf16.msra.mxu0 0
    %707 = vmatprep.subr.bf16.mxu0 0
    %708 = vmatpush1.bf16.msra.mxu0 0
    %709 = vmatprep.subr.bf16.mxu0 0
    %710 = vmatpush1.bf16.msra.mxu0 0
    %711 = vmatprep.subr.bf16.mxu0 0
    %712 = vmatpush1.bf16.msra.mxu0 0
    %713 = vmatprep.mubr.bf16.mxu0 0
    %714 = vmatmul.mubr.bf16.gmra.mrb[0].mxu0 %v488
    %v715 = vpop.f32.mrb[0].mxu0
    %v716 = vadd.f32 0.0, %v715
    %v717 = vpop.f32.mrb[0].mxu0
    %v718 = vadd.f32 0.0, %v717
    %v719 = vpop.f32.mrb[0].mxu0
    %v720 = vpop.f32.mrb[0].mxu0
    %721 = vdwg.mxu0
    %722 = vmatprep.subr.bf16.mxu0 %v620
    %723 = vmatpush1.bf16.msra.mxu0 %v619
    %724 = vmatprep.subr.bf16.mxu0 %v624
    %725 = vmatpush1.bf16.msra.mxu0 %v623
    %726 = vmatprep.subr.bf16.mxu0 %v628
    %727 = vmatpush1.bf16.msra.mxu0 %v627
    %728 = vmatprep.subr.bf16.mxu0 %v632
    %729 = vmatpush1.bf16.msra.mxu0 %v631
    %730 = vmatprep.subr.bf16.mxu0 %v636
    %731 = vmatpush1.bf16.msra.mxu0 %v635
    %732 = vmatprep.subr.bf16.mxu0 %v640
    %733 = vmatpush1.bf16.msra.mxu0 %v639
    %734 = vmatprep.subr.bf16.mxu0 %v644
    %735 = vmatpush1.bf16.msra.mxu0 %v643
    %736 = vmatprep.subr.bf16.mxu0 %v648
    %737 = vmatpush1.bf16.msra.mxu0 %v647
    %738 = vmatprep.subr.bf16.mxu0 0
    %739 = vmatpush1.bf16.msra.mxu0 0
    %740 = vmatprep.subr.bf16.mxu0 0
    %741 = vmatpush1.bf16.msra.mxu0 0
    %742 = vmatprep.subr.bf16.mxu0 0
    %743 = vmatpush1.bf16.msra.mxu0 0
    %744 = vmatprep.subr.bf16.mxu0 0
    %745 = vmatpush1.bf16.msra.mxu0 0
    %746 = vmatprep.subr.bf16.mxu0 0
    %747 = vmatpush1.bf16.msra.mxu0 0
    %748 = vmatprep.subr.bf16.mxu0 0
    %749 = vmatpush1.bf16.msra.mxu0 0
    %750 = vmatprep.subr.bf16.mxu0 0
    %751 = vmatpush1.bf16.msra.mxu0 0
    %752 = vmatprep.subr.bf16.mxu0 0
    %753 = vmatpush1.bf16.msra.mxu0 0
    %754 = vmatprep.mubr.bf16.mxu0 0
    %755 = vmatmul.mubr.bf16.gmra.mrb[0].mxu0 %v488
    %v756 = vpop.f32.mrb[0].mxu0
    %v757 = vadd.f32 0.0, %v756
    %v758 = vpop.f32.mrb[0].mxu0
    %v759 = vadd.f32 0.0, %v758
    %v760 = vpop.f32.mrb[0].mxu0
    %v761 = vpop.f32.mrb[0].mxu0
    %762 = vdwg.mxu0
    %v795 = vunpack.c.l.b16 %v456
    %v796 = vunpack.c.h.b16 %v456
    %v797 = vunpack.c.l.b16 %v457
    %v798 = vunpack.c.h.b16 %v457
    %v799 = vunpack.c.l.b16 %v458
    %v800 = vunpack.c.h.b16 %v458
    %v801 = vunpack.c.l.b16 %v459
    %v802 = vunpack.c.h.b16 %v459
    %v803 = vunpack.c.l.b16 %v460
    %v804 = vunpack.c.h.b16 %v460
    %v805 = vunpack.c.l.b16 %v461
    %v806 = vunpack.c.h.b16 %v461
    %v807 = vunpack.c.l.b16 %v462
    %v808 = vunpack.c.h.b16 %v462
    %v809 = vunpack.c.l.b16 %v463
    %v810 = vunpack.c.h.b16 %v463
    %v811 = vunpack.c.l.b16 %v464
    %v812 = vunpack.c.h.b16 %v464
    %v813 = vunpack.c.l.b16 %v465
    %v814 = vunpack.c.h.b16 %v465
    %v815 = vunpack.c.l.b16 %v466
    %v816 = vunpack.c.h.b16 %v466
    %v817 = vunpack.c.l.b16 %v467
    %v818 = vunpack.c.h.b16 %v467
    %v819 = vunpack.c.l.b16 %v468
    %v820 = vunpack.c.h.b16 %v468
    %v821 = vunpack.c.l.b16 %v469
    %v822 = vunpack.c.h.b16 %v469
    %v823 = vunpack.c.l.b16 %v470
    %v824 = vunpack.c.h.b16 %v470
    %v825 = vunpack.c.l.b16 %v471
    %v826 = vunpack.c.h.b16 %v471
    %v827 = vunpack.c.l.b16 %v472
    %v828 = vunpack.c.h.b16 %v472
    %v829 = vunpack.c.l.b16 %v473
    %v830 = vunpack.c.h.b16 %v473
    %v831 = vunpack.c.l.b16 %v474
    %v832 = vunpack.c.h.b16 %v474
    %v833 = vunpack.c.l.b16 %v475
    %v834 = vunpack.c.h.b16 %v475
    %v835 = vunpack.c.l.b16 %v476
    %v836 = vunpack.c.h.b16 %v476
    %v837 = vunpack.c.l.b16 %v477
    %v838 = vunpack.c.h.b16 %v477
    %v839 = vunpack.c.l.b16 %v478
    %v840 = vunpack.c.h.b16 %v478
    %v841 = vunpack.c.l.b16 %v479
    %v842 = vunpack.c.h.b16 %v479
    %v843 = vunpack.c.l.b16 %v480
    %v844 = vunpack.c.h.b16 %v480
    %v845 = vunpack.c.l.b16 %v481
    %v846 = vunpack.c.h.b16 %v481
    %v847 = vunpack.c.l.b16 %v482
    %v848 = vunpack.c.h.b16 %v482
    %v849 = vunpack.c.l.b16 %v483
    %v850 = vunpack.c.h.b16 %v483
    %v851 = vunpack.c.l.b16 %v484
    %v852 = vunpack.c.h.b16 %v484
    %v853 = vunpack.c.l.b16 %v485
    %v854 = vunpack.c.h.b16 %v485
    %v855 = vunpack.c.l.b16 %v486
    %v856 = vunpack.c.h.b16 %v486
    %v857 = vunpack.c.l.b16 %v487
    %v858 = vunpack.c.h.b16 %v487
    %v859 = vpack.c.b16 %v799, %v795
    %v860 = vpack.c.b16 %v800, %v796
    %v861 = vpack.c.b16 %v801, %v797
    %v862 = vpack.c.b16 %v802, %v798
    %v863 = vpack.c.b16 %v807, %v803
    %v864 = vpack.c.b16 %v808, %v804
    %v865 = vpack.c.b16 %v809, %v805
    %v866 = vpack.c.b16 %v810, %v806
    %v867 = vpack.c.b16 %v815, %v811
    %v868 = vpack.c.b16 %v816, %v812
    %v869 = vpack.c.b16 %v817, %v813
    %v870 = vpack.c.b16 %v818, %v814
    %v871 = vpack.c.b16 %v823, %v819
    %v872 = vpack.c.b16 %v824, %v820
    %v873 = vpack.c.b16 %v825, %v821
    %v874 = vpack.c.b16 %v826, %v822
    %v875 = vpack.c.b16 %v831, %v827
    %v876 = vpack.c.b16 %v832, %v828
    %v877 = vpack.c.b16 %v833, %v829
    %v878 = vpack.c.b16 %v834, %v830
    %v879 = vpack.c.b16 %v839, %v835
    %v880 = vpack.c.b16 %v840, %v836
    %v881 = vpack.c.b16 %v841, %v837
    %v882 = vpack.c.b16 %v842, %v838
    %v883 = vpack.c.b16 %v847, %v843
    %v884 = vpack.c.b16 %v848, %v844
    %v885 = vpack.c.b16 %v849, %v845
    %v886 = vpack.c.b16 %v850, %v846
    %v887 = vpack.c.b16 %v855, %v851
    %v888 = vpack.c.b16 %v856, %v852
    %v889 = vpack.c.b16 %v857, %v853
    %v890 = vpack.c.b16 %v858, %v854
    %923 = vmatprep.subr.bf16.mxu0 %v860
    %924 = vmatpush1.bf16.msra.mxu0 %v859
    %925 = vmatprep.subr.bf16.mxu0 %v864
    %926 = vmatpush1.bf16.msra.mxu0 %v863
    %927 = vmatprep.subr.bf16.mxu0 %v868
    %928 = vmatpush1.bf16.msra.mxu0 %v867
    %929 = vmatprep.subr.bf16.mxu0 %v872
    %930 = vmatpush1.bf16.msra.mxu0 %v871
    %931 = vmatprep.subr.bf16.mxu0 %v876
    %932 = vmatpush1.bf16.msra.mxu0 %v875
    %933 = vmatprep.subr.bf16.mxu0 %v880
    %934 = vmatpush1.bf16.msra.mxu0 %v879
    %935 = vmatprep.subr.bf16.mxu0 %v884
    %936 = vmatpush1.bf16.msra.mxu0 %v883
    %937 = vmatprep.subr.bf16.mxu0 %v888
    %938 = vmatpush1.bf16.msra.mxu0 %v887
    %939 = vmatprep.subr.bf16.mxu0 0
    %940 = vmatpush1.bf16.msra.mxu0 0
    %941 = vmatprep.subr.bf16.mxu0 0
    %942 = vmatpush1.bf16.msra.mxu0 0
    %943 = vmatprep.subr.bf16.mxu0 0
    %944 = vmatpush1.bf16.msra.mxu0 0
    %945 = vmatprep.subr.bf16.mxu0 0
    %946 = vmatpush1.bf16.msra.mxu0 0
    %947 = vmatprep.subr.bf16.mxu0 0
    %948 = vmatpush1.bf16.msra.mxu0 0
    %949 = vmatprep.subr.bf16.mxu0 0
    %950 = vmatpush1.bf16.msra.mxu0 0
    %951 = vmatprep.subr.bf16.mxu0 0
    %952 = vmatpush1.bf16.msra.mxu0 0
    %953 = vmatprep.subr.bf16.mxu0 0
    %954 = vmatpush1.bf16.msra.mxu0 0
    %955 = vmatprep.mubr.bf16.mxu0 0
    %956 = vmatmul.mubr.bf16.gmra.mrb[0].mxu0 %v455
    %v957 = vpop.f32.mrb[0].mxu0
    %v958 = vadd.f32 %v716, %v957
    %v959 = vpop.f32.mrb[0].mxu0
    %v960 = vadd.f32 %v718, %v959
    %v961 = vpop.f32.mrb[0].mxu0
    %v962 = vpop.f32.mrb[0].mxu0
    %963 = vdwg.mxu0
    %964 = vmatprep.subr.bf16.mxu0 %v862
    %965 = vmatpush1.bf16.msra.mxu0 %v861
    %966 = vmatprep.subr.bf16.mxu0 %v866
    %967 = vmatpush1.bf16.msra.mxu0 %v865
    %968 = vmatprep.subr.bf16.mxu0 %v870
    %969 = vmatpush1.bf16.msra.mxu0 %v869
    %970 = vmatprep.subr.bf16.mxu0 %v874
    %971 = vmatpush1.bf16.msra.mxu0 %v873
    %972 = vmatprep.subr.bf16.mxu0 %v878
    %973 = vmatpush1.bf16.msra.mxu0 %v877
    %974 = vmatprep.subr.bf16.mxu0 %v882
    %975 = vmatpush1.bf16.msra.mxu0 %v881
    %976 = vmatprep.subr.bf16.mxu0 %v886
    %977 = vmatpush1.bf16.msra.mxu0 %v885
    %978 = vmatprep.subr.bf16.mxu0 %v890
    %979 = vmatpush1.bf16.msra.mxu0 %v889
    %980 = vmatprep.subr.bf16.mxu0 0
    %981 = vmatpush1.bf16.msra.mxu0 0
    %982 = vmatprep.subr.bf16.mxu0 0
    %983 = vmatpush1.bf16.msra.mxu0 0
    %984 = vmatprep.subr.bf16.mxu0 0
    %985 = vmatpush1.bf16.msra.mxu0 0
    %986 = vmatprep.subr.bf16.mxu0 0
    %987 = vmatpush1.bf16.msra.mxu0 0
    %988 = vmatprep.subr.bf16.mxu0 0
    %989 = vmatpush1.bf16.msra.mxu0 0
    %990 = vmatprep.subr.bf16.mxu0 0
    %991 = vmatpush1.bf16.msra.mxu0 0
    %992 = vmatprep.subr.bf16.mxu0 0
    %993 = vmatpush1.bf16.msra.mxu0 0
    %994 = vmatprep.subr.bf16.mxu0 0
    %995 = vmatpush1.bf16.msra.mxu0 0
    %996 = vmatprep.mubr.bf16.mxu0 0
    %997 = vmatmul.mubr.bf16.gmra.mrb[0].mxu0 %v455
    %v998 = vpop.f32.mrb[0].mxu0
    %v999 = vadd.f32 %v757, %v998
    %v1000 = vpop.f32.mrb[0].mxu0
    %v1001 = vadd.f32 %v759, %v1000
    %v1002 = vpop.f32.mrb[0].mxu0
    %v1003 = vpop.f32.mrb[0].mxu0
    %1004 = vdwg.mxu0
    %v1005 = vadd.f32 %v958, %v117
    %v1006 = vadd.f32 %v960, %v121
    %v1007 = vadd.f32 %v999, %v125
    %v1008 = vadd.f32 %v1001, %v129
    %v1009 = vxor.u32 %v1005, 2147483648
    %v1010 = vmul.f32 %v1009, 1.442695
    %v1011 = vpow.pop %v1010
    %v1012 = vadd.f32 %v1011, 1.0
    %v1013 = vrcp.pop %v1012
    %v1014 = vmul.f32 1.0, %v1013
    %v1015 = vxor.u32 %v1006, 2147483648
    %v1016 = vmul.f32 %v1015, 1.442695
    %v1017 = vpow.pop %v1016
    %v1018 = vadd.f32 %v1017, 1.0
    %v1019 = vrcp.pop %v1018
    %v1020 = vmul.f32 1.0, %v1019
    %v1021 = vtanh.pop %v1007
    %v1022 = vxor.u32 %v1008, 2147483648
    %v1023 = vmul.f32 %v1022, 1.442695
    %v1024 = vpow.pop %v1023
    %v1025 = vadd.f32 %v1024, 1.0
    %v1026 = vrcp.pop %v1025
    %v1027 = vmul.f32 1.0, %v1026
    %v1028 = vmul.f32 %v1020, %v138
    %v1029 = vmul.f32 %v1014, %v1021
    %v1030 = vadd.f32 %v1028, %v1029
    %v1031 = vtanh.pop %v1030
    %v1032 = vmul.f32 %v1027, %v1031
    %v1033 = vsel %vm145, %v1032, %v137
    %v1034 = vsel %vm145, %v1030, %v138
    %v1035 = vsel %vm145, %v1032, 0.0
    %1036 = vst [vmem:[#allocation6] sm:$0xff] %v1035
    %s1037 = sadd.s32 %s134, 1
    %v1038 = vstv %s1037
    %vm1039 = vcmp.gt.s32.totalorder %v111, %v1038
    %v1040 = vsel %vm1039, 1, 0
    %1041 = vset.pattern.permute.xlu0 0
    %1042 = vperm.xlu0 %1041, %v1040
    %v1043 = vpop.permute.xlu0 %1042
    %vm1044 = vcmp.eq.s32.totalorder %v1043, 1
    %s1045 = scalar_lea.vmem [#allocation7], 32
    %v1046 = vld [vmem:[%s1045] sm:$0xff]
    %v1047 = vld [vmem:[%s1045 + $0x8] sm:$0xff]
    %v1048 = vld [vmem:[%s1045 + $0x10] sm:$0xff]
    %v1049 = vld [vmem:[%s1045 + $0x18] sm:$0xff]
    %v1050 = vld [vmem:[#allocation10] sm:$0xff]
    %v1051 = vld [vmem:[#allocation10 + $0x8] sm:$0xff]
    %v1052 = vld [vmem:[#allocation10 + $0x10] sm:$0xff]
    %v1053 = vld [vmem:[#allocation10 + $0x18] sm:$0xff]
    %v1054 = vld [vmem:[#allocation10 + $0x20] sm:$0xff]
    %v1055 = vld [vmem:[#allocation10 + $0x28] sm:$0xff]
    %v1056 = vld [vmem:[#allocation10 + $0x30] sm:$0xff]
    %v1057 = vld [vmem:[#allocation10 + $0x38] sm:$0xff]
    %v1058 = vld [vmem:[#allocation10 + $0x40] sm:$0xff]
    %v1059 = vld [vmem:[#allocation10 + $0x48] sm:$0xff]
    %v1060 = vld [vmem:[#allocation10 + $0x50] sm:$0xff]
    %v1061 = vld [vmem:[#allocation10 + $0x58] sm:$0xff]
    %v1062 = vld [vmem:[#allocation10 + $0x60] sm:$0xff]
    %v1063 = vld [vmem:[#allocation10 + $0x68] sm:$0xff]
    %v1064 = vld [vmem:[#allocation10 + $0x70] sm:$0xff]
    %v1065 = vld [vmem:[#allocation10 + $0x78] sm:$0xff]
    %v1066 = vld [vmem:[#allocation10 + $0x80] sm:$0xff]
    %v1067 = vld [vmem:[#allocation10 + $0x88] sm:$0xff]
    %v1068 = vld [vmem:[#allocation10 + $0x90] sm:$0xff]
    %v1069 = vld [vmem:[#allocation10 + $0x98] sm:$0xff]
    %v1070 = vld [vmem:[#allocation10 + $0xa0] sm:$0xff]
    %v1071 = vld [vmem:[#allocation10 + $0xa8] sm:$0xff]
    %v1072 = vld [vmem:[#allocation10 + $0xb0] sm:$0xff]
    %v1073 = vld [vmem:[#allocation10 + $0xb8] sm:$0xff]
    %v1074 = vld [vmem:[#allocation10 + $0xc0] sm:$0xff]
    %v1075 = vld [vmem:[#allocation10 + $0xc8] sm:$0xff]
    %v1076 = vld [vmem:[#allocation10 + $0xd0] sm:$0xff]
    %v1077 = vld [vmem:[#allocation10 + $0xd8] sm:$0xff]
    %v1078 = vld [vmem:[#allocation10 + $0xe0] sm:$0xff]
    %v1079 = vld [vmem:[#allocation10 + $0xe8] sm:$0xff]
    %v1080 = vld [vmem:[#allocation10 + $0xf0] sm:$0xff]
    %v1081 = vld [vmem:[#allocation10 + $0xf8] sm:$0xff]
    %v1114 = vunpack.c.l.b16 %v1050
    %v1115 = vunpack.c.h.b16 %v1050
    %v1116 = vunpack.c.l.b16 %v1051
    %v1117 = vunpack.c.h.b16 %v1051
    %v1118 = vunpack.c.l.b16 %v1052
    %v1119 = vunpack.c.h.b16 %v1052
    %v1120 = vunpack.c.l.b16 %v1053
    %v1121 = vunpack.c.h.b16 %v1053
    %v1122 = vunpack.c.l.b16 %v1054
    %v1123 = vunpack.c.h.b16 %v1054
    %v1124 = vunpack.c.l.b16 %v1055
    %v1125 = vunpack.c.h.b16 %v1055
    %v1126 = vunpack.c.l.b16 %v1056
    %v1127 = vunpack.c.h.b16 %v1056
    %v1128 = vunpack.c.l.b16 %v1057
    %v1129 = vunpack.c.h.b16 %v1057
    %v1130 = vunpack.c.l.b16 %v1058
    %v1131 = vunpack.c.h.b16 %v1058
    %v1132 = vunpack.c.l.b16 %v1059
    %v1133 = vunpack.c.h.b16 %v1059
    %v1134 = vunpack.c.l.b16 %v1060
    %v1135 = vunpack.c.h.b16 %v1060
    %v1136 = vunpack.c.l.b16 %v1061
    %v1137 = vunpack.c.h.b16 %v1061
    %v1138 = vunpack.c.l.b16 %v1062
    %v1139 = vunpack.c.h.b16 %v1062
    %v1140 = vunpack.c.l.b16 %v1063
    %v1141 = vunpack.c.h.b16 %v1063
    %v1142 = vunpack.c.l.b16 %v1064
    %v1143 = vunpack.c.h.b16 %v1064
    %v1144 = vunpack.c.l.b16 %v1065
    %v1145 = vunpack.c.h.b16 %v1065
    %v1146 = vunpack.c.l.b16 %v1066
    %v1147 = vunpack.c.h.b16 %v1066
    %v1148 = vunpack.c.l.b16 %v1067
    %v1149 = vunpack.c.h.b16 %v1067
    %v1150 = vunpack.c.l.b16 %v1068
    %v1151 = vunpack.c.h.b16 %v1068
    %v1152 = vunpack.c.l.b16 %v1069
    %v1153 = vunpack.c.h.b16 %v1069
    %v1154 = vunpack.c.l.b16 %v1070
    %v1155 = vunpack.c.h.b16 %v1070
    %v1156 = vunpack.c.l.b16 %v1071
    %v1157 = vunpack.c.h.b16 %v1071
    %v1158 = vunpack.c.l.b16 %v1072
    %v1159 = vunpack.c.h.b16 %v1072
    %v1160 = vunpack.c.l.b16 %v1073
    %v1161 = vunpack.c.h.b16 %v1073
    %v1162 = vunpack.c.l.b16 %v1074
    %v1163 = vunpack.c.h.b16 %v1074
    %v1164 = vunpack.c.l.b16 %v1075
    %v1165 = vunpack.c.h.b16 %v1075
    %v1166 = vunpack.c.l.b16 %v1076
    %v1167 = vunpack.c.h.b16 %v1076
    %v1168 = vunpack.c.l.b16 %v1077
    %v1169 = vunpack.c.h.b16 %v1077
    %v1170 = vunpack.c.l.b16 %v1078
    %v1171 = vunpack.c.h.b16 %v1078
    %v1172 = vunpack.c.l.b16 %v1079
    %v1173 = vunpack.c.h.b16 %v1079
    %v1174 = vunpack.c.l.b16 %v1080
    %v1175 = vunpack.c.h.b16 %v1080
    %v1176 = vunpack.c.l.b16 %v1081
    %v1177 = vunpack.c.h.b16 %v1081
    %v1178 = vpack.c.b16 %v1118, %v1114
    %v1179 = vpack.c.b16 %v1119, %v1115
    %v1180 = vpack.c.b16 %v1120, %v1116
    %v1181 = vpack.c.b16 %v1121, %v1117
    %v1182 = vpack.c.b16 %v1126, %v1122
    %v1183 = vpack.c.b16 %v1127, %v1123
    %v1184 = vpack.c.b16 %v1128, %v1124
    %v1185 = vpack.c.b16 %v1129, %v1125
    %v1186 = vpack.c.b16 %v1134, %v1130
    %v1187 = vpack.c.b16 %v1135, %v1131
    %v1188 = vpack.c.b16 %v1136, %v1132
    %v1189 = vpack.c.b16 %v1137, %v1133
    %v1190 = vpack.c.b16 %v1142, %v1138
    %v1191 = vpack.c.b16 %v1143, %v1139
    %v1192 = vpack.c.b16 %v1144, %v1140
    %v1193 = vpack.c.b16 %v1145, %v1141
    %v1194 = vpack.c.b16 %v1150, %v1146
    %v1195 = vpack.c.b16 %v1151, %v1147
    %v1196 = vpack.c.b16 %v1152, %v1148
    %v1197 = vpack.c.b16 %v1153, %v1149
    %v1198 = vpack.c.b16 %v1158, %v1154
    %v1199 = vpack.c.b16 %v1159, %v1155
    %v1200 = vpack.c.b16 %v1160, %v1156
    %v1201 = vpack.c.b16 %v1161, %v1157
    %v1202 = vpack.c.b16 %v1166, %v1162
    %v1203 = vpack.c.b16 %v1167, %v1163
    %v1204 = vpack.c.b16 %v1168, %v1164
    %v1205 = vpack.c.b16 %v1169, %v1165
    %v1206 = vpack.c.b16 %v1174, %v1170
    %v1207 = vpack.c.b16 %v1175, %v1171
    %v1208 = vpack.c.b16 %v1176, %v1172
    %v1209 = vpack.c.b16 %v1177, %v1173
    %1242 = vmatprep.subr.bf16.mxu0 %v1179
    %1243 = vmatpush1.bf16.msra.mxu0 %v1178
    %1244 = vmatprep.subr.bf16.mxu0 %v1183
    %1245 = vmatpush1.bf16.msra.mxu0 %v1182
    %1246 = vmatprep.subr.bf16.mxu0 %v1187
    %1247 = vmatpush1.bf16.msra.mxu0 %v1186
    %1248 = vmatprep.subr.bf16.mxu0 %v1191
    %1249 = vmatpush1.bf16.msra.mxu0 %v1190
    %1250 = vmatprep.subr.bf16.mxu0 %v1195
    %1251 = vmatpush1.bf16.msra.mxu0 %v1194
    %1252 = vmatprep.subr.bf16.mxu0 %v1199
    %1253 = vmatpush1.bf16.msra.mxu0 %v1198
    %1254 = vmatprep.subr.bf16.mxu0 %v1203
    %1255 = vmatpush1.bf16.msra.mxu0 %v1202
    %1256 = vmatprep.subr.bf16.mxu0 %v1207
    %1257 = vmatpush1.bf16.msra.mxu0 %v1206
    %1258 = vmatprep.subr.bf16.mxu0 0
    %1259 = vmatpush1.bf16.msra.mxu0 0
    %1260 = vmatprep.subr.bf16.mxu0 0
    %1261 = vmatpush1.bf16.msra.mxu0 0
    %1262 = vmatprep.subr.bf16.mxu0 0
    %1263 = vmatpush1.bf16.msra.mxu0 0
    %1264 = vmatprep.subr.bf16.mxu0 0
    %1265 = vmatpush1.bf16.msra.mxu0 0
    %1266 = vmatprep.subr.bf16.mxu0 0
    %1267 = vmatpush1.bf16.msra.mxu0 0
    %1268 = vmatprep.subr.bf16.mxu0 0
    %1269 = vmatpush1.bf16.msra.mxu0 0
    %1270 = vmatprep.subr.bf16.mxu0 0
    %1271 = vmatpush1.bf16.msra.mxu0 0
    %1272 = vmatprep.subr.bf16.mxu0 0
    %1273 = vmatpush1.bf16.msra.mxu0 0
    %1274 = vmatprep.mubr.bf16.mxu0 0
    %1275 = vmatmul.mubr.bf16.gmra.mrb[0].mxu0 %v455
    %v1276 = vpop.f32.mrb[0].mxu0
    %v1277 = vadd.f32 0.0, %v1276
    %v1278 = vpop.f32.mrb[0].mxu0
    %v1279 = vadd.f32 0.0, %v1278
    %v1280 = vpop.f32.mrb[0].mxu0
    %v1281 = vpop.f32.mrb[0].mxu0
    %1282 = vdwg.mxu0
    %1283 = vmatprep.subr.bf16.mxu0 %v1181
    %1284 = vmatpush1.bf16.msra.mxu0 %v1180
    %1285 = vmatprep.subr.bf16.mxu0 %v1185
    %1286 = vmatpush1.bf16.msra.mxu0 %v1184
    %1287 = vmatprep.subr.bf16.mxu0 %v1189
    %1288 = vmatpush1.bf16.msra.mxu0 %v1188
    %1289 = vmatprep.subr.bf16.mxu0 %v1193
    %1290 = vmatpush1.bf16.msra.mxu0 %v1192
    %1291 = vmatprep.subr.bf16.mxu0 %v1197
    %1292 = vmatpush1.bf16.msra.mxu0 %v1196
    %1293 = vmatprep.subr.bf16.mxu0 %v1201
    %1294 = vmatpush1.bf16.msra.mxu0 %v1200
    %1295 = vmatprep.subr.bf16.mxu0 %v1205
    %1296 = vmatpush1.bf16.msra.mxu0 %v1204
    %1297 = vmatprep.subr.bf16.mxu0 %v1209
    %1298 = vmatpush1.bf16.msra.mxu0 %v1208
    %1299 = vmatprep.subr.bf16.mxu0 0
    %1300 = vmatpush1.bf16.msra.mxu0 0
    %1301 = vmatprep.subr.bf16.mxu0 0
    %1302 = vmatpush1.bf16.msra.mxu0 0
    %1303 = vmatprep.subr.bf16.mxu0 0
    %1304 = vmatpush1.bf16.msra.mxu0 0
    %1305 = vmatprep.subr.bf16.mxu0 0
    %1306 = vmatpush1.bf16.msra.mxu0 0
    %1307 = vmatprep.subr.bf16.mxu0 0
    %1308 = vmatpush1.bf16.msra.mxu0 0
    %1309 = vmatprep.subr.bf16.mxu0 0
    %1310 = vmatpush1.bf16.msra.mxu0 0
    %1311 = vmatprep.subr.bf16.mxu0 0
    %1312 = vmatpush1.bf16.msra.mxu0 0
    %1313 = vmatprep.subr.bf16.mxu0 0
    %1314 = vmatpush1.bf16.msra.mxu0 0
    %1315 = vmatprep.mubr.bf16.mxu0 0
    %1316 = vmatmul.mubr.bf16.gmra.mrb[0].mxu0 %v455
    %v1317 = vpop.f32.mrb[0].mxu0
    %v1318 = vadd.f32 0.0, %v1317
    %v1319 = vpop.f32.mrb[0].mxu0
    %v1320 = vadd.f32 0.0, %v1319
    %v1321 = vpop.f32.mrb[0].mxu0
    %v1322 = vpop.f32.mrb[0].mxu0
    %1323 = vdwg.mxu0
    %v1324 = vadd.f32 %v1046, %v1277
    %v1325 = vadd.f32 %v1047, %v1279
    %v1326 = vadd.f32 %v1048, %v1318
    %v1327 = vadd.f32 %v1049, %v1320
    %v1328 = vxor.u32 %v1324, 2147483648
    %v1329 = vmul.f32 %v1328, 1.442695
    %v1330 = vpow.pop %v1329
    %v1331 = vadd.f32 %v1330, 1.0
    %v1332 = vrcp.pop %v1331
    %v1333 = vmul.f32 1.0, %v1332
    %v1334 = vxor.u32 %v1325, 2147483648
    %v1335 = vmul.f32 %v1334, 1.442695
    %v1336 = vpow.pop %v1335
    %v1337 = vadd.f32 %v1336, 1.0
    %v1338 = vrcp.pop %v1337
    %v1339 = vmul.f32 1.0, %v1338
    %v1340 = vtanh.pop %v1326
    %v1341 = vxor.u32 %v1327, 2147483648
    %v1342 = vmul.f32 %v1341, 1.442695
    %v1343 = vpow.pop %v1342
    %v1344 = vadd.f32 %v1343, 1.0
    %v1345 = vrcp.pop %v1344
    %v1346 = vmul.f32 1.0, %v1345
    %v1347 = vmul.f32 %v1339, %v454
    %v1348 = vmul.f32 %v1333, %v1340
    %v1349 = vadd.f32 %v1347, %v1348
    %v1350 = vtanh.pop %v1349
    %v1351 = vmul.f32 %v1346, %v1350
    %v1352 = vsel %vm1044, %v1351, %v453
    %v1353 = vsel %vm1044, %v1349, %v454
    %v1354 = vpack.c.bf16 %v1352, %v1352
    %v1355 = vld [vmem:[#allocation12] sm:$0xff]
    %v1356 = vld [vmem:[#allocation12 + $0x8] sm:$0xff]
    %v1357 = vld [vmem:[#allocation12 + $0x10] sm:$0xff]
    %v1358 = vld [vmem:[#allocation12 + $0x18] sm:$0xff]
    %v1359 = vld [vmem:[#allocation12 + $0x20] sm:$0xff]
    %v1360 = vld [vmem:[#allocation12 + $0x28] sm:$0xff]
    %v1361 = vld [vmem:[#allocation12 + $0x30] sm:$0xff]
    %v1362 = vld [vmem:[#allocation12 + $0x38] sm:$0xff]
    %v1363 = vld [vmem:[#allocation12 + $0x40] sm:$0xff]
    %v1364 = vld [vmem:[#allocation12 + $0x48] sm:$0xff]
    %v1365 = vld [vmem:[#allocation12 + $0x50] sm:$0xff]
    %v1366 = vld [vmem:[#allocation12 + $0x58] sm:$0xff]
    %v1367 = vld [vmem:[#allocation12 + $0x60] sm:$0xff]
    %v1368 = vld [vmem:[#allocation12 + $0x68] sm:$0xff]
    %v1369 = vld [vmem:[#allocation12 + $0x70] sm:$0xff]
    %v1370 = vld [vmem:[#allocation12 + $0x78] sm:$0xff]
    %v1371 = vld [vmem:[#allocation12 + $0x80] sm:$0xff]
    %v1372 = vld [vmem:[#allocation12 + $0x88] sm:$0xff]
    %v1373 = vld [vmem:[#allocation12 + $0x90] sm:$0xff]
    %v1374 = vld [vmem:[#allocation12 + $0x98] sm:$0xff]
    %v1375 = vld [vmem:[#allocation12 + $0xa0] sm:$0xff]
    %v1376 = vld [vmem:[#allocation12 + $0xa8] sm:$0xff]
    %v1377 = vld [vmem:[#allocation12 + $0xb0] sm:$0xff]
    %v1378 = vld [vmem:[#allocation12 + $0xb8] sm:$0xff]
    %v1379 = vld [vmem:[#allocation12 + $0xc0] sm:$0xff]
    %v1380 = vld [vmem:[#allocation12 + $0xc8] sm:$0xff]
    %v1381 = vld [vmem:[#allocation12 + $0xd0] sm:$0xff]
    %v1382 = vld [vmem:[#allocation12 + $0xd8] sm:$0xff]
    %v1383 = vld [vmem:[#allocation12 + $0xe0] sm:$0xff]
    %v1384 = vld [vmem:[#allocation12 + $0xe8] sm:$0xff]
    %v1385 = vld [vmem:[#allocation12 + $0xf0] sm:$0xff]
    %v1386 = vld [vmem:[#allocation12 + $0xf8] sm:$0xff]
    %v1387 = vpack.c.bf16 %v1033, %v1033
    %v1388 = vld [vmem:[#allocation13] sm:$0xff]
    %v1389 = vld [vmem:[#allocation13 + $0x8] sm:$0xff]
    %v1390 = vld [vmem:[#allocation13 + $0x10] sm:$0xff]
    %v1391 = vld [vmem:[#allocation13 + $0x18] sm:$0xff]
    %v1392 = vld [vmem:[#allocation13 + $0x20] sm:$0xff]
    %v1393 = vld [vmem:[#allocation13 + $0x28] sm:$0xff]
    %v1394 = vld [vmem:[#allocation13 + $0x30] sm:$0xff]
    %v1395 = vld [vmem:[#allocation13 + $0x38] sm:$0xff]
    %v1396 = vld [vmem:[#allocation13 + $0x40] sm:$0xff]
    %v1397 = vld [vmem:[#allocation13 + $0x48] sm:$0xff]
    %v1398 = vld [vmem:[#allocation13 + $0x50] sm:$0xff]
    %v1399 = vld [vmem:[#allocation13 + $0x58] sm:$0xff]
    %v1400 = vld [vmem:[#allocation13 + $0x60] sm:$0xff]
    %v1401 = vld [vmem:[#allocation13 + $0x68] sm:$0xff]
    %v1402 = vld [vmem:[#allocation13 + $0x70] sm:$0xff]
    %v1403 = vld [vmem:[#allocation13 + $0x78] sm:$0xff]
    %v1404 = vld [vmem:[#allocation13 + $0x80] sm:$0xff]
    %v1405 = vld [vmem:[#allocation13 + $0x88] sm:$0xff]
    %v1406 = vld [vmem:[#allocation13 + $0x90] sm:$0xff]
    %v1407 = vld [vmem:[#allocation13 + $0x98] sm:$0xff]
    %v1408 = vld [vmem:[#allocation13 + $0xa0] sm:$0xff]
    %v1409 = vld [vmem:[#allocation13 + $0xa8] sm:$0xff]
    %v1410 = vld [vmem:[#allocation13 + $0xb0] sm:$0xff]
    %v1411 = vld [vmem:[#allocation13 + $0xb8] sm:$0xff]
    %v1412 = vld [vmem:[#allocation13 + $0xc0] sm:$0xff]
    %v1413 = vld [vmem:[#allocation13 + $0xc8] sm:$0xff]
    %v1414 = vld [vmem:[#allocation13 + $0xd0] sm:$0xff]
    %v1415 = vld [vmem:[#allocation13 + $0xd8] sm:$0xff]
    %v1416 = vld [vmem:[#allocation13 + $0xe0] sm:$0xff]
    %v1417 = vld [vmem:[#allocation13 + $0xe8] sm:$0xff]
    %v1418 = vld [vmem:[#allocation13 + $0xf0] sm:$0xff]
    %v1419 = vld [vmem:[#allocation13 + $0xf8] sm:$0xff]
    %v1452 = vunpack.c.l.b16 %v1388
    %v1453 = vunpack.c.h.b16 %v1388
    %v1454 = vunpack.c.l.b16 %v1389
    %v1455 = vunpack.c.h.b16 %v1389
    %v1456 = vunpack.c.l.b16 %v1390
    %v1457 = vunpack.c.h.b16 %v1390
    %v1458 = vunpack.c.l.b16 %v1391
    %v1459 = vunpack.c.h.b16 %v1391
    %v1460 = vunpack.c.l.b16 %v1392
    %v1461 = vunpack.c.h.b16 %v1392
    %v1462 = vunpack.c.l.b16 %v1393
    %v1463 = vunpack.c.h.b16 %v1393
    %v1464 = vunpack.c.l.b16 %v1394
    %v1465 = vunpack.c.h.b16 %v1394
    %v1466 = vunpack.c.l.b16 %v1395
    %v1467 = vunpack.c.h.b16 %v1395
    %v1468 = vunpack.c.l.b16 %v1396
    %v1469 = vunpack.c.h.b16 %v1396
    %v1470 = vunpack.c.l.b16 %v1397
    %v1471 = vunpack.c.h.b16 %v1397
    %v1472 = vunpack.c.l.b16 %v1398
    %v1473 = vunpack.c.h.b16 %v1398
    %v1474 = vunpack.c.l.b16 %v1399
    %v1475 = vunpack.c.h.b16 %v1399
    %v1476 = vunpack.c.l.b16 %v1400
    %v1477 = vunpack.c.h.b16 %v1400
    %v1478 = vunpack.c.l.b16 %v1401
    %v1479 = vunpack.c.h.b16 %v1401
    %v1480 = vunpack.c.l.b16 %v1402
    %v1481 = vunpack.c.h.b16 %v1402
    %v1482 = vunpack.c.l.b16 %v1403
    %v1483 = vunpack.c.h.b16 %v1403
    %v1484 = vunpack.c.l.b16 %v1404
    %v1485 = vunpack.c.h.b16 %v1404
    %v1486 = vunpack.c.l.b16 %v1405
    %v1487 = vunpack.c.h.b16 %v1405
    %v1488 = vunpack.c.l.b16 %v1406
    %v1489 = vunpack.c.h.b16 %v1406
    %v1490 = vunpack.c.l.b16 %v1407
    %v1491 = vunpack.c.h.b16 %v1407
    %v1492 = vunpack.c.l.b16 %v1408
    %v1493 = vunpack.c.h.b16 %v1408
    %v1494 = vunpack.c.l.b16 %v1409
    %v1495 = vunpack.c.h.b16 %v1409
    %v1496 = vunpack.c.l.b16 %v1410
    %v1497 = vunpack.c.h.b16 %v1410
    %v1498 = vunpack.c.l.b16 %v1411
    %v1499 = vunpack.c.h.b16 %v1411
    %v1500 = vunpack.c.l.b16 %v1412
    %v1501 = vunpack.c.h.b16 %v1412
    %v1502 = vunpack.c.l.b16 %v1413
    %v1503 = vunpack.c.h.b16 %v1413
    %v1504 = vunpack.c.l.b16 %v1414
    %v1505 = vunpack.c.h.b16 %v1414
    %v1506 = vunpack.c.l.b16 %v1415
    %v1507 = vunpack.c.h.b16 %v1415
    %v1508 = vunpack.c.l.b16 %v1416
    %v1509 = vunpack.c.h.b16 %v1416
    %v1510 = vunpack.c.l.b16 %v1417
    %v1511 = vunpack.c.h.b16 %v1417
    %v1512 = vunpack.c.l.b16 %v1418
    %v1513 = vunpack.c.h.b16 %v1418
    %v1514 = vunpack.c.l.b16 %v1419
    %v1515 = vunpack.c.h.b16 %v1419
    %v1516 = vpack.c.b16 %v1456, %v1452
    %v1517 = vpack.c.b16 %v1457, %v1453
    %v1518 = vpack.c.b16 %v1458, %v1454
    %v1519 = vpack.c.b16 %v1459, %v1455
    %v1520 = vpack.c.b16 %v1464, %v1460
    %v1521 = vpack.c.b16 %v1465, %v1461
    %v1522 = vpack.c.b16 %v1466, %v1462
    %v1523 = vpack.c.b16 %v1467, %v1463
    %v1524 = vpack.c.b16 %v1472, %v1468
    %v1525 = vpack.c.b16 %v1473, %v1469
    %v1526 = vpack.c.b16 %v1474, %v1470
    %v1527 = vpack.c.b16 %v1475, %v1471
    %v1528 = vpack.c.b16 %v1480, %v1476
    %v1529 = vpack.c.b16 %v1481, %v1477
    %v1530 = vpack.c.b16 %v1482, %v1478
    %v1531 = vpack.c.b16 %v1483, %v1479
    %v1532 = vpack.c.b16 %v1488, %v1484
    %v1533 = vpack.c.b16 %v1489, %v1485
    %v1534 = vpack.c.b16 %v1490, %v1486
    %v1535 = vpack.c.b16 %v1491, %v1487
    %v1536 = vpack.c.b16 %v1496, %v1492
    %v1537 = vpack.c.b16 %v1497, %v1493
    %v1538 = vpack.c.b16 %v1498, %v1494
    %v1539 = vpack.c.b16 %v1499, %v1495
    %v1540 = vpack.c.b16 %v1504, %v1500
    %v1541 = vpack.c.b16 %v1505, %v1501
    %v1542 = vpack.c.b16 %v1506, %v1502
    %v1543 = vpack.c.b16 %v1507, %v1503
    %v1544 = vpack.c.b16 %v1512, %v1508
    %v1545 = vpack.c.b16 %v1513, %v1509
    %v1546 = vpack.c.b16 %v1514, %v1510
    %v1547 = vpack.c.b16 %v1515, %v1511
    %1580 = vmatprep.subr.bf16.mxu0 %v1517
    %1581 = vmatpush1.bf16.msra.mxu0 %v1516
    %1582 = vmatprep.subr.bf16.mxu0 %v1521
    %1583 = vmatpush1.bf16.msra.mxu0 %v1520
    %1584 = vmatprep.subr.bf16.mxu0 %v1525
    %1585 = vmatpush1.bf16.msra.mxu0 %v1524
    %1586 = vmatprep.subr.bf16.mxu0 %v1529
    %1587 = vmatpush1.bf16.msra.mxu0 %v1528
    %1588 = vmatprep.subr.bf16.mxu0 %v1533
    %1589 = vmatpush1.bf16.msra.mxu0 %v1532
    %1590 = vmatprep.subr.bf16.mxu0 %v1537
    %1591 = vmatpush1.bf16.msra.mxu0 %v1536
    %1592 = vmatprep.subr.bf16.mxu0 %v1541
    %1593 = vmatpush1.bf16.msra.mxu0 %v1540
    %1594 = vmatprep.subr.bf16.mxu0 %v1545
    %1595 = vmatpush1.bf16.msra.mxu0 %v1544
    %1596 = vmatprep.subr.bf16.mxu0 0
    %1597 = vmatpush1.bf16.msra.mxu0 0
    %1598 = vmatprep.subr.bf16.mxu0 0
    %1599 = vmatpush1.bf16.msra.mxu0 0
    %1600 = vmatprep.subr.bf16.mxu0 0
    %1601 = vmatpush1.bf16.msra.mxu0 0
    %1602 = vmatprep.subr.bf16.mxu0 0
    %1603 = vmatpush1.bf16.msra.mxu0 0
    %1604 = vmatprep.subr.bf16.mxu0 0
    %1605 = vmatpush1.bf16.msra.mxu0 0
    %1606 = vmatprep.subr.bf16.mxu0 0
    %1607 = vmatpush1.bf16.msra.mxu0 0
    %1608 = vmatprep.subr.bf16.mxu0 0
    %1609 = vmatpush1.bf16.msra.mxu0 0
    %1610 = vmatprep.subr.bf16.mxu0 0
    %1611 = vmatpush1.bf16.msra.mxu0 0
    %1612 = vmatprep.mubr.bf16.mxu0 0
    %1613 = vmatmul.mubr.bf16.gmra.mrb[0].mxu0 %v1387
    %v1614 = vpop.f32.mrb[0].mxu0
    %v1615 = vadd.f32 0.0, %v1614
    %v1616 = vpop.f32.mrb[0].mxu0
    %v1617 = vadd.f32 0.0, %v1616
    %v1618 = vpop.f32.mrb[0].mxu0
    %v1619 = vpop.f32.mrb[0].mxu0
    %1620 = vdwg.mxu0
    %1621 = vmatprep.subr.bf16.mxu0 %v1519
    %1622 = vmatpush1.bf16.msra.mxu0 %v1518
    %1623 = vmatprep.subr.bf16.mxu0 %v1523
    %1624 = vmatpush1.bf16.msra.mxu0 %v1522
    %1625 = vmatprep.subr.bf16.mxu0 %v1527
    %1626 = vmatpush1.bf16.msra.mxu0 %v1526
    %1627 = vmatprep.subr.bf16.mxu0 %v1531
    %1628 = vmatpush1.bf16.msra.mxu0 %v1530
    %1629 = vmatprep.subr.bf16.mxu0 %v1535
    %1630 = vmatpush1.bf16.msra.mxu0 %v1534
    %1631 = vmatprep.subr.bf16.mxu0 %v1539
    %1632 = vmatpush1.bf16.msra.mxu0 %v1538
    %1633 = vmatprep.subr.bf16.mxu0 %v1543
    %1634 = vmatpush1.bf16.msra.mxu0 %v1542
    %1635 = vmatprep.subr.bf16.mxu0 %v1547
    %1636 = vmatpush1.bf16.msra.mxu0 %v1546
    %1637 = vmatprep.subr.bf16.mxu0 0
    %1638 = vmatpush1.bf16.msra.mxu0 0
    %1639 = vmatprep.subr.bf16.mxu0 0
    %1640 = vmatpush1.bf16.msra.mxu0 0
    %1641 = vmatprep.subr.bf16.mxu0 0
    %1642 = vmatpush1.bf16.msra.mxu0 0
    %1643 = vmatprep.subr.bf16.mxu0 0
    %1644 = vmatpush1.bf16.msra.mxu0 0
    %1645 = vmatprep.subr.bf16.mxu0 0
    %1646 = vmatpush1.bf16.msra.mxu0 0
    %1647 = vmatprep.subr.bf16.mxu0 0
    %1648 = vmatpush1.bf16.msra.mxu0 0
    %1649 = vmatprep.subr.bf16.mxu0 0
    %1650 = vmatpush1.bf16.msra.mxu0 0
    %1651 = vmatprep.subr.bf16.mxu0 0
    %1652 = vmatpush1.bf16.msra.mxu0 0
    %1653 = vmatprep.mubr.bf16.mxu0 0
    %1654 = vmatmul.mubr.bf16.gmra.mrb[0].mxu0 %v1387
    %v1655 = vpop.f32.mrb[0].mxu0
    %v1656 = vadd.f32 0.0, %v1655
    %v1657 = vpop.f32.mrb[0].mxu0
    %v1658 = vadd.f32 0.0, %v1657
    %v1659 = vpop.f32.mrb[0].mxu0
    %v1660 = vpop.f32.mrb[0].mxu0
    %1661 = vdwg.mxu0
    %v1694 = vunpack.c.l.b16 %v1355
    %v1695 = vunpack.c.h.b16 %v1355
    %v1696 = vunpack.c.l.b16 %v1356
    %v1697 = vunpack.c.h.b16 %v1356
    %v1698 = vunpack.c.l.b16 %v1357
    %v1699 = vunpack.c.h.b16 %v1357
    %v1700 = vunpack.c.l.b16 %v1358
    %v1701 = vunpack.c.h.b16 %v1358
    %v1702 = vunpack.c.l.b16 %v1359
    %v1703 = vunpack.c.h.b16 %v1359
    %v1704 = vunpack.c.l.b16 %v1360
    %v1705 = vunpack.c.h.b16 %v1360
    %v1706 = vunpack.c.l.b16 %v1361
    %v1707 = vunpack.c.h.b16 %v1361
    %v1708 = vunpack.c.l.b16 %v1362
    %v1709 = vunpack.c.h.b16 %v1362
    %v1710 = vunpack.c.l.b16 %v1363
    %v1711 = vunpack.c.h.b16 %v1363
    %v1712 = vunpack.c.l.b16 %v1364
    %v1713 = vunpack.c.h.b16 %v1364
    %v1714 = vunpack.c.l.b16 %v1365
    %v1715 = vunpack.c.h.b16 %v1365
    %v1716 = vunpack.c.l.b16 %v1366
    %v1717 = vunpack.c.h.b16 %v1366
    %v1718 = vunpack.c.l.b16 %v1367
    %v1719 = vunpack.c.h.b16 %v1367
    %v1720 = vunpack.c.l.b16 %v1368
    %v1721 = vunpack.c.h.b16 %v1368
    %v1722 = vunpack.c.l.b16 %v1369
    %v1723 = vunpack.c.h.b16 %v1369
    %v1724 = vunpack.c.l.b16 %v1370
    %v1725 = vunpack.c.h.b16 %v1370
    %v1726 = vunpack.c.l.b16 %v1371
    %v1727 = vunpack.c.h.b16 %v1371
    %v1728 = vunpack.c.l.b16 %v1372
    %v1729 = vunpack.c.h.b16 %v1372
    %v1730 = vunpack.c.l.b16 %v1373
    %v1731 = vunpack.c.h.b16 %v1373
    %v1732 = vunpack.c.l.b16 %v1374
    %v1733 = vunpack.c.h.b16 %v1374
    %v1734 = vunpack.c.l.b16 %v1375
    %v1735 = vunpack.c.h.b16 %v1375
    %v1736 = vunpack.c.l.b16 %v1376
    %v1737 = vunpack.c.h.b16 %v1376
    %v1738 = vunpack.c.l.b16 %v1377
    %v1739 = vunpack.c.h.b16 %v1377
    %v1740 = vunpack.c.l.b16 %v1378
    %v1741 = vunpack.c.h.b16 %v1378
    %v1742 = vunpack.c.l.b16 %v1379
    %v1743 = vunpack.c.h.b16 %v1379
    %v1744 = vunpack.c.l.b16 %v1380
    %v1745 = vunpack.c.h.b16 %v1380
    %v1746 = vunpack.c.l.b16 %v1381
    %v1747 = vunpack.c.h.b16 %v1381
    %v1748 = vunpack.c.l.b16 %v1382
    %v1749 = vunpack.c.h.b16 %v1382
    %v1750 = vunpack.c.l.b16 %v1383
    %v1751 = vunpack.c.h.b16 %v1383
    %v1752 = vunpack.c.l.b16 %v1384
    %v1753 = vunpack.c.h.b16 %v1384
    %v1754 = vunpack.c.l.b16 %v1385
    %v1755 = vunpack.c.h.b16 %v1385
    %v1756 = vunpack.c.l.b16 %v1386
    %v1757 = vunpack.c.h.b16 %v1386
    %v1758 = vpack.c.b16 %v1698, %v1694
    %v1759 = vpack.c.b16 %v1699, %v1695
    %v1760 = vpack.c.b16 %v1700, %v1696
    %v1761 = vpack.c.b16 %v1701, %v1697
    %v1762 = vpack.c.b16 %v1706, %v1702
    %v1763 = vpack.c.b16 %v1707, %v1703
    %v1764 = vpack.c.b16 %v1708, %v1704
    %v1765 = vpack.c.b16 %v1709, %v1705
    %v1766 = vpack.c.b16 %v1714, %v1710
    %v1767 = vpack.c.b16 %v1715, %v1711
    %v1768 = vpack.c.b16 %v1716, %v1712
    %v1769 = vpack.c.b16 %v1717, %v1713
    %v1770 = vpack.c.b16 %v1722, %v1718
    %v1771 = vpack.c.b16 %v1723, %v1719
    %v1772 = vpack.c.b16 %v1724, %v1720
    %v1773 = vpack.c.b16 %v1725, %v1721
    %v1774 = vpack.c.b16 %v1730, %v1726
    %v1775 = vpack.c.b16 %v1731, %v1727
    %v1776 = vpack.c.b16 %v1732, %v1728
    %v1777 = vpack.c.b16 %v1733, %v1729
    %v1778 = vpack.c.b16 %v1738, %v1734
    %v1779 = vpack.c.b16 %v1739, %v1735
    %v1780 = vpack.c.b16 %v1740, %v1736
    %v1781 = vpack.c.b16 %v1741, %v1737
    %v1782 = vpack.c.b16 %v1746, %v1742
    %v1783 = vpack.c.b16 %v1747, %v1743
    %v1784 = vpack.c.b16 %v1748, %v1744
    %v1785 = vpack.c.b16 %v1749, %v1745
    %v1786 = vpack.c.b16 %v1754, %v1750
    %v1787 = vpack.c.b16 %v1755, %v1751
    %v1788 = vpack.c.b16 %v1756, %v1752
    %v1789 = vpack.c.b16 %v1757, %v1753
    %1822 = vmatprep.subr.bf16.mxu0 %v1759
    %1823 = vmatpush1.bf16.msra.mxu0 %v1758
    %1824 = vmatprep.subr.bf16.mxu0 %v1763
    %1825 = vmatpush1.bf16.msra.mxu0 %v1762
    %1826 = vmatprep.subr.bf16.mxu0 %v1767
    %1827 = vmatpush1.bf16.msra.mxu0 %v1766
    %1828 = vmatprep.subr.bf16.mxu0 %v1771
    %1829 = vmatpush1.bf16.msra.mxu0 %v1770
    %1830 = vmatprep.subr.bf16.mxu0 %v1775
    %1831 = vmatpush1.bf16.msra.mxu0 %v1774
    %1832 = vmatprep.subr.bf16.mxu0 %v1779
    %1833 = vmatpush1.bf16.msra.mxu0 %v1778
    %1834 = vmatprep.subr.bf16.mxu0 %v1783
    %1835 = vmatpush1.bf16.msra.mxu0 %v1782
    %1836 = vmatprep.subr.bf16.mxu0 %v1787
    %1837 = vmatpush1.bf16.msra.mxu0 %v1786
    %1838 = vmatprep.subr.bf16.mxu0 0
    %1839 = vmatpush1.bf16.msra.mxu0 0
    %1840 = vmatprep.subr.bf16.mxu0 0
    %1841 = vmatpush1.bf16.msra.mxu0 0
    %1842 = vmatprep.subr.bf16.mxu0 0
    %1843 = vmatpush1.bf16.msra.mxu0 0
    %1844 = vmatprep.subr.bf16.mxu0 0
    %1845 = vmatpush1.bf16.msra.mxu0 0
    %1846 = vmatprep.subr.bf16.mxu0 0
    %1847 = vmatpush1.bf16.msra.mxu0 0
    %1848 = vmatprep.subr.bf16.mxu0 0
    %1849 = vmatpush1.bf16.msra.mxu0 0
    %1850 = vmatprep.subr.bf16.mxu0 0
    %1851 = vmatpush1.bf16.msra.mxu0 0
    %1852 = vmatprep.subr.bf16.mxu0 0
    %1853 = vmatpush1.bf16.msra.mxu0 0
    %1854 = vmatprep.mubr.bf16.mxu0 0
    %1855 = vmatmul.mubr.bf16.gmra.mrb[0].mxu0 %v1354
    %v1856 = vpop.f32.mrb[0].mxu0
    %v1857 = vadd.f32 %v1615, %v1856
    %v1858 = vpop.f32.mrb[0].mxu0
    %v1859 = vadd.f32 %v1617, %v1858
    %v1860 = vpop.f32.mrb[0].mxu0
    %v1861 = vpop.f32.mrb[0].mxu0
    %1862 = vdwg.mxu0
    %1863 = vmatprep.subr.bf16.mxu0 %v1761
    %1864 = vmatpush1.bf16.msra.mxu0 %v1760
    %1865 = vmatprep.subr.bf16.mxu0 %v1765
    %1866 = vmatpush1.bf16.msra.mxu0 %v1764
    %1867 = vmatprep.subr.bf16.mxu0 %v1769
    %1868 = vmatpush1.bf16.msra.mxu0 %v1768
    %1869 = vmatprep.subr.bf16.mxu0 %v1773
    %1870 = vmatpush1.bf16.msra.mxu0 %v1772
    %1871 = vmatprep.subr.bf16.mxu0 %v1777
    %1872 = vmatpush1.bf16.msra.mxu0 %v1776
    %1873 = vmatprep.subr.bf16.mxu0 %v1781
    %1874 = vmatpush1.bf16.msra.mxu0 %v1780
    %1875 = vmatprep.subr.bf16.mxu0 %v1785
    %1876 = vmatpush1.bf16.msra.mxu0 %v1784
    %1877 = vmatprep.subr.bf16.mxu0 %v1789
    %1878 = vmatpush1.bf16.msra.mxu0 %v1788
    %1879 = vmatprep.subr.bf16.mxu0 0
    %1880 = vmatpush1.bf16.msra.mxu0 0
    %1881 = vmatprep.subr.bf16.mxu0 0
    %1882 = vmatpush1.bf16.msra.mxu0 0
    %1883 = vmatprep.subr.bf16.mxu0 0
    %1884 = vmatpush1.bf16.msra.mxu0 0
    %1885 = vmatprep.subr.bf16.mxu0 0
    %1886 = vmatpush1.bf16.msra.mxu0 0
    %1887 = vmatprep.subr.bf16.mxu0 0
    %1888 = vmatpush1.bf16.msra.mxu0 0
    %1889 = vmatprep.subr.bf16.mxu0 0
    %1890 = vmatpush1.bf16.msra.mxu0 0
    %1891 = vmatprep.subr.bf16.mxu0 0
    %1892 = vmatpush1.bf16.msra.mxu0 0
    %1893 = vmatprep.subr.bf16.mxu0 0
    %1894 = vmatpush1.bf16.msra.mxu0 0
    %1895 = vmatprep.mubr.bf16.mxu0 0
    %1896 = vmatmul.mubr.bf16.gmra.mrb[0].mxu0 %v1354
    %v1897 = vpop.f32.mrb[0].mxu0
    %v1898 = vadd.f32 %v1656, %v1897
    %v1899 = vpop.f32.mrb[0].mxu0
    %v1900 = vadd.f32 %v1658, %v1899
    %v1901 = vpop.f32.mrb[0].mxu0
    %v1902 = vpop.f32.mrb[0].mxu0
    %1903 = vdwg.mxu0
    %v1904 = vadd.f32 %v1857, %v117
    %v1905 = vadd.f32 %v1859, %v121
    %v1906 = vadd.f32 %v1898, %v125
    %v1907 = vadd.f32 %v1900, %v129
    %v1908 = vxor.u32 %v1904, 2147483648
    %v1909 = vmul.f32 %v1908, 1.442695
    %v1910 = vpow.pop %v1909
    %v1911 = vadd.f32 %v1910, 1.0
    %v1912 = vrcp.pop %v1911
    %v1913 = vmul.f32 1.0, %v1912
    %v1914 = vxor.u32 %v1905, 2147483648
    %v1915 = vmul.f32 %v1914, 1.442695
    %v1916 = vpow.pop %v1915
    %v1917 = vadd.f32 %v1916, 1.0
    %v1918 = vrcp.pop %v1917
    %v1919 = vmul.f32 1.0, %v1918
    %v1920 = vtanh.pop %v1906
    %v1921 = vxor.u32 %v1907, 2147483648
    %v1922 = vmul.f32 %v1921, 1.442695
    %v1923 = vpow.pop %v1922
    %v1924 = vadd.f32 %v1923, 1.0
    %v1925 = vrcp.pop %v1924
    %v1926 = vmul.f32 1.0, %v1925
    %v1927 = vmul.f32 %v1919, %v1034
    %v1928 = vmul.f32 %v1913, %v1920
    %v1929 = vadd.f32 %v1927, %v1928
    %v1930 = vtanh.pop %v1929
    %v1931 = vmul.f32 %v1926, %v1930
    %v1932 = vsel %vm1044, %v1931, %v1033
    %v1933 = vsel %vm1044, %v1929, %v1034
    %v1934 = vsel %vm1044, %v1931, 0.0
    %s1935 = scalar_lea.vmem [#allocation6], 8
    %1936 = vst [vmem:[%s1935] sm:$0xff] %v1934
    %s1937 = sadd.s32 %s134, 2
    %v1938 = vstv %s1937
    %vm1939 = vcmp.gt.s32.totalorder %v111, %v1938
    %v1940 = vsel %vm1939, 1, 0
    %1941 = vset.pattern.permute.xlu0 0
    %1942 = vperm.xlu0 %1941, %v1940
    %v1943 = vpop.permute.xlu0 %1942
    %vm1944 = vcmp.eq.s32.totalorder %v1943, 1
    %s1945 = scalar_lea.vmem [#allocation7], 64
    %v1946 = vld [vmem:[%s1945] sm:$0xff]
    %v1947 = vld [vmem:[%s1945 + $0x8] sm:$0xff]
    %v1948 = vld [vmem:[%s1945 + $0x10] sm:$0xff]
    %v1949 = vld [vmem:[%s1945 + $0x18] sm:$0xff]
    %v1950 = vld [vmem:[#allocation10] sm:$0xff]
    %v1951 = vld [vmem:[#allocation10 + $0x8] sm:$0xff]
    %v1952 = vld [vmem:[#allocation10 + $0x10] sm:$0xff]
    %v1953 = vld [vmem:[#allocation10 + $0x18] sm:$0xff]
    %v1954 = vld [vmem:[#allocation10 + $0x20] sm:$0xff]
    %v1955 = vld [vmem:[#allocation10 + $0x28] sm:$0xff]
    %v1956 = vld [vmem:[#allocation10 + $0x30] sm:$0xff]
    %v1957 = vld [vmem:[#allocation10 + $0x38] sm:$0xff]
    %v1958 = vld [vmem:[#allocation10 + $0x40] sm:$0xff]
    %v1959 = vld [vmem:[#allocation10 + $0x48] sm:$0xff]
    %v1960 = vld [vmem:[#allocation10 + $0x50] sm:$0xff]
    %v1961 = vld [vmem:[#allocation10 + $0x58] sm:$0xff]
    %v1962 = vld [vmem:[#allocation10 + $0x60] sm:$0xff]
    %v1963 = vld [vmem:[#allocation10 + $0x68] sm:$0xff]
    %v1964 = vld [vmem:[#allocation10 + $0x70] sm:$0xff]
    %v1965 = vld [vmem:[#allocation10 + $0x78] sm:$0xff]
    %v1966 = vld [vmem:[#allocation10 + $0x80] sm:$0xff]
    %v1967 = vld [vmem:[#allocation10 + $0x88] sm:$0xff]
    %v1968 = vld [vmem:[#allocation10 + $0x90] sm:$0xff]
    %v1969 = vld [vmem:[#allocation10 + $0x98] sm:$0xff]
    %v1970 = vld [vmem:[#allocation10 + $0xa0] sm:$0xff]
    %v1971 = vld [vmem:[#allocation10 + $0xa8] sm:$0xff]
    %v1972 = vld [vmem:[#allocation10 + $0xb0] sm:$0xff]
    %v1973 = vld [vmem:[#allocation10 + $0xb8] sm:$0xff]
    %v1974 = vld [vmem:[#allocation10 + $0xc0] sm:$0xff]
    %v1975 = vld [vmem:[#allocation10 + $0xc8] sm:$0xff]
    %v1976 = vld [vmem:[#allocation10 + $0xd0] sm:$0xff]
    %v1977 = vld [vmem:[#allocation10 + $0xd8] sm:$0xff]
    %v1978 = vld [vmem:[#allocation10 + $0xe0] sm:$0xff]
    %v1979 = vld [vmem:[#allocation10 + $0xe8] sm:$0xff]
    %v1980 = vld [vmem:[#allocation10 + $0xf0] sm:$0xff]
    %v1981 = vld [vmem:[#allocation10 + $0xf8] sm:$0xff]
    %v2014 = vunpack.c.l.b16 %v1950
    %v2015 = vunpack.c.h.b16 %v1950
    %v2016 = vunpack.c.l.b16 %v1951
    %v2017 = vunpack.c.h.b16 %v1951
    %v2018 = vunpack.c.l.b16 %v1952
    %v2019 = vunpack.c.h.b16 %v1952
    %v2020 = vunpack.c.l.b16 %v1953
    %v2021 = vunpack.c.h.b16 %v1953
    %v2022 = vunpack.c.l.b16 %v1954
    %v2023 = vunpack.c.h.b16 %v1954
    %v2024 = vunpack.c.l.b16 %v1955
    %v2025 = vunpack.c.h.b16 %v1955
    %v2026 = vunpack.c.l.b16 %v1956
    %v2027 = vunpack.c.h.b16 %v1956
    %v2028 = vunpack.c.l.b16 %v1957
    %v2029 = vunpack.c.h.b16 %v1957
    %v2030 = vunpack.c.l.b16 %v1958
    %v2031 = vunpack.c.h.b16 %v1958
    %v2032 = vunpack.c.l.b16 %v1959
    %v2033 = vunpack.c.h.b16 %v1959
    %v2034 = vunpack.c.l.b16 %v1960
    %v2035 = vunpack.c.h.b16 %v1960
    %v2036 = vunpack.c.l.b16 %v1961
    %v2037 = vunpack.c.h.b16 %v1961
    %v2038 = vunpack.c.l.b16 %v1962
    %v2039 = vunpack.c.h.b16 %v1962
    %v2040 = vunpack.c.l.b16 %v1963
    %v2041 = vunpack.c.h.b16 %v1963
    %v2042 = vunpack.c.l.b16 %v1964
    %v2043 = vunpack.c.h.b16 %v1964
    %v2044 = vunpack.c.l.b16 %v1965
    %v2045 = vunpack.c.h.b16 %v1965
    %v2046 = vunpack.c.l.b16 %v1966
    %v2047 = vunpack.c.h.b16 %v1966
    %v2048 = vunpack.c.l.b16 %v1967
    %v2049 = vunpack.c.h.b16 %v1967
    %v2050 = vunpack.c.l.b16 %v1968
    %v2051 = vunpack.c.h.b16 %v1968
    %v2052 = vunpack.c.l.b16 %v1969
    %v2053 = vunpack.c.h.b16 %v1969
    %v2054 = vunpack.c.l.b16 %v1970
    %v2055 = vunpack.c.h.b16 %v1970
    %v2056 = vunpack.c.l.b16 %v1971
    %v2057 = vunpack.c.h.b16 %v1971
    %v2058 = vunpack.c.l.b16 %v1972
    %v2059 = vunpack.c.h.b16 %v1972
    %v2060 = vunpack.c.l.b16 %v1973
    %v2061 = vunpack.c.h.b16 %v1973
    %v2062 = vunpack.c.l.b16 %v1974
    %v2063 = vunpack.c.h.b16 %v1974
    %v2064 = vunpack.c.l.b16 %v1975
    %v2065 = vunpack.c.h.b16 %v1975
    %v2066 = vunpack.c.l.b16 %v1976
    %v2067 = vunpack.c.h.b16 %v1976
    %v2068 = vunpack.c.l.b16 %v1977
    %v2069 = vunpack.c.h.b16 %v1977
    %v2070 = vunpack.c.l.b16 %v1978
    %v2071 = vunpack.c.h.b16 %v1978
    %v2072 = vunpack.c.l.b16 %v1979
    %v2073 = vunpack.c.h.b16 %v1979
    %v2074 = vunpack.c.l.b16 %v1980
    %v2075 = vunpack.c.h.b16 %v1980
    %v2076 = vunpack.c.l.b16 %v1981
    %v2077 = vunpack.c.h.b16 %v1981
    %v2078 = vpack.c.b16 %v2018, %v2014
    %v2079 = vpack.c.b16 %v2019, %v2015
    %v2080 = vpack.c.b16 %v2020, %v2016
    %v2081 = vpack.c.b16 %v2021, %v2017
    %v2082 = vpack.c.b16 %v2026, %v2022
    %v2083 = vpack.c.b16 %v2027, %v2023
    %v2084 = vpack.c.b16 %v2028, %v2024
    %v2085 = vpack.c.b16 %v2029, %v2025
    %v2086 = vpack.c.b16 %v2034, %v2030
    %v2087 = vpack.c.b16 %v2035, %v2031
    %v2088 = vpack.c.b16 %v2036, %v2032
    %v2089 = vpack.c.b16 %v2037, %v2033
    %v2090 = vpack.c.b16 %v2042, %v2038
    %v2091 = vpack.c.b16 %v2043, %v2039
    %v2092 = vpack.c.b16 %v2044, %v2040
    %v2093 = vpack.c.b16 %v2045, %v2041
    %v2094 = vpack.c.b16 %v2050, %v2046
    %v2095 = vpack.c.b16 %v2051, %v2047
    %v2096 = vpack.c.b16 %v2052, %v2048
    %v2097 = vpack.c.b16 %v2053, %v2049
    %v2098 = vpack.c.b16 %v2058, %v2054
    %v2099 = vpack.c.b16 %v2059, %v2055
    %v2100 = vpack.c.b16 %v2060, %v2056
    %v2101 = vpack.c.b16 %v2061, %v2057
    %v2102 = vpack.c.b16 %v2066, %v2062
    %v2103 = vpack.c.b16 %v2067, %v2063
    %v2104 = vpack.c.b16 %v2068, %v2064
    %v2105 = vpack.c.b16 %v2069, %v2065
    %v2106 = vpack.c.b16 %v2074, %v2070
    %v2107 = vpack.c.b16 %v2075, %v2071
    %v2108 = vpack.c.b16 %v2076, %v2072
    %v2109 = vpack.c.b16 %v2077, %v2073
    %2142 = vmatprep.subr.bf16.mxu0 %v2079
    %2143 = vmatpush1.bf16.msra.mxu0 %v2078
    %2144 = vmatprep.subr.bf16.mxu0 %v2083
    %2145 = vmatpush1.bf16.msra.mxu0 %v2082
    %2146 = vmatprep.subr.bf16.mxu0 %v2087
    %2147 = vmatpush1.bf16.msra.mxu0 %v2086
    %2148 = vmatprep.subr.bf16.mxu0 %v2091
    %2149 = vmatpush1.bf16.msra.mxu0 %v2090
    %2150 = vmatprep.subr.bf16.mxu0 %v2095
    %2151 = vmatpush1.bf16.msra.mxu0 %v2094
    %2152 = vmatprep.subr.bf16.mxu0 %v2099
    %2153 = vmatpush1.bf16.msra.mxu0 %v2098
    %2154 = vmatprep.subr.bf16.mxu0 %v2103
    %2155 = vmatpush1.bf16.msra.mxu0 %v2102
    %2156 = vmatprep.subr.bf16.mxu0 %v2107
    %2157 = vmatpush1.bf16.msra.mxu0 %v2106
    %2158 = vmatprep.subr.bf16.mxu0 0
    %2159 = vmatpush1.bf16.msra.mxu0 0
    %2160 = vmatprep.subr.bf16.mxu0 0
    %2161 = vmatpush1.bf16.msra.mxu0 0
    %2162 = vmatprep.subr.bf16.mxu0 0
    %2163 = vmatpush1.bf16.msra.mxu0 0
    %2164 = vmatprep.subr.bf16.mxu0 0
    %2165 = vmatpush1.bf16.msra.mxu0 0
    %2166 = vmatprep.subr.bf16.mxu0 0
    %2167 = vmatpush1.bf16.msra.mxu0 0
    %2168 = vmatprep.subr.bf16.mxu0 0
    %2169 = vmatpush1.bf16.msra.mxu0 0
    %2170 = vmatprep.subr.bf16.mxu0 0
    %2171 = vmatpush1.bf16.msra.mxu0 0
    %2172 = vmatprep.subr.bf16.mxu0 0
    %2173 = vmatpush1.bf16.msra.mxu0 0
    %2174 = vmatprep.mubr.bf16.mxu0 0
    %2175 = vmatmul.mubr.bf16.gmra.mrb[0].mxu0 %v1354
    %v2176 = vpop.f32.mrb[0].mxu0
    %v2177 = vadd.f32 0.0, %v2176
    %v2178 = vpop.f32.mrb[0].mxu0
    %v2179 = vadd.f32 0.0, %v2178
    %v2180 = vpop.f32.mrb[0].mxu0
    %v2181 = vpop.f32.mrb[0].mxu0
    %2182 = vdwg.mxu0
    %2183 = vmatprep.subr.bf16.mxu0 %v2081
    %2184 = vmatpush1.bf16.msra.mxu0 %v2080
    %2185 = vmatprep.subr.bf16.mxu0 %v2085
    %2186 = vmatpush1.bf16.msra.mxu0 %v2084
    %2187 = vmatprep.subr.bf16.mxu0 %v2089
    %2188 = vmatpush1.bf16.msra.mxu0 %v2088
    %2189 = vmatprep.subr.bf16.mxu0 %v2093
    %2190 = vmatpush1.bf16.msra.mxu0 %v2092
    %2191 = vmatprep.subr.bf16.mxu0 %v2097
    %2192 = vmatpush1.bf16.msra.mxu0 %v2096
    %2193 = vmatprep.subr.bf16.mxu0 %v2101
    %2194 = vmatpush1.bf16.msra.mxu0 %v2100
    %2195 = vmatprep.subr.bf16.mxu0 %v2105
    %2196 = vmatpush1.bf16.msra.mxu0 %v2104
    %2197 = vmatprep.subr.bf16.mxu0 %v2109
    %2198 = vmatpush1.bf16.msra.mxu0 %v2108
    %2199 = vmatprep.subr.bf16.mxu0 0
    %2200 = vmatpush1.bf16.msra.mxu0 0
    %2201 = vmatprep.subr.bf16.mxu0 0
    %2202 = vmatpush1.bf16.msra.mxu0 0
    %2203 = vmatprep.subr.bf16.mxu0 0
    %2204 = vmatpush1.bf16.msra.mxu0 0
    %2205 = vmatprep.subr.bf16.mxu0 0
    %2206 = vmatpush1.bf16.msra.mxu0 0
    %2207 = vmatprep.subr.bf16.mxu0 0
    %2208 = vmatpush1.bf16.msra.mxu0 0
    %2209 = vmatprep.subr.bf16.mxu0 0
    %2210 = vmatpush1.bf16.msra.mxu0 0
    %2211 = vmatprep.subr.bf16.mxu0 0
    %2212 = vmatpush1.bf16.msra.mxu0 0
    %2213 = vmatprep.subr.bf16.mxu0 0
    %2214 = vmatpush1.bf16.msra.mxu0 0
    %2215 = vmatprep.mubr.bf16.mxu0 0
    %2216 = vmatmul.mubr.bf16.gmra.mrb[0].mxu0 %v1354
    %v2217 = vpop.f32.mrb[0].mxu0
    %v2218 = vadd.f32 0.0, %v2217
    %v2219 = vpop.f32.mrb[0].mxu0
    %v2220 = vadd.f32 0.0, %v2219
    %v2221 = vpop.f32.mrb[0].mxu0
    %v2222 = vpop.f32.mrb[0].mxu0
    %2223 = vdwg.mxu0
    %v2224 = vadd.f32 %v1946, %v2177
    %v2225 = vadd.f32 %v1947, %v2179
    %v2226 = vadd.f32 %v1948, %v2218
    %v2227 = vadd.f32 %v1949, %v2220
    %v2228 = vxor.u32 %v2224, 2147483648
    %v2229 = vmul.f32 %v2228, 1.442695
    %v2230 = vpow.pop %v2229
    %v2231 = vadd.f32 %v2230, 1.0
    %v2232 = vrcp.pop %v2231
    %v2233 = vmul.f32 1.0, %v2232
    %v2234 = vxor.u32 %v2225, 2147483648
    %v2235 = vmul.f32 %v2234, 1.442695
    %v2236 = vpow.pop %v2235
    %v2237 = vadd.f32 %v2236, 1.0
    %v2238 = vrcp.pop %v2237
    %v2239 = vmul.f32 1.0, %v2238
    %v2240 = vtanh.pop %v2226
    %v2241 = vxor.u32 %v2227, 2147483648
    %v2242 = vmul.f32 %v2241, 1.442695
    %v2243 = vpow.pop %v2242
    %v2244 = vadd.f32 %v2243, 1.0
    %v2245 = vrcp.pop %v2244
    %v2246 = vmul.f32 1.0, %v2245
    %v2247 = vmul.f32 %v2239, %v1353
    %v2248 = vmul.f32 %v2233, %v2240
    %v2249 = vadd.f32 %v2247, %v2248
    %v2250 = vtanh.pop %v2249
    %v2251 = vmul.f32 %v2246, %v2250
    %v2252 = vsel %vm1944, %v2251, %v1352
    %v2253 = vsel %vm1944, %v2249, %v1353
    %v2254 = vpack.c.bf16 %v2252, %v2252
    %v2255 = vld [vmem:[#allocation12] sm:$0xff]
    %v2256 = vld [vmem:[#allocation12 + $0x8] sm:$0xff]
    %v2257 = vld [vmem:[#allocation12 + $0x10] sm:$0xff]
    %v2258 = vld [vmem:[#allocation12 + $0x18] sm:$0xff]
    %v2259 = vld [vmem:[#allocation12 + $0x20] sm:$0xff]
    %v2260 = vld [vmem:[#allocation12 + $0x28] sm:$0xff]
    %v2261 = vld [vmem:[#allocation12 + $0x30] sm:$0xff]
    %v2262 = vld [vmem:[#allocation12 + $0x38] sm:$0xff]
    %v2263 = vld [vmem:[#allocation12 + $0x40] sm:$0xff]
    %v2264 = vld [vmem:[#allocation12 + $0x48] sm:$0xff]
    %v2265 = vld [vmem:[#allocation12 + $0x50] sm:$0xff]
    %v2266 = vld [vmem:[#allocation12 + $0x58] sm:$0xff]
    %v2267 = vld [vmem:[#allocation12 + $0x60] sm:$0xff]
    %v2268 = vld [vmem:[#allocation12 + $0x68] sm:$0xff]
    %v2269 = vld [vmem:[#allocation12 + $0x70] sm:$0xff]
    %v2270 = vld [vmem:[#allocation12 + $0x78] sm:$0xff]
    %v2271 = vld [vmem:[#allocation12 + $0x80] sm:$0xff]
    %v2272 = vld [vmem:[#allocation12 + $0x88] sm:$0xff]
    %v2273 = vld [vmem:[#allocation12 + $0x90] sm:$0xff]
    %v2274 = vld [vmem:[#allocation12 + $0x98] sm:$0xff]
    %v2275 = vld [vmem:[#allocation12 + $0xa0] sm:$0xff]
    %v2276 = vld [vmem:[#allocation12 + $0xa8] sm:$0xff]
    %v2277 = vld [vmem:[#allocation12 + $0xb0] sm:$0xff]
    %v2278 = vld [vmem:[#allocation12 + $0xb8] sm:$0xff]
    %v2279 = vld [vmem:[#allocation12 + $0xc0] sm:$0xff]
    %v2280 = vld [vmem:[#allocation12 + $0xc8] sm:$0xff]
    %v2281 = vld [vmem:[#allocation12 + $0xd0] sm:$0xff]
    %v2282 = vld [vmem:[#allocation12 + $0xd8] sm:$0xff]
    %v2283 = vld [vmem:[#allocation12 + $0xe0] sm:$0xff]
    %v2284 = vld [vmem:[#allocation12 + $0xe8] sm:$0xff]
    %v2285 = vld [vmem:[#allocation12 + $0xf0] sm:$0xff]
    %v2286 = vld [vmem:[#allocation12 + $0xf8] sm:$0xff]
    %v2287 = vpack.c.bf16 %v1932, %v1932
    %v2288 = vld [vmem:[#allocation13] sm:$0xff]
    %v2289 = vld [vmem:[#allocation13 + $0x8] sm:$0xff]
    %v2290 = vld [vmem:[#allocation13 + $0x10] sm:$0xff]
    %v2291 = vld [vmem:[#allocation13 + $0x18] sm:$0xff]
    %v2292 = vld [vmem:[#allocation13 + $0x20] sm:$0xff]
    %v2293 = vld [vmem:[#allocation13 + $0x28] sm:$0xff]
    %v2294 = vld [vmem:[#allocation13 + $0x30] sm:$0xff]
    %v2295 = vld [vmem:[#allocation13 + $0x38] sm:$0xff]
    %v2296 = vld [vmem:[#allocation13 + $0x40] sm:$0xff]
    %v2297 = vld [vmem:[#allocation13 + $0x48] sm:$0xff]
    %v2298 = vld [vmem:[#allocation13 + $0x50] sm:$0xff]
    %v2299 = vld [vmem:[#allocation13 + $0x58] sm:$0xff]
    %v2300 = vld [vmem:[#allocation13 + $0x60] sm:$0xff]
    %v2301 = vld [vmem:[#allocation13 + $0x68] sm:$0xff]
    %v2302 = vld [vmem:[#allocation13 + $0x70] sm:$0xff]
    %v2303 = vld [vmem:[#allocation13 + $0x78] sm:$0xff]
    %v2304 = vld [vmem:[#allocation13 + $0x80] sm:$0xff]
    %v2305 = vld [vmem:[#allocation13 + $0x88] sm:$0xff]
    %v2306 = vld [vmem:[#allocation13 + $0x90] sm:$0xff]
    %v2307 = vld [vmem:[#allocation13 + $0x98] sm:$0xff]
    %v2308 = vld [vmem:[#allocation13 + $0xa0] sm:$0xff]
    %v2309 = vld [vmem:[#allocation13 + $0xa8] sm:$0xff]
    %v2310 = vld [vmem:[#allocation13 + $0xb0] sm:$0xff]
    %v2311 = vld [vmem:[#allocation13 + $0xb8] sm:$0xff]
    %v2312 = vld [vmem:[#allocation13 + $0xc0] sm:$0xff]
    %v2313 = vld [vmem:[#allocation13 + $0xc8] sm:$0xff]
    %v2314 = vld [vmem:[#allocation13 + $0xd0] sm:$0xff]
    %v2315 = vld [vmem:[#allocation13 + $0xd8] sm:$0xff]
    %v2316 = vld [vmem:[#allocation13 + $0xe0] sm:$0xff]
    %v2317 = vld [vmem:[#allocation13 + $0xe8] sm:$0xff]
    %v2318 = vld [vmem:[#allocation13 + $0xf0] sm:$0xff]
    %v2319 = vld [vmem:[#allocation13 + $0xf8] sm:$0xff]
    %v2352 = vunpack.c.l.b16 %v2288
    %v2353 = vunpack.c.h.b16 %v2288
    %v2354 = vunpack.c.l.b16 %v2289
    %v2355 = vunpack.c.h.b16 %v2289
    %v2356 = vunpack.c.l.b16 %v2290
    %v2357 = vunpack.c.h.b16 %v2290
    %v2358 = vunpack.c.l.b16 %v2291
    %v2359 = vunpack.c.h.b16 %v2291
    %v2360 = vunpack.c.l.b16 %v2292
    %v2361 = vunpack.c.h.b16 %v2292
    %v2362 = vunpack.c.l.b16 %v2293
    %v2363 = vunpack.c.h.b16 %v2293
    %v2364 = vunpack.c.l.b16 %v2294
    %v2365 = vunpack.c.h.b16 %v2294
    %v2366 = vunpack.c.l.b16 %v2295
    %v2367 = vunpack.c.h.b16 %v2295
    %v2368 = vunpack.c.l.b16 %v2296
    %v2369 = vunpack.c.h.b16 %v2296
    %v2370 = vunpack.c.l.b16 %v2297
    %v2371 = vunpack.c.h.b16 %v2297
    %v2372 = vunpack.c.l.b16 %v2298
    %v2373 = vunpack.c.h.b16 %v2298
    %v2374 = vunpack.c.l.b16 %v2299
    %v2375 = vunpack.c.h.b16 %v2299
    %v2376 = vunpack.c.l.b16 %v2300
    %v2377 = vunpack.c.h.b16 %v2300
    %v2378 = vunpack.c.l.b16 %v2301
    %v2379 = vunpack.c.h.b16 %v2301
    %v2380 = vunpack.c.l.b16 %v2302
    %v2381 = vunpack.c.h.b16 %v2302
    %v2382 = vunpack.c.l.b16 %v2303
    %v2383 = vunpack.c.h.b16 %v2303
    %v2384 = vunpack.c.l.b16 %v2304
    %v2385 = vunpack.c.h.b16 %v2304
    %v2386 = vunpack.c.l.b16 %v2305
    %v2387 = vunpack.c.h.b16 %v2305
    %v2388 = vunpack.c.l.b16 %v2306
    %v2389 = vunpack.c.h.b16 %v2306
    %v2390 = vunpack.c.l.b16 %v2307
    %v2391 = vunpack.c.h.b16 %v2307
    %v2392 = vunpack.c.l.b16 %v2308
    %v2393 = vunpack.c.h.b16 %v2308
    %v2394 = vunpack.c.l.b16 %v2309
    %v2395 = vunpack.c.h.b16 %v2309
    %v2396 = vunpack.c.l.b16 %v2310
    %v2397 = vunpack.c.h.b16 %v2310
    %v2398 = vunpack.c.l.b16 %v2311
    %v2399 = vunpack.c.h.b16 %v2311
    %v2400 = vunpack.c.l.b16 %v2312
    %v2401 = vunpack.c.h.b16 %v2312
    %v2402 = vunpack.c.l.b16 %v2313
    %v2403 = vunpack.c.h.b16 %v2313
    %v2404 = vunpack.c.l.b16 %v2314
    %v2405 = vunpack.c.h.b16 %v2314
    %v2406 = vunpack.c.l.b16 %v2315
    %v2407 = vunpack.c.h.b16 %v2315
    %v2408 = vunpack.c.l.b16 %v2316
    %v2409 = vunpack.c.h.b16 %v2316
    %v2410 = vunpack.c.l.b16 %v2317
    %v2411 = vunpack.c.h.b16 %v2317
    %v2412 = vunpack.c.l.b16 %v2318
    %v2413 = vunpack.c.h.b16 %v2318
    %v2414 = vunpack.c.l.b16 %v2319
    %v2415 = vunpack.c.h.b16 %v2319
    %v2416 = vpack.c.b16 %v2356, %v2352
    %v2417 = vpack.c.b16 %v2357, %v2353
    %v2418 = vpack.c.b16 %v2358, %v2354
    %v2419 = vpack.c.b16 %v2359, %v2355
    %v2420 = vpack.c.b16 %v2364, %v2360
    %v2421 = vpack.c.b16 %v2365, %v2361
    %v2422 = vpack.c.b16 %v2366, %v2362
    %v2423 = vpack.c.b16 %v2367, %v2363
    %v2424 = vpack.c.b16 %v2372, %v2368
    %v2425 = vpack.c.b16 %v2373, %v2369
    %v2426 = vpack.c.b16 %v2374, %v2370
    %v2427 = vpack.c.b16 %v2375, %v2371
    %v2428 = vpack.c.b16 %v2380, %v2376
    %v2429 = vpack.c.b16 %v2381, %v2377
    %v2430 = vpack.c.b16 %v2382, %v2378
    %v2431 = vpack.c.b16 %v2383, %v2379
    %v2432 = vpack.c.b16 %v2388, %v2384
    %v2433 = vpack.c.b16 %v2389, %v2385
    %v2434 = vpack.c.b16 %v2390, %v2386
    %v2435 = vpack.c.b16 %v2391, %v2387
    %v2436 = vpack.c.b16 %v2396, %v2392
    %v2437 = vpack.c.b16 %v2397, %v2393
    %v2438 = vpack.c.b16 %v2398, %v2394
    %v2439 = vpack.c.b16 %v2399, %v2395
    %v2440 = vpack.c.b16 %v2404, %v2400
    %v2441 = vpack.c.b16 %v2405, %v2401
    %v2442 = vpack.c.b16 %v2406, %v2402
    %v2443 = vpack.c.b16 %v2407, %v2403
    %v2444 = vpack.c.b16 %v2412, %v2408
    %v2445 = vpack.c.b16 %v2413, %v2409
    %v2446 = vpack.c.b16 %v2414, %v2410
    %v2447 = vpack.c.b16 %v2415, %v2411
    %2480 = vmatprep.subr.bf16.mxu0 %v2417
    %2481 = vmatpush1.bf16.msra.mxu0 %v2416
    %2482 = vmatprep.subr.bf16.mxu0 %v2421
    %2483 = vmatpush1.bf16.msra.mxu0 %v2420
    %2484 = vmatprep.subr.bf16.mxu0 %v2425
    %2485 = vmatpush1.bf16.msra.mxu0 %v2424
    %2486 = vmatprep.subr.bf16.mxu0 %v2429
    %2487 = vmatpush1.bf16.msra.mxu0 %v2428
    %2488 = vmatprep.subr.bf16.mxu0 %v2433
    %2489 = vmatpush1.bf16.msra.mxu0 %v2432
    %2490 = vmatprep.subr.bf16.mxu0 %v2437
    %2491 = vmatpush1.bf16.msra.mxu0 %v2436
    %2492 = vmatprep.subr.bf16.mxu0 %v2441
    %2493 = vmatpush1.bf16.msra.mxu0 %v2440
    %2494 = vmatprep.subr.bf16.mxu0 %v2445
    %2495 = vmatpush1.bf16.msra.mxu0 %v2444
    %2496 = vmatprep.subr.bf16.mxu0 0
    %2497 = vmatpush1.bf16.msra.mxu0 0
    %2498 = vmatprep.subr.bf16.mxu0 0
    %2499 = vmatpush1.bf16.msra.mxu0 0
    %2500 = vmatprep.subr.bf16.mxu0 0
    %2501 = vmatpush1.bf16.msra.mxu0 0
    %2502 = vmatprep.subr.bf16.mxu0 0
    %2503 = vmatpush1.bf16.msra.mxu0 0
    %2504 = vmatprep.subr.bf16.mxu0 0
    %2505 = vmatpush1.bf16.msra.mxu0 0
    %2506 = vmatprep.subr.bf16.mxu0 0
    %2507 = vmatpush1.bf16.msra.mxu0 0
    %2508 = vmatprep.subr.bf16.mxu0 0
    %2509 = vmatpush1.bf16.msra.mxu0 0
    %2510 = vmatprep.subr.bf16.mxu0 0
    %2511 = vmatpush1.bf16.msra.mxu0 0
    %2512 = vmatprep.mubr.bf16.mxu0 0
    %2513 = vmatmul.mubr.bf16.gmra.mrb[0].mxu0 %v2287
    %v2514 = vpop.f32.mrb[0].mxu0
    %v2515 = vadd.f32 0.0, %v2514
    %v2516 = vpop.f32.mrb[0].mxu0
    %v2517 = vadd.f32 0.0, %v2516
    %v2518 = vpop.f32.mrb[0].mxu0
    %v2519 = vpop.f32.mrb[0].mxu0
    %2520 = vdwg.mxu0
    %2521 = vmatprep.subr.bf16.mxu0 %v2419
    %2522 = vmatpush1.bf16.msra.mxu0 %v2418
    %2523 = vmatprep.subr.bf16.mxu0 %v2423
    %2524 = vmatpush1.bf16.msra.mxu0 %v2422
    %2525 = vmatprep.subr.bf16.mxu0 %v2427
    %2526 = vmatpush1.bf16.msra.mxu0 %v2426
    %2527 = vmatprep.subr.bf16.mxu0 %v2431
    %2528 = vmatpush1.bf16.msra.mxu0 %v2430
    %2529 = vmatprep.subr.bf16.mxu0 %v2435
    %2530 = vmatpush1.bf16.msra.mxu0 %v2434
    %2531 = vmatprep.subr.bf16.mxu0 %v2439
    %2532 = vmatpush1.bf16.msra.mxu0 %v2438
    %2533 = vmatprep.subr.bf16.mxu0 %v2443
    %2534 = vmatpush1.bf16.msra.mxu0 %v2442
    %2535 = vmatprep.subr.bf16.mxu0 %v2447
    %2536 = vmatpush1.bf16.msra.mxu0 %v2446
    %2537 = vmatprep.subr.bf16.mxu0 0
    %2538 = vmatpush1.bf16.msra.mxu0 0
    %2539 = vmatprep.subr.bf16.mxu0 0
    %2540 = vmatpush1.bf16.msra.mxu0 0
    %2541 = vmatprep.subr.bf16.mxu0 0
    %2542 = vmatpush1.bf16.msra.mxu0 0
    %2543 = vmatprep.subr.bf16.mxu0 0
    %2544 = vmatpush1.bf16.msra.mxu0 0
    %2545 = vmatprep.subr.bf16.mxu0 0
    %2546 = vmatpush1.bf16.msra.mxu0 0
    %2547 = vmatprep.subr.bf16.mxu0 0
    %2548 = vmatpush1.bf16.msra.mxu0 0
    %2549 = vmatprep.subr.bf16.mxu0 0
    %2550 = vmatpush1.bf16.msra.mxu0 0
    %2551 = vmatprep.subr.bf16.mxu0 0
    %2552 = vmatpush1.bf16.msra.mxu0 0
    %2553 = vmatprep.mubr.bf16.mxu0 0
    %2554 = vmatmul.mubr.bf16.gmra.mrb[0].mxu0 %v2287
    %v2555 = vpop.f32.mrb[0].mxu0
    %v2556 = vadd.f32 0.0, %v2555
    %v2557 = vpop.f32.mrb[0].mxu0
    %v2558 = vadd.f32 0.0, %v2557
    %v2559 = vpop.f32.mrb[0].mxu0
    %v2560 = vpop.f32.mrb[0].mxu0
    %2561 = vdwg.mxu0
    %v2594 = vunpack.c.l.b16 %v2255
    %v2595 = vunpack.c.h.b16 %v2255
    %v2596 = vunpack.c.l.b16 %v2256
    %v2597 = vunpack.c.h.b16 %v2256
    %v2598 = vunpack.c.l.b16 %v2257
    %v2599 = vunpack.c.h.b16 %v2257
    %v2600 = vunpack.c.l.b16 %v2258
    %v2601 = vunpack.c.h.b16 %v2258
    %v2602 = vunpack.c.l.b16 %v2259
    %v2603 = vunpack.c.h.b16 %v2259
    %v2604 = vunpack.c.l.b16 %v2260
    %v2605 = vunpack.c.h.b16 %v2260
    %v2606 = vunpack.c.l.b16 %v2261
    %v2607 = vunpack.c.h.b16 %v2261
    %v2608 = vunpack.c.l.b16 %v2262
    %v2609 = vunpack.c.h.b16 %v2262
    %v2610 = vunpack.c.l.b16 %v2263
    %v2611 = vunpack.c.h.b16 %v2263
    %v2612 = vunpack.c.l.b16 %v2264
    %v2613 = vunpack.c.h.b16 %v2264
    %v2614 = vunpack.c.l.b16 %v2265
    %v2615 = vunpack.c.h.b16 %v2265
    %v2616 = vunpack.c.l.b16 %v2266
    %v2617 = vunpack.c.h.b16 %v2266
    %v2618 = vunpack.c.l.b16 %v2267
    %v2619 = vunpack.c.h.b16 %v2267
    %v2620 = vunpack.c.l.b16 %v2268
    %v2621 = vunpack.c.h.b16 %v2268
    %v2622 = vunpack.c.l.b16 %v2269
    %v2623 = vunpack.c.h.b16 %v2269
    %v2624 = vunpack.c.l.b16 %v2270
    %v2625 = vunpack.c.h.b16 %v2270
    %v2626 = vunpack.c.l.b16 %v2271
    %v2627 = vunpack.c.h.b16 %v2271
    %v2628 = vunpack.c.l.b16 %v2272
    %v2629 = vunpack.c.h.b16 %v2272
    %v2630 = vunpack.c.l.b16 %v2273
    %v2631 = vunpack.c.h.b16 %v2273
    %v2632 = vunpack.c.l.b16 %v2274
    %v2633 = vunpack.c.h.b16 %v2274
    %v2634 = vunpack.c.l.b16 %v2275
    %v2635 = vunpack.c.h.b16 %v2275
    %v2636 = vunpack.c.l.b16 %v2276
    %v2637 = vunpack.c.h.b16 %v2276
    %v2638 = vunpack.c.l.b16 %v2277
    %v2639 = vunpack.c.h.b16 %v2277
    %v2640 = vunpack.c.l.b16 %v2278
    %v2641 = vunpack.c.h.b16 %v2278
    %v2642 = vunpack.c.l.b16 %v2279
    %v2643 = vunpack.c.h.b16 %v2279
    %v2644 = vunpack.c.l.b16 %v2280
    %v2645 = vunpack.c.h.b16 %v2280
    %v2646 = vunpack.c.l.b16 %v2281
    %v2647 = vunpack.c.h.b16 %v2281
    %v2648 = vunpack.c.l.b16 %v2282
    %v2649 = vunpack.c.h.b16 %v2282
    %v2650 = vunpack.c.l.b16 %v2283
    %v2651 = vunpack.c.h.b16 %v2283
    %v2652 = vunpack.c.l.b16 %v2284
    %v2653 = vunpack.c.h.b16 %v2284
    %v2654 = vunpack.c.l.b16 %v2285
    %v2655 = vunpack.c.h.b16 %v2285
    %v2656 = vunpack.c.l.b16 %v2286
    %v2657 = vunpack.c.h.b16 %v2286
    %v2658 = vpack.c.b16 %v2598, %v2594
    %v2659 = vpack.c.b16 %v2599, %v2595
    %v2660 = vpack.c.b16 %v2600, %v2596
    %v2661 = vpack.c.b16 %v2601, %v2597
    %v2662 = vpack.c.b16 %v2606, %v2602
    %v2663 = vpack.c.b16 %v2607, %v2603
    %v2664 = vpack.c.b16 %v2608, %v2604
    %v2665 = vpack.c.b16 %v2609, %v2605
    %v2666 = vpack.c.b16 %v2614, %v2610
    %v2667 = vpack.c.b16 %v2615, %v2611
    %v2668 = vpack.c.b16 %v2616, %v2612
    %v2669 = vpack.c.b16 %v2617, %v2613
    %v2670 = vpack.c.b16 %v2622, %v2618
    %v2671 = vpack.c.b16 %v2623, %v2619
    %v2672 = vpack.c.b16 %v2624, %v2620
    %v2673 = vpack.c.b16 %v2625, %v2621
    %v2674 = vpack.c.b16 %v2630, %v2626
    %v2675 = vpack.c.b16 %v2631, %v2627
    %v2676 = vpack.c.b16 %v2632, %v2628
    %v2677 = vpack.c.b16 %v2633, %v2629
    %v2678 = vpack.c.b16 %v2638, %v2634
    %v2679 = vpack.c.b16 %v2639, %v2635
    %v2680 = vpack.c.b16 %v2640, %v2636
    %v2681 = vpack.c.b16 %v2641, %v2637
    %v2682 = vpack.c.b16 %v2646, %v2642
    %v2683 = vpack.c.b16 %v2647, %v2643
    %v2684 = vpack.c.b16 %v2648, %v2644
    %v2685 = vpack.c.b16 %v2649, %v2645
    %v2686 = vpack.c.b16 %v2654, %v2650
    %v2687 = vpack.c.b16 %v2655, %v2651
    %v2688 = vpack.c.b16 %v2656, %v2652
    %v2689 = vpack.c.b16 %v2657, %v2653
    %2722 = vmatprep.subr.bf16.mxu0 %v2659
    %2723 = vmatpush1.bf16.msra.mxu0 %v2658
    %2724 = vmatprep.subr.bf16.mxu0 %v2663
    %2725 = vmatpush1.bf16.msra.mxu0 %v2662
    %2726 = vmatprep.subr.bf16.mxu0 %v2667
    %2727 = vmatpush1.bf16.msra.mxu0 %v2666
    %2728 = vmatprep.subr.bf16.mxu0 %v2671
    %2729 = vmatpush1.bf16.msra.mxu0 %v2670
    %2730 = vmatprep.subr.bf16.mxu0 %v2675
    %2731 = vmatpush1.bf16.msra.mxu0 %v2674
    %2732 = vmatprep.subr.bf16.mxu0 %v2679
    %2733 = vmatpush1.bf16.msra.mxu0 %v2678
    %2734 = vmatprep.subr.bf16.mxu0 %v2683
    %2735 = vmatpush1.bf16.msra.mxu0 %v2682
    %2736 = vmatprep.subr.bf16.mxu0 %v2687
    %2737 = vmatpush1.bf16.msra.mxu0 %v2686
    %2738 = vmatprep.subr.bf16.mxu0 0
    %2739 = vmatpush1.bf16.msra.mxu0 0
    %2740 = vmatprep.subr.bf16.mxu0 0
    %2741 = vmatpush1.bf16.msra.mxu0 0
    %2742 = vmatprep.subr.bf16.mxu0 0
    %2743 = vmatpush1.bf16.msra.mxu0 0
    %2744 = vmatprep.subr.bf16.mxu0 0
    %2745 = vmatpush1.bf16.msra.mxu0 0
    %2746 = vmatprep.subr.bf16.mxu0 0
    %2747 = vmatpush1.bf16.msra.mxu0 0
    %2748 = vmatprep.subr.bf16.mxu0 0
    %2749 = vmatpush1.bf16.msra.mxu0 0
    %2750 = vmatprep.subr.bf16.mxu0 0
    %2751 = vmatpush1.bf16.msra.mxu0 0
    %2752 = vmatprep.subr.bf16.mxu0 0
    %2753 = vmatpush1.bf16.msra.mxu0 0
    %2754 = vmatprep.mubr.bf16.mxu0 0
    %2755 = vmatmul.mubr.bf16.gmra.mrb[0].mxu0 %v2254
    %v2756 = vpop.f32.mrb[0].mxu0
    %v2757 = vadd.f32 %v2515, %v2756
    %v2758 = vpop.f32.mrb[0].mxu0
    %v2759 = vadd.f32 %v2517, %v2758
    %v2760 = vpop.f32.mrb[0].mxu0
    %v2761 = vpop.f32.mrb[0].mxu0
    %2762 = vdwg.mxu0
    %2763 = vmatprep.subr.bf16.mxu0 %v2661
    %2764 = vmatpush1.bf16.msra.mxu0 %v2660
    %2765 = vmatprep.subr.bf16.mxu0 %v2665
    %2766 = vmatpush1.bf16.msra.mxu0 %v2664
    %2767 = vmatprep.subr.bf16.mxu0 %v2669
    %2768 = vmatpush1.bf16.msra.mxu0 %v2668
    %2769 = vmatprep.subr.bf16.mxu0 %v2673
    %2770 = vmatpush1.bf16.msra.mxu0 %v2672
    %2771 = vmatprep.subr.bf16.mxu0 %v2677
    %2772 = vmatpush1.bf16.msra.mxu0 %v2676
    %2773 = vmatprep.subr.bf16.mxu0 %v2681
    %2774 = vmatpush1.bf16.msra.mxu0 %v2680
    %2775 = vmatprep.subr.bf16.mxu0 %v2685
    %2776 = vmatpush1.bf16.msra.mxu0 %v2684
    %2777 = vmatprep.subr.bf16.mxu0 %v2689
    %2778 = vmatpush1.bf16.msra.mxu0 %v2688
    %2779 = vmatprep.subr.bf16.mxu0 0
    %2780 = vmatpush1.bf16.msra.mxu0 0
    %2781 = vmatprep.subr.bf16.mxu0 0
    %2782 = vmatpush1.bf16.msra.mxu0 0
    %2783 = vmatprep.subr.bf16.mxu0 0
    %2784 = vmatpush1.bf16.msra.mxu0 0
    %2785 = vmatprep.subr.bf16.mxu0 0
    %2786 = vmatpush1.bf16.msra.mxu0 0
    %2787 = vmatprep.subr.bf16.mxu0 0
    %2788 = vmatpush1.bf16.msra.mxu0 0
    %2789 = vmatprep.subr.bf16.mxu0 0
    %2790 = vmatpush1.bf16.msra.mxu0 0
    %2791 = vmatprep.subr.bf16.mxu0 0
    %2792 = vmatpush1.bf16.msra.mxu0 0
    %2793 = vmatprep.subr.bf16.mxu0 0
    %2794 = vmatpush1.bf16.msra.mxu0 0
    %2795 = vmatprep.mubr.bf16.mxu0 0
    %2796 = vmatmul.mubr.bf16.gmra.mrb[0].mxu0 %v2254
    %v2797 = vpop.f32.mrb[0].mxu0
    %v2798 = vadd.f32 %v2556, %v2797
    %v2799 = vpop.f32.mrb[0].mxu0
    %v2800 = vadd.f32 %v2558, %v2799
    %v2801 = vpop.f32.mrb[0].mxu0
    %v2802 = vpop.f32.mrb[0].mxu0
    %2803 = vdwg.mxu0
    %v2804 = vadd.f32 %v2757, %v117
    %v2805 = vadd.f32 %v2759, %v121
    %v2806 = vadd.f32 %v2798, %v125
    %v2807 = vadd.f32 %v2800, %v129
    %v2808 = vxor.u32 %v2804, 2147483648
    %v2809 = vmul.f32 %v2808, 1.442695
    %v2810 = vpow.pop %v2809
    %v2811 = vadd.f32 %v2810, 1.0
    %v2812 = vrcp.pop %v2811
    %v2813 = vmul.f32 1.0, %v2812
    %v2814 = vxor.u32 %v2805, 2147483648
    %v2815 = vmul.f32 %v2814, 1.442695
    %v2816 = vpow.pop %v2815
    %v2817 = vadd.f32 %v2816, 1.0
    %v2818 = vrcp.pop %v2817
    %v2819 = vmul.f32 1.0, %v2818
    %v2820 = vtanh.pop %v2806
    %v2821 = vxor.u32 %v2807, 2147483648
    %v2822 = vmul.f32 %v2821, 1.442695
    %v2823 = vpow.pop %v2822
    %v2824 = vadd.f32 %v2823, 1.0
    %v2825 = vrcp.pop %v2824
    %v2826 = vmul.f32 1.0, %v2825
    %v2827 = vmul.f32 %v2819, %v1933
    %v2828 = vmul.f32 %v2813, %v2820
    %v2829 = vadd.f32 %v2827, %v2828
    %v2830 = vtanh.pop %v2829
    %v2831 = vmul.f32 %v2826, %v2830
    %v2832 = vsel %vm1944, %v2831, %v1932
    %v2833 = vsel %vm1944, %v2829, %v1933
    %v2834 = vsel %vm1944, %v2831, 0.0
    %s2835 = scalar_lea.vmem [#allocation6], 16
    %2836 = vst [vmem:[%s2835] sm:$0xff] %v2834
    %s2837 = sadd.s32 %s134, 3
    %v2838 = vstv %s2837
    %vm2839 = vcmp.gt.s32.totalorder %v111, %v2838
    %v2840 = vsel %vm2839, 1, 0
    %2841 = vset.pattern.permute.xlu0 0
    %2842 = vperm.xlu0 %2841, %v2840
    %v2843 = vpop.permute.xlu0 %2842
    %vm2844 = vcmp.eq.s32.totalorder %v2843, 1
    %s2845 = scalar_lea.vmem [#allocation7], 96
    %v2846 = vld [vmem:[%s2845] sm:$0xff]
    %v2847 = vld [vmem:[%s2845 + $0x8] sm:$0xff]
    %v2848 = vld [vmem:[%s2845 + $0x10] sm:$0xff]
    %v2849 = vld [vmem:[%s2845 + $0x18] sm:$0xff]
    %v2850 = vld [vmem:[#allocation10] sm:$0xff]
    %v2851 = vld [vmem:[#allocation10 + $0x8] sm:$0xff]
    %v2852 = vld [vmem:[#allocation10 + $0x10] sm:$0xff]
    %v2853 = vld [vmem:[#allocation10 + $0x18] sm:$0xff]
    %v2854 = vld [vmem:[#allocation10 + $0x20] sm:$0xff]
    %v2855 = vld [vmem:[#allocation10 + $0x28] sm:$0xff]
    %v2856 = vld [vmem:[#allocation10 + $0x30] sm:$0xff]
    %v2857 = vld [vmem:[#allocation10 + $0x38] sm:$0xff]
    %v2858 = vld [vmem:[#allocation10 + $0x40] sm:$0xff]
    %v2859 = vld [vmem:[#allocation10 + $0x48] sm:$0xff]
    %v2860 = vld [vmem:[#allocation10 + $0x50] sm:$0xff]
    %v2861 = vld [vmem:[#allocation10 + $0x58] sm:$0xff]
    %v2862 = vld [vmem:[#allocation10 + $0x60] sm:$0xff]
    %v2863 = vld [vmem:[#allocation10 + $0x68] sm:$0xff]
    %v2864 = vld [vmem:[#allocation10 + $0x70] sm:$0xff]
    %v2865 = vld [vmem:[#allocation10 + $0x78] sm:$0xff]
    %v2866 = vld [vmem:[#allocation10 + $0x80] sm:$0xff]
    %v2867 = vld [vmem:[#allocation10 + $0x88] sm:$0xff]
    %v2868 = vld [vmem:[#allocation10 + $0x90] sm:$0xff]
    %v2869 = vld [vmem:[#allocation10 + $0x98] sm:$0xff]
    %v2870 = vld [vmem:[#allocation10 + $0xa0] sm:$0xff]
    %v2871 = vld [vmem:[#allocation10 + $0xa8] sm:$0xff]
    %v2872 = vld [vmem:[#allocation10 + $0xb0] sm:$0xff]
    %v2873 = vld [vmem:[#allocation10 + $0xb8] sm:$0xff]
    %v2874 = vld [vmem:[#allocation10 + $0xc0] sm:$0xff]
    %v2875 = vld [vmem:[#allocation10 + $0xc8] sm:$0xff]
    %v2876 = vld [vmem:[#allocation10 + $0xd0] sm:$0xff]
    %v2877 = vld [vmem:[#allocation10 + $0xd8] sm:$0xff]
    %v2878 = vld [vmem:[#allocation10 + $0xe0] sm:$0xff]
    %v2879 = vld [vmem:[#allocation10 + $0xe8] sm:$0xff]
    %v2880 = vld [vmem:[#allocation10 + $0xf0] sm:$0xff]
    %v2881 = vld [vmem:[#allocation10 + $0xf8] sm:$0xff]
    %v2914 = vunpack.c.l.b16 %v2850
    %v2915 = vunpack.c.h.b16 %v2850
    %v2916 = vunpack.c.l.b16 %v2851
    %v2917 = vunpack.c.h.b16 %v2851
    %v2918 = vunpack.c.l.b16 %v2852
    %v2919 = vunpack.c.h.b16 %v2852
    %v2920 = vunpack.c.l.b16 %v2853
    %v2921 = vunpack.c.h.b16 %v2853
    %v2922 = vunpack.c.l.b16 %v2854
    %v2923 = vunpack.c.h.b16 %v2854
    %v2924 = vunpack.c.l.b16 %v2855
    %v2925 = vunpack.c.h.b16 %v2855
    %v2926 = vunpack.c.l.b16 %v2856
    %v2927 = vunpack.c.h.b16 %v2856
    %v2928 = vunpack.c.l.b16 %v2857
    %v2929 = vunpack.c.h.b16 %v2857
    %v2930 = vunpack.c.l.b16 %v2858
    %v2931 = vunpack.c.h.b16 %v2858
    %v2932 = vunpack.c.l.b16 %v2859
    %v2933 = vunpack.c.h.b16 %v2859
    %v2934 = vunpack.c.l.b16 %v2860
    %v2935 = vunpack.c.h.b16 %v2860
    %v2936 = vunpack.c.l.b16 %v2861
    %v2937 = vunpack.c.h.b16 %v2861
    %v2938 = vunpack.c.l.b16 %v2862
    %v2939 = vunpack.c.h.b16 %v2862
    %v2940 = vunpack.c.l.b16 %v2863
    %v2941 = vunpack.c.h.b16 %v2863
    %v2942 = vunpack.c.l.b16 %v2864
    %v2943 = vunpack.c.h.b16 %v2864
    %v2944 = vunpack.c.l.b16 %v2865
    %v2945 = vunpack.c.h.b16 %v2865
    %v2946 = vunpack.c.l.b16 %v2866
    %v2947 = vunpack.c.h.b16 %v2866
    %v2948 = vunpack.c.l.b16 %v2867
    %v2949 = vunpack.c.h.b16 %v2867
    %v2950 = vunpack.c.l.b16 %v2868
    %v2951 = vunpack.c.h.b16 %v2868
    %v2952 = vunpack.c.l.b16 %v2869
    %v2953 = vunpack.c.h.b16 %v2869
    %v2954 = vunpack.c.l.b16 %v2870
    %v2955 = vunpack.c.h.b16 %v2870
    %v2956 = vunpack.c.l.b16 %v2871
    %v2957 = vunpack.c.h.b16 %v2871
    %v2958 = vunpack.c.l.b16 %v2872
    %v2959 = vunpack.c.h.b16 %v2872
    %v2960 = vunpack.c.l.b16 %v2873
    %v2961 = vunpack.c.h.b16 %v2873
    %v2962 = vunpack.c.l.b16 %v2874
    %v2963 = vunpack.c.h.b16 %v2874
    %v2964 = vunpack.c.l.b16 %v2875
    %v2965 = vunpack.c.h.b16 %v2875
    %v2966 = vunpack.c.l.b16 %v2876
    %v2967 = vunpack.c.h.b16 %v2876
    %v2968 = vunpack.c.l.b16 %v2877
    %v2969 = vunpack.c.h.b16 %v2877
    %v2970 = vunpack.c.l.b16 %v2878
    %v2971 = vunpack.c.h.b16 %v2878
    %v2972 = vunpack.c.l.b16 %v2879
    %v2973 = vunpack.c.h.b16 %v2879
    %v2974 = vunpack.c.l.b16 %v2880
    %v2975 = vunpack.c.h.b16 %v2880
    %v2976 = vunpack.c.l.b16 %v2881
    %v2977 = vunpack.c.h.b16 %v2881
    %v2978 = vpack.c.b16 %v2918, %v2914
    %v2979 = vpack.c.b16 %v2919, %v2915
    %v2980 = vpack.c.b16 %v2920, %v2916
    %v2981 = vpack.c.b16 %v2921, %v2917
    %v2982 = vpack.c.b16 %v2926, %v2922
    %v2983 = vpack.c.b16 %v2927, %v2923
    %v2984 = vpack.c.b16 %v2928, %v2924
    %v2985 = vpack.c.b16 %v2929, %v2925
    %v2986 = vpack.c.b16 %v2934, %v2930
    %v2987 = vpack.c.b16 %v2935, %v2931
    %v2988 = vpack.c.b16 %v2936, %v2932
    %v2989 = vpack.c.b16 %v2937, %v2933
    %v2990 = vpack.c.b16 %v2942, %v2938
    %v2991 = vpack.c.b16 %v2943, %v2939
    %v2992 = vpack.c.b16 %v2944, %v2940
    %v2993 = vpack.c.b16 %v2945, %v2941
    %v2994 = vpack.c.b16 %v2950, %v2946
    %v2995 = vpack.c.b16 %v2951, %v2947
    %v2996 = vpack.c.b16 %v2952, %v2948
    %v2997 = vpack.c.b16 %v2953, %v2949
    %v2998 = vpack.c.b16 %v2958, %v2954
    %v2999 = vpack.c.b16 %v2959, %v2955
    %v3000 = vpack.c.b16 %v2960, %v2956
    %v3001 = vpack.c.b16 %v2961, %v2957
    %v3002 = vpack.c.b16 %v2966, %v2962
    %v3003 = vpack.c.b16 %v2967, %v2963
    %v3004 = vpack.c.b16 %v2968, %v2964
    %v3005 = vpack.c.b16 %v2969, %v2965
    %v3006 = vpack.c.b16 %v2974, %v2970
    %v3007 = vpack.c.b16 %v2975, %v2971
    %v3008 = vpack.c.b16 %v2976, %v2972
    %v3009 = vpack.c.b16 %v2977, %v2973
    %3042 = vmatprep.subr.bf16.mxu0 %v2979
    %3043 = vmatpush1.bf16.msra.mxu0 %v2978
    %3044 = vmatprep.subr.bf16.mxu0 %v2983
    %3045 = vmatpush1.bf16.msra.mxu0 %v2982
    %3046 = vmatprep.subr.bf16.mxu0 %v2987
    %3047 = vmatpush1.bf16.msra.mxu0 %v2986
    %3048 = vmatprep.subr.bf16.mxu0 %v2991
    %3049 = vmatpush1.bf16.msra.mxu0 %v2990
    %3050 = vmatprep.subr.bf16.mxu0 %v2995
    %3051 = vmatpush1.bf16.msra.mxu0 %v2994
    %3052 = vmatprep.subr.bf16.mxu0 %v2999
    %3053 = vmatpush1.bf16.msra.mxu0 %v2998
    %3054 = vmatprep.subr.bf16.mxu0 %v3003
    %3055 = vmatpush1.bf16.msra.mxu0 %v3002
    %3056 = vmatprep.subr.bf16.mxu0 %v3007
    %3057 = vmatpush1.bf16.msra.mxu0 %v3006
    %3058 = vmatprep.subr.bf16.mxu0 0
    %3059 = vmatpush1.bf16.msra.mxu0 0
    %3060 = vmatprep.subr.bf16.mxu0 0
    %3061 = vmatpush1.bf16.msra.mxu0 0
    %3062 = vmatprep.subr.bf16.mxu0 0
    %3063 = vmatpush1.bf16.msra.mxu0 0
    %3064 = vmatprep.subr.bf16.mxu0 0
    %3065 = vmatpush1.bf16.msra.mxu0 0
    %3066 = vmatprep.subr.bf16.mxu0 0
    %3067 = vmatpush1.bf16.msra.mxu0 0
    %3068 = vmatprep.subr.bf16.mxu0 0
    %3069 = vmatpush1.bf16.msra.mxu0 0
    %3070 = vmatprep.subr.bf16.mxu0 0
    %3071 = vmatpush1.bf16.msra.mxu0 0
    %3072 = vmatprep.subr.bf16.mxu0 0
    %3073 = vmatpush1.bf16.msra.mxu0 0
    %3074 = vmatprep.mubr.bf16.mxu0 0
    %3075 = vmatmul.mubr.bf16.gmra.mrb[0].mxu0 %v2254
    %v3076 = vpop.f32.mrb[0].mxu0
    %v3077 = vadd.f32 0.0, %v3076
    %v3078 = vpop.f32.mrb[0].mxu0
    %v3079 = vadd.f32 0.0, %v3078
    %v3080 = vpop.f32.mrb[0].mxu0
    %v3081 = vpop.f32.mrb[0].mxu0
    %3082 = vdwg.mxu0
    %3083 = vmatprep.subr.bf16.mxu0 %v2981
    %3084 = vmatpush1.bf16.msra.mxu0 %v2980
    %3085 = vmatprep.subr.bf16.mxu0 %v2985
    %3086 = vmatpush1.bf16.msra.mxu0 %v2984
    %3087 = vmatprep.subr.bf16.mxu0 %v2989
    %3088 = vmatpush1.bf16.msra.mxu0 %v2988
    %3089 = vmatprep.subr.bf16.mxu0 %v2993
    %3090 = vmatpush1.bf16.msra.mxu0 %v2992
    %3091 = vmatprep.subr.bf16.mxu0 %v2997
    %3092 = vmatpush1.bf16.msra.mxu0 %v2996
    %3093 = vmatprep.subr.bf16.mxu0 %v3001
    %3094 = vmatpush1.bf16.msra.mxu0 %v3000
    %3095 = vmatprep.subr.bf16.mxu0 %v3005
    %3096 = vmatpush1.bf16.msra.mxu0 %v3004
    %3097 = vmatprep.subr.bf16.mxu0 %v3009
    %3098 = vmatpush1.bf16.msra.mxu0 %v3008
    %3099 = vmatprep.subr.bf16.mxu0 0
    %3100 = vmatpush1.bf16.msra.mxu0 0
    %3101 = vmatprep.subr.bf16.mxu0 0
    %3102 = vmatpush1.bf16.msra.mxu0 0
    %3103 = vmatprep.subr.bf16.mxu0 0
    %3104 = vmatpush1.bf16.msra.mxu0 0
    %3105 = vmatprep.subr.bf16.mxu0 0
    %3106 = vmatpush1.bf16.msra.mxu0 0
    %3107 = vmatprep.subr.bf16.mxu0 0
    %3108 = vmatpush1.bf16.msra.mxu0 0
    %3109 = vmatprep.subr.bf16.mxu0 0
    %3110 = vmatpush1.bf16.msra.mxu0 0
    %3111 = vmatprep.subr.bf16.mxu0 0
    %3112 = vmatpush1.bf16.msra.mxu0 0
    %3113 = vmatprep.subr.bf16.mxu0 0
    %3114 = vmatpush1.bf16.msra.mxu0 0
    %3115 = vmatprep.mubr.bf16.mxu0 0
    %3116 = vmatmul.mubr.bf16.gmra.mrb[0].mxu0 %v2254
    %v3117 = vpop.f32.mrb[0].mxu0
    %v3118 = vadd.f32 0.0, %v3117
    %v3119 = vpop.f32.mrb[0].mxu0
    %v3120 = vadd.f32 0.0, %v3119
    %v3121 = vpop.f32.mrb[0].mxu0
    %v3122 = vpop.f32.mrb[0].mxu0
    %3123 = vdwg.mxu0
    %v3124 = vadd.f32 %v2846, %v3077
    %v3125 = vadd.f32 %v2847, %v3079
    %v3126 = vadd.f32 %v2848, %v3118
    %v3127 = vadd.f32 %v2849, %v3120
    %v3128 = vxor.u32 %v3124, 2147483648
    %v3129 = vmul.f32 %v3128, 1.442695
    %v3130 = vpow.pop %v3129
    %v3131 = vadd.f32 %v3130, 1.0
    %v3132 = vrcp.pop %v3131
    %v3133 = vmul.f32 1.0, %v3132
    %v3134 = vxor.u32 %v3125, 2147483648
    %v3135 = vmul.f32 %v3134, 1.442695
    %v3136 = vpow.pop %v3135
    %v3137 = vadd.f32 %v3136, 1.0
    %v3138 = vrcp.pop %v3137
    %v3139 = vmul.f32 1.0, %v3138
    %v3140 = vtanh.pop %v3126
    %v3141 = vxor.u32 %v3127, 2147483648
    %v3142 = vmul.f32 %v3141, 1.442695
    %v3143 = vpow.pop %v3142
    %v3144 = vadd.f32 %v3143, 1.0
    %v3145 = vrcp.pop %v3144
    %v3146 = vmul.f32 1.0, %v3145
    %v3147 = vmul.f32 %v3139, %v2253
    %v3148 = vmul.f32 %v3133, %v3140
    %v3149 = vadd.f32 %v3147, %v3148
    %v3150 = vtanh.pop %v3149
    %v3151 = vmul.f32 %v3146, %v3150
    %v3152 = vsel %vm2844, %v3151, %v2252
    %v3153 = vsel %vm2844, %v3149, %v2253
    %v3154 = vpack.c.bf16 %v3152, %v3152
    %v3155 = vld [vmem:[#allocation12] sm:$0xff]
    %v3156 = vld [vmem:[#allocation12 + $0x8] sm:$0xff]
    %v3157 = vld [vmem:[#allocation12 + $0x10] sm:$0xff]
    %v3158 = vld [vmem:[#allocation12 + $0x18] sm:$0xff]
    %v3159 = vld [vmem:[#allocation12 + $0x20] sm:$0xff]
    %v3160 = vld [vmem:[#allocation12 + $0x28] sm:$0xff]
    %v3161 = vld [vmem:[#allocation12 + $0x30] sm:$0xff]
    %v3162 = vld [vmem:[#allocation12 + $0x38] sm:$0xff]
    %v3163 = vld [vmem:[#allocation12 + $0x40] sm:$0xff]
    %v3164 = vld [vmem:[#allocation12 + $0x48] sm:$0xff]
    %v3165 = vld [vmem:[#allocation12 + $0x50] sm:$0xff]
    %v3166 = vld [vmem:[#allocation12 + $0x58] sm:$0xff]
    %v3167 = vld [vmem:[#allocation12 + $0x60] sm:$0xff]
    %v3168 = vld [vmem:[#allocation12 + $0x68] sm:$0xff]
    %v3169 = vld [vmem:[#allocation12 + $0x70] sm:$0xff]
    %v3170 = vld [vmem:[#allocation12 + $0x78] sm:$0xff]
    %v3171 = vld [vmem:[#allocation12 + $0x80] sm:$0xff]
    %v3172 = vld [vmem:[#allocation12 + $0x88] sm:$0xff]
    %v3173 = vld [vmem:[#allocation12 + $0x90] sm:$0xff]
    %v3174 = vld [vmem:[#allocation12 + $0x98] sm:$0xff]
    %v3175 = vld [vmem:[#allocation12 + $0xa0] sm:$0xff]
    %v3176 = vld [vmem:[#allocation12 + $0xa8] sm:$0xff]
    %v3177 = vld [vmem:[#allocation12 + $0xb0] sm:$0xff]
    %v3178 = vld [vmem:[#allocation12 + $0xb8] sm:$0xff]
    %v3179 = vld [vmem:[#allocation12 + $0xc0] sm:$0xff]
    %v3180 = vld [vmem:[#allocation12 + $0xc8] sm:$0xff]
    %v3181 = vld [vmem:[#allocation12 + $0xd0] sm:$0xff]
    %v3182 = vld [vmem:[#allocation12 + $0xd8] sm:$0xff]
    %v3183 = vld [vmem:[#allocation12 + $0xe0] sm:$0xff]
    %v3184 = vld [vmem:[#allocation12 + $0xe8] sm:$0xff]
    %v3185 = vld [vmem:[#allocation12 + $0xf0] sm:$0xff]
    %v3186 = vld [vmem:[#allocation12 + $0xf8] sm:$0xff]
    %v3187 = vpack.c.bf16 %v2832, %v2832
    %v3188 = vld [vmem:[#allocation13] sm:$0xff]
    %v3189 = vld [vmem:[#allocation13 + $0x8] sm:$0xff]
    %v3190 = vld [vmem:[#allocation13 + $0x10] sm:$0xff]
    %v3191 = vld [vmem:[#allocation13 + $0x18] sm:$0xff]
    %v3192 = vld [vmem:[#allocation13 + $0x20] sm:$0xff]
    %v3193 = vld [vmem:[#allocation13 + $0x28] sm:$0xff]
    %v3194 = vld [vmem:[#allocation13 + $0x30] sm:$0xff]
    %v3195 = vld [vmem:[#allocation13 + $0x38] sm:$0xff]
    %v3196 = vld [vmem:[#allocation13 + $0x40] sm:$0xff]
    %v3197 = vld [vmem:[#allocation13 + $0x48] sm:$0xff]
    %v3198 = vld [vmem:[#allocation13 + $0x50] sm:$0xff]
    %v3199 = vld [vmem:[#allocation13 + $0x58] sm:$0xff]
    %v3200 = vld [vmem:[#allocation13 + $0x60] sm:$0xff]
    %v3201 = vld [vmem:[#allocation13 + $0x68] sm:$0xff]
    %v3202 = vld [vmem:[#allocation13 + $0x70] sm:$0xff]
    %v3203 = vld [vmem:[#allocation13 + $0x78] sm:$0xff]
    %v3204 = vld [vmem:[#allocation13 + $0x80] sm:$0xff]
    %v3205 = vld [vmem:[#allocation13 + $0x88] sm:$0xff]
    %v3206 = vld [vmem:[#allocation13 + $0x90] sm:$0xff]
    %v3207 = vld [vmem:[#allocation13 + $0x98] sm:$0xff]
    %v3208 = vld [vmem:[#allocation13 + $0xa0] sm:$0xff]
    %v3209 = vld [vmem:[#allocation13 + $0xa8] sm:$0xff]
    %v3210 = vld [vmem:[#allocation13 + $0xb0] sm:$0xff]
    %v3211 = vld [vmem:[#allocation13 + $0xb8] sm:$0xff]
    %v3212 = vld [vmem:[#allocation13 + $0xc0] sm:$0xff]
    %v3213 = vld [vmem:[#allocation13 + $0xc8] sm:$0xff]
    %v3214 = vld [vmem:[#allocation13 + $0xd0] sm:$0xff]
    %v3215 = vld [vmem:[#allocation13 + $0xd8] sm:$0xff]
    %v3216 = vld [vmem:[#allocation13 + $0xe0] sm:$0xff]
    %v3217 = vld [vmem:[#allocation13 + $0xe8] sm:$0xff]
    %v3218 = vld [vmem:[#allocation13 + $0xf0] sm:$0xff]
    %v3219 = vld [vmem:[#allocation13 + $0xf8] sm:$0xff]
    %v3252 = vunpack.c.l.b16 %v3188
    %v3253 = vunpack.c.h.b16 %v3188
    %v3254 = vunpack.c.l.b16 %v3189
    %v3255 = vunpack.c.h.b16 %v3189
    %v3256 = vunpack.c.l.b16 %v3190
    %v3257 = vunpack.c.h.b16 %v3190
    %v3258 = vunpack.c.l.b16 %v3191
    %v3259 = vunpack.c.h.b16 %v3191
    %v3260 = vunpack.c.l.b16 %v3192
    %v3261 = vunpack.c.h.b16 %v3192
    %v3262 = vunpack.c.l.b16 %v3193
    %v3263 = vunpack.c.h.b16 %v3193
    %v3264 = vunpack.c.l.b16 %v3194
    %v3265 = vunpack.c.h.b16 %v3194
    %v3266 = vunpack.c.l.b16 %v3195
    %v3267 = vunpack.c.h.b16 %v3195
    %v3268 = vunpack.c.l.b16 %v3196
    %v3269 = vunpack.c.h.b16 %v3196
    %v3270 = vunpack.c.l.b16 %v3197
    %v3271 = vunpack.c.h.b16 %v3197
    %v3272 = vunpack.c.l.b16 %v3198
    %v3273 = vunpack.c.h.b16 %v3198
    %v3274 = vunpack.c.l.b16 %v3199
    %v3275 = vunpack.c.h.b16 %v3199
    %v3276 = vunpack.c.l.b16 %v3200
    %v3277 = vunpack.c.h.b16 %v3200
    %v3278 = vunpack.c.l.b16 %v3201
    %v3279 = vunpack.c.h.b16 %v3201
    %v3280 = vunpack.c.l.b16 %v3202
    %v3281 = vunpack.c.h.b16 %v3202
    %v3282 = vunpack.c.l.b16 %v3203
    %v3283 = vunpack.c.h.b16 %v3203
    %v3284 = vunpack.c.l.b16 %v3204
    %v3285 = vunpack.c.h.b16 %v3204
    %v3286 = vunpack.c.l.b16 %v3205
    %v3287 = vunpack.c.h.b16 %v3205
    %v3288 = vunpack.c.l.b16 %v3206
    %v3289 = vunpack.c.h.b16 %v3206
    %v3290 = vunpack.c.l.b16 %v3207
    %v3291 = vunpack.c.h.b16 %v3207
    %v3292 = vunpack.c.l.b16 %v3208
    %v3293 = vunpack.c.h.b16 %v3208
    %v3294 = vunpack.c.l.b16 %v3209
    %v3295 = vunpack.c.h.b16 %v3209
    %v3296 = vunpack.c.l.b16 %v3210
    %v3297 = vunpack.c.h.b16 %v3210
    %v3298 = vunpack.c.l.b16 %v3211
    %v3299 = vunpack.c.h.b16 %v3211
    %v3300 = vunpack.c.l.b16 %v3212
    %v3301 = vunpack.c.h.b16 %v3212
    %v3302 = vunpack.c.l.b16 %v3213
    %v3303 = vunpack.c.h.b16 %v3213
    %v3304 = vunpack.c.l.b16 %v3214
    %v3305 = vunpack.c.h.b16 %v3214
    %v3306 = vunpack.c.l.b16 %v3215
    %v3307 = vunpack.c.h.b16 %v3215
    %v3308 = vunpack.c.l.b16 %v3216
    %v3309 = vunpack.c.h.b16 %v3216
    %v3310 = vunpack.c.l.b16 %v3217
    %v3311 = vunpack.c.h.b16 %v3217
    %v3312 = vunpack.c.l.b16 %v3218
    %v3313 = vunpack.c.h.b16 %v3218
    %v3314 = vunpack.c.l.b16 %v3219
    %v3315 = vunpack.c.h.b16 %v3219
    %v3316 = vpack.c.b16 %v3256, %v3252
    %v3317 = vpack.c.b16 %v3257, %v3253
    %v3318 = vpack.c.b16 %v3258, %v3254
    %v3319 = vpack.c.b16 %v3259, %v3255
    %v3320 = vpack.c.b16 %v3264, %v3260
    %v3321 = vpack.c.b16 %v3265, %v3261
    %v3322 = vpack.c.b16 %v3266, %v3262
    %v3323 = vpack.c.b16 %v3267, %v3263
    %v3324 = vpack.c.b16 %v3272, %v3268
    %v3325 = vpack.c.b16 %v3273, %v3269
    %v3326 = vpack.c.b16 %v3274, %v3270
    %v3327 = vpack.c.b16 %v3275, %v3271
    %v3328 = vpack.c.b16 %v3280, %v3276
    %v3329 = vpack.c.b16 %v3281, %v3277
    %v3330 = vpack.c.b16 %v3282, %v3278
    %v3331 = vpack.c.b16 %v3283, %v3279
    %v3332 = vpack.c.b16 %v3288, %v3284
    %v3333 = vpack.c.b16 %v3289, %v3285
    %v3334 = vpack.c.b16 %v3290, %v3286
    %v3335 = vpack.c.b16 %v3291, %v3287
    %v3336 = vpack.c.b16 %v3296, %v3292
    %v3337 = vpack.c.b16 %v3297, %v3293
    %v3338 = vpack.c.b16 %v3298, %v3294
    %v3339 = vpack.c.b16 %v3299, %v3295
    %v3340 = vpack.c.b16 %v3304, %v3300
    %v3341 = vpack.c.b16 %v3305, %v3301
    %v3342 = vpack.c.b16 %v3306, %v3302
    %v3343 = vpack.c.b16 %v3307, %v3303
    %v3344 = vpack.c.b16 %v3312, %v3308
    %v3345 = vpack.c.b16 %v3313, %v3309
    %v3346 = vpack.c.b16 %v3314, %v3310
    %v3347 = vpack.c.b16 %v3315, %v3311
    %3380 = vmatprep.subr.bf16.mxu0 %v3317
    %3381 = vmatpush1.bf16.msra.mxu0 %v3316
    %3382 = vmatprep.subr.bf16.mxu0 %v3321
    %3383 = vmatpush1.bf16.msra.mxu0 %v3320
    %3384 = vmatprep.subr.bf16.mxu0 %v3325
    %3385 = vmatpush1.bf16.msra.mxu0 %v3324
    %3386 = vmatprep.subr.bf16.mxu0 %v3329
    %3387 = vmatpush1.bf16.msra.mxu0 %v3328
    %3388 = vmatprep.subr.bf16.mxu0 %v3333
    %3389 = vmatpush1.bf16.msra.mxu0 %v3332
    %3390 = vmatprep.subr.bf16.mxu0 %v3337
    %3391 = vmatpush1.bf16.msra.mxu0 %v3336
    %3392 = vmatprep.subr.bf16.mxu0 %v3341
    %3393 = vmatpush1.bf16.msra.mxu0 %v3340
    %3394 = vmatprep.subr.bf16.mxu0 %v3345
    %3395 = vmatpush1.bf16.msra.mxu0 %v3344
    %3396 = vmatprep.subr.bf16.mxu0 0
    %3397 = vmatpush1.bf16.msra.mxu0 0
    %3398 = vmatprep.subr.bf16.mxu0 0
    %3399 = vmatpush1.bf16.msra.mxu0 0
    %3400 = vmatprep.subr.bf16.mxu0 0
    %3401 = vmatpush1.bf16.msra.mxu0 0
    %3402 = vmatprep.subr.bf16.mxu0 0
    %3403 = vmatpush1.bf16.msra.mxu0 0
    %3404 = vmatprep.subr.bf16.mxu0 0
    %3405 = vmatpush1.bf16.msra.mxu0 0
    %3406 = vmatprep.subr.bf16.mxu0 0
    %3407 = vmatpush1.bf16.msra.mxu0 0
    %3408 = vmatprep.subr.bf16.mxu0 0
    %3409 = vmatpush1.bf16.msra.mxu0 0
    %3410 = vmatprep.subr.bf16.mxu0 0
    %3411 = vmatpush1.bf16.msra.mxu0 0
    %3412 = vmatprep.mubr.bf16.mxu0 0
    %3413 = vmatmul.mubr.bf16.gmra.mrb[0].mxu0 %v3187
    %v3414 = vpop.f32.mrb[0].mxu0
    %v3415 = vadd.f32 0.0, %v3414
    %v3416 = vpop.f32.mrb[0].mxu0
    %v3417 = vadd.f32 0.0, %v3416
    %v3418 = vpop.f32.mrb[0].mxu0
    %v3419 = vpop.f32.mrb[0].mxu0
    %3420 = vdwg.mxu0
    %3421 = vmatprep.subr.bf16.mxu0 %v3319
    %3422 = vmatpush1.bf16.msra.mxu0 %v3318
    %3423 = vmatprep.subr.bf16.mxu0 %v3323
    %3424 = vmatpush1.bf16.msra.mxu0 %v3322
    %3425 = vmatprep.subr.bf16.mxu0 %v3327
    %3426 = vmatpush1.bf16.msra.mxu0 %v3326
    %3427 = vmatprep.subr.bf16.mxu0 %v3331
    %3428 = vmatpush1.bf16.msra.mxu0 %v3330
    %3429 = vmatprep.subr.bf16.mxu0 %v3335
    %3430 = vmatpush1.bf16.msra.mxu0 %v3334
    %3431 = vmatprep.subr.bf16.mxu0 %v3339
    %3432 = vmatpush1.bf16.msra.mxu0 %v3338
    %3433 = vmatprep.subr.bf16.mxu0 %v3343
    %3434 = vmatpush1.bf16.msra.mxu0 %v3342
    %3435 = vmatprep.subr.bf16.mxu0 %v3347
    %3436 = vmatpush1.bf16.msra.mxu0 %v3346
    %3437 = vmatprep.subr.bf16.mxu0 0
    %3438 = vmatpush1.bf16.msra.mxu0 0
    %3439 = vmatprep.subr.bf16.mxu0 0
    %3440 = vmatpush1.bf16.msra.mxu0 0
    %3441 = vmatprep.subr.bf16.mxu0 0
    %3442 = vmatpush1.bf16.msra.mxu0 0
    %3443 = vmatprep.subr.bf16.mxu0 0
    %3444 = vmatpush1.bf16.msra.mxu0 0
    %3445 = vmatprep.subr.bf16.mxu0 0
    %3446 = vmatpush1.bf16.msra.mxu0 0
    %3447 = vmatprep.subr.bf16.mxu0 0
    %3448 = vmatpush1.bf16.msra.mxu0 0
    %3449 = vmatprep.subr.bf16.mxu0 0
    %3450 = vmatpush1.bf16.msra.mxu0 0
    %3451 = vmatprep.subr.bf16.mxu0 0
    %3452 = vmatpush1.bf16.msra.mxu0 0
    %3453 = vmatprep.mubr.bf16.mxu0 0
    %3454 = vmatmul.mubr.bf16.gmra.mrb[0].mxu0 %v3187
    %v3455 = vpop.f32.mrb[0].mxu0
    %v3456 = vadd.f32 0.0, %v3455
    %v3457 = vpop.f32.mrb[0].mxu0
    %v3458 = vadd.f32 0.0, %v3457
    %v3459 = vpop.f32.mrb[0].mxu0
    %v3460 = vpop.f32.mrb[0].mxu0
    %3461 = vdwg.mxu0
    %v3494 = vunpack.c.l.b16 %v3155
    %v3495 = vunpack.c.h.b16 %v3155
    %v3496 = vunpack.c.l.b16 %v3156
    %v3497 = vunpack.c.h.b16 %v3156
    %v3498 = vunpack.c.l.b16 %v3157
    %v3499 = vunpack.c.h.b16 %v3157
    %v3500 = vunpack.c.l.b16 %v3158
    %v3501 = vunpack.c.h.b16 %v3158
    %v3502 = vunpack.c.l.b16 %v3159
    %v3503 = vunpack.c.h.b16 %v3159
    %v3504 = vunpack.c.l.b16 %v3160
    %v3505 = vunpack.c.h.b16 %v3160
    %v3506 = vunpack.c.l.b16 %v3161
    %v3507 = vunpack.c.h.b16 %v3161
    %v3508 = vunpack.c.l.b16 %v3162
    %v3509 = vunpack.c.h.b16 %v3162
    %v3510 = vunpack.c.l.b16 %v3163
    %v3511 = vunpack.c.h.b16 %v3163
    %v3512 = vunpack.c.l.b16 %v3164
    %v3513 = vunpack.c.h.b16 %v3164
    %v3514 = vunpack.c.l.b16 %v3165
    %v3515 = vunpack.c.h.b16 %v3165
    %v3516 = vunpack.c.l.b16 %v3166
    %v3517 = vunpack.c.h.b16 %v3166
    %v3518 = vunpack.c.l.b16 %v3167
    %v3519 = vunpack.c.h.b16 %v3167
    %v3520 = vunpack.c.l.b16 %v3168
    %v3521 = vunpack.c.h.b16 %v3168
    %v3522 = vunpack.c.l.b16 %v3169
    %v3523 = vunpack.c.h.b16 %v3169
    %v3524 = vunpack.c.l.b16 %v3170
    %v3525 = vunpack.c.h.b16 %v3170
    %v3526 = vunpack.c.l.b16 %v3171
    %v3527 = vunpack.c.h.b16 %v3171
    %v3528 = vunpack.c.l.b16 %v3172
    %v3529 = vunpack.c.h.b16 %v3172
    %v3530 = vunpack.c.l.b16 %v3173
    %v3531 = vunpack.c.h.b16 %v3173
    %v3532 = vunpack.c.l.b16 %v3174
    %v3533 = vunpack.c.h.b16 %v3174
    %v3534 = vunpack.c.l.b16 %v3175
    %v3535 = vunpack.c.h.b16 %v3175
    %v3536 = vunpack.c.l.b16 %v3176
    %v3537 = vunpack.c.h.b16 %v3176
    %v3538 = vunpack.c.l.b16 %v3177
    %v3539 = vunpack.c.h.b16 %v3177
    %v3540 = vunpack.c.l.b16 %v3178
    %v3541 = vunpack.c.h.b16 %v3178
    %v3542 = vunpack.c.l.b16 %v3179
    %v3543 = vunpack.c.h.b16 %v3179
    %v3544 = vunpack.c.l.b16 %v3180
    %v3545 = vunpack.c.h.b16 %v3180
    %v3546 = vunpack.c.l.b16 %v3181
    %v3547 = vunpack.c.h.b16 %v3181
    %v3548 = vunpack.c.l.b16 %v3182
    %v3549 = vunpack.c.h.b16 %v3182
    %v3550 = vunpack.c.l.b16 %v3183
    %v3551 = vunpack.c.h.b16 %v3183
    %v3552 = vunpack.c.l.b16 %v3184
    %v3553 = vunpack.c.h.b16 %v3184
    %v3554 = vunpack.c.l.b16 %v3185
    %v3555 = vunpack.c.h.b16 %v3185
    %v3556 = vunpack.c.l.b16 %v3186
    %v3557 = vunpack.c.h.b16 %v3186
    %v3558 = vpack.c.b16 %v3498, %v3494
    %v3559 = vpack.c.b16 %v3499, %v3495
    %v3560 = vpack.c.b16 %v3500, %v3496
    %v3561 = vpack.c.b16 %v3501, %v3497
    %v3562 = vpack.c.b16 %v3506, %v3502
    %v3563 = vpack.c.b16 %v3507, %v3503
    %v3564 = vpack.c.b16 %v3508, %v3504
    %v3565 = vpack.c.b16 %v3509, %v3505
    %v3566 = vpack.c.b16 %v3514, %v3510
    %v3567 = vpack.c.b16 %v3515, %v3511
    %v3568 = vpack.c.b16 %v3516, %v3512
    %v3569 = vpack.c.b16 %v3517, %v3513
    %v3570 = vpack.c.b16 %v3522, %v3518
    %v3571 = vpack.c.b16 %v3523, %v3519
    %v3572 = vpack.c.b16 %v3524, %v3520
    %v3573 = vpack.c.b16 %v3525, %v3521
    %v3574 = vpack.c.b16 %v3530, %v3526
    %v3575 = vpack.c.b16 %v3531, %v3527
    %v3576 = vpack.c.b16 %v3532, %v3528
    %v3577 = vpack.c.b16 %v3533, %v3529
    %v3578 = vpack.c.b16 %v3538, %v3534
    %v3579 = vpack.c.b16 %v3539, %v3535
    %v3580 = vpack.c.b16 %v3540, %v3536
    %v3581 = vpack.c.b16 %v3541, %v3537
    %v3582 = vpack.c.b16 %v3546, %v3542
    %v3583 = vpack.c.b16 %v3547, %v3543
    %v3584 = vpack.c.b16 %v3548, %v3544
    %v3585 = vpack.c.b16 %v3549, %v3545
    %v3586 = vpack.c.b16 %v3554, %v3550
    %v3587 = vpack.c.b16 %v3555, %v3551
    %v3588 = vpack.c.b16 %v3556, %v3552
    %v3589 = vpack.c.b16 %v3557, %v3553
    %3622 = vmatprep.subr.bf16.mxu0 %v3559
    %3623 = vmatpush1.bf16.msra.mxu0 %v3558
    %3624 = vmatprep.subr.bf16.mxu0 %v3563
    %3625 = vmatpush1.bf16.msra.mxu0 %v3562
    %3626 = vmatprep.subr.bf16.mxu0 %v3567
    %3627 = vmatpush1.bf16.msra.mxu0 %v3566
    %3628 = vmatprep.subr.bf16.mxu0 %v3571
    %3629 = vmatpush1.bf16.msra.mxu0 %v3570
    %3630 = vmatprep.subr.bf16.mxu0 %v3575
    %3631 = vmatpush1.bf16.msra.mxu0 %v3574
    %3632 = vmatprep.subr.bf16.mxu0 %v3579
    %3633 = vmatpush1.bf16.msra.mxu0 %v3578
    %3634 = vmatprep.subr.bf16.mxu0 %v3583
    %3635 = vmatpush1.bf16.msra.mxu0 %v3582
    %3636 = vmatprep.subr.bf16.mxu0 %v3587
    %3637 = vmatpush1.bf16.msra.mxu0 %v3586
    %3638 = vmatprep.subr.bf16.mxu0 0
    %3639 = vmatpush1.bf16.msra.mxu0 0
    %3640 = vmatprep.subr.bf16.mxu0 0
    %3641 = vmatpush1.bf16.msra.mxu0 0
    %3642 = vmatprep.subr.bf16.mxu0 0
    %3643 = vmatpush1.bf16.msra.mxu0 0
    %3644 = vmatprep.subr.bf16.mxu0 0
    %3645 = vmatpush1.bf16.msra.mxu0 0
    %3646 = vmatprep.subr.bf16.mxu0 0
    %3647 = vmatpush1.bf16.msra.mxu0 0
    %3648 = vmatprep.subr.bf16.mxu0 0
    %3649 = vmatpush1.bf16.msra.mxu0 0
    %3650 = vmatprep.subr.bf16.mxu0 0
    %3651 = vmatpush1.bf16.msra.mxu0 0
    %3652 = vmatprep.subr.bf16.mxu0 0
    %3653 = vmatpush1.bf16.msra.mxu0 0
    %3654 = vmatprep.mubr.bf16.mxu0 0
    %3655 = vmatmul.mubr.bf16.gmra.mrb[0].mxu0 %v3154
    %v3656 = vpop.f32.mrb[0].mxu0
    %v3657 = vadd.f32 %v3415, %v3656
    %v3658 = vpop.f32.mrb[0].mxu0
    %v3659 = vadd.f32 %v3417, %v3658
    %v3660 = vpop.f32.mrb[0].mxu0
    %v3661 = vpop.f32.mrb[0].mxu0
    %3662 = vdwg.mxu0
    %3663 = vmatprep.subr.bf16.mxu0 %v3561
    %3664 = vmatpush1.bf16.msra.mxu0 %v3560
    %3665 = vmatprep.subr.bf16.mxu0 %v3565
    %3666 = vmatpush1.bf16.msra.mxu0 %v3564
    %3667 = vmatprep.subr.bf16.mxu0 %v3569
    %3668 = vmatpush1.bf16.msra.mxu0 %v3568
    %3669 = vmatprep.subr.bf16.mxu0 %v3573
    %3670 = vmatpush1.bf16.msra.mxu0 %v3572
    %3671 = vmatprep.subr.bf16.mxu0 %v3577
    %3672 = vmatpush1.bf16.msra.mxu0 %v3576
    %3673 = vmatprep.subr.bf16.mxu0 %v3581
    %3674 = vmatpush1.bf16.msra.mxu0 %v3580
    %3675 = vmatprep.subr.bf16.mxu0 %v3585
    %3676 = vmatpush1.bf16.msra.mxu0 %v3584
    %3677 = vmatprep.subr.bf16.mxu0 %v3589
    %3678 = vmatpush1.bf16.msra.mxu0 %v3588
    %3679 = vmatprep.subr.bf16.mxu0 0
    %3680 = vmatpush1.bf16.msra.mxu0 0
    %3681 = vmatprep.subr.bf16.mxu0 0
    %3682 = vmatpush1.bf16.msra.mxu0 0
    %3683 = vmatprep.subr.bf16.mxu0 0
    %3684 = vmatpush1.bf16.msra.mxu0 0
    %3685 = vmatprep.subr.bf16.mxu0 0
    %3686 = vmatpush1.bf16.msra.mxu0 0
    %3687 = vmatprep.subr.bf16.mxu0 0
    %3688 = vmatpush1.bf16.msra.mxu0 0
    %3689 = vmatprep.subr.bf16.mxu0 0
    %3690 = vmatpush1.bf16.msra.mxu0 0
    %3691 = vmatprep.subr.bf16.mxu0 0
    %3692 = vmatpush1.bf16.msra.mxu0 0
    %3693 = vmatprep.subr.bf16.mxu0 0
    %3694 = vmatpush1.bf16.msra.mxu0 0
    %3695 = vmatprep.mubr.bf16.mxu0 0
    %3696 = vmatmul.mubr.bf16.gmra.mrb[0].mxu0 %v3154
    %v3697 = vpop.f32.mrb[0].mxu0
    %v3698 = vadd.f32 %v3456, %v3697
    %v3699 = vpop.f32.mrb[0].mxu0
    %v3700 = vadd.f32 %v3458, %v3699
    %v3701 = vpop.f32.mrb[0].mxu0
    %v3702 = vpop.f32.mrb[0].mxu0
    %3703 = vdwg.mxu0
    %v3704 = vadd.f32 %v3657, %v117
    %v3705 = vadd.f32 %v3659, %v121
    %v3706 = vadd.f32 %v3698, %v125
    %v3707 = vadd.f32 %v3700, %v129
    %v3708 = vxor.u32 %v3704, 2147483648
    %v3709 = vmul.f32 %v3708, 1.442695
    %v3710 = vpow.pop %v3709
    %v3711 = vadd.f32 %v3710, 1.0
    %v3712 = vrcp.pop %v3711
    %v3713 = vmul.f32 1.0, %v3712
    %v3714 = vxor.u32 %v3705, 2147483648
    %v3715 = vmul.f32 %v3714, 1.442695
    %v3716 = vpow.pop %v3715
    %v3717 = vadd.f32 %v3716, 1.0
    %v3718 = vrcp.pop %v3717
    %v3719 = vmul.f32 1.0, %v3718
    %v3720 = vtanh.pop %v3706
    %v3721 = vxor.u32 %v3707, 2147483648
    %v3722 = vmul.f32 %v3721, 1.442695
    %v3723 = vpow.pop %v3722
    %v3724 = vadd.f32 %v3723, 1.0
    %v3725 = vrcp.pop %v3724
    %v3726 = vmul.f32 1.0, %v3725
    %v3727 = vmul.f32 %v3719, %v2833
    %v3728 = vmul.f32 %v3713, %v3720
    %v3729 = vadd.f32 %v3727, %v3728
    %v3730 = vtanh.pop %v3729
    %v3731 = vmul.f32 %v3726, %v3730
    %v3732 = vsel %vm2844, %v3731, %v2832
    %v3733 = vsel %vm2844, %v3729, %v2833
    %v3734 = vsel %vm2844, %v3731, 0.0
    %s3735 = scalar_lea.vmem [#allocation6], 24
    %3736 = vst [vmem:[%s3735] sm:$0xff] %v3734
    %s3737 = sadd.s32 %s134, 4
    %v3738 = vstv %s3737
    %vm3739 = vcmp.gt.s32.totalorder %v111, %v3738
    %v3740 = vsel %vm3739, 1, 0
    %3741 = vset.pattern.permute.xlu0 0
    %3742 = vperm.xlu0 %3741, %v3740
    %v3743 = vpop.permute.xlu0 %3742
    %vm3744 = vcmp.eq.s32.totalorder %v3743, 1
    %s3745 = scalar_lea.vmem [#allocation7], 128
    %v3746 = vld [vmem:[%s3745] sm:$0xff]
    %v3747 = vld [vmem:[%s3745 + $0x8] sm:$0xff]
    %v3748 = vld [vmem:[%s3745 + $0x10] sm:$0xff]
    %v3749 = vld [vmem:[%s3745 + $0x18] sm:$0xff]
    %v3750 = vld [vmem:[#allocation10] sm:$0xff]
    %v3751 = vld [vmem:[#allocation10 + $0x8] sm:$0xff]
    %v3752 = vld [vmem:[#allocation10 + $0x10] sm:$0xff]
    %v3753 = vld [vmem:[#allocation10 + $0x18] sm:$0xff]
    %v3754 = vld [vmem:[#allocation10 + $0x20] sm:$0xff]
    %v3755 = vld [vmem:[#allocation10 + $0x28] sm:$0xff]
    %v3756 = vld [vmem:[#allocation10 + $0x30] sm:$0xff]
    %v3757 = vld [vmem:[#allocation10 + $0x38] sm:$0xff]
    %v3758 = vld [vmem:[#allocation10 + $0x40] sm:$0xff]
    %v3759 = vld [vmem:[#allocation10 + $0x48] sm:$0xff]
    %v3760 = vld [vmem:[#allocation10 + $0x50] sm:$0xff]
    %v3761 = vld [vmem:[#allocation10 + $0x58] sm:$0xff]
    %v3762 = vld [vmem:[#allocation10 + $0x60] sm:$0xff]
    %v3763 = vld [vmem:[#allocation10 + $0x68] sm:$0xff]
    %v3764 = vld [vmem:[#allocation10 + $0x70] sm:$0xff]
    %v3765 = vld [vmem:[#allocation10 + $0x78] sm:$0xff]
    %v3766 = vld [vmem:[#allocation10 + $0x80] sm:$0xff]
    %v3767 = vld [vmem:[#allocation10 + $0x88] sm:$0xff]
    %v3768 = vld [vmem:[#allocation10 + $0x90] sm:$0xff]
    %v3769 = vld [vmem:[#allocation10 + $0x98] sm:$0xff]
    %v3770 = vld [vmem:[#allocation10 + $0xa0] sm:$0xff]
    %v3771 = vld [vmem:[#allocation10 + $0xa8] sm:$0xff]
    %v3772 = vld [vmem:[#allocation10 + $0xb0] sm:$0xff]
    %v3773 = vld [vmem:[#allocation10 + $0xb8] sm:$0xff]
    %v3774 = vld [vmem:[#allocation10 + $0xc0] sm:$0xff]
    %v3775 = vld [vmem:[#allocation10 + $0xc8] sm:$0xff]
    %v3776 = vld [vmem:[#allocation10 + $0xd0] sm:$0xff]
    %v3777 = vld [vmem:[#allocation10 + $0xd8] sm:$0xff]
    %v3778 = vld [vmem:[#allocation10 + $0xe0] sm:$0xff]
    %v3779 = vld [vmem:[#allocation10 + $0xe8] sm:$0xff]
    %v3780 = vld [vmem:[#allocation10 + $0xf0] sm:$0xff]
    %v3781 = vld [vmem:[#allocation10 + $0xf8] sm:$0xff]
    %v3814 = vunpack.c.l.b16 %v3750
    %v3815 = vunpack.c.h.b16 %v3750
    %v3816 = vunpack.c.l.b16 %v3751
    %v3817 = vunpack.c.h.b16 %v3751
    %v3818 = vunpack.c.l.b16 %v3752
    %v3819 = vunpack.c.h.b16 %v3752
    %v3820 = vunpack.c.l.b16 %v3753
    %v3821 = vunpack.c.h.b16 %v3753
    %v3822 = vunpack.c.l.b16 %v3754
    %v3823 = vunpack.c.h.b16 %v3754
    %v3824 = vunpack.c.l.b16 %v3755
    %v3825 = vunpack.c.h.b16 %v3755
    %v3826 = vunpack.c.l.b16 %v3756
    %v3827 = vunpack.c.h.b16 %v3756
    %v3828 = vunpack.c.l.b16 %v3757
    %v3829 = vunpack.c.h.b16 %v3757
    %v3830 = vunpack.c.l.b16 %v3758
    %v3831 = vunpack.c.h.b16 %v3758
    %v3832 = vunpack.c.l.b16 %v3759
    %v3833 = vunpack.c.h.b16 %v3759
    %v3834 = vunpack.c.l.b16 %v3760
    %v3835 = vunpack.c.h.b16 %v3760
    %v3836 = vunpack.c.l.b16 %v3761
    %v3837 = vunpack.c.h.b16 %v3761
    %v3838 = vunpack.c.l.b16 %v3762
    %v3839 = vunpack.c.h.b16 %v3762
    %v3840 = vunpack.c.l.b16 %v3763
    %v3841 = vunpack.c.h.b16 %v3763
    %v3842 = vunpack.c.l.b16 %v3764
    %v3843 = vunpack.c.h.b16 %v3764
    %v3844 = vunpack.c.l.b16 %v3765
    %v3845 = vunpack.c.h.b16 %v3765
    %v3846 = vunpack.c.l.b16 %v3766
    %v3847 = vunpack.c.h.b16 %v3766
    %v3848 = vunpack.c.l.b16 %v3767
    %v3849 = vunpack.c.h.b16 %v3767
    %v3850 = vunpack.c.l.b16 %v3768
    %v3851 = vunpack.c.h.b16 %v3768
    %v3852 = vunpack.c.l.b16 %v3769
    %v3853 = vunpack.c.h.b16 %v3769
    %v3854 = vunpack.c.l.b16 %v3770
    %v3855 = vunpack.c.h.b16 %v3770
    %v3856 = vunpack.c.l.b16 %v3771
    %v3857 = vunpack.c.h.b16 %v3771
    %v3858 = vunpack.c.l.b16 %v3772
    %v3859 = vunpack.c.h.b16 %v3772
    %v3860 = vunpack.c.l.b16 %v3773
    %v3861 = vunpack.c.h.b16 %v3773
    %v3862 = vunpack.c.l.b16 %v3774
    %v3863 = vunpack.c.h.b16 %v3774
    %v3864 = vunpack.c.l.b16 %v3775
    %v3865 = vunpack.c.h.b16 %v3775
    %v3866 = vunpack.c.l.b16 %v3776
    %v3867 = vunpack.c.h.b16 %v3776
    %v3868 = vunpack.c.l.b16 %v3777
    %v3869 = vunpack.c.h.b16 %v3777
    %v3870 = vunpack.c.l.b16 %v3778
    %v3871 = vunpack.c.h.b16 %v3778
    %v3872 = vunpack.c.l.b16 %v3779
    %v3873 = vunpack.c.h.b16 %v3779
    %v3874 = vunpack.c.l.b16 %v3780
    %v3875 = vunpack.c.h.b16 %v3780
    %v3876 = vunpack.c.l.b16 %v3781
    %v3877 = vunpack.c.h.b16 %v3781
    %v3878 = vpack.c.b16 %v3818, %v3814
    %v3879 = vpack.c.b16 %v3819, %v3815
    %v3880 = vpack.c.b16 %v3820, %v3816
    %v3881 = vpack.c.b16 %v3821, %v3817
    %v3882 = vpack.c.b16 %v3826, %v3822
    %v3883 = vpack.c.b16 %v3827, %v3823
    %v3884 = vpack.c.b16 %v3828, %v3824
    %v3885 = vpack.c.b16 %v3829, %v3825
    %v3886 = vpack.c.b16 %v3834, %v3830
    %v3887 = vpack.c.b16 %v3835, %v3831
    %v3888 = vpack.c.b16 %v3836, %v3832
    %v3889 = vpack.c.b16 %v3837, %v3833
    %v3890 = vpack.c.b16 %v3842, %v3838
    %v3891 = vpack.c.b16 %v3843, %v3839
    %v3892 = vpack.c.b16 %v3844, %v3840
    %v3893 = vpack.c.b16 %v3845, %v3841
    %v3894 = vpack.c.b16 %v3850, %v3846
    %v3895 = vpack.c.b16 %v3851, %v3847
    %v3896 = vpack.c.b16 %v3852, %v3848
    %v3897 = vpack.c.b16 %v3853, %v3849
    %v3898 = vpack.c.b16 %v3858, %v3854
    %v3899 = vpack.c.b16 %v3859, %v3855
    %v3900 = vpack.c.b16 %v3860, %v3856
    %v3901 = vpack.c.b16 %v3861, %v3857
    %v3902 = vpack.c.b16 %v3866, %v3862
    %v3903 = vpack.c.b16 %v3867, %v3863
    %v3904 = vpack.c.b16 %v3868, %v3864
    %v3905 = vpack.c.b16 %v3869, %v3865
    %v3906 = vpack.c.b16 %v3874, %v3870
    %v3907 = vpack.c.b16 %v3875, %v3871
    %v3908 = vpack.c.b16 %v3876, %v3872
    %v3909 = vpack.c.b16 %v3877, %v3873
    %3942 = vmatprep.subr.bf16.mxu0 %v3879
    %3943 = vmatpush1.bf16.msra.mxu0 %v3878
    %3944 = vmatprep.subr.bf16.mxu0 %v3883
    %3945 = vmatpush1.bf16.msra.mxu0 %v3882
    %3946 = vmatprep.subr.bf16.mxu0 %v3887
    %3947 = vmatpush1.bf16.msra.mxu0 %v3886
    %3948 = vmatprep.subr.bf16.mxu0 %v3891
    %3949 = vmatpush1.bf16.msra.mxu0 %v3890
    %3950 = vmatprep.subr.bf16.mxu0 %v3895
    %3951 = vmatpush1.bf16.msra.mxu0 %v3894
    %3952 = vmatprep.subr.bf16.mxu0 %v3899
    %3953 = vmatpush1.bf16.msra.mxu0 %v3898
    %3954 = vmatprep.subr.bf16.mxu0 %v3903
    %3955 = vmatpush1.bf16.msra.mxu0 %v3902
    %3956 = vmatprep.subr.bf16.mxu0 %v3907
    %3957 = vmatpush1.bf16.msra.mxu0 %v3906
    %3958 = vmatprep.subr.bf16.mxu0 0
    %3959 = vmatpush1.bf16.msra.mxu0 0
    %3960 = vmatprep.subr.bf16.mxu0 0
    %3961 = vmatpush1.bf16.msra.mxu0 0
    %3962 = vmatprep.subr.bf16.mxu0 0
    %3963 = vmatpush1.bf16.msra.mxu0 0
    %3964 = vmatprep.subr.bf16.mxu0 0
    %3965 = vmatpush1.bf16.msra.mxu0 0
    %3966 = vmatprep.subr.bf16.mxu0 0
    %3967 = vmatpush1.bf16.msra.mxu0 0
    %3968 = vmatprep.subr.bf16.mxu0 0
    %3969 = vmatpush1.bf16.msra.mxu0 0
    %3970 = vmatprep.subr.bf16.mxu0 0
    %3971 = vmatpush1.bf16.msra.mxu0 0
    %3972 = vmatprep.subr.bf16.mxu0 0
    %3973 = vmatpush1.bf16.msra.mxu0 0
    %3974 = vmatprep.mubr.bf16.mxu0 0
    %3975 = vmatmul.mubr.bf16.gmra.mrb[0].mxu0 %v3154
    %v3976 = vpop.f32.mrb[0].mxu0
    %v3977 = vadd.f32 0.0, %v3976
    %v3978 = vpop.f32.mrb[0].mxu0
    %v3979 = vadd.f32 0.0, %v3978
    %v3980 = vpop.f32.mrb[0].mxu0
    %v3981 = vpop.f32.mrb[0].mxu0
    %3982 = vdwg.mxu0
    %3983 = vmatprep.subr.bf16.mxu0 %v3881
    %3984 = vmatpush1.bf16.msra.mxu0 %v3880
    %3985 = vmatprep.subr.bf16.mxu0 %v3885
    %3986 = vmatpush1.bf16.msra.mxu0 %v3884
    %3987 = vmatprep.subr.bf16.mxu0 %v3889
    %3988 = vmatpush1.bf16.msra.mxu0 %v3888
    %3989 = vmatprep.subr.bf16.mxu0 %v3893
    %3990 = vmatpush1.bf16.msra.mxu0 %v3892
    %3991 = vmatprep.subr.bf16.mxu0 %v3897
    %3992 = vmatpush1.bf16.msra.mxu0 %v3896
    %3993 = vmatprep.subr.bf16.mxu0 %v3901
    %3994 = vmatpush1.bf16.msra.mxu0 %v3900
    %3995 = vmatprep.subr.bf16.mxu0 %v3905
    %3996 = vmatpush1.bf16.msra.mxu0 %v3904
    %3997 = vmatprep.subr.bf16.mxu0 %v3909
    %3998 = vmatpush1.bf16.msra.mxu0 %v3908
    %3999 = vmatprep.subr.bf16.mxu0 0
    %4000 = vmatpush1.bf16.msra.mxu0 0
    %4001 = vmatprep.subr.bf16.mxu0 0
    %4002 = vmatpush1.bf16.msra.mxu0 0
    %4003 = vmatprep.subr.bf16.mxu0 0
    %4004 = vmatpush1.bf16.msra.mxu0 0
    %4005 = vmatprep.subr.bf16.mxu0 0
    %4006 = vmatpush1.bf16.msra.mxu0 0
    %4007 = vmatprep.subr.bf16.mxu0 0
    %4008 = vmatpush1.bf16.msra.mxu0 0
    %4009 = vmatprep.subr.bf16.mxu0 0
    %4010 = vmatpush1.bf16.msra.mxu0 0
    %4011 = vmatprep.subr.bf16.mxu0 0
    %4012 = vmatpush1.bf16.msra.mxu0 0
    %4013 = vmatprep.subr.bf16.mxu0 0
    %4014 = vmatpush1.bf16.msra.mxu0 0
    %4015 = vmatprep.mubr.bf16.mxu0 0
    %4016 = vmatmul.mubr.bf16.gmra.mrb[0].mxu0 %v3154
    %v4017 = vpop.f32.mrb[0].mxu0
    %v4018 = vadd.f32 0.0, %v4017
    %v4019 = vpop.f32.mrb[0].mxu0
    %v4020 = vadd.f32 0.0, %v4019
    %v4021 = vpop.f32.mrb[0].mxu0
    %v4022 = vpop.f32.mrb[0].mxu0
    %4023 = vdwg.mxu0
    %v4024 = vadd.f32 %v3746, %v3977
    %v4025 = vadd.f32 %v3747, %v3979
    %v4026 = vadd.f32 %v3748, %v4018
    %v4027 = vadd.f32 %v3749, %v4020
    %v4028 = vxor.u32 %v4024, 2147483648
    %v4029 = vmul.f32 %v4028, 1.442695
    %v4030 = vpow.pop %v4029
    %v4031 = vadd.f32 %v4030, 1.0
    %v4032 = vrcp.pop %v4031
    %v4033 = vmul.f32 1.0, %v4032
    %v4034 = vxor.u32 %v4025, 2147483648
    %v4035 = vmul.f32 %v4034, 1.442695
    %v4036 = vpow.pop %v4035
    %v4037 = vadd.f32 %v4036, 1.0
    %v4038 = vrcp.pop %v4037
    %v4039 = vmul.f32 1.0, %v4038
    %v4040 = vtanh.pop %v4026
    %v4041 = vxor.u32 %v4027, 2147483648
    %v4042 = vmul.f32 %v4041, 1.442695
    %v4043 = vpow.pop %v4042
    %v4044 = vadd.f32 %v4043, 1.0
    %v4045 = vrcp.pop %v4044
    %v4046 = vmul.f32 1.0, %v4045
    %v4047 = vmul.f32 %v4039, %v3153
    %v4048 = vmul.f32 %v4033, %v4040
    %v4049 = vadd.f32 %v4047, %v4048
    %v4050 = vtanh.pop %v4049
    %v4051 = vmul.f32 %v4046, %v4050
    %v4052 = vsel %vm3744, %v4051, %v3152
    %v4053 = vsel %vm3744, %v4049, %v3153
    %v4054 = vpack.c.bf16 %v4052, %v4052
    %v4055 = vld [vmem:[#allocation12] sm:$0xff]
    %v4056 = vld [vmem:[#allocation12 + $0x8] sm:$0xff]
    %v4057 = vld [vmem:[#allocation12 + $0x10] sm:$0xff]
    %v4058 = vld [vmem:[#allocation12 + $0x18] sm:$0xff]
    %v4059 = vld [vmem:[#allocation12 + $0x20] sm:$0xff]
    %v4060 = vld [vmem:[#allocation12 + $0x28] sm:$0xff]
    %v4061 = vld [vmem:[#allocation12 + $0x30] sm:$0xff]
    %v4062 = vld [vmem:[#allocation12 + $0x38] sm:$0xff]
    %v4063 = vld [vmem:[#allocation12 + $0x40] sm:$0xff]
    %v4064 = vld [vmem:[#allocation12 + $0x48] sm:$0xff]
    %v4065 = vld [vmem:[#allocation12 + $0x50] sm:$0xff]
    %v4066 = vld [vmem:[#allocation12 + $0x58] sm:$0xff]
    %v4067 = vld [vmem:[#allocation12 + $0x60] sm:$0xff]
    %v4068 = vld [vmem:[#allocation12 + $0x68] sm:$0xff]
    %v4069 = vld [vmem:[#allocation12 + $0x70] sm:$0xff]
    %v4070 = vld [vmem:[#allocation12 + $0x78] sm:$0xff]
    %v4071 = vld [vmem:[#allocation12 + $0x80] sm:$0xff]
    %v4072 = vld [vmem:[#allocation12 + $0x88] sm:$0xff]
    %v4073 = vld [vmem:[#allocation12 + $0x90] sm:$0xff]
    %v4074 = vld [vmem:[#allocation12 + $0x98] sm:$0xff]
    %v4075 = vld [vmem:[#allocation12 + $0xa0] sm:$0xff]
    %v4076 = vld [vmem:[#allocation12 + $0xa8] sm:$0xff]
    %v4077 = vld [vmem:[#allocation12 + $0xb0] sm:$0xff]
    %v4078 = vld [vmem:[#allocation12 + $0xb8] sm:$0xff]
    %v4079 = vld [vmem:[#allocation12 + $0xc0] sm:$0xff]
    %v4080 = vld [vmem:[#allocation12 + $0xc8] sm:$0xff]
    %v4081 = vld [vmem:[#allocation12 + $0xd0] sm:$0xff]
    %v4082 = vld [vmem:[#allocation12 + $0xd8] sm:$0xff]
    %v4083 = vld [vmem:[#allocation12 + $0xe0] sm:$0xff]
    %v4084 = vld [vmem:[#allocation12 + $0xe8] sm:$0xff]
    %v4085 = vld [vmem:[#allocation12 + $0xf0] sm:$0xff]
    %v4086 = vld [vmem:[#allocation12 + $0xf8] sm:$0xff]
    %v4087 = vpack.c.bf16 %v3732, %v3732
    %v4088 = vld [vmem:[#allocation13] sm:$0xff]
    %v4089 = vld [vmem:[#allocation13 + $0x8] sm:$0xff]
    %v4090 = vld [vmem:[#allocation13 + $0x10] sm:$0xff]
    %v4091 = vld [vmem:[#allocation13 + $0x18] sm:$0xff]
    %v4092 = vld [vmem:[#allocation13 + $0x20] sm:$0xff]
    %v4093 = vld [vmem:[#allocation13 + $0x28] sm:$0xff]
    %v4094 = vld [vmem:[#allocation13 + $0x30] sm:$0xff]
    %v4095 = vld [vmem:[#allocation13 + $0x38] sm:$0xff]
    %v4096 = vld [vmem:[#allocation13 + $0x40] sm:$0xff]
    %v4097 = vld [vmem:[#allocation13 + $0x48] sm:$0xff]
    %v4098 = vld [vmem:[#allocation13 + $0x50] sm:$0xff]
    %v4099 = vld [vmem:[#allocation13 + $0x58] sm:$0xff]
    %v4100 = vld [vmem:[#allocation13 + $0x60] sm:$0xff]
    %v4101 = vld [vmem:[#allocation13 + $0x68] sm:$0xff]
    %v4102 = vld [vmem:[#allocation13 + $0x70] sm:$0xff]
    %v4103 = vld [vmem:[#allocation13 + $0x78] sm:$0xff]
    %v4104 = vld [vmem:[#allocation13 + $0x80] sm:$0xff]
    %v4105 = vld [vmem:[#allocation13 + $0x88] sm:$0xff]
    %v4106 = vld [vmem:[#allocation13 + $0x90] sm:$0xff]
    %v4107 = vld [vmem:[#allocation13 + $0x98] sm:$0xff]
    %v4108 = vld [vmem:[#allocation13 + $0xa0] sm:$0xff]
    %v4109 = vld [vmem:[#allocation13 + $0xa8] sm:$0xff]
    %v4110 = vld [vmem:[#allocation13 + $0xb0] sm:$0xff]
    %v4111 = vld [vmem:[#allocation13 + $0xb8] sm:$0xff]
    %v4112 = vld [vmem:[#allocation13 + $0xc0] sm:$0xff]
    %v4113 = vld [vmem:[#allocation13 + $0xc8] sm:$0xff]
    %v4114 = vld [vmem:[#allocation13 + $0xd0] sm:$0xff]
    %v4115 = vld [vmem:[#allocation13 + $0xd8] sm:$0xff]
    %v4116 = vld [vmem:[#allocation13 + $0xe0] sm:$0xff]
    %v4117 = vld [vmem:[#allocation13 + $0xe8] sm:$0xff]
    %v4118 = vld [vmem:[#allocation13 + $0xf0] sm:$0xff]
    %v4119 = vld [vmem:[#allocation13 + $0xf8] sm:$0xff]
    %v4152 = vunpack.c.l.b16 %v4088
    %v4153 = vunpack.c.h.b16 %v4088
    %v4154 = vunpack.c.l.b16 %v4089
    %v4155 = vunpack.c.h.b16 %v4089
    %v4156 = vunpack.c.l.b16 %v4090
    %v4157 = vunpack.c.h.b16 %v4090
    %v4158 = vunpack.c.l.b16 %v4091
    %v4159 = vunpack.c.h.b16 %v4091
    %v4160 = vunpack.c.l.b16 %v4092
    %v4161 = vunpack.c.h.b16 %v4092
    %v4162 = vunpack.c.l.b16 %v4093
    %v4163 = vunpack.c.h.b16 %v4093
    %v4164 = vunpack.c.l.b16 %v4094
    %v4165 = vunpack.c.h.b16 %v4094
    %v4166 = vunpack.c.l.b16 %v4095
    %v4167 = vunpack.c.h.b16 %v4095
    %v4168 = vunpack.c.l.b16 %v4096
    %v4169 = vunpack.c.h.b16 %v4096
    %v4170 = vunpack.c.l.b16 %v4097
    %v4171 = vunpack.c.h.b16 %v4097
    %v4172 = vunpack.c.l.b16 %v4098
    %v4173 = vunpack.c.h.b16 %v4098
    %v4174 = vunpack.c.l.b16 %v4099
    %v4175 = vunpack.c.h.b16 %v4099
    %v4176 = vunpack.c.l.b16 %v4100
    %v4177 = vunpack.c.h.b16 %v4100
    %v4178 = vunpack.c.l.b16 %v4101
    %v4179 = vunpack.c.h.b16 %v4101
    %v4180 = vunpack.c.l.b16 %v4102
    %v4181 = vunpack.c.h.b16 %v4102
    %v4182 = vunpack.c.l.b16 %v4103
    %v4183 = vunpack.c.h.b16 %v4103
    %v4184 = vunpack.c.l.b16 %v4104
    %v4185 = vunpack.c.h.b16 %v4104
    %v4186 = vunpack.c.l.b16 %v4105
    %v4187 = vunpack.c.h.b16 %v4105
    %v4188 = vunpack.c.l.b16 %v4106
    %v4189 = vunpack.c.h.b16 %v4106
    %v4190 = vunpack.c.l.b16 %v4107
    %v4191 = vunpack.c.h.b16 %v4107
    %v4192 = vunpack.c.l.b16 %v4108
    %v4193 = vunpack.c.h.b16 %v4108
    %v4194 = vunpack.c.l.b16 %v4109
    %v4195 = vunpack.c.h.b16 %v4109
    %v4196 = vunpack.c.l.b16 %v4110
    %v4197 = vunpack.c.h.b16 %v4110
    %v4198 = vunpack.c.l.b16 %v4111
    %v4199 = vunpack.c.h.b16 %v4111
    %v4200 = vunpack.c.l.b16 %v4112
    %v4201 = vunpack.c.h.b16 %v4112
    %v4202 = vunpack.c.l.b16 %v4113
    %v4203 = vunpack.c.h.b16 %v4113
    %v4204 = vunpack.c.l.b16 %v4114
    %v4205 = vunpack.c.h.b16 %v4114
    %v4206 = vunpack.c.l.b16 %v4115
    %v4207 = vunpack.c.h.b16 %v4115
    %v4208 = vunpack.c.l.b16 %v4116
    %v4209 = vunpack.c.h.b16 %v4116
    %v4210 = vunpack.c.l.b16 %v4117
    %v4211 = vunpack.c.h.b16 %v4117
    %v4212 = vunpack.c.l.b16 %v4118
    %v4213 = vunpack.c.h.b16 %v4118
    %v4214 = vunpack.c.l.b16 %v4119
    %v4215 = vunpack.c.h.b16 %v4119
    %v4216 = vpack.c.b16 %v4156, %v4152
    %v4217 = vpack.c.b16 %v4157, %v4153
    %v4218 = vpack.c.b16 %v4158, %v4154
    %v4219 = vpack.c.b16 %v4159, %v4155
    %v4220 = vpack.c.b16 %v4164, %v4160
    %v4221 = vpack.c.b16 %v4165, %v4161
    %v4222 = vpack.c.b16 %v4166, %v4162
    %v4223 = vpack.c.b16 %v4167, %v4163
    %v4224 = vpack.c.b16 %v4172, %v4168
    %v4225 = vpack.c.b16 %v4173, %v4169
    %v4226 = vpack.c.b16 %v4174, %v4170
    %v4227 = vpack.c.b16 %v4175, %v4171
    %v4228 = vpack.c.b16 %v4180, %v4176
    %v4229 = vpack.c.b16 %v4181, %v4177
    %v4230 = vpack.c.b16 %v4182, %v4178
    %v4231 = vpack.c.b16 %v4183, %v4179
    %v4232 = vpack.c.b16 %v4188, %v4184
    %v4233 = vpack.c.b16 %v4189, %v4185
    %v4234 = vpack.c.b16 %v4190, %v4186
    %v4235 = vpack.c.b16 %v4191, %v4187
    %v4236 = vpack.c.b16 %v4196, %v4192
    %v4237 = vpack.c.b16 %v4197, %v4193
    %v4238 = vpack.c.b16 %v4198, %v4194
    %v4239 = vpack.c.b16 %v4199, %v4195
    %v4240 = vpack.c.b16 %v4204, %v4200
    %v4241 = vpack.c.b16 %v4205, %v4201
    %v4242 = vpack.c.b16 %v4206, %v4202
    %v4243 = vpack.c.b16 %v4207, %v4203
    %v4244 = vpack.c.b16 %v4212, %v4208
    %v4245 = vpack.c.b16 %v4213, %v4209
    %v4246 = vpack.c.b16 %v4214, %v4210
    %v4247 = vpack.c.b16 %v4215, %v4211
    %4280 = vmatprep.subr.bf16.mxu0 %v4217
    %4281 = vmatpush1.bf16.msra.mxu0 %v4216
    %4282 = vmatprep.subr.bf16.mxu0 %v4221
    %4283 = vmatpush1.bf16.msra.mxu0 %v4220
    %4284 = vmatprep.subr.bf16.mxu0 %v4225
    %4285 = vmatpush1.bf16.msra.mxu0 %v4224
    %4286 = vmatprep.subr.bf16.mxu0 %v4229
    %4287 = vmatpush1.bf16.msra.mxu0 %v4228
    %4288 = vmatprep.subr.bf16.mxu0 %v4233
    %4289 = vmatpush1.bf16.msra.mxu0 %v4232
    %4290 = vmatprep.subr.bf16.mxu0 %v4237
    %4291 = vmatpush1.bf16.msra.mxu0 %v4236
    %4292 = vmatprep.subr.bf16.mxu0 %v4241
    %4293 = vmatpush1.bf16.msra.mxu0 %v4240
    %4294 = vmatprep.subr.bf16.mxu0 %v4245
    %4295 = vmatpush1.bf16.msra.mxu0 %v4244
    %4296 = vmatprep.subr.bf16.mxu0 0
    %4297 = vmatpush1.bf16.msra.mxu0 0
    %4298 = vmatprep.subr.bf16.mxu0 0
    %4299 = vmatpush1.bf16.msra.mxu0 0
    %4300 = vmatprep.subr.bf16.mxu0 0
    %4301 = vmatpush1.bf16.msra.mxu0 0
    %4302 = vmatprep.subr.bf16.mxu0 0
    %4303 = vmatpush1.bf16.msra.mxu0 0
    %4304 = vmatprep.subr.bf16.mxu0 0
    %4305 = vmatpush1.bf16.msra.mxu0 0
    %4306 = vmatprep.subr.bf16.mxu0 0
    %4307 = vmatpush1.bf16.msra.mxu0 0
    %4308 = vmatprep.subr.bf16.mxu0 0
    %4309 = vmatpush1.bf16.msra.mxu0 0
    %4310 = vmatprep.subr.bf16.mxu0 0
    %4311 = vmatpush1.bf16.msra.mxu0 0
    %4312 = vmatprep.mubr.bf16.mxu0 0
    %4313 = vmatmul.mubr.bf16.gmra.mrb[0].mxu0 %v4087
    %v4314 = vpop.f32.mrb[0].mxu0
    %v4315 = vadd.f32 0.0, %v4314
    %v4316 = vpop.f32.mrb[0].mxu0
    %v4317 = vadd.f32 0.0, %v4316
    %v4318 = vpop.f32.mrb[0].mxu0
    %v4319 = vpop.f32.mrb[0].mxu0
    %4320 = vdwg.mxu0
    %4321 = vmatprep.subr.bf16.mxu0 %v4219
    %4322 = vmatpush1.bf16.msra.mxu0 %v4218
    %4323 = vmatprep.subr.bf16.mxu0 %v4223
    %4324 = vmatpush1.bf16.msra.mxu0 %v4222
    %4325 = vmatprep.subr.bf16.mxu0 %v4227
    %4326 = vmatpush1.bf16.msra.mxu0 %v4226
    %4327 = vmatprep.subr.bf16.mxu0 %v4231
    %4328 = vmatpush1.bf16.msra.mxu0 %v4230
    %4329 = vmatprep.subr.bf16.mxu0 %v4235
    %4330 = vmatpush1.bf16.msra.mxu0 %v4234
    %4331 = vmatprep.subr.bf16.mxu0 %v4239
    %4332 = vmatpush1.bf16.msra.mxu0 %v4238
    %4333 = vmatprep.subr.bf16.mxu0 %v4243
    %4334 = vmatpush1.bf16.msra.mxu0 %v4242
    %4335 = vmatprep.subr.bf16.mxu0 %v4247
    %4336 = vmatpush1.bf16.msra.mxu0 %v4246
    %4337 = vmatprep.subr.bf16.mxu0 0
    %4338 = vmatpush1.bf16.msra.mxu0 0
    %4339 = vmatprep.subr.bf16.mxu0 0
    %4340 = vmatpush1.bf16.msra.mxu0 0
    %4341 = vmatprep.subr.bf16.mxu0 0
    %4342 = vmatpush1.bf16.msra.mxu0 0
    %4343 = vmatprep.subr.bf16.mxu0 0
    %4344 = vmatpush1.bf16.msra.mxu0 0
    %4345 = vmatprep.subr.bf16.mxu0 0
    %4346 = vmatpush1.bf16.msra.mxu0 0
    %4347 = vmatprep.subr.bf16.mxu0 0
    %4348 = vmatpush1.bf16.msra.mxu0 0
    %4349 = vmatprep.subr.bf16.mxu0 0
    %4350 = vmatpush1.bf16.msra.mxu0 0
    %4351 = vmatprep.subr.bf16.mxu0 0
    %4352 = vmatpush1.bf16.msra.mxu0 0
    %4353 = vmatprep.mubr.bf16.mxu0 0
    %4354 = vmatmul.mubr.bf16.gmra.mrb[0].mxu0 %v4087
    %v4355 = vpop.f32.mrb[0].mxu0
    %v4356 = vadd.f32 0.0, %v4355
    %v4357 = vpop.f32.mrb[0].mxu0
    %v4358 = vadd.f32 0.0, %v4357
    %v4359 = vpop.f32.mrb[0].mxu0
    %v4360 = vpop.f32.mrb[0].mxu0
    %4361 = vdwg.mxu0
    %v4394 = vunpack.c.l.b16 %v4055
    %v4395 = vunpack.c.h.b16 %v4055
    %v4396 = vunpack.c.l.b16 %v4056
    %v4397 = vunpack.c.h.b16 %v4056
    %v4398 = vunpack.c.l.b16 %v4057
    %v4399 = vunpack.c.h.b16 %v4057
    %v4400 = vunpack.c.l.b16 %v4058
    %v4401 = vunpack.c.h.b16 %v4058
    %v4402 = vunpack.c.l.b16 %v4059
    %v4403 = vunpack.c.h.b16 %v4059
    %v4404 = vunpack.c.l.b16 %v4060
    %v4405 = vunpack.c.h.b16 %v4060
    %v4406 = vunpack.c.l.b16 %v4061
    %v4407 = vunpack.c.h.b16 %v4061
    %v4408 = vunpack.c.l.b16 %v4062
    %v4409 = vunpack.c.h.b16 %v4062
    %v4410 = vunpack.c.l.b16 %v4063
    %v4411 = vunpack.c.h.b16 %v4063
    %v4412 = vunpack.c.l.b16 %v4064
    %v4413 = vunpack.c.h.b16 %v4064
    %v4414 = vunpack.c.l.b16 %v4065
    %v4415 = vunpack.c.h.b16 %v4065
    %v4416 = vunpack.c.l.b16 %v4066
    %v4417 = vunpack.c.h.b16 %v4066
    %v4418 = vunpack.c.l.b16 %v4067
    %v4419 = vunpack.c.h.b16 %v4067
    %v4420 = vunpack.c.l.b16 %v4068
    %v4421 = vunpack.c.h.b16 %v4068
    %v4422 = vunpack.c.l.b16 %v4069
    %v4423 = vunpack.c.h.b16 %v4069
    %v4424 = vunpack.c.l.b16 %v4070
    %v4425 = vunpack.c.h.b16 %v4070
    %v4426 = vunpack.c.l.b16 %v4071
    %v4427 = vunpack.c.h.b16 %v4071
    %v4428 = vunpack.c.l.b16 %v4072
    %v4429 = vunpack.c.h.b16 %v4072
    %v4430 = vunpack.c.l.b16 %v4073
    %v4431 = vunpack.c.h.b16 %v4073
    %v4432 = vunpack.c.l.b16 %v4074
    %v4433 = vunpack.c.h.b16 %v4074
    %v4434 = vunpack.c.l.b16 %v4075
    %v4435 = vunpack.c.h.b16 %v4075
    %v4436 = vunpack.c.l.b16 %v4076
    %v4437 = vunpack.c.h.b16 %v4076
    %v4438 = vunpack.c.l.b16 %v4077
    %v4439 = vunpack.c.h.b16 %v4077
    %v4440 = vunpack.c.l.b16 %v4078
    %v4441 = vunpack.c.h.b16 %v4078
    %v4442 = vunpack.c.l.b16 %v4079
    %v4443 = vunpack.c.h.b16 %v4079
    %v4444 = vunpack.c.l.b16 %v4080
    %v4445 = vunpack.c.h.b16 %v4080
    %v4446 = vunpack.c.l.b16 %v4081
    %v4447 = vunpack.c.h.b16 %v4081
    %v4448 = vunpack.c.l.b16 %v4082
    %v4449 = vunpack.c.h.b16 %v4082
    %v4450 = vunpack.c.l.b16 %v4083
    %v4451 = vunpack.c.h.b16 %v4083
    %v4452 = vunpack.c.l.b16 %v4084
    %v4453 = vunpack.c.h.b16 %v4084
    %v4454 = vunpack.c.l.b16 %v4085
    %v4455 = vunpack.c.h.b16 %v4085
    %v4456 = vunpack.c.l.b16 %v4086
    %v4457 = vunpack.c.h.b16 %v4086
    %v4458 = vpack.c.b16 %v4398, %v4394
    %v4459 = vpack.c.b16 %v4399, %v4395
    %v4460 = vpack.c.b16 %v4400, %v4396
    %v4461 = vpack.c.b16 %v4401, %v4397
    %v4462 = vpack.c.b16 %v4406, %v4402
    %v4463 = vpack.c.b16 %v4407, %v4403
    %v4464 = vpack.c.b16 %v4408, %v4404
    %v4465 = vpack.c.b16 %v4409, %v4405
    %v4466 = vpack.c.b16 %v4414, %v4410
    %v4467 = vpack.c.b16 %v4415, %v4411
    %v4468 = vpack.c.b16 %v4416, %v4412
    %v4469 = vpack.c.b16 %v4417, %v4413
    %v4470 = vpack.c.b16 %v4422, %v4418
    %v4471 = vpack.c.b16 %v4423, %v4419
    %v4472 = vpack.c.b16 %v4424, %v4420
    %v4473 = vpack.c.b16 %v4425, %v4421
    %v4474 = vpack.c.b16 %v4430, %v4426
    %v4475 = vpack.c.b16 %v4431, %v4427
    %v4476 = vpack.c.b16 %v4432, %v4428
    %v4477 = vpack.c.b16 %v4433, %v4429
    %v4478 = vpack.c.b16 %v4438, %v4434
    %v4479 = vpack.c.b16 %v4439, %v4435
    %v4480 = vpack.c.b16 %v4440, %v4436
    %v4481 = vpack.c.b16 %v4441, %v4437
    %v4482 = vpack.c.b16 %v4446, %v4442
    %v4483 = vpack.c.b16 %v4447, %v4443
    %v4484 = vpack.c.b16 %v4448, %v4444
    %v4485 = vpack.c.b16 %v4449, %v4445
    %v4486 = vpack.c.b16 %v4454, %v4450
    %v4487 = vpack.c.b16 %v4455, %v4451
    %v4488 = vpack.c.b16 %v4456, %v4452
    %v4489 = vpack.c.b16 %v4457, %v4453
    %4522 = vmatprep.subr.bf16.mxu0 %v4459
    %4523 = vmatpush1.bf16.msra.mxu0 %v4458
    %4524 = vmatprep.subr.bf16.mxu0 %v4463
    %4525 = vmatpush1.bf16.msra.mxu0 %v4462
    %4526 = vmatprep.subr.bf16.mxu0 %v4467
    %4527 = vmatpush1.bf16.msra.mxu0 %v4466
    %4528 = vmatprep.subr.bf16.mxu0 %v4471
    %4529 = vmatpush1.bf16.msra.mxu0 %v4470
    %4530 = vmatprep.subr.bf16.mxu0 %v4475
    %4531 = vmatpush1.bf16.msra.mxu0 %v4474
    %4532 = vmatprep.subr.bf16.mxu0 %v4479
    %4533 = vmatpush1.bf16.msra.mxu0 %v4478
    %4534 = vmatprep.subr.bf16.mxu0 %v4483
    %4535 = vmatpush1.bf16.msra.mxu0 %v4482
    %4536 = vmatprep.subr.bf16.mxu0 %v4487
    %4537 = vmatpush1.bf16.msra.mxu0 %v4486
    %4538 = vmatprep.subr.bf16.mxu0 0
    %4539 = vmatpush1.bf16.msra.mxu0 0
    %4540 = vmatprep.subr.bf16.mxu0 0
    %4541 = vmatpush1.bf16.msra.mxu0 0
    %4542 = vmatprep.subr.bf16.mxu0 0
    %4543 = vmatpush1.bf16.msra.mxu0 0
    %4544 = vmatprep.subr.bf16.mxu0 0
    %4545 = vmatpush1.bf16.msra.mxu0 0
    %4546 = vmatprep.subr.bf16.mxu0 0
    %4547 = vmatpush1.bf16.msra.mxu0 0
    %4548 = vmatprep.subr.bf16.mxu0 0
    %4549 = vmatpush1.bf16.msra.mxu0 0
    %4550 = vmatprep.subr.bf16.mxu0 0
    %4551 = vmatpush1.bf16.msra.mxu0 0
    %4552 = vmatprep.subr.bf16.mxu0 0
    %4553 = vmatpush1.bf16.msra.mxu0 0
    %4554 = vmatprep.mubr.bf16.mxu0 0
    %4555 = vmatmul.mubr.bf16.gmra.mrb[0].mxu0 %v4054
    %v4556 = vpop.f32.mrb[0].mxu0
    %v4557 = vadd.f32 %v4315, %v4556
    %v4558 = vpop.f32.mrb[0].mxu0
    %v4559 = vadd.f32 %v4317, %v4558
    %v4560 = vpop.f32.mrb[0].mxu0
    %v4561 = vpop.f32.mrb[0].mxu0
    %4562 = vdwg.mxu0
    %4563 = vmatprep.subr.bf16.mxu0 %v4461
    %4564 = vmatpush1.bf16.msra.mxu0 %v4460
    %4565 = vmatprep.subr.bf16.mxu0 %v4465
    %4566 = vmatpush1.bf16.msra.mxu0 %v4464
    %4567 = vmatprep.subr.bf16.mxu0 %v4469
    %4568 = vmatpush1.bf16.msra.mxu0 %v4468
    %4569 = vmatprep.subr.bf16.mxu0 %v4473
    %4570 = vmatpush1.bf16.msra.mxu0 %v4472
    %4571 = vmatprep.subr.bf16.mxu0 %v4477
    %4572 = vmatpush1.bf16.msra.mxu0 %v4476
    %4573 = vmatprep.subr.bf16.mxu0 %v4481
    %4574 = vmatpush1.bf16.msra.mxu0 %v4480
    %4575 = vmatprep.subr.bf16.mxu0 %v4485
    %4576 = vmatpush1.bf16.msra.mxu0 %v4484
    %4577 = vmatprep.subr.bf16.mxu0 %v4489
    %4578 = vmatpush1.bf16.msra.mxu0 %v4488
    %4579 = vmatprep.subr.bf16.mxu0 0
    %4580 = vmatpush1.bf16.msra.mxu0 0
    %4581 = vmatprep.subr.bf16.mxu0 0
    %4582 = vmatpush1.bf16.msra.mxu0 0
    %4583 = vmatprep.subr.bf16.mxu0 0
    %4584 = vmatpush1.bf16.msra.mxu0 0
    %4585 = vmatprep.subr.bf16.mxu0 0
    %4586 = vmatpush1.bf16.msra.mxu0 0
    %4587 = vmatprep.subr.bf16.mxu0 0
    %4588 = vmatpush1.bf16.msra.mxu0 0
    %4589 = vmatprep.subr.bf16.mxu0 0
    %4590 = vmatpush1.bf16.msra.mxu0 0
    %4591 = vmatprep.subr.bf16.mxu0 0
    %4592 = vmatpush1.bf16.msra.mxu0 0
    %4593 = vmatprep.subr.bf16.mxu0 0
    %4594 = vmatpush1.bf16.msra.mxu0 0
    %4595 = vmatprep.mubr.bf16.mxu0 0
    %4596 = vmatmul.mubr.bf16.gmra.mrb[0].mxu0 %v4054
    %v4597 = vpop.f32.mrb[0].mxu0
    %v4598 = vadd.f32 %v4356, %v4597
    %v4599 = vpop.f32.mrb[0].mxu0
    %v4600 = vadd.f32 %v4358, %v4599
    %v4601 = vpop.f32.mrb[0].mxu0
    %v4602 = vpop.f32.mrb[0].mxu0
    %4603 = vdwg.mxu0
    %v4604 = vadd.f32 %v4557, %v117
    %v4605 = vadd.f32 %v4559, %v121
    %v4606 = vadd.f32 %v4598, %v125
    %v4607 = vadd.f32 %v4600, %v129
    %v4608 = vxor.u32 %v4604, 2147483648
    %v4609 = vmul.f32 %v4608, 1.442695
    %v4610 = vpow.pop %v4609
    %v4611 = vadd.f32 %v4610, 1.0
    %v4612 = vrcp.pop %v4611
    %v4613 = vmul.f32 1.0, %v4612
    %v4614 = vxor.u32 %v4605, 2147483648
    %v4615 = vmul.f32 %v4614, 1.442695
    %v4616 = vpow.pop %v4615
    %v4617 = vadd.f32 %v4616, 1.0
    %v4618 = vrcp.pop %v4617
    %v4619 = vmul.f32 1.0, %v4618
    %v4620 = vtanh.pop %v4606
    %v4621 = vxor.u32 %v4607, 2147483648
    %v4622 = vmul.f32 %v4621, 1.442695
    %v4623 = vpow.pop %v4622
    %v4624 = vadd.f32 %v4623, 1.0
    %v4625 = vrcp.pop %v4624
    %v4626 = vmul.f32 1.0, %v4625
    %v4627 = vmul.f32 %v4619, %v3733
    %v4628 = vmul.f32 %v4613, %v4620
    %v4629 = vadd.f32 %v4627, %v4628
    %v4630 = vtanh.pop %v4629
    %v4631 = vmul.f32 %v4626, %v4630
    %v4632 = vsel %vm3744, %v4631, %v3732
    %v4633 = vsel %vm3744, %v4629, %v3733
    %v4634 = vsel %vm3744, %v4631, 0.0
    %s4635 = scalar_lea.vmem [#allocation6], 32
    %4636 = vst [vmem:[%s4635] sm:$0xff] %v4634
    %s4637 = sadd.s32 %s134, 5
    %v4638 = vstv %s4637
    %vm4639 = vcmp.gt.s32.totalorder %v111, %v4638
    %v4640 = vsel %vm4639, 1, 0
    %4641 = vset.pattern.permute.xlu0 0
    %4642 = vperm.xlu0 %4641, %v4640
    %v4643 = vpop.permute.xlu0 %4642
    %vm4644 = vcmp.eq.s32.totalorder %v4643, 1
    %s4645 = scalar_lea.vmem [#allocation7], 160
    %v4646 = vld [vmem:[%s4645] sm:$0xff]
    %v4647 = vld [vmem:[%s4645 + $0x8] sm:$0xff]
    %v4648 = vld [vmem:[%s4645 + $0x10] sm:$0xff]
    %v4649 = vld [vmem:[%s4645 + $0x18] sm:$0xff]
    %v4650 = vld [vmem:[#allocation10] sm:$0xff]
    %v4651 = vld [vmem:[#allocation10 + $0x8] sm:$0xff]
    %v4652 = vld [vmem:[#allocation10 + $0x10] sm:$0xff]
    %v4653 = vld [vmem:[#allocation10 + $0x18] sm:$0xff]
    %v4654 = vld [vmem:[#allocation10 + $0x20] sm:$0xff]
    %v4655 = vld [vmem:[#allocation10 + $0x28] sm:$0xff]
    %v4656 = vld [vmem:[#allocation10 + $0x30] sm:$0xff]
    %v4657 = vld [vmem:[#allocation10 + $0x38] sm:$0xff]
    %v4658 = vld [vmem:[#allocation10 + $0x40] sm:$0xff]
    %v4659 = vld [vmem:[#allocation10 + $0x48] sm:$0xff]
    %v4660 = vld [vmem:[#allocation10 + $0x50] sm:$0xff]
    %v4661 = vld [vmem:[#allocation10 + $0x58] sm:$0xff]
    %v4662 = vld [vmem:[#allocation10 + $0x60] sm:$0xff]
    %v4663 = vld [vmem:[#allocation10 + $0x68] sm:$0xff]
    %v4664 = vld [vmem:[#allocation10 + $0x70] sm:$0xff]
    %v4665 = vld [vmem:[#allocation10 + $0x78] sm:$0xff]
    %v4666 = vld [vmem:[#allocation10 + $0x80] sm:$0xff]
    %v4667 = vld [vmem:[#allocation10 + $0x88] sm:$0xff]
    %v4668 = vld [vmem:[#allocation10 + $0x90] sm:$0xff]
    %v4669 = vld [vmem:[#allocation10 + $0x98] sm:$0xff]
    %v4670 = vld [vmem:[#allocation10 + $0xa0] sm:$0xff]
    %v4671 = vld [vmem:[#allocation10 + $0xa8] sm:$0xff]
    %v4672 = vld [vmem:[#allocation10 + $0xb0] sm:$0xff]
    %v4673 = vld [vmem:[#allocation10 + $0xb8] sm:$0xff]
    %v4674 = vld [vmem:[#allocation10 + $0xc0] sm:$0xff]
    %v4675 = vld [vmem:[#allocation10 + $0xc8] sm:$0xff]
    %v4676 = vld [vmem:[#allocation10 + $0xd0] sm:$0xff]
    %v4677 = vld [vmem:[#allocation10 + $0xd8] sm:$0xff]
    %v4678 = vld [vmem:[#allocation10 + $0xe0] sm:$0xff]
    %v4679 = vld [vmem:[#allocation10 + $0xe8] sm:$0xff]
    %v4680 = vld [vmem:[#allocation10 + $0xf0] sm:$0xff]
    %v4681 = vld [vmem:[#allocation10 + $0xf8] sm:$0xff]
    %v4714 = vunpack.c.l.b16 %v4650
    %v4715 = vunpack.c.h.b16 %v4650
    %v4716 = vunpack.c.l.b16 %v4651
    %v4717 = vunpack.c.h.b16 %v4651
    %v4718 = vunpack.c.l.b16 %v4652
    %v4719 = vunpack.c.h.b16 %v4652
    %v4720 = vunpack.c.l.b16 %v4653
    %v4721 = vunpack.c.h.b16 %v4653
    %v4722 = vunpack.c.l.b16 %v4654
    %v4723 = vunpack.c.h.b16 %v4654
    %v4724 = vunpack.c.l.b16 %v4655
    %v4725 = vunpack.c.h.b16 %v4655
    %v4726 = vunpack.c.l.b16 %v4656
    %v4727 = vunpack.c.h.b16 %v4656
    %v4728 = vunpack.c.l.b16 %v4657
    %v4729 = vunpack.c.h.b16 %v4657
    %v4730 = vunpack.c.l.b16 %v4658
    %v4731 = vunpack.c.h.b16 %v4658
    %v4732 = vunpack.c.l.b16 %v4659
    %v4733 = vunpack.c.h.b16 %v4659
    %v4734 = vunpack.c.l.b16 %v4660
    %v4735 = vunpack.c.h.b16 %v4660
    %v4736 = vunpack.c.l.b16 %v4661
    %v4737 = vunpack.c.h.b16 %v4661
    %v4738 = vunpack.c.l.b16 %v4662
    %v4739 = vunpack.c.h.b16 %v4662
    %v4740 = vunpack.c.l.b16 %v4663
    %v4741 = vunpack.c.h.b16 %v4663
    %v4742 = vunpack.c.l.b16 %v4664
    %v4743 = vunpack.c.h.b16 %v4664
    %v4744 = vunpack.c.l.b16 %v4665
    %v4745 = vunpack.c.h.b16 %v4665
    %v4746 = vunpack.c.l.b16 %v4666
    %v4747 = vunpack.c.h.b16 %v4666
    %v4748 = vunpack.c.l.b16 %v4667
    %v4749 = vunpack.c.h.b16 %v4667
    %v4750 = vunpack.c.l.b16 %v4668
    %v4751 = vunpack.c.h.b16 %v4668
    %v4752 = vunpack.c.l.b16 %v4669
    %v4753 = vunpack.c.h.b16 %v4669
    %v4754 = vunpack.c.l.b16 %v4670
    %v4755 = vunpack.c.h.b16 %v4670
    %v4756 = vunpack.c.l.b16 %v4671
    %v4757 = vunpack.c.h.b16 %v4671
    %v4758 = vunpack.c.l.b16 %v4672
    %v4759 = vunpack.c.h.b16 %v4672
    %v4760 = vunpack.c.l.b16 %v4673
    %v4761 = vunpack.c.h.b16 %v4673
    %v4762 = vunpack.c.l.b16 %v4674
    %v4763 = vunpack.c.h.b16 %v4674
    %v4764 = vunpack.c.l.b16 %v4675
    %v4765 = vunpack.c.h.b16 %v4675
    %v4766 = vunpack.c.l.b16 %v4676
    %v4767 = vunpack.c.h.b16 %v4676
    %v4768 = vunpack.c.l.b16 %v4677
    %v4769 = vunpack.c.h.b16 %v4677
    %v4770 = vunpack.c.l.b16 %v4678
    %v4771 = vunpack.c.h.b16 %v4678
    %v4772 = vunpack.c.l.b16 %v4679
    %v4773 = vunpack.c.h.b16 %v4679
    %v4774 = vunpack.c.l.b16 %v4680
    %v4775 = vunpack.c.h.b16 %v4680
    %v4776 = vunpack.c.l.b16 %v4681
    %v4777 = vunpack.c.h.b16 %v4681
    %v4778 = vpack.c.b16 %v4718, %v4714
    %v4779 = vpack.c.b16 %v4719, %v4715
    %v4780 = vpack.c.b16 %v4720, %v4716
    %v4781 = vpack.c.b16 %v4721, %v4717
    %v4782 = vpack.c.b16 %v4726, %v4722
    %v4783 = vpack.c.b16 %v4727, %v4723
    %v4784 = vpack.c.b16 %v4728, %v4724
    %v4785 = vpack.c.b16 %v4729, %v4725
    %v4786 = vpack.c.b16 %v4734, %v4730
    %v4787 = vpack.c.b16 %v4735, %v4731
    %v4788 = vpack.c.b16 %v4736, %v4732
    %v4789 = vpack.c.b16 %v4737, %v4733
    %v4790 = vpack.c.b16 %v4742, %v4738
    %v4791 = vpack.c.b16 %v4743, %v4739
    %v4792 = vpack.c.b16 %v4744, %v4740
    %v4793 = vpack.c.b16 %v4745, %v4741
    %v4794 = vpack.c.b16 %v4750, %v4746
    %v4795 = vpack.c.b16 %v4751, %v4747
    %v4796 = vpack.c.b16 %v4752, %v4748
    %v4797 = vpack.c.b16 %v4753, %v4749
    %v4798 = vpack.c.b16 %v4758, %v4754
    %v4799 = vpack.c.b16 %v4759, %v4755
    %v4800 = vpack.c.b16 %v4760, %v4756
    %v4801 = vpack.c.b16 %v4761, %v4757
    %v4802 = vpack.c.b16 %v4766, %v4762
    %v4803 = vpack.c.b16 %v4767, %v4763
    %v4804 = vpack.c.b16 %v4768, %v4764
    %v4805 = vpack.c.b16 %v4769, %v4765
    %v4806 = vpack.c.b16 %v4774, %v4770
    %v4807 = vpack.c.b16 %v4775, %v4771
    %v4808 = vpack.c.b16 %v4776, %v4772
    %v4809 = vpack.c.b16 %v4777, %v4773
    %4842 = vmatprep.subr.bf16.mxu0 %v4779
    %4843 = vmatpush1.bf16.msra.mxu0 %v4778
    %4844 = vmatprep.subr.bf16.mxu0 %v4783
    %4845 = vmatpush1.bf16.msra.mxu0 %v4782
    %4846 = vmatprep.subr.bf16.mxu0 %v4787
    %4847 = vmatpush1.bf16.msra.mxu0 %v4786
    %4848 = vmatprep.subr.bf16.mxu0 %v4791
    %4849 = vmatpush1.bf16.msra.mxu0 %v4790
    %4850 = vmatprep.subr.bf16.mxu0 %v4795
    %4851 = vmatpush1.bf16.msra.mxu0 %v4794
    %4852 = vmatprep.subr.bf16.mxu0 %v4799
    %4853 = vmatpush1.bf16.msra.mxu0 %v4798
    %4854 = vmatprep.subr.bf16.mxu0 %v4803
    %4855 = vmatpush1.bf16.msra.mxu0 %v4802
    %4856 = vmatprep.subr.bf16.mxu0 %v4807
    %4857 = vmatpush1.bf16.msra.mxu0 %v4806
    %4858 = vmatprep.subr.bf16.mxu0 0
    %4859 = vmatpush1.bf16.msra.mxu0 0
    %4860 = vmatprep.subr.bf16.mxu0 0
    %4861 = vmatpush1.bf16.msra.mxu0 0
    %4862 = vmatprep.subr.bf16.mxu0 0
    %4863 = vmatpush1.bf16.msra.mxu0 0
    %4864 = vmatprep.subr.bf16.mxu0 0
    %4865 = vmatpush1.bf16.msra.mxu0 0
    %4866 = vmatprep.subr.bf16.mxu0 0
    %4867 = vmatpush1.bf16.msra.mxu0 0
    %4868 = vmatprep.subr.bf16.mxu0 0
    %4869 = vmatpush1.bf16.msra.mxu0 0
    %4870 = vmatprep.subr.bf16.mxu0 0
    %4871 = vmatpush1.bf16.msra.mxu0 0
    %4872 = vmatprep.subr.bf16.mxu0 0
    %4873 = vmatpush1.bf16.msra.mxu0 0
    %4874 = vmatprep.mubr.bf16.mxu0 0
    %4875 = vmatmul.mubr.bf16.gmra.mrb[0].mxu0 %v4054
    %v4876 = vpop.f32.mrb[0].mxu0
    %v4877 = vadd.f32 0.0, %v4876
    %v4878 = vpop.f32.mrb[0].mxu0
    %v4879 = vadd.f32 0.0, %v4878
    %v4880 = vpop.f32.mrb[0].mxu0
    %v4881 = vpop.f32.mrb[0].mxu0
    %4882 = vdwg.mxu0
    %4883 = vmatprep.subr.bf16.mxu0 %v4781
    %4884 = vmatpush1.bf16.msra.mxu0 %v4780
    %4885 = vmatprep.subr.bf16.mxu0 %v4785
    %4886 = vmatpush1.bf16.msra.mxu0 %v4784
    %4887 = vmatprep.subr.bf16.mxu0 %v4789
    %4888 = vmatpush1.bf16.msra.mxu0 %v4788
    %4889 = vmatprep.subr.bf16.mxu0 %v4793
    %4890 = vmatpush1.bf16.msra.mxu0 %v4792
    %4891 = vmatprep.subr.bf16.mxu0 %v4797
    %4892 = vmatpush1.bf16.msra.mxu0 %v4796
    %4893 = vmatprep.subr.bf16.mxu0 %v4801
    %4894 = vmatpush1.bf16.msra.mxu0 %v4800
    %4895 = vmatprep.subr.bf16.mxu0 %v4805
    %4896 = vmatpush1.bf16.msra.mxu0 %v4804
    %4897 = vmatprep.subr.bf16.mxu0 %v4809
    %4898 = vmatpush1.bf16.msra.mxu0 %v4808
    %4899 = vmatprep.subr.bf16.mxu0 0
    %4900 = vmatpush1.bf16.msra.mxu0 0
    %4901 = vmatprep.subr.bf16.mxu0 0
    %4902 = vmatpush1.bf16.msra.mxu0 0
    %4903 = vmatprep.subr.bf16.mxu0 0
    %4904 = vmatpush1.bf16.msra.mxu0 0
    %4905 = vmatprep.subr.bf16.mxu0 0
    %4906 = vmatpush1.bf16.msra.mxu0 0
    %4907 = vmatprep.subr.bf16.mxu0 0
    %4908 = vmatpush1.bf16.msra.mxu0 0
    %4909 = vmatprep.subr.bf16.mxu0 0
    %4910 = vmatpush1.bf16.msra.mxu0 0
    %4911 = vmatprep.subr.bf16.mxu0 0
    %4912 = vmatpush1.bf16.msra.mxu0 0
    %4913 = vmatprep.subr.bf16.mxu0 0
    %4914 = vmatpush1.bf16.msra.mxu0 0
    %4915 = vmatprep.mubr.bf16.mxu0 0
    %4916 = vmatmul.mubr.bf16.gmra.mrb[0].mxu0 %v4054
    %v4917 = vpop.f32.mrb[0].mxu0
    %v4918 = vadd.f32 0.0, %v4917
    %v4919 = vpop.f32.mrb[0].mxu0
    %v4920 = vadd.f32 0.0, %v4919
    %v4921 = vpop.f32.mrb[0].mxu0
    %v4922 = vpop.f32.mrb[0].mxu0
    %4923 = vdwg.mxu0
    %v4924 = vadd.f32 %v4646, %v4877
    %v4925 = vadd.f32 %v4647, %v4879
    %v4926 = vadd.f32 %v4648, %v4918
    %v4927 = vadd.f32 %v4649, %v4920
    %v4928 = vxor.u32 %v4924, 2147483648
    %v4929 = vmul.f32 %v4928, 1.442695
    %v4930 = vpow.pop %v4929
    %v4931 = vadd.f32 %v4930, 1.0
    %v4932 = vrcp.pop %v4931
    %v4933 = vmul.f32 1.0, %v4932
    %v4934 = vxor.u32 %v4925, 2147483648
    %v4935 = vmul.f32 %v4934, 1.442695
    %v4936 = vpow.pop %v4935
    %v4937 = vadd.f32 %v4936, 1.0
    %v4938 = vrcp.pop %v4937
    %v4939 = vmul.f32 1.0, %v4938
    %v4940 = vtanh.pop %v4926
    %v4941 = vxor.u32 %v4927, 2147483648
    %v4942 = vmul.f32 %v4941, 1.442695
    %v4943 = vpow.pop %v4942
    %v4944 = vadd.f32 %v4943, 1.0
    %v4945 = vrcp.pop %v4944
    %v4946 = vmul.f32 1.0, %v4945
    %v4947 = vmul.f32 %v4939, %v4053
    %v4948 = vmul.f32 %v4933, %v4940
    %v4949 = vadd.f32 %v4947, %v4948
    %v4950 = vtanh.pop %v4949
    %v4951 = vmul.f32 %v4946, %v4950
    %v4952 = vsel %vm4644, %v4951, %v4052
    %v4953 = vsel %vm4644, %v4949, %v4053
    %v4954 = vpack.c.bf16 %v4952, %v4952
    %v4955 = vld [vmem:[#allocation12] sm:$0xff]
    %v4956 = vld [vmem:[#allocation12 + $0x8] sm:$0xff]
    %v4957 = vld [vmem:[#allocation12 + $0x10] sm:$0xff]
    %v4958 = vld [vmem:[#allocation12 + $0x18] sm:$0xff]
    %v4959 = vld [vmem:[#allocation12 + $0x20] sm:$0xff]
    %v4960 = vld [vmem:[#allocation12 + $0x28] sm:$0xff]
    %v4961 = vld [vmem:[#allocation12 + $0x30] sm:$0xff]
    %v4962 = vld [vmem:[#allocation12 + $0x38] sm:$0xff]
    %v4963 = vld [vmem:[#allocation12 + $0x40] sm:$0xff]
    %v4964 = vld [vmem:[#allocation12 + $0x48] sm:$0xff]
    %v4965 = vld [vmem:[#allocation12 + $0x50] sm:$0xff]
    %v4966 = vld [vmem:[#allocation12 + $0x58] sm:$0xff]
    %v4967 = vld [vmem:[#allocation12 + $0x60] sm:$0xff]
    %v4968 = vld [vmem:[#allocation12 + $0x68] sm:$0xff]
    %v4969 = vld [vmem:[#allocation12 + $0x70] sm:$0xff]
    %v4970 = vld [vmem:[#allocation12 + $0x78] sm:$0xff]
    %v4971 = vld [vmem:[#allocation12 + $0x80] sm:$0xff]
    %v4972 = vld [vmem:[#allocation12 + $0x88] sm:$0xff]
    %v4973 = vld [vmem:[#allocation12 + $0x90] sm:$0xff]
    %v4974 = vld [vmem:[#allocation12 + $0x98] sm:$0xff]
    %v4975 = vld [vmem:[#allocation12 + $0xa0] sm:$0xff]
    %v4976 = vld [vmem:[#allocation12 + $0xa8] sm:$0xff]
    %v4977 = vld [vmem:[#allocation12 + $0xb0] sm:$0xff]
    %v4978 = vld [vmem:[#allocation12 + $0xb8] sm:$0xff]
    %v4979 = vld [vmem:[#allocation12 + $0xc0] sm:$0xff]
    %v4980 = vld [vmem:[#allocation12 + $0xc8] sm:$0xff]
    %v4981 = vld [vmem:[#allocation12 + $0xd0] sm:$0xff]
    %v4982 = vld [vmem:[#allocation12 + $0xd8] sm:$0xff]
    %v4983 = vld [vmem:[#allocation12 + $0xe0] sm:$0xff]
    %v4984 = vld [vmem:[#allocation12 + $0xe8] sm:$0xff]
    %v4985 = vld [vmem:[#allocation12 + $0xf0] sm:$0xff]
    %v4986 = vld [vmem:[#allocation12 + $0xf8] sm:$0xff]
    %v4987 = vpack.c.bf16 %v4632, %v4632
    %v4988 = vld [vmem:[#allocation13] sm:$0xff]
    %v4989 = vld [vmem:[#allocation13 + $0x8] sm:$0xff]
    %v4990 = vld [vmem:[#allocation13 + $0x10] sm:$0xff]
    %v4991 = vld [vmem:[#allocation13 + $0x18] sm:$0xff]
    %v4992 = vld [vmem:[#allocation13 + $0x20] sm:$0xff]
    %v4993 = vld [vmem:[#allocation13 + $0x28] sm:$0xff]
    %v4994 = vld [vmem:[#allocation13 + $0x30] sm:$0xff]
    %v4995 = vld [vmem:[#allocation13 + $0x38] sm:$0xff]
    %v4996 = vld [vmem:[#allocation13 + $0x40] sm:$0xff]
    %v4997 = vld [vmem:[#allocation13 + $0x48] sm:$0xff]
    %v4998 = vld [vmem:[#allocation13 + $0x50] sm:$0xff]
    %v4999 = vld [vmem:[#allocation13 + $0x58] sm:$0xff]
    %v5000 = vld [vmem:[#allocation13 + $0x60] sm:$0xff]
    %v5001 = vld [vmem:[#allocation13 + $0x68] sm:$0xff]
    %v5002 = vld [vmem:[#allocation13 + $0x70] sm:$0xff]
    %v5003 = vld [vmem:[#allocation13 + $0x78] sm:$0xff]
    %v5004 = vld [vmem:[#allocation13 + $0x80] sm:$0xff]
    %v5005 = vld [vmem:[#allocation13 + $0x88] sm:$0xff]
    %v5006 = vld [vmem:[#allocation13 + $0x90] sm:$0xff]
    %v5007 = vld [vmem:[#allocation13 + $0x98] sm:$0xff]
    %v5008 = vld [vmem:[#allocation13 + $0xa0] sm:$0xff]
    %v5009 = vld [vmem:[#allocation13 + $0xa8] sm:$0xff]
    %v5010 = vld [vmem:[#allocation13 + $0xb0] sm:$0xff]
    %v5011 = vld [vmem:[#allocation13 + $0xb8] sm:$0xff]
    %v5012 = vld [vmem:[#allocation13 + $0xc0] sm:$0xff]
    %v5013 = vld [vmem:[#allocation13 + $0xc8] sm:$0xff]
    %v5014 = vld [vmem:[#allocation13 + $0xd0] sm:$0xff]
    %v5015 = vld [vmem:[#allocation13 + $0xd8] sm:$0xff]
    %v5016 = vld [vmem:[#allocation13 + $0xe0] sm:$0xff]
    %v5017 = vld [vmem:[#allocation13 + $0xe8] sm:$0xff]
    %v5018 = vld [vmem:[#allocation13 + $0xf0] sm:$0xff]
    %v5019 = vld [vmem:[#allocation13 + $0xf8] sm:$0xff]
    %v5052 = vunpack.c.l.b16 %v4988
    %v5053 = vunpack.c.h.b16 %v4988
    %v5054 = vunpack.c.l.b16 %v4989
    %v5055 = vunpack.c.h.b16 %v4989
    %v5056 = vunpack.c.l.b16 %v4990
    %v5057 = vunpack.c.h.b16 %v4990
    %v5058 = vunpack.c.l.b16 %v4991
    %v5059 = vunpack.c.h.b16 %v4991
    %v5060 = vunpack.c.l.b16 %v4992
    %v5061 = vunpack.c.h.b16 %v4992
    %v5062 = vunpack.c.l.b16 %v4993
    %v5063 = vunpack.c.h.b16 %v4993
    %v5064 = vunpack.c.l.b16 %v4994
    %v5065 = vunpack.c.h.b16 %v4994
    %v5066 = vunpack.c.l.b16 %v4995
    %v5067 = vunpack.c.h.b16 %v4995
    %v5068 = vunpack.c.l.b16 %v4996
    %v5069 = vunpack.c.h.b16 %v4996
    %v5070 = vunpack.c.l.b16 %v4997
    %v5071 = vunpack.c.h.b16 %v4997
    %v5072 = vunpack.c.l.b16 %v4998
    %v5073 = vunpack.c.h.b16 %v4998
    %v5074 = vunpack.c.l.b16 %v4999
    %v5075 = vunpack.c.h.b16 %v4999
    %v5076 = vunpack.c.l.b16 %v5000
    %v5077 = vunpack.c.h.b16 %v5000
    %v5078 = vunpack.c.l.b16 %v5001
    %v5079 = vunpack.c.h.b16 %v5001
    %v5080 = vunpack.c.l.b16 %v5002
    %v5081 = vunpack.c.h.b16 %v5002
    %v5082 = vunpack.c.l.b16 %v5003
    %v5083 = vunpack.c.h.b16 %v5003
    %v5084 = vunpack.c.l.b16 %v5004
    %v5085 = vunpack.c.h.b16 %v5004
    %v5086 = vunpack.c.l.b16 %v5005
    %v5087 = vunpack.c.h.b16 %v5005
    %v5088 = vunpack.c.l.b16 %v5006
    %v5089 = vunpack.c.h.b16 %v5006
    %v5090 = vunpack.c.l.b16 %v5007
    %v5091 = vunpack.c.h.b16 %v5007
    %v5092 = vunpack.c.l.b16 %v5008
    %v5093 = vunpack.c.h.b16 %v5008
    %v5094 = vunpack.c.l.b16 %v5009
    %v5095 = vunpack.c.h.b16 %v5009
    %v5096 = vunpack.c.l.b16 %v5010
    %v5097 = vunpack.c.h.b16 %v5010
    %v5098 = vunpack.c.l.b16 %v5011
    %v5099 = vunpack.c.h.b16 %v5011
    %v5100 = vunpack.c.l.b16 %v5012
    %v5101 = vunpack.c.h.b16 %v5012
    %v5102 = vunpack.c.l.b16 %v5013
    %v5103 = vunpack.c.h.b16 %v5013
    %v5104 = vunpack.c.l.b16 %v5014
    %v5105 = vunpack.c.h.b16 %v5014
    %v5106 = vunpack.c.l.b16 %v5015
    %v5107 = vunpack.c.h.b16 %v5015
    %v5108 = vunpack.c.l.b16 %v5016
    %v5109 = vunpack.c.h.b16 %v5016
    %v5110 = vunpack.c.l.b16 %v5017
    %v5111 = vunpack.c.h.b16 %v5017
    %v5112 = vunpack.c.l.b16 %v5018
    %v5113 = vunpack.c.h.b16 %v5018
    %v5114 = vunpack.c.l.b16 %v5019
    %v5115 = vunpack.c.h.b16 %v5019
    %v5116 = vpack.c.b16 %v5056, %v5052
    %v5117 = vpack.c.b16 %v5057, %v5053
    %v5118 = vpack.c.b16 %v5058, %v5054
    %v5119 = vpack.c.b16 %v5059, %v5055
    %v5120 = vpack.c.b16 %v5064, %v5060
    %v5121 = vpack.c.b16 %v5065, %v5061
    %v5122 = vpack.c.b16 %v5066, %v5062
    %v5123 = vpack.c.b16 %v5067, %v5063
    %v5124 = vpack.c.b16 %v5072, %v5068
    %v5125 = vpack.c.b16 %v5073, %v5069
    %v5126 = vpack.c.b16 %v5074, %v5070
    %v5127 = vpack.c.b16 %v5075, %v5071
    %v5128 = vpack.c.b16 %v5080, %v5076
    %v5129 = vpack.c.b16 %v5081, %v5077
    %v5130 = vpack.c.b16 %v5082, %v5078
    %v5131 = vpack.c.b16 %v5083, %v5079
    %v5132 = vpack.c.b16 %v5088, %v5084
    %v5133 = vpack.c.b16 %v5089, %v5085
    %v5134 = vpack.c.b16 %v5090, %v5086
    %v5135 = vpack.c.b16 %v5091, %v5087
    %v5136 = vpack.c.b16 %v5096, %v5092
    %v5137 = vpack.c.b16 %v5097, %v5093
    %v5138 = vpack.c.b16 %v5098, %v5094
    %v5139 = vpack.c.b16 %v5099, %v5095
    %v5140 = vpack.c.b16 %v5104, %v5100
    %v5141 = vpack.c.b16 %v5105, %v5101
    %v5142 = vpack.c.b16 %v5106, %v5102
    %v5143 = vpack.c.b16 %v5107, %v5103
    %v5144 = vpack.c.b16 %v5112, %v5108
    %v5145 = vpack.c.b16 %v5113, %v5109
    %v5146 = vpack.c.b16 %v5114, %v5110
    %v5147 = vpack.c.b16 %v5115, %v5111
    %5180 = vmatprep.subr.bf16.mxu0 %v5117
    %5181 = vmatpush1.bf16.msra.mxu0 %v5116
    %5182 = vmatprep.subr.bf16.mxu0 %v5121
    %5183 = vmatpush1.bf16.msra.mxu0 %v5120
    %5184 = vmatprep.subr.bf16.mxu0 %v5125
    %5185 = vmatpush1.bf16.msra.mxu0 %v5124
    %5186 = vmatprep.subr.bf16.mxu0 %v5129
    %5187 = vmatpush1.bf16.msra.mxu0 %v5128
    %5188 = vmatprep.subr.bf16.mxu0 %v5133
    %5189 = vmatpush1.bf16.msra.mxu0 %v5132
    %5190 = vmatprep.subr.bf16.mxu0 %v5137
    %5191 = vmatpush1.bf16.msra.mxu0 %v5136
    %5192 = vmatprep.subr.bf16.mxu0 %v5141
    %5193 = vmatpush1.bf16.msra.mxu0 %v5140
    %5194 = vmatprep.subr.bf16.mxu0 %v5145
    %5195 = vmatpush1.bf16.msra.mxu0 %v5144
    %5196 = vmatprep.subr.bf16.mxu0 0
    %5197 = vmatpush1.bf16.msra.mxu0 0
    %5198 = vmatprep.subr.bf16.mxu0 0
    %5199 = vmatpush1.bf16.msra.mxu0 0
    %5200 = vmatprep.subr.bf16.mxu0 0
    %5201 = vmatpush1.bf16.msra.mxu0 0
    %5202 = vmatprep.subr.bf16.mxu0 0
    %5203 = vmatpush1.bf16.msra.mxu0 0
    %5204 = vmatprep.subr.bf16.mxu0 0
    %5205 = vmatpush1.bf16.msra.mxu0 0
    %5206 = vmatprep.subr.bf16.mxu0 0
    %5207 = vmatpush1.bf16.msra.mxu0 0
    %5208 = vmatprep.subr.bf16.mxu0 0
    %5209 = vmatpush1.bf16.msra.mxu0 0
    %5210 = vmatprep.subr.bf16.mxu0 0
    %5211 = vmatpush1.bf16.msra.mxu0 0
    %5212 = vmatprep.mubr.bf16.mxu0 0
    %5213 = vmatmul.mubr.bf16.gmra.mrb[0].mxu0 %v4987
    %v5214 = vpop.f32.mrb[0].mxu0
    %v5215 = vadd.f32 0.0, %v5214
    %v5216 = vpop.f32.mrb[0].mxu0
    %v5217 = vadd.f32 0.0, %v5216
    %v5218 = vpop.f32.mrb[0].mxu0
    %v5219 = vpop.f32.mrb[0].mxu0
    %5220 = vdwg.mxu0
    %5221 = vmatprep.subr.bf16.mxu0 %v5119
    %5222 = vmatpush1.bf16.msra.mxu0 %v5118
    %5223 = vmatprep.subr.bf16.mxu0 %v5123
    %5224 = vmatpush1.bf16.msra.mxu0 %v5122
    %5225 = vmatprep.subr.bf16.mxu0 %v5127
    %5226 = vmatpush1.bf16.msra.mxu0 %v5126
    %5227 = vmatprep.subr.bf16.mxu0 %v5131
    %5228 = vmatpush1.bf16.msra.mxu0 %v5130
    %5229 = vmatprep.subr.bf16.mxu0 %v5135
    %5230 = vmatpush1.bf16.msra.mxu0 %v5134
    %5231 = vmatprep.subr.bf16.mxu0 %v5139
    %5232 = vmatpush1.bf16.msra.mxu0 %v5138
    %5233 = vmatprep.subr.bf16.mxu0 %v5143
    %5234 = vmatpush1.bf16.msra.mxu0 %v5142
    %5235 = vmatprep.subr.bf16.mxu0 %v5147
    %5236 = vmatpush1.bf16.msra.mxu0 %v5146
    %5237 = vmatprep.subr.bf16.mxu0 0
    %5238 = vmatpush1.bf16.msra.mxu0 0
    %5239 = vmatprep.subr.bf16.mxu0 0
    %5240 = vmatpush1.bf16.msra.mxu0 0
    %5241 = vmatprep.subr.bf16.mxu0 0
    %5242 = vmatpush1.bf16.msra.mxu0 0
    %5243 = vmatprep.subr.bf16.mxu0 0
    %5244 = vmatpush1.bf16.msra.mxu0 0
    %5245 = vmatprep.subr.bf16.mxu0 0
    %5246 = vmatpush1.bf16.msra.mxu0 0
    %5247 = vmatprep.subr.bf16.mxu0 0
    %5248 = vmatpush1.bf16.msra.mxu0 0
    %5249 = vmatprep.subr.bf16.mxu0 0
    %5250 = vmatpush1.bf16.msra.mxu0 0
    %5251 = vmatprep.subr.bf16.mxu0 0
    %5252 = vmatpush1.bf16.msra.mxu0 0
    %5253 = vmatprep.mubr.bf16.mxu0 0
    %5254 = vmatmul.mubr.bf16.gmra.mrb[0].mxu0 %v4987
    %v5255 = vpop.f32.mrb[0].mxu0
    %v5256 = vadd.f32 0.0, %v5255
    %v5257 = vpop.f32.mrb[0].mxu0
    %v5258 = vadd.f32 0.0, %v5257
    %v5259 = vpop.f32.mrb[0].mxu0
    %v5260 = vpop.f32.mrb[0].mxu0
    %5261 = vdwg.mxu0
    %v5294 = vunpack.c.l.b16 %v4955
    %v5295 = vunpack.c.h.b16 %v4955
    %v5296 = vunpack.c.l.b16 %v4956
    %v5297 = vunpack.c.h.b16 %v4956
    %v5298 = vunpack.c.l.b16 %v4957
    %v5299 = vunpack.c.h.b16 %v4957
    %v5300 = vunpack.c.l.b16 %v4958
    %v5301 = vunpack.c.h.b16 %v4958
    %v5302 = vunpack.c.l.b16 %v4959
    %v5303 = vunpack.c.h.b16 %v4959
    %v5304 = vunpack.c.l.b16 %v4960
    %v5305 = vunpack.c.h.b16 %v4960
    %v5306 = vunpack.c.l.b16 %v4961
    %v5307 = vunpack.c.h.b16 %v4961
    %v5308 = vunpack.c.l.b16 %v4962
    %v5309 = vunpack.c.h.b16 %v4962
    %v5310 = vunpack.c.l.b16 %v4963
    %v5311 = vunpack.c.h.b16 %v4963
    %v5312 = vunpack.c.l.b16 %v4964
    %v5313 = vunpack.c.h.b16 %v4964
    %v5314 = vunpack.c.l.b16 %v4965
    %v5315 = vunpack.c.h.b16 %v4965
    %v5316 = vunpack.c.l.b16 %v4966
    %v5317 = vunpack.c.h.b16 %v4966
    %v5318 = vunpack.c.l.b16 %v4967
    %v5319 = vunpack.c.h.b16 %v4967
    %v5320 = vunpack.c.l.b16 %v4968
    %v5321 = vunpack.c.h.b16 %v4968
    %v5322 = vunpack.c.l.b16 %v4969
    %v5323 = vunpack.c.h.b16 %v4969
    %v5324 = vunpack.c.l.b16 %v4970
    %v5325 = vunpack.c.h.b16 %v4970
    %v5326 = vunpack.c.l.b16 %v4971
    %v5327 = vunpack.c.h.b16 %v4971
    %v5328 = vunpack.c.l.b16 %v4972
    %v5329 = vunpack.c.h.b16 %v4972
    %v5330 = vunpack.c.l.b16 %v4973
    %v5331 = vunpack.c.h.b16 %v4973
    %v5332 = vunpack.c.l.b16 %v4974
    %v5333 = vunpack.c.h.b16 %v4974
    %v5334 = vunpack.c.l.b16 %v4975
    %v5335 = vunpack.c.h.b16 %v4975
    %v5336 = vunpack.c.l.b16 %v4976
    %v5337 = vunpack.c.h.b16 %v4976
    %v5338 = vunpack.c.l.b16 %v4977
    %v5339 = vunpack.c.h.b16 %v4977
    %v5340 = vunpack.c.l.b16 %v4978
    %v5341 = vunpack.c.h.b16 %v4978
    %v5342 = vunpack.c.l.b16 %v4979
    %v5343 = vunpack.c.h.b16 %v4979
    %v5344 = vunpack.c.l.b16 %v4980
    %v5345 = vunpack.c.h.b16 %v4980
    %v5346 = vunpack.c.l.b16 %v4981
    %v5347 = vunpack.c.h.b16 %v4981
    %v5348 = vunpack.c.l.b16 %v4982
    %v5349 = vunpack.c.h.b16 %v4982
    %v5350 = vunpack.c.l.b16 %v4983
    %v5351 = vunpack.c.h.b16 %v4983
    %v5352 = vunpack.c.l.b16 %v4984
    %v5353 = vunpack.c.h.b16 %v4984
    %v5354 = vunpack.c.l.b16 %v4985
    %v5355 = vunpack.c.h.b16 %v4985
    %v5356 = vunpack.c.l.b16 %v4986
    %v5357 = vunpack.c.h.b16 %v4986
    %v5358 = vpack.c.b16 %v5298, %v5294
    %v5359 = vpack.c.b16 %v5299, %v5295
    %v5360 = vpack.c.b16 %v5300, %v5296
    %v5361 = vpack.c.b16 %v5301, %v5297
    %v5362 = vpack.c.b16 %v5306, %v5302
    %v5363 = vpack.c.b16 %v5307, %v5303
    %v5364 = vpack.c.b16 %v5308, %v5304
    %v5365 = vpack.c.b16 %v5309, %v5305
    %v5366 = vpack.c.b16 %v5314, %v5310
    %v5367 = vpack.c.b16 %v5315, %v5311
    %v5368 = vpack.c.b16 %v5316, %v5312
    %v5369 = vpack.c.b16 %v5317, %v5313
    %v5370 = vpack.c.b16 %v5322, %v5318
    %v5371 = vpack.c.b16 %v5323, %v5319
    %v5372 = vpack.c.b16 %v5324, %v5320
    %v5373 = vpack.c.b16 %v5325, %v5321
    %v5374 = vpack.c.b16 %v5330, %v5326
    %v5375 = vpack.c.b16 %v5331, %v5327
    %v5376 = vpack.c.b16 %v5332, %v5328
    %v5377 = vpack.c.b16 %v5333, %v5329
    %v5378 = vpack.c.b16 %v5338, %v5334
    %v5379 = vpack.c.b16 %v5339, %v5335
    %v5380 = vpack.c.b16 %v5340, %v5336
    %v5381 = vpack.c.b16 %v5341, %v5337
    %v5382 = vpack.c.b16 %v5346, %v5342
    %v5383 = vpack.c.b16 %v5347, %v5343
    %v5384 = vpack.c.b16 %v5348, %v5344
    %v5385 = vpack.c.b16 %v5349, %v5345
    %v5386 = vpack.c.b16 %v5354, %v5350
    %v5387 = vpack.c.b16 %v5355, %v5351
    %v5388 = vpack.c.b16 %v5356, %v5352
    %v5389 = vpack.c.b16 %v5357, %v5353
    %5422 = vmatprep.subr.bf16.mxu0 %v5359
    %5423 = vmatpush1.bf16.msra.mxu0 %v5358
    %5424 = vmatprep.subr.bf16.mxu0 %v5363
    %5425 = vmatpush1.bf16.msra.mxu0 %v5362
    %5426 = vmatprep.subr.bf16.mxu0 %v5367
    %5427 = vmatpush1.bf16.msra.mxu0 %v5366
    %5428 = vmatprep.subr.bf16.mxu0 %v5371
    %5429 = vmatpush1.bf16.msra.mxu0 %v5370
    %5430 = vmatprep.subr.bf16.mxu0 %v5375
    %5431 = vmatpush1.bf16.msra.mxu0 %v5374
    %5432 = vmatprep.subr.bf16.mxu0 %v5379
    %5433 = vmatpush1.bf16.msra.mxu0 %v5378
    %5434 = vmatprep.subr.bf16.mxu0 %v5383
    %5435 = vmatpush1.bf16.msra.mxu0 %v5382
    %5436 = vmatprep.subr.bf16.mxu0 %v5387
    %5437 = vmatpush1.bf16.msra.mxu0 %v5386
    %5438 = vmatprep.subr.bf16.mxu0 0
    %5439 = vmatpush1.bf16.msra.mxu0 0
    %5440 = vmatprep.subr.bf16.mxu0 0
    %5441 = vmatpush1.bf16.msra.mxu0 0
    %5442 = vmatprep.subr.bf16.mxu0 0
    %5443 = vmatpush1.bf16.msra.mxu0 0
    %5444 = vmatprep.subr.bf16.mxu0 0
    %5445 = vmatpush1.bf16.msra.mxu0 0
    %5446 = vmatprep.subr.bf16.mxu0 0
    %5447 = vmatpush1.bf16.msra.mxu0 0
    %5448 = vmatprep.subr.bf16.mxu0 0
    %5449 = vmatpush1.bf16.msra.mxu0 0
    %5450 = vmatprep.subr.bf16.mxu0 0
    %5451 = vmatpush1.bf16.msra.mxu0 0
    %5452 = vmatprep.subr.bf16.mxu0 0
    %5453 = vmatpush1.bf16.msra.mxu0 0
    %5454 = vmatprep.mubr.bf16.mxu0 0
    %5455 = vmatmul.mubr.bf16.gmra.mrb[0].mxu0 %v4954
    %v5456 = vpop.f32.mrb[0].mxu0
    %v5457 = vadd.f32 %v5215, %v5456
    %v5458 = vpop.f32.mrb[0].mxu0
    %v5459 = vadd.f32 %v5217, %v5458
    %v5460 = vpop.f32.mrb[0].mxu0
    %v5461 = vpop.f32.mrb[0].mxu0
    %5462 = vdwg.mxu0
    %5463 = vmatprep.subr.bf16.mxu0 %v5361
    %5464 = vmatpush1.bf16.msra.mxu0 %v5360
    %5465 = vmatprep.subr.bf16.mxu0 %v5365
    %5466 = vmatpush1.bf16.msra.mxu0 %v5364
    %5467 = vmatprep.subr.bf16.mxu0 %v5369
    %5468 = vmatpush1.bf16.msra.mxu0 %v5368
    %5469 = vmatprep.subr.bf16.mxu0 %v5373
    %5470 = vmatpush1.bf16.msra.mxu0 %v5372
    %5471 = vmatprep.subr.bf16.mxu0 %v5377
    %5472 = vmatpush1.bf16.msra.mxu0 %v5376
    %5473 = vmatprep.subr.bf16.mxu0 %v5381
    %5474 = vmatpush1.bf16.msra.mxu0 %v5380
    %5475 = vmatprep.subr.bf16.mxu0 %v5385
    %5476 = vmatpush1.bf16.msra.mxu0 %v5384
    %5477 = vmatprep.subr.bf16.mxu0 %v5389
    %5478 = vmatpush1.bf16.msra.mxu0 %v5388
    %5479 = vmatprep.subr.bf16.mxu0 0
    %5480 = vmatpush1.bf16.msra.mxu0 0
    %5481 = vmatprep.subr.bf16.mxu0 0
    %5482 = vmatpush1.bf16.msra.mxu0 0
    %5483 = vmatprep.subr.bf16.mxu0 0
    %5484 = vmatpush1.bf16.msra.mxu0 0
    %5485 = vmatprep.subr.bf16.mxu0 0
    %5486 = vmatpush1.bf16.msra.mxu0 0
    %5487 = vmatprep.subr.bf16.mxu0 0
    %5488 = vmatpush1.bf16.msra.mxu0 0
    %5489 = vmatprep.subr.bf16.mxu0 0
    %5490 = vmatpush1.bf16.msra.mxu0 0
    %5491 = vmatprep.subr.bf16.mxu0 0
    %5492 = vmatpush1.bf16.msra.mxu0 0
    %5493 = vmatprep.subr.bf16.mxu0 0
    %5494 = vmatpush1.bf16.msra.mxu0 0
    %5495 = vmatprep.mubr.bf16.mxu0 0
    %5496 = vmatmul.mubr.bf16.gmra.mrb[0].mxu0 %v4954
    %v5497 = vpop.f32.mrb[0].mxu0
    %v5498 = vadd.f32 %v5256, %v5497
    %v5499 = vpop.f32.mrb[0].mxu0
    %v5500 = vadd.f32 %v5258, %v5499
    %v5501 = vpop.f32.mrb[0].mxu0
    %v5502 = vpop.f32.mrb[0].mxu0
    %5503 = vdwg.mxu0
    %v5504 = vadd.f32 %v5457, %v117
    %v5505 = vadd.f32 %v5459, %v121
    %v5506 = vadd.f32 %v5498, %v125
    %v5507 = vadd.f32 %v5500, %v129
    %v5508 = vxor.u32 %v5504, 2147483648
    %v5509 = vmul.f32 %v5508, 1.442695
    %v5510 = vpow.pop %v5509
    %v5511 = vadd.f32 %v5510, 1.0
    %v5512 = vrcp.pop %v5511
    %v5513 = vmul.f32 1.0, %v5512
    %v5514 = vxor.u32 %v5505, 2147483648
    %v5515 = vmul.f32 %v5514, 1.442695
    %v5516 = vpow.pop %v5515
    %v5517 = vadd.f32 %v5516, 1.0
    %v5518 = vrcp.pop %v5517
    %v5519 = vmul.f32 1.0, %v5518
    %v5520 = vtanh.pop %v5506
    %v5521 = vxor.u32 %v5507, 2147483648
    %v5522 = vmul.f32 %v5521, 1.442695
    %v5523 = vpow.pop %v5522
    %v5524 = vadd.f32 %v5523, 1.0
    %v5525 = vrcp.pop %v5524
    %v5526 = vmul.f32 1.0, %v5525
    %v5527 = vmul.f32 %v5519, %v4633
    %v5528 = vmul.f32 %v5513, %v5520
    %v5529 = vadd.f32 %v5527, %v5528
    %v5530 = vtanh.pop %v5529
    %v5531 = vmul.f32 %v5526, %v5530
    %v5532 = vsel %vm4644, %v5531, %v4632
    %v5533 = vsel %vm4644, %v5529, %v4633
    %v5534 = vsel %vm4644, %v5531, 0.0
    %s5535 = scalar_lea.vmem [#allocation6], 40
    %5536 = vst [vmem:[%s5535] sm:$0xff] %v5534
    %s5537 = sadd.s32 %s134, 6
    %v5538 = vstv %s5537
    %vm5539 = vcmp.gt.s32.totalorder %v111, %v5538
    %v5540 = vsel %vm5539, 1, 0
    %5541 = vset.pattern.permute.xlu0 0
    %5542 = vperm.xlu0 %5541, %v5540
    %v5543 = vpop.permute.xlu0 %5542
    %vm5544 = vcmp.eq.s32.totalorder %v5543, 1
    %s5545 = scalar_lea.vmem [#allocation7], 192
    %v5546 = vld [vmem:[%s5545] sm:$0xff]
    %v5547 = vld [vmem:[%s5545 + $0x8] sm:$0xff]
    %v5548 = vld [vmem:[%s5545 + $0x10] sm:$0xff]
    %v5549 = vld [vmem:[%s5545 + $0x18] sm:$0xff]
    %v5550 = vld [vmem:[#allocation10] sm:$0xff]
    %v5551 = vld [vmem:[#allocation10 + $0x8] sm:$0xff]
    %v5552 = vld [vmem:[#allocation10 + $0x10] sm:$0xff]
    %v5553 = vld [vmem:[#allocation10 + $0x18] sm:$0xff]
    %v5554 = vld [vmem:[#allocation10 + $0x20] sm:$0xff]
    %v5555 = vld [vmem:[#allocation10 + $0x28] sm:$0xff]
    %v5556 = vld [vmem:[#allocation10 + $0x30] sm:$0xff]
    %v5557 = vld [vmem:[#allocation10 + $0x38] sm:$0xff]
    %v5558 = vld [vmem:[#allocation10 + $0x40] sm:$0xff]
    %v5559 = vld [vmem:[#allocation10 + $0x48] sm:$0xff]
    %v5560 = vld [vmem:[#allocation10 + $0x50] sm:$0xff]
    %v5561 = vld [vmem:[#allocation10 + $0x58] sm:$0xff]
    %v5562 = vld [vmem:[#allocation10 + $0x60] sm:$0xff]
    %v5563 = vld [vmem:[#allocation10 + $0x68] sm:$0xff]
    %v5564 = vld [vmem:[#allocation10 + $0x70] sm:$0xff]
    %v5565 = vld [vmem:[#allocation10 + $0x78] sm:$0xff]
    %v5566 = vld [vmem:[#allocation10 + $0x80] sm:$0xff]
    %v5567 = vld [vmem:[#allocation10 + $0x88] sm:$0xff]
    %v5568 = vld [vmem:[#allocation10 + $0x90] sm:$0xff]
    %v5569 = vld [vmem:[#allocation10 + $0x98] sm:$0xff]
    %v5570 = vld [vmem:[#allocation10 + $0xa0] sm:$0xff]
    %v5571 = vld [vmem:[#allocation10 + $0xa8] sm:$0xff]
    %v5572 = vld [vmem:[#allocation10 + $0xb0] sm:$0xff]
    %v5573 = vld [vmem:[#allocation10 + $0xb8] sm:$0xff]
    %v5574 = vld [vmem:[#allocation10 + $0xc0] sm:$0xff]
    %v5575 = vld [vmem:[#allocation10 + $0xc8] sm:$0xff]
    %v5576 = vld [vmem:[#allocation10 + $0xd0] sm:$0xff]
    %v5577 = vld [vmem:[#allocation10 + $0xd8] sm:$0xff]
    %v5578 = vld [vmem:[#allocation10 + $0xe0] sm:$0xff]
    %v5579 = vld [vmem:[#allocation10 + $0xe8] sm:$0xff]
    %v5580 = vld [vmem:[#allocation10 + $0xf0] sm:$0xff]
    %v5581 = vld [vmem:[#allocation10 + $0xf8] sm:$0xff]
    %v5614 = vunpack.c.l.b16 %v5550
    %v5615 = vunpack.c.h.b16 %v5550
    %v5616 = vunpack.c.l.b16 %v5551
    %v5617 = vunpack.c.h.b16 %v5551
    %v5618 = vunpack.c.l.b16 %v5552
    %v5619 = vunpack.c.h.b16 %v5552
    %v5620 = vunpack.c.l.b16 %v5553
    %v5621 = vunpack.c.h.b16 %v5553
    %v5622 = vunpack.c.l.b16 %v5554
    %v5623 = vunpack.c.h.b16 %v5554
    %v5624 = vunpack.c.l.b16 %v5555
    %v5625 = vunpack.c.h.b16 %v5555
    %v5626 = vunpack.c.l.b16 %v5556
    %v5627 = vunpack.c.h.b16 %v5556
    %v5628 = vunpack.c.l.b16 %v5557
    %v5629 = vunpack.c.h.b16 %v5557
    %v5630 = vunpack.c.l.b16 %v5558
    %v5631 = vunpack.c.h.b16 %v5558
    %v5632 = vunpack.c.l.b16 %v5559
    %v5633 = vunpack.c.h.b16 %v5559
    %v5634 = vunpack.c.l.b16 %v5560
    %v5635 = vunpack.c.h.b16 %v5560
    %v5636 = vunpack.c.l.b16 %v5561
    %v5637 = vunpack.c.h.b16 %v5561
    %v5638 = vunpack.c.l.b16 %v5562
    %v5639 = vunpack.c.h.b16 %v5562
    %v5640 = vunpack.c.l.b16 %v5563
    %v5641 = vunpack.c.h.b16 %v5563
    %v5642 = vunpack.c.l.b16 %v5564
    %v5643 = vunpack.c.h.b16 %v5564
    %v5644 = vunpack.c.l.b16 %v5565
    %v5645 = vunpack.c.h.b16 %v5565
    %v5646 = vunpack.c.l.b16 %v5566
    %v5647 = vunpack.c.h.b16 %v5566
    %v5648 = vunpack.c.l.b16 %v5567
    %v5649 = vunpack.c.h.b16 %v5567
    %v5650 = vunpack.c.l.b16 %v5568
    %v5651 = vunpack.c.h.b16 %v5568
    %v5652 = vunpack.c.l.b16 %v5569
    %v5653 = vunpack.c.h.b16 %v5569
    %v5654 = vunpack.c.l.b16 %v5570
    %v5655 = vunpack.c.h.b16 %v5570
    %v5656 = vunpack.c.l.b16 %v5571
    %v5657 = vunpack.c.h.b16 %v5571
    %v5658 = vunpack.c.l.b16 %v5572
    %v5659 = vunpack.c.h.b16 %v5572
    %v5660 = vunpack.c.l.b16 %v5573
    %v5661 = vunpack.c.h.b16 %v5573
    %v5662 = vunpack.c.l.b16 %v5574
    %v5663 = vunpack.c.h.b16 %v5574
    %v5664 = vunpack.c.l.b16 %v5575
    %v5665 = vunpack.c.h.b16 %v5575
    %v5666 = vunpack.c.l.b16 %v5576
    %v5667 = vunpack.c.h.b16 %v5576
    %v5668 = vunpack.c.l.b16 %v5577
    %v5669 = vunpack.c.h.b16 %v5577
    %v5670 = vunpack.c.l.b16 %v5578
    %v5671 = vunpack.c.h.b16 %v5578
    %v5672 = vunpack.c.l.b16 %v5579
    %v5673 = vunpack.c.h.b16 %v5579
    %v5674 = vunpack.c.l.b16 %v5580
    %v5675 = vunpack.c.h.b16 %v5580
    %v5676 = vunpack.c.l.b16 %v5581
    %v5677 = vunpack.c.h.b16 %v5581
    %v5678 = vpack.c.b16 %v5618, %v5614
    %v5679 = vpack.c.b16 %v5619, %v5615
    %v5680 = vpack.c.b16 %v5620, %v5616
    %v5681 = vpack.c.b16 %v5621, %v5617
    %v5682 = vpack.c.b16 %v5626, %v5622
    %v5683 = vpack.c.b16 %v5627, %v5623
    %v5684 = vpack.c.b16 %v5628, %v5624
    %v5685 = vpack.c.b16 %v5629, %v5625
    %v5686 = vpack.c.b16 %v5634, %v5630
    %v5687 = vpack.c.b16 %v5635, %v5631
    %v5688 = vpack.c.b16 %v5636, %v5632
    %v5689 = vpack.c.b16 %v5637, %v5633
    %v5690 = vpack.c.b16 %v5642, %v5638
    %v5691 = vpack.c.b16 %v5643, %v5639
    %v5692 = vpack.c.b16 %v5644, %v5640
    %v5693 = vpack.c.b16 %v5645, %v5641
    %v5694 = vpack.c.b16 %v5650, %v5646
    %v5695 = vpack.c.b16 %v5651, %v5647
    %v5696 = vpack.c.b16 %v5652, %v5648
    %v5697 = vpack.c.b16 %v5653, %v5649
    %v5698 = vpack.c.b16 %v5658, %v5654
    %v5699 = vpack.c.b16 %v5659, %v5655
    %v5700 = vpack.c.b16 %v5660, %v5656
    %v5701 = vpack.c.b16 %v5661, %v5657
    %v5702 = vpack.c.b16 %v5666, %v5662
    %v5703 = vpack.c.b16 %v5667, %v5663
    %v5704 = vpack.c.b16 %v5668, %v5664
    %v5705 = vpack.c.b16 %v5669, %v5665
    %v5706 = vpack.c.b16 %v5674, %v5670
    %v5707 = vpack.c.b16 %v5675, %v5671
    %v5708 = vpack.c.b16 %v5676, %v5672
    %v5709 = vpack.c.b16 %v5677, %v5673
    %5742 = vmatprep.subr.bf16.mxu0 %v5679
    %5743 = vmatpush1.bf16.msra.mxu0 %v5678
    %5744 = vmatprep.subr.bf16.mxu0 %v5683
    %5745 = vmatpush1.bf16.msra.mxu0 %v5682
    %5746 = vmatprep.subr.bf16.mxu0 %v5687
    %5747 = vmatpush1.bf16.msra.mxu0 %v5686
    %5748 = vmatprep.subr.bf16.mxu0 %v5691
    %5749 = vmatpush1.bf16.msra.mxu0 %v5690
    %5750 = vmatprep.subr.bf16.mxu0 %v5695
    %5751 = vmatpush1.bf16.msra.mxu0 %v5694
    %5752 = vmatprep.subr.bf16.mxu0 %v5699
    %5753 = vmatpush1.bf16.msra.mxu0 %v5698
    %5754 = vmatprep.subr.bf16.mxu0 %v5703
    %5755 = vmatpush1.bf16.msra.mxu0 %v5702
    %5756 = vmatprep.subr.bf16.mxu0 %v5707
    %5757 = vmatpush1.bf16.msra.mxu0 %v5706
    %5758 = vmatprep.subr.bf16.mxu0 0
    %5759 = vmatpush1.bf16.msra.mxu0 0
    %5760 = vmatprep.subr.bf16.mxu0 0
    %5761 = vmatpush1.bf16.msra.mxu0 0
    %5762 = vmatprep.subr.bf16.mxu0 0
    %5763 = vmatpush1.bf16.msra.mxu0 0
    %5764 = vmatprep.subr.bf16.mxu0 0
    %5765 = vmatpush1.bf16.msra.mxu0 0
    %5766 = vmatprep.subr.bf16.mxu0 0
    %5767 = vmatpush1.bf16.msra.mxu0 0
    %5768 = vmatprep.subr.bf16.mxu0 0
    %5769 = vmatpush1.bf16.msra.mxu0 0
    %5770 = vmatprep.subr.bf16.mxu0 0
    %5771 = vmatpush1.bf16.msra.mxu0 0
    %5772 = vmatprep.subr.bf16.mxu0 0
    %5773 = vmatpush1.bf16.msra.mxu0 0
    %5774 = vmatprep.mubr.bf16.mxu0 0
    %5775 = vmatmul.mubr.bf16.gmra.mrb[0].mxu0 %v4954
    %v5776 = vpop.f32.mrb[0].mxu0
    %v5777 = vadd.f32 0.0, %v5776
    %v5778 = vpop.f32.mrb[0].mxu0
    %v5779 = vadd.f32 0.0, %v5778
    %v5780 = vpop.f32.mrb[0].mxu0
    %v5781 = vpop.f32.mrb[0].mxu0
    %5782 = vdwg.mxu0
    %5783 = vmatprep.subr.bf16.mxu0 %v5681
    %5784 = vmatpush1.bf16.msra.mxu0 %v5680
    %5785 = vmatprep.subr.bf16.mxu0 %v5685
    %5786 = vmatpush1.bf16.msra.mxu0 %v5684
    %5787 = vmatprep.subr.bf16.mxu0 %v5689
    %5788 = vmatpush1.bf16.msra.mxu0 %v5688
    %5789 = vmatprep.subr.bf16.mxu0 %v5693
    %5790 = vmatpush1.bf16.msra.mxu0 %v5692
    %5791 = vmatprep.subr.bf16.mxu0 %v5697
    %5792 = vmatpush1.bf16.msra.mxu0 %v5696
    %5793 = vmatprep.subr.bf16.mxu0 %v5701
    %5794 = vmatpush1.bf16.msra.mxu0 %v5700
    %5795 = vmatprep.subr.bf16.mxu0 %v5705
    %5796 = vmatpush1.bf16.msra.mxu0 %v5704
    %5797 = vmatprep.subr.bf16.mxu0 %v5709
    %5798 = vmatpush1.bf16.msra.mxu0 %v5708
    %5799 = vmatprep.subr.bf16.mxu0 0
    %5800 = vmatpush1.bf16.msra.mxu0 0
    %5801 = vmatprep.subr.bf16.mxu0 0
    %5802 = vmatpush1.bf16.msra.mxu0 0
    %5803 = vmatprep.subr.bf16.mxu0 0
    %5804 = vmatpush1.bf16.msra.mxu0 0
    %5805 = vmatprep.subr.bf16.mxu0 0
    %5806 = vmatpush1.bf16.msra.mxu0 0
    %5807 = vmatprep.subr.bf16.mxu0 0
    %5808 = vmatpush1.bf16.msra.mxu0 0
    %5809 = vmatprep.subr.bf16.mxu0 0
    %5810 = vmatpush1.bf16.msra.mxu0 0
    %5811 = vmatprep.subr.bf16.mxu0 0
    %5812 = vmatpush1.bf16.msra.mxu0 0
    %5813 = vmatprep.subr.bf16.mxu0 0
    %5814 = vmatpush1.bf16.msra.mxu0 0
    %5815 = vmatprep.mubr.bf16.mxu0 0
    %5816 = vmatmul.mubr.bf16.gmra.mrb[0].mxu0 %v4954
    %v5817 = vpop.f32.mrb[0].mxu0
    %v5818 = vadd.f32 0.0, %v5817
    %v5819 = vpop.f32.mrb[0].mxu0
    %v5820 = vadd.f32 0.0, %v5819
    %v5821 = vpop.f32.mrb[0].mxu0
    %v5822 = vpop.f32.mrb[0].mxu0
    %5823 = vdwg.mxu0
    %v5824 = vadd.f32 %v5546, %v5777
    %v5825 = vadd.f32 %v5547, %v5779
    %v5826 = vadd.f32 %v5548, %v5818
    %v5827 = vadd.f32 %v5549, %v5820
    %v5828 = vxor.u32 %v5824, 2147483648
    %v5829 = vmul.f32 %v5828, 1.442695
    %v5830 = vpow.pop %v5829
    %v5831 = vadd.f32 %v5830, 1.0
    %v5832 = vrcp.pop %v5831
    %v5833 = vmul.f32 1.0, %v5832
    %v5834 = vxor.u32 %v5825, 2147483648
    %v5835 = vmul.f32 %v5834, 1.442695
    %v5836 = vpow.pop %v5835
    %v5837 = vadd.f32 %v5836, 1.0
    %v5838 = vrcp.pop %v5837
    %v5839 = vmul.f32 1.0, %v5838
    %v5840 = vtanh.pop %v5826
    %v5841 = vxor.u32 %v5827, 2147483648
    %v5842 = vmul.f32 %v5841, 1.442695
    %v5843 = vpow.pop %v5842
    %v5844 = vadd.f32 %v5843, 1.0
    %v5845 = vrcp.pop %v5844
    %v5846 = vmul.f32 1.0, %v5845
    %v5847 = vmul.f32 %v5839, %v4953
    %v5848 = vmul.f32 %v5833, %v5840
    %v5849 = vadd.f32 %v5847, %v5848
    %v5850 = vtanh.pop %v5849
    %v5851 = vmul.f32 %v5846, %v5850
    %v5852 = vsel %vm5544, %v5851, %v4952
    %v5853 = vsel %vm5544, %v5849, %v4953
    %v5854 = vpack.c.bf16 %v5852, %v5852
    %v5855 = vld [vmem:[#allocation12] sm:$0xff]
    %v5856 = vld [vmem:[#allocation12 + $0x8] sm:$0xff]
    %v5857 = vld [vmem:[#allocation12 + $0x10] sm:$0xff]
    %v5858 = vld [vmem:[#allocation12 + $0x18] sm:$0xff]
    %v5859 = vld [vmem:[#allocation12 + $0x20] sm:$0xff]
    %v5860 = vld [vmem:[#allocation12 + $0x28] sm:$0xff]
    %v5861 = vld [vmem:[#allocation12 + $0x30] sm:$0xff]
    %v5862 = vld [vmem:[#allocation12 + $0x38] sm:$0xff]
    %v5863 = vld [vmem:[#allocation12 + $0x40] sm:$0xff]
    %v5864 = vld [vmem:[#allocation12 + $0x48] sm:$0xff]
    %v5865 = vld [vmem:[#allocation12 + $0x50] sm:$0xff]
    %v5866 = vld [vmem:[#allocation12 + $0x58] sm:$0xff]
    %v5867 = vld [vmem:[#allocation12 + $0x60] sm:$0xff]
    %v5868 = vld [vmem:[#allocation12 + $0x68] sm:$0xff]
    %v5869 = vld [vmem:[#allocation12 + $0x70] sm:$0xff]
    %v5870 = vld [vmem:[#allocation12 + $0x78] sm:$0xff]
    %v5871 = vld [vmem:[#allocation12 + $0x80] sm:$0xff]
    %v5872 = vld [vmem:[#allocation12 + $0x88] sm:$0xff]
    %v5873 = vld [vmem:[#allocation12 + $0x90] sm:$0xff]
    %v5874 = vld [vmem:[#allocation12 + $0x98] sm:$0xff]
    %v5875 = vld [vmem:[#allocation12 + $0xa0] sm:$0xff]
    %v5876 = vld [vmem:[#allocation12 + $0xa8] sm:$0xff]
    %v5877 = vld [vmem:[#allocation12 + $0xb0] sm:$0xff]
    %v5878 = vld [vmem:[#allocation12 + $0xb8] sm:$0xff]
    %v5879 = vld [vmem:[#allocation12 + $0xc0] sm:$0xff]
    %v5880 = vld [vmem:[#allocation12 + $0xc8] sm:$0xff]
    %v5881 = vld [vmem:[#allocation12 + $0xd0] sm:$0xff]
    %v5882 = vld [vmem:[#allocation12 + $0xd8] sm:$0xff]
    %v5883 = vld [vmem:[#allocation12 + $0xe0] sm:$0xff]
    %v5884 = vld [vmem:[#allocation12 + $0xe8] sm:$0xff]
    %v5885 = vld [vmem:[#allocation12 + $0xf0] sm:$0xff]
    %v5886 = vld [vmem:[#allocation12 + $0xf8] sm:$0xff]
    %v5887 = vpack.c.bf16 %v5532, %v5532
    %v5888 = vld [vmem:[#allocation13] sm:$0xff]
    %v5889 = vld [vmem:[#allocation13 + $0x8] sm:$0xff]
    %v5890 = vld [vmem:[#allocation13 + $0x10] sm:$0xff]
    %v5891 = vld [vmem:[#allocation13 + $0x18] sm:$0xff]
    %v5892 = vld [vmem:[#allocation13 + $0x20] sm:$0xff]
    %v5893 = vld [vmem:[#allocation13 + $0x28] sm:$0xff]
    %v5894 = vld [vmem:[#allocation13 + $0x30] sm:$0xff]
    %v5895 = vld [vmem:[#allocation13 + $0x38] sm:$0xff]
    %v5896 = vld [vmem:[#allocation13 + $0x40] sm:$0xff]
    %v5897 = vld [vmem:[#allocation13 + $0x48] sm:$0xff]
    %v5898 = vld [vmem:[#allocation13 + $0x50] sm:$0xff]
    %v5899 = vld [vmem:[#allocation13 + $0x58] sm:$0xff]
    %v5900 = vld [vmem:[#allocation13 + $0x60] sm:$0xff]
    %v5901 = vld [vmem:[#allocation13 + $0x68] sm:$0xff]
    %v5902 = vld [vmem:[#allocation13 + $0x70] sm:$0xff]
    %v5903 = vld [vmem:[#allocation13 + $0x78] sm:$0xff]
    %v5904 = vld [vmem:[#allocation13 + $0x80] sm:$0xff]
    %v5905 = vld [vmem:[#allocation13 + $0x88] sm:$0xff]
    %v5906 = vld [vmem:[#allocation13 + $0x90] sm:$0xff]
    %v5907 = vld [vmem:[#allocation13 + $0x98] sm:$0xff]
    %v5908 = vld [vmem:[#allocation13 + $0xa0] sm:$0xff]
    %v5909 = vld [vmem:[#allocation13 + $0xa8] sm:$0xff]
    %v5910 = vld [vmem:[#allocation13 + $0xb0] sm:$0xff]
    %v5911 = vld [vmem:[#allocation13 + $0xb8] sm:$0xff]
    %v5912 = vld [vmem:[#allocation13 + $0xc0] sm:$0xff]
    %v5913 = vld [vmem:[#allocation13 + $0xc8] sm:$0xff]
    %v5914 = vld [vmem:[#allocation13 + $0xd0] sm:$0xff]
    %v5915 = vld [vmem:[#allocation13 + $0xd8] sm:$0xff]
    %v5916 = vld [vmem:[#allocation13 + $0xe0] sm:$0xff]
    %v5917 = vld [vmem:[#allocation13 + $0xe8] sm:$0xff]
    %v5918 = vld [vmem:[#allocation13 + $0xf0] sm:$0xff]
    %v5919 = vld [vmem:[#allocation13 + $0xf8] sm:$0xff]
    %v5952 = vunpack.c.l.b16 %v5888
    %v5953 = vunpack.c.h.b16 %v5888
    %v5954 = vunpack.c.l.b16 %v5889
    %v5955 = vunpack.c.h.b16 %v5889
    %v5956 = vunpack.c.l.b16 %v5890
    %v5957 = vunpack.c.h.b16 %v5890
    %v5958 = vunpack.c.l.b16 %v5891
    %v5959 = vunpack.c.h.b16 %v5891
    %v5960 = vunpack.c.l.b16 %v5892
    %v5961 = vunpack.c.h.b16 %v5892
    %v5962 = vunpack.c.l.b16 %v5893
    %v5963 = vunpack.c.h.b16 %v5893
    %v5964 = vunpack.c.l.b16 %v5894
    %v5965 = vunpack.c.h.b16 %v5894
    %v5966 = vunpack.c.l.b16 %v5895
    %v5967 = vunpack.c.h.b16 %v5895
    %v5968 = vunpack.c.l.b16 %v5896
    %v5969 = vunpack.c.h.b16 %v5896
    %v5970 = vunpack.c.l.b16 %v5897
    %v5971 = vunpack.c.h.b16 %v5897
    %v5972 = vunpack.c.l.b16 %v5898
    %v5973 = vunpack.c.h.b16 %v5898
    %v5974 = vunpack.c.l.b16 %v5899
    %v5975 = vunpack.c.h.b16 %v5899
    %v5976 = vunpack.c.l.b16 %v5900
    %v5977 = vunpack.c.h.b16 %v5900
    %v5978 = vunpack.c.l.b16 %v5901
    %v5979 = vunpack.c.h.b16 %v5901
    %v5980 = vunpack.c.l.b16 %v5902
    %v5981 = vunpack.c.h.b16 %v5902
    %v5982 = vunpack.c.l.b16 %v5903
    %v5983 = vunpack.c.h.b16 %v5903
    %v5984 = vunpack.c.l.b16 %v5904
    %v5985 = vunpack.c.h.b16 %v5904
    %v5986 = vunpack.c.l.b16 %v5905
    %v5987 = vunpack.c.h.b16 %v5905
    %v5988 = vunpack.c.l.b16 %v5906
    %v5989 = vunpack.c.h.b16 %v5906
    %v5990 = vunpack.c.l.b16 %v5907
    %v5991 = vunpack.c.h.b16 %v5907
    %v5992 = vunpack.c.l.b16 %v5908
    %v5993 = vunpack.c.h.b16 %v5908
    %v5994 = vunpack.c.l.b16 %v5909
    %v5995 = vunpack.c.h.b16 %v5909
    %v5996 = vunpack.c.l.b16 %v5910
    %v5997 = vunpack.c.h.b16 %v5910
    %v5998 = vunpack.c.l.b16 %v5911
    %v5999 = vunpack.c.h.b16 %v5911
    %v6000 = vunpack.c.l.b16 %v5912
    %v6001 = vunpack.c.h.b16 %v5912
    %v6002 = vunpack.c.l.b16 %v5913
    %v6003 = vunpack.c.h.b16 %v5913
    %v6004 = vunpack.c.l.b16 %v5914
    %v6005 = vunpack.c.h.b16 %v5914
    %v6006 = vunpack.c.l.b16 %v5915
    %v6007 = vunpack.c.h.b16 %v5915
    %v6008 = vunpack.c.l.b16 %v5916
    %v6009 = vunpack.c.h.b16 %v5916
    %v6010 = vunpack.c.l.b16 %v5917
    %v6011 = vunpack.c.h.b16 %v5917
    %v6012 = vunpack.c.l.b16 %v5918
    %v6013 = vunpack.c.h.b16 %v5918
    %v6014 = vunpack.c.l.b16 %v5919
    %v6015 = vunpack.c.h.b16 %v5919
    %v6016 = vpack.c.b16 %v5956, %v5952
    %v6017 = vpack.c.b16 %v5957, %v5953
    %v6018 = vpack.c.b16 %v5958, %v5954
    %v6019 = vpack.c.b16 %v5959, %v5955
    %v6020 = vpack.c.b16 %v5964, %v5960
    %v6021 = vpack.c.b16 %v5965, %v5961
    %v6022 = vpack.c.b16 %v5966, %v5962
    %v6023 = vpack.c.b16 %v5967, %v5963
    %v6024 = vpack.c.b16 %v5972, %v5968
    %v6025 = vpack.c.b16 %v5973, %v5969
    %v6026 = vpack.c.b16 %v5974, %v5970
    %v6027 = vpack.c.b16 %v5975, %v5971
    %v6028 = vpack.c.b16 %v5980, %v5976
    %v6029 = vpack.c.b16 %v5981, %v5977
    %v6030 = vpack.c.b16 %v5982, %v5978
    %v6031 = vpack.c.b16 %v5983, %v5979
    %v6032 = vpack.c.b16 %v5988, %v5984
    %v6033 = vpack.c.b16 %v5989, %v5985
    %v6034 = vpack.c.b16 %v5990, %v5986
    %v6035 = vpack.c.b16 %v5991, %v5987
    %v6036 = vpack.c.b16 %v5996, %v5992
    %v6037 = vpack.c.b16 %v5997, %v5993
    %v6038 = vpack.c.b16 %v5998, %v5994
    %v6039 = vpack.c.b16 %v5999, %v5995
    %v6040 = vpack.c.b16 %v6004, %v6000
    %v6041 = vpack.c.b16 %v6005, %v6001
    %v6042 = vpack.c.b16 %v6006, %v6002
    %v6043 = vpack.c.b16 %v6007, %v6003
    %v6044 = vpack.c.b16 %v6012, %v6008
    %v6045 = vpack.c.b16 %v6013, %v6009
    %v6046 = vpack.c.b16 %v6014, %v6010
    %v6047 = vpack.c.b16 %v6015, %v6011
    %6080 = vmatprep.subr.bf16.mxu0 %v6017
    %6081 = vmatpush1.bf16.msra.mxu0 %v6016
    %6082 = vmatprep.subr.bf16.mxu0 %v6021
    %6083 = vmatpush1.bf16.msra.mxu0 %v6020
    %6084 = vmatprep.subr.bf16.mxu0 %v6025
    %6085 = vmatpush1.bf16.msra.mxu0 %v6024
    %6086 = vmatprep.subr.bf16.mxu0 %v6029
    %6087 = vmatpush1.bf16.msra.mxu0 %v6028
    %6088 = vmatprep.subr.bf16.mxu0 %v6033
    %6089 = vmatpush1.bf16.msra.mxu0 %v6032
    %6090 = vmatprep.subr.bf16.mxu0 %v6037
    %6091 = vmatpush1.bf16.msra.mxu0 %v6036
    %6092 = vmatprep.subr.bf16.mxu0 %v6041
    %6093 = vmatpush1.bf16.msra.mxu0 %v6040
    %6094 = vmatprep.subr.bf16.mxu0 %v6045
    %6095 = vmatpush1.bf16.msra.mxu0 %v6044
    %6096 = vmatprep.subr.bf16.mxu0 0
    %6097 = vmatpush1.bf16.msra.mxu0 0
    %6098 = vmatprep.subr.bf16.mxu0 0
    %6099 = vmatpush1.bf16.msra.mxu0 0
    %6100 = vmatprep.subr.bf16.mxu0 0
    %6101 = vmatpush1.bf16.msra.mxu0 0
    %6102 = vmatprep.subr.bf16.mxu0 0
    %6103 = vmatpush1.bf16.msra.mxu0 0
    %6104 = vmatprep.subr.bf16.mxu0 0
    %6105 = vmatpush1.bf16.msra.mxu0 0
    %6106 = vmatprep.subr.bf16.mxu0 0
    %6107 = vmatpush1.bf16.msra.mxu0 0
    %6108 = vmatprep.subr.bf16.mxu0 0
    %6109 = vmatpush1.bf16.msra.mxu0 0
    %6110 = vmatprep.subr.bf16.mxu0 0
    %6111 = vmatpush1.bf16.msra.mxu0 0
    %6112 = vmatprep.mubr.bf16.mxu0 0
    %6113 = vmatmul.mubr.bf16.gmra.mrb[0].mxu0 %v5887
    %v6114 = vpop.f32.mrb[0].mxu0
    %v6115 = vadd.f32 0.0, %v6114
    %v6116 = vpop.f32.mrb[0].mxu0
    %v6117 = vadd.f32 0.0, %v6116
    %v6118 = vpop.f32.mrb[0].mxu0
    %v6119 = vpop.f32.mrb[0].mxu0
    %6120 = vdwg.mxu0
    %6121 = vmatprep.subr.bf16.mxu0 %v6019
    %6122 = vmatpush1.bf16.msra.mxu0 %v6018
    %6123 = vmatprep.subr.bf16.mxu0 %v6023
    %6124 = vmatpush1.bf16.msra.mxu0 %v6022
    %6125 = vmatprep.subr.bf16.mxu0 %v6027
    %6126 = vmatpush1.bf16.msra.mxu0 %v6026
    %6127 = vmatprep.subr.bf16.mxu0 %v6031
    %6128 = vmatpush1.bf16.msra.mxu0 %v6030
    %6129 = vmatprep.subr.bf16.mxu0 %v6035
    %6130 = vmatpush1.bf16.msra.mxu0 %v6034
    %6131 = vmatprep.subr.bf16.mxu0 %v6039
    %6132 = vmatpush1.bf16.msra.mxu0 %v6038
    %6133 = vmatprep.subr.bf16.mxu0 %v6043
    %6134 = vmatpush1.bf16.msra.mxu0 %v6042
    %6135 = vmatprep.subr.bf16.mxu0 %v6047
    %6136 = vmatpush1.bf16.msra.mxu0 %v6046
    %6137 = vmatprep.subr.bf16.mxu0 0
    %6138 = vmatpush1.bf16.msra.mxu0 0
    %6139 = vmatprep.subr.bf16.mxu0 0
    %6140 = vmatpush1.bf16.msra.mxu0 0
    %6141 = vmatprep.subr.bf16.mxu0 0
    %6142 = vmatpush1.bf16.msra.mxu0 0
    %6143 = vmatprep.subr.bf16.mxu0 0
    %6144 = vmatpush1.bf16.msra.mxu0 0
    %6145 = vmatprep.subr.bf16.mxu0 0
    %6146 = vmatpush1.bf16.msra.mxu0 0
    %6147 = vmatprep.subr.bf16.mxu0 0
    %6148 = vmatpush1.bf16.msra.mxu0 0
    %6149 = vmatprep.subr.bf16.mxu0 0
    %6150 = vmatpush1.bf16.msra.mxu0 0
    %6151 = vmatprep.subr.bf16.mxu0 0
    %6152 = vmatpush1.bf16.msra.mxu0 0
    %6153 = vmatprep.mubr.bf16.mxu0 0
    %6154 = vmatmul.mubr.bf16.gmra.mrb[0].mxu0 %v5887
    %v6155 = vpop.f32.mrb[0].mxu0
    %v6156 = vadd.f32 0.0, %v6155
    %v6157 = vpop.f32.mrb[0].mxu0
    %v6158 = vadd.f32 0.0, %v6157
    %v6159 = vpop.f32.mrb[0].mxu0
    %v6160 = vpop.f32.mrb[0].mxu0
    %6161 = vdwg.mxu0
    %v6194 = vunpack.c.l.b16 %v5855
    %v6195 = vunpack.c.h.b16 %v5855
    %v6196 = vunpack.c.l.b16 %v5856
    %v6197 = vunpack.c.h.b16 %v5856
    %v6198 = vunpack.c.l.b16 %v5857
    %v6199 = vunpack.c.h.b16 %v5857
    %v6200 = vunpack.c.l.b16 %v5858
    %v6201 = vunpack.c.h.b16 %v5858
    %v6202 = vunpack.c.l.b16 %v5859
    %v6203 = vunpack.c.h.b16 %v5859
    %v6204 = vunpack.c.l.b16 %v5860
    %v6205 = vunpack.c.h.b16 %v5860
    %v6206 = vunpack.c.l.b16 %v5861
    %v6207 = vunpack.c.h.b16 %v5861
    %v6208 = vunpack.c.l.b16 %v5862
    %v6209 = vunpack.c.h.b16 %v5862
    %v6210 = vunpack.c.l.b16 %v5863
    %v6211 = vunpack.c.h.b16 %v5863
    %v6212 = vunpack.c.l.b16 %v5864
    %v6213 = vunpack.c.h.b16 %v5864
    %v6214 = vunpack.c.l.b16 %v5865
    %v6215 = vunpack.c.h.b16 %v5865
    %v6216 = vunpack.c.l.b16 %v5866
    %v6217 = vunpack.c.h.b16 %v5866
    %v6218 = vunpack.c.l.b16 %v5867
    %v6219 = vunpack.c.h.b16 %v5867
    %v6220 = vunpack.c.l.b16 %v5868
    %v6221 = vunpack.c.h.b16 %v5868
    %v6222 = vunpack.c.l.b16 %v5869
    %v6223 = vunpack.c.h.b16 %v5869
    %v6224 = vunpack.c.l.b16 %v5870
    %v6225 = vunpack.c.h.b16 %v5870
    %v6226 = vunpack.c.l.b16 %v5871
    %v6227 = vunpack.c.h.b16 %v5871
    %v6228 = vunpack.c.l.b16 %v5872
    %v6229 = vunpack.c.h.b16 %v5872
    %v6230 = vunpack.c.l.b16 %v5873
    %v6231 = vunpack.c.h.b16 %v5873
    %v6232 = vunpack.c.l.b16 %v5874
    %v6233 = vunpack.c.h.b16 %v5874
    %v6234 = vunpack.c.l.b16 %v5875
    %v6235 = vunpack.c.h.b16 %v5875
    %v6236 = vunpack.c.l.b16 %v5876
    %v6237 = vunpack.c.h.b16 %v5876
    %v6238 = vunpack.c.l.b16 %v5877
    %v6239 = vunpack.c.h.b16 %v5877
    %v6240 = vunpack.c.l.b16 %v5878
    %v6241 = vunpack.c.h.b16 %v5878
    %v6242 = vunpack.c.l.b16 %v5879
    %v6243 = vunpack.c.h.b16 %v5879
    %v6244 = vunpack.c.l.b16 %v5880
    %v6245 = vunpack.c.h.b16 %v5880
    %v6246 = vunpack.c.l.b16 %v5881
    %v6247 = vunpack.c.h.b16 %v5881
    %v6248 = vunpack.c.l.b16 %v5882
    %v6249 = vunpack.c.h.b16 %v5882
    %v6250 = vunpack.c.l.b16 %v5883
    %v6251 = vunpack.c.h.b16 %v5883
    %v6252 = vunpack.c.l.b16 %v5884
    %v6253 = vunpack.c.h.b16 %v5884
    %v6254 = vunpack.c.l.b16 %v5885
    %v6255 = vunpack.c.h.b16 %v5885
    %v6256 = vunpack.c.l.b16 %v5886
    %v6257 = vunpack.c.h.b16 %v5886
    %v6258 = vpack.c.b16 %v6198, %v6194
    %v6259 = vpack.c.b16 %v6199, %v6195
    %v6260 = vpack.c.b16 %v6200, %v6196
    %v6261 = vpack.c.b16 %v6201, %v6197
    %v6262 = vpack.c.b16 %v6206, %v6202
    %v6263 = vpack.c.b16 %v6207, %v6203
    %v6264 = vpack.c.b16 %v6208, %v6204
    %v6265 = vpack.c.b16 %v6209, %v6205
    %v6266 = vpack.c.b16 %v6214, %v6210
    %v6267 = vpack.c.b16 %v6215, %v6211
    %v6268 = vpack.c.b16 %v6216, %v6212
    %v6269 = vpack.c.b16 %v6217, %v6213
    %v6270 = vpack.c.b16 %v6222, %v6218
    %v6271 = vpack.c.b16 %v6223, %v6219
    %v6272 = vpack.c.b16 %v6224, %v6220
    %v6273 = vpack.c.b16 %v6225, %v6221
    %v6274 = vpack.c.b16 %v6230, %v6226
    %v6275 = vpack.c.b16 %v6231, %v6227
    %v6276 = vpack.c.b16 %v6232, %v6228
    %v6277 = vpack.c.b16 %v6233, %v6229
    %v6278 = vpack.c.b16 %v6238, %v6234
    %v6279 = vpack.c.b16 %v6239, %v6235
    %v6280 = vpack.c.b16 %v6240, %v6236
    %v6281 = vpack.c.b16 %v6241, %v6237
    %v6282 = vpack.c.b16 %v6246, %v6242
    %v6283 = vpack.c.b16 %v6247, %v6243
    %v6284 = vpack.c.b16 %v6248, %v6244
    %v6285 = vpack.c.b16 %v6249, %v6245
    %v6286 = vpack.c.b16 %v6254, %v6250
    %v6287 = vpack.c.b16 %v6255, %v6251
    %v6288 = vpack.c.b16 %v6256, %v6252
    %v6289 = vpack.c.b16 %v6257, %v6253
    %6322 = vmatprep.subr.bf16.mxu0 %v6259
    %6323 = vmatpush1.bf16.msra.mxu0 %v6258
    %6324 = vmatprep.subr.bf16.mxu0 %v6263
    %6325 = vmatpush1.bf16.msra.mxu0 %v6262
    %6326 = vmatprep.subr.bf16.mxu0 %v6267
    %6327 = vmatpush1.bf16.msra.mxu0 %v6266
    %6328 = vmatprep.subr.bf16.mxu0 %v6271
    %6329 = vmatpush1.bf16.msra.mxu0 %v6270
    %6330 = vmatprep.subr.bf16.mxu0 %v6275
    %6331 = vmatpush1.bf16.msra.mxu0 %v6274
    %6332 = vmatprep.subr.bf16.mxu0 %v6279
    %6333 = vmatpush1.bf16.msra.mxu0 %v6278
    %6334 = vmatprep.subr.bf16.mxu0 %v6283
    %6335 = vmatpush1.bf16.msra.mxu0 %v6282
    %6336 = vmatprep.subr.bf16.mxu0 %v6287
    %6337 = vmatpush1.bf16.msra.mxu0 %v6286
    %6338 = vmatprep.subr.bf16.mxu0 0
    %6339 = vmatpush1.bf16.msra.mxu0 0
    %6340 = vmatprep.subr.bf16.mxu0 0
    %6341 = vmatpush1.bf16.msra.mxu0 0
    %6342 = vmatprep.subr.bf16.mxu0 0
    %6343 = vmatpush1.bf16.msra.mxu0 0
    %6344 = vmatprep.subr.bf16.mxu0 0
    %6345 = vmatpush1.bf16.msra.mxu0 0
    %6346 = vmatprep.subr.bf16.mxu0 0
    %6347 = vmatpush1.bf16.msra.mxu0 0
    %6348 = vmatprep.subr.bf16.mxu0 0
    %6349 = vmatpush1.bf16.msra.mxu0 0
    %6350 = vmatprep.subr.bf16.mxu0 0
    %6351 = vmatpush1.bf16.msra.mxu0 0
    %6352 = vmatprep.subr.bf16.mxu0 0
    %6353 = vmatpush1.bf16.msra.mxu0 0
    %6354 = vmatprep.mubr.bf16.mxu0 0
    %6355 = vmatmul.mubr.bf16.gmra.mrb[0].mxu0 %v5854
    %v6356 = vpop.f32.mrb[0].mxu0
    %v6357 = vadd.f32 %v6115, %v6356
    %v6358 = vpop.f32.mrb[0].mxu0
    %v6359 = vadd.f32 %v6117, %v6358
    %v6360 = vpop.f32.mrb[0].mxu0
    %v6361 = vpop.f32.mrb[0].mxu0
    %6362 = vdwg.mxu0
    %6363 = vmatprep.subr.bf16.mxu0 %v6261
    %6364 = vmatpush1.bf16.msra.mxu0 %v6260
    %6365 = vmatprep.subr.bf16.mxu0 %v6265
    %6366 = vmatpush1.bf16.msra.mxu0 %v6264
    %6367 = vmatprep.subr.bf16.mxu0 %v6269
    %6368 = vmatpush1.bf16.msra.mxu0 %v6268
    %6369 = vmatprep.subr.bf16.mxu0 %v6273
    %6370 = vmatpush1.bf16.msra.mxu0 %v6272
    %6371 = vmatprep.subr.bf16.mxu0 %v6277
    %6372 = vmatpush1.bf16.msra.mxu0 %v6276
    %6373 = vmatprep.subr.bf16.mxu0 %v6281
    %6374 = vmatpush1.bf16.msra.mxu0 %v6280
    %6375 = vmatprep.subr.bf16.mxu0 %v6285
    %6376 = vmatpush1.bf16.msra.mxu0 %v6284
    %6377 = vmatprep.subr.bf16.mxu0 %v6289
    %6378 = vmatpush1.bf16.msra.mxu0 %v6288
    %6379 = vmatprep.subr.bf16.mxu0 0
    %6380 = vmatpush1.bf16.msra.mxu0 0
    %6381 = vmatprep.subr.bf16.mxu0 0
    %6382 = vmatpush1.bf16.msra.mxu0 0
    %6383 = vmatprep.subr.bf16.mxu0 0
    %6384 = vmatpush1.bf16.msra.mxu0 0
    %6385 = vmatprep.subr.bf16.mxu0 0
    %6386 = vmatpush1.bf16.msra.mxu0 0
    %6387 = vmatprep.subr.bf16.mxu0 0
    %6388 = vmatpush1.bf16.msra.mxu0 0
    %6389 = vmatprep.subr.bf16.mxu0 0
    %6390 = vmatpush1.bf16.msra.mxu0 0
    %6391 = vmatprep.subr.bf16.mxu0 0
    %6392 = vmatpush1.bf16.msra.mxu0 0
    %6393 = vmatprep.subr.bf16.mxu0 0
    %6394 = vmatpush1.bf16.msra.mxu0 0
    %6395 = vmatprep.mubr.bf16.mxu0 0
    %6396 = vmatmul.mubr.bf16.gmra.mrb[0].mxu0 %v5854
    %v6397 = vpop.f32.mrb[0].mxu0
    %v6398 = vadd.f32 %v6156, %v6397
    %v6399 = vpop.f32.mrb[0].mxu0
    %v6400 = vadd.f32 %v6158, %v6399
    %v6401 = vpop.f32.mrb[0].mxu0
    %v6402 = vpop.f32.mrb[0].mxu0
    %6403 = vdwg.mxu0
    %v6404 = vadd.f32 %v6357, %v117
    %v6405 = vadd.f32 %v6359, %v121
    %v6406 = vadd.f32 %v6398, %v125
    %v6407 = vadd.f32 %v6400, %v129
    %v6408 = vxor.u32 %v6404, 2147483648
    %v6409 = vmul.f32 %v6408, 1.442695
    %v6410 = vpow.pop %v6409
    %v6411 = vadd.f32 %v6410, 1.0
    %v6412 = vrcp.pop %v6411
    %v6413 = vmul.f32 1.0, %v6412
    %v6414 = vxor.u32 %v6405, 2147483648
    %v6415 = vmul.f32 %v6414, 1.442695
    %v6416 = vpow.pop %v6415
    %v6417 = vadd.f32 %v6416, 1.0
    %v6418 = vrcp.pop %v6417
    %v6419 = vmul.f32 1.0, %v6418
    %v6420 = vtanh.pop %v6406
    %v6421 = vxor.u32 %v6407, 2147483648
    %v6422 = vmul.f32 %v6421, 1.442695
    %v6423 = vpow.pop %v6422
    %v6424 = vadd.f32 %v6423, 1.0
    %v6425 = vrcp.pop %v6424
    %v6426 = vmul.f32 1.0, %v6425
    %v6427 = vmul.f32 %v6419, %v5533
    %v6428 = vmul.f32 %v6413, %v6420
    %v6429 = vadd.f32 %v6427, %v6428
    %v6430 = vtanh.pop %v6429
    %v6431 = vmul.f32 %v6426, %v6430
    %v6432 = vsel %vm5544, %v6431, %v5532
    %v6433 = vsel %vm5544, %v6429, %v5533
    %v6434 = vsel %vm5544, %v6431, 0.0
    %s6435 = scalar_lea.vmem [#allocation6], 48
    %6436 = vst [vmem:[%s6435] sm:$0xff] %v6434
    %s6437 = sadd.s32 %s134, 7
    %v6438 = vstv %s6437
    %vm6439 = vcmp.gt.s32.totalorder %v111, %v6438
    %v6440 = vsel %vm6439, 1, 0
    %6441 = vset.pattern.permute.xlu0 0
    %6442 = vperm.xlu0 %6441, %v6440
    %v6443 = vpop.permute.xlu0 %6442
    %vm6444 = vcmp.eq.s32.totalorder %v6443, 1
    %s6445 = scalar_lea.vmem [#allocation7], 224
    %v6446 = vld [vmem:[%s6445] sm:$0xff]
    %v6447 = vld [vmem:[%s6445 + $0x8] sm:$0xff]
    %v6448 = vld [vmem:[%s6445 + $0x10] sm:$0xff]
    %v6449 = vld [vmem:[%s6445 + $0x18] sm:$0xff]
    %v6450 = vld [vmem:[#allocation10] sm:$0xff]
    %v6451 = vld [vmem:[#allocation10 + $0x8] sm:$0xff]
    %v6452 = vld [vmem:[#allocation10 + $0x10] sm:$0xff]
    %v6453 = vld [vmem:[#allocation10 + $0x18] sm:$0xff]
    %v6454 = vld [vmem:[#allocation10 + $0x20] sm:$0xff]
    %v6455 = vld [vmem:[#allocation10 + $0x28] sm:$0xff]
    %v6456 = vld [vmem:[#allocation10 + $0x30] sm:$0xff]
    %v6457 = vld [vmem:[#allocation10 + $0x38] sm:$0xff]
    %v6458 = vld [vmem:[#allocation10 + $0x40] sm:$0xff]
    %v6459 = vld [vmem:[#allocation10 + $0x48] sm:$0xff]
    %v6460 = vld [vmem:[#allocation10 + $0x50] sm:$0xff]
    %v6461 = vld [vmem:[#allocation10 + $0x58] sm:$0xff]
    %v6462 = vld [vmem:[#allocation10 + $0x60] sm:$0xff]
    %v6463 = vld [vmem:[#allocation10 + $0x68] sm:$0xff]
    %v6464 = vld [vmem:[#allocation10 + $0x70] sm:$0xff]
    %v6465 = vld [vmem:[#allocation10 + $0x78] sm:$0xff]
    %v6466 = vld [vmem:[#allocation10 + $0x80] sm:$0xff]
    %v6467 = vld [vmem:[#allocation10 + $0x88] sm:$0xff]
    %v6468 = vld [vmem:[#allocation10 + $0x90] sm:$0xff]
    %v6469 = vld [vmem:[#allocation10 + $0x98] sm:$0xff]
    %v6470 = vld [vmem:[#allocation10 + $0xa0] sm:$0xff]
    %v6471 = vld [vmem:[#allocation10 + $0xa8] sm:$0xff]
    %v6472 = vld [vmem:[#allocation10 + $0xb0] sm:$0xff]
    %v6473 = vld [vmem:[#allocation10 + $0xb8] sm:$0xff]
    %v6474 = vld [vmem:[#allocation10 + $0xc0] sm:$0xff]
    %v6475 = vld [vmem:[#allocation10 + $0xc8] sm:$0xff]
    %v6476 = vld [vmem:[#allocation10 + $0xd0] sm:$0xff]
    %v6477 = vld [vmem:[#allocation10 + $0xd8] sm:$0xff]
    %v6478 = vld [vmem:[#allocation10 + $0xe0] sm:$0xff]
    %v6479 = vld [vmem:[#allocation10 + $0xe8] sm:$0xff]
    %v6480 = vld [vmem:[#allocation10 + $0xf0] sm:$0xff]
    %v6481 = vld [vmem:[#allocation10 + $0xf8] sm:$0xff]
    %v6514 = vunpack.c.l.b16 %v6450
    %v6515 = vunpack.c.h.b16 %v6450
    %v6516 = vunpack.c.l.b16 %v6451
    %v6517 = vunpack.c.h.b16 %v6451
    %v6518 = vunpack.c.l.b16 %v6452
    %v6519 = vunpack.c.h.b16 %v6452
    %v6520 = vunpack.c.l.b16 %v6453
    %v6521 = vunpack.c.h.b16 %v6453
    %v6522 = vunpack.c.l.b16 %v6454
    %v6523 = vunpack.c.h.b16 %v6454
    %v6524 = vunpack.c.l.b16 %v6455
    %v6525 = vunpack.c.h.b16 %v6455
    %v6526 = vunpack.c.l.b16 %v6456
    %v6527 = vunpack.c.h.b16 %v6456
    %v6528 = vunpack.c.l.b16 %v6457
    %v6529 = vunpack.c.h.b16 %v6457
    %v6530 = vunpack.c.l.b16 %v6458
    %v6531 = vunpack.c.h.b16 %v6458
    %v6532 = vunpack.c.l.b16 %v6459
    %v6533 = vunpack.c.h.b16 %v6459
    %v6534 = vunpack.c.l.b16 %v6460
    %v6535 = vunpack.c.h.b16 %v6460
    %v6536 = vunpack.c.l.b16 %v6461
    %v6537 = vunpack.c.h.b16 %v6461
    %v6538 = vunpack.c.l.b16 %v6462
    %v6539 = vunpack.c.h.b16 %v6462
    %v6540 = vunpack.c.l.b16 %v6463
    %v6541 = vunpack.c.h.b16 %v6463
    %v6542 = vunpack.c.l.b16 %v6464
    %v6543 = vunpack.c.h.b16 %v6464
    %v6544 = vunpack.c.l.b16 %v6465
    %v6545 = vunpack.c.h.b16 %v6465
    %v6546 = vunpack.c.l.b16 %v6466
    %v6547 = vunpack.c.h.b16 %v6466
    %v6548 = vunpack.c.l.b16 %v6467
    %v6549 = vunpack.c.h.b16 %v6467
    %v6550 = vunpack.c.l.b16 %v6468
    %v6551 = vunpack.c.h.b16 %v6468
    %v6552 = vunpack.c.l.b16 %v6469
    %v6553 = vunpack.c.h.b16 %v6469
    %v6554 = vunpack.c.l.b16 %v6470
    %v6555 = vunpack.c.h.b16 %v6470
    %v6556 = vunpack.c.l.b16 %v6471
    %v6557 = vunpack.c.h.b16 %v6471
    %v6558 = vunpack.c.l.b16 %v6472
    %v6559 = vunpack.c.h.b16 %v6472
    %v6560 = vunpack.c.l.b16 %v6473
    %v6561 = vunpack.c.h.b16 %v6473
    %v6562 = vunpack.c.l.b16 %v6474
    %v6563 = vunpack.c.h.b16 %v6474
    %v6564 = vunpack.c.l.b16 %v6475
    %v6565 = vunpack.c.h.b16 %v6475
    %v6566 = vunpack.c.l.b16 %v6476
    %v6567 = vunpack.c.h.b16 %v6476
    %v6568 = vunpack.c.l.b16 %v6477
    %v6569 = vunpack.c.h.b16 %v6477
    %v6570 = vunpack.c.l.b16 %v6478
    %v6571 = vunpack.c.h.b16 %v6478
    %v6572 = vunpack.c.l.b16 %v6479
    %v6573 = vunpack.c.h.b16 %v6479
    %v6574 = vunpack.c.l.b16 %v6480
    %v6575 = vunpack.c.h.b16 %v6480
    %v6576 = vunpack.c.l.b16 %v6481
    %v6577 = vunpack.c.h.b16 %v6481
    %v6578 = vpack.c.b16 %v6518, %v6514
    %v6579 = vpack.c.b16 %v6519, %v6515
    %v6580 = vpack.c.b16 %v6520, %v6516
    %v6581 = vpack.c.b16 %v6521, %v6517
    %v6582 = vpack.c.b16 %v6526, %v6522
    %v6583 = vpack.c.b16 %v6527, %v6523
    %v6584 = vpack.c.b16 %v6528, %v6524
    %v6585 = vpack.c.b16 %v6529, %v6525
    %v6586 = vpack.c.b16 %v6534, %v6530
    %v6587 = vpack.c.b16 %v6535, %v6531
    %v6588 = vpack.c.b16 %v6536, %v6532
    %v6589 = vpack.c.b16 %v6537, %v6533
    %v6590 = vpack.c.b16 %v6542, %v6538
    %v6591 = vpack.c.b16 %v6543, %v6539
    %v6592 = vpack.c.b16 %v6544, %v6540
    %v6593 = vpack.c.b16 %v6545, %v6541
    %v6594 = vpack.c.b16 %v6550, %v6546
    %v6595 = vpack.c.b16 %v6551, %v6547
    %v6596 = vpack.c.b16 %v6552, %v6548
    %v6597 = vpack.c.b16 %v6553, %v6549
    %v6598 = vpack.c.b16 %v6558, %v6554
    %v6599 = vpack.c.b16 %v6559, %v6555
    %v6600 = vpack.c.b16 %v6560, %v6556
    %v6601 = vpack.c.b16 %v6561, %v6557
    %v6602 = vpack.c.b16 %v6566, %v6562
    %v6603 = vpack.c.b16 %v6567, %v6563
    %v6604 = vpack.c.b16 %v6568, %v6564
    %v6605 = vpack.c.b16 %v6569, %v6565
    %v6606 = vpack.c.b16 %v6574, %v6570
    %v6607 = vpack.c.b16 %v6575, %v6571
    %v6608 = vpack.c.b16 %v6576, %v6572
    %v6609 = vpack.c.b16 %v6577, %v6573
    %6642 = vmatprep.subr.bf16.mxu0 %v6579
    %6643 = vmatpush1.bf16.msra.mxu0 %v6578
    %6644 = vmatprep.subr.bf16.mxu0 %v6583
    %6645 = vmatpush1.bf16.msra.mxu0 %v6582
    %6646 = vmatprep.subr.bf16.mxu0 %v6587
    %6647 = vmatpush1.bf16.msra.mxu0 %v6586
    %6648 = vmatprep.subr.bf16.mxu0 %v6591
    %6649 = vmatpush1.bf16.msra.mxu0 %v6590
    %6650 = vmatprep.subr.bf16.mxu0 %v6595
    %6651 = vmatpush1.bf16.msra.mxu0 %v6594
    %6652 = vmatprep.subr.bf16.mxu0 %v6599
    %6653 = vmatpush1.bf16.msra.mxu0 %v6598
    %6654 = vmatprep.subr.bf16.mxu0 %v6603
    %6655 = vmatpush1.bf16.msra.mxu0 %v6602
    %6656 = vmatprep.subr.bf16.mxu0 %v6607
    %6657 = vmatpush1.bf16.msra.mxu0 %v6606
    %6658 = vmatprep.subr.bf16.mxu0 0
    %6659 = vmatpush1.bf16.msra.mxu0 0
    %6660 = vmatprep.subr.bf16.mxu0 0
    %6661 = vmatpush1.bf16.msra.mxu0 0
    %6662 = vmatprep.subr.bf16.mxu0 0
    %6663 = vmatpush1.bf16.msra.mxu0 0
    %6664 = vmatprep.subr.bf16.mxu0 0
    %6665 = vmatpush1.bf16.msra.mxu0 0
    %6666 = vmatprep.subr.bf16.mxu0 0
    %6667 = vmatpush1.bf16.msra.mxu0 0
    %6668 = vmatprep.subr.bf16.mxu0 0
    %6669 = vmatpush1.bf16.msra.mxu0 0
    %6670 = vmatprep.subr.bf16.mxu0 0
    %6671 = vmatpush1.bf16.msra.mxu0 0
    %6672 = vmatprep.subr.bf16.mxu0 0
    %6673 = vmatpush1.bf16.msra.mxu0 0
    %6674 = vmatprep.mubr.bf16.mxu0 0
    %6675 = vmatmul.mubr.bf16.gmra.mrb[0].mxu0 %v5854
    %v6676 = vpop.f32.mrb[0].mxu0
    %v6677 = vadd.f32 0.0, %v6676
    %v6678 = vpop.f32.mrb[0].mxu0
    %v6679 = vadd.f32 0.0, %v6678
    %v6680 = vpop.f32.mrb[0].mxu0
    %v6681 = vpop.f32.mrb[0].mxu0
    %6682 = vdwg.mxu0
    %6683 = vmatprep.subr.bf16.mxu0 %v6581
    %6684 = vmatpush1.bf16.msra.mxu0 %v6580
    %6685 = vmatprep.subr.bf16.mxu0 %v6585
    %6686 = vmatpush1.bf16.msra.mxu0 %v6584
    %6687 = vmatprep.subr.bf16.mxu0 %v6589
    %6688 = vmatpush1.bf16.msra.mxu0 %v6588
    %6689 = vmatprep.subr.bf16.mxu0 %v6593
    %6690 = vmatpush1.bf16.msra.mxu0 %v6592
    %6691 = vmatprep.subr.bf16.mxu0 %v6597
    %6692 = vmatpush1.bf16.msra.mxu0 %v6596
    %6693 = vmatprep.subr.bf16.mxu0 %v6601
    %6694 = vmatpush1.bf16.msra.mxu0 %v6600
    %6695 = vmatprep.subr.bf16.mxu0 %v6605
    %6696 = vmatpush1.bf16.msra.mxu0 %v6604
    %6697 = vmatprep.subr.bf16.mxu0 %v6609
    %6698 = vmatpush1.bf16.msra.mxu0 %v6608
    %6699 = vmatprep.subr.bf16.mxu0 0
    %6700 = vmatpush1.bf16.msra.mxu0 0
    %6701 = vmatprep.subr.bf16.mxu0 0
    %6702 = vmatpush1.bf16.msra.mxu0 0
    %6703 = vmatprep.subr.bf16.mxu0 0
    %6704 = vmatpush1.bf16.msra.mxu0 0
    %6705 = vmatprep.subr.bf16.mxu0 0
    %6706 = vmatpush1.bf16.msra.mxu0 0
    %6707 = vmatprep.subr.bf16.mxu0 0
    %6708 = vmatpush1.bf16.msra.mxu0 0
    %6709 = vmatprep.subr.bf16.mxu0 0
    %6710 = vmatpush1.bf16.msra.mxu0 0
    %6711 = vmatprep.subr.bf16.mxu0 0
    %6712 = vmatpush1.bf16.msra.mxu0 0
    %6713 = vmatprep.subr.bf16.mxu0 0
    %6714 = vmatpush1.bf16.msra.mxu0 0
    %6715 = vmatprep.mubr.bf16.mxu0 0
    %6716 = vmatmul.mubr.bf16.gmra.mrb[0].mxu0 %v5854
    %v6717 = vpop.f32.mrb[0].mxu0
    %v6718 = vadd.f32 0.0, %v6717
    %v6719 = vpop.f32.mrb[0].mxu0
    %v6720 = vadd.f32 0.0, %v6719
    %v6721 = vpop.f32.mrb[0].mxu0
    %v6722 = vpop.f32.mrb[0].mxu0
    %6723 = vdwg.mxu0
    %v6724 = vadd.f32 %v6446, %v6677
    %v6725 = vadd.f32 %v6447, %v6679
    %v6726 = vadd.f32 %v6448, %v6718
    %v6727 = vadd.f32 %v6449, %v6720
    %v6728 = vxor.u32 %v6724, 2147483648
    %v6729 = vmul.f32 %v6728, 1.442695
    %v6730 = vpow.pop %v6729
    %v6731 = vadd.f32 %v6730, 1.0
    %v6732 = vrcp.pop %v6731
    %v6733 = vmul.f32 1.0, %v6732
    %v6734 = vxor.u32 %v6725, 2147483648
    %v6735 = vmul.f32 %v6734, 1.442695
    %v6736 = vpow.pop %v6735
    %v6737 = vadd.f32 %v6736, 1.0
    %v6738 = vrcp.pop %v6737
    %v6739 = vmul.f32 1.0, %v6738
    %v6740 = vtanh.pop %v6726
    %v6741 = vxor.u32 %v6727, 2147483648
    %v6742 = vmul.f32 %v6741, 1.442695
    %v6743 = vpow.pop %v6742
    %v6744 = vadd.f32 %v6743, 1.0
    %v6745 = vrcp.pop %v6744
    %v6746 = vmul.f32 1.0, %v6745
    %v6747 = vmul.f32 %v6739, %v5853
    %v6748 = vmul.f32 %v6733, %v6740
    %v6749 = vadd.f32 %v6747, %v6748
    %v6750 = vtanh.pop %v6749
    %v6751 = vmul.f32 %v6746, %v6750
    %v6752 = vsel %vm6444, %v6751, %v5852
    %v6753 = vsel %vm6444, %v6749, %v5853
    %v6754 = vpack.c.bf16 %v6752, %v6752
    %v6755 = vld [vmem:[#allocation12] sm:$0xff]
    %v6756 = vld [vmem:[#allocation12 + $0x8] sm:$0xff]
    %v6757 = vld [vmem:[#allocation12 + $0x10] sm:$0xff]
    %v6758 = vld [vmem:[#allocation12 + $0x18] sm:$0xff]
    %v6759 = vld [vmem:[#allocation12 + $0x20] sm:$0xff]
    %v6760 = vld [vmem:[#allocation12 + $0x28] sm:$0xff]
    %v6761 = vld [vmem:[#allocation12 + $0x30] sm:$0xff]
    %v6762 = vld [vmem:[#allocation12 + $0x38] sm:$0xff]
    %v6763 = vld [vmem:[#allocation12 + $0x40] sm:$0xff]
    %v6764 = vld [vmem:[#allocation12 + $0x48] sm:$0xff]
    %v6765 = vld [vmem:[#allocation12 + $0x50] sm:$0xff]
    %v6766 = vld [vmem:[#allocation12 + $0x58] sm:$0xff]
    %v6767 = vld [vmem:[#allocation12 + $0x60] sm:$0xff]
    %v6768 = vld [vmem:[#allocation12 + $0x68] sm:$0xff]
    %v6769 = vld [vmem:[#allocation12 + $0x70] sm:$0xff]
    %v6770 = vld [vmem:[#allocation12 + $0x78] sm:$0xff]
    %v6771 = vld [vmem:[#allocation12 + $0x80] sm:$0xff]
    %v6772 = vld [vmem:[#allocation12 + $0x88] sm:$0xff]
    %v6773 = vld [vmem:[#allocation12 + $0x90] sm:$0xff]
    %v6774 = vld [vmem:[#allocation12 + $0x98] sm:$0xff]
    %v6775 = vld [vmem:[#allocation12 + $0xa0] sm:$0xff]
    %v6776 = vld [vmem:[#allocation12 + $0xa8] sm:$0xff]
    %v6777 = vld [vmem:[#allocation12 + $0xb0] sm:$0xff]
    %v6778 = vld [vmem:[#allocation12 + $0xb8] sm:$0xff]
    %v6779 = vld [vmem:[#allocation12 + $0xc0] sm:$0xff]
    %v6780 = vld [vmem:[#allocation12 + $0xc8] sm:$0xff]
    %v6781 = vld [vmem:[#allocation12 + $0xd0] sm:$0xff]
    %v6782 = vld [vmem:[#allocation12 + $0xd8] sm:$0xff]
    %v6783 = vld [vmem:[#allocation12 + $0xe0] sm:$0xff]
    %v6784 = vld [vmem:[#allocation12 + $0xe8] sm:$0xff]
    %v6785 = vld [vmem:[#allocation12 + $0xf0] sm:$0xff]
    %v6786 = vld [vmem:[#allocation12 + $0xf8] sm:$0xff]
    %v6787 = vpack.c.bf16 %v6432, %v6432
    %v6788 = vld [vmem:[#allocation13] sm:$0xff]
    %v6789 = vld [vmem:[#allocation13 + $0x8] sm:$0xff]
    %v6790 = vld [vmem:[#allocation13 + $0x10] sm:$0xff]
    %v6791 = vld [vmem:[#allocation13 + $0x18] sm:$0xff]
    %v6792 = vld [vmem:[#allocation13 + $0x20] sm:$0xff]
    %v6793 = vld [vmem:[#allocation13 + $0x28] sm:$0xff]
    %v6794 = vld [vmem:[#allocation13 + $0x30] sm:$0xff]
    %v6795 = vld [vmem:[#allocation13 + $0x38] sm:$0xff]
    %v6796 = vld [vmem:[#allocation13 + $0x40] sm:$0xff]
    %v6797 = vld [vmem:[#allocation13 + $0x48] sm:$0xff]
    %v6798 = vld [vmem:[#allocation13 + $0x50] sm:$0xff]
    %v6799 = vld [vmem:[#allocation13 + $0x58] sm:$0xff]
    %v6800 = vld [vmem:[#allocation13 + $0x60] sm:$0xff]
    %v6801 = vld [vmem:[#allocation13 + $0x68] sm:$0xff]
    %v6802 = vld [vmem:[#allocation13 + $0x70] sm:$0xff]
    %v6803 = vld [vmem:[#allocation13 + $0x78] sm:$0xff]
    %v6804 = vld [vmem:[#allocation13 + $0x80] sm:$0xff]
    %v6805 = vld [vmem:[#allocation13 + $0x88] sm:$0xff]
    %v6806 = vld [vmem:[#allocation13 + $0x90] sm:$0xff]
    %v6807 = vld [vmem:[#allocation13 + $0x98] sm:$0xff]
    %v6808 = vld [vmem:[#allocation13 + $0xa0] sm:$0xff]
    %v6809 = vld [vmem:[#allocation13 + $0xa8] sm:$0xff]
    %v6810 = vld [vmem:[#allocation13 + $0xb0] sm:$0xff]
    %v6811 = vld [vmem:[#allocation13 + $0xb8] sm:$0xff]
    %v6812 = vld [vmem:[#allocation13 + $0xc0] sm:$0xff]
    %v6813 = vld [vmem:[#allocation13 + $0xc8] sm:$0xff]
    %v6814 = vld [vmem:[#allocation13 + $0xd0] sm:$0xff]
    %v6815 = vld [vmem:[#allocation13 + $0xd8] sm:$0xff]
    %v6816 = vld [vmem:[#allocation13 + $0xe0] sm:$0xff]
    %v6817 = vld [vmem:[#allocation13 + $0xe8] sm:$0xff]
    %v6818 = vld [vmem:[#allocation13 + $0xf0] sm:$0xff]
    %v6819 = vld [vmem:[#allocation13 + $0xf8] sm:$0xff]
    %v6852 = vunpack.c.l.b16 %v6788
    %v6853 = vunpack.c.h.b16 %v6788
    %v6854 = vunpack.c.l.b16 %v6789
    %v6855 = vunpack.c.h.b16 %v6789
    %v6856 = vunpack.c.l.b16 %v6790
    %v6857 = vunpack.c.h.b16 %v6790
    %v6858 = vunpack.c.l.b16 %v6791
    %v6859 = vunpack.c.h.b16 %v6791
    %v6860 = vunpack.c.l.b16 %v6792
    %v6861 = vunpack.c.h.b16 %v6792
    %v6862 = vunpack.c.l.b16 %v6793
    %v6863 = vunpack.c.h.b16 %v6793
    %v6864 = vunpack.c.l.b16 %v6794
    %v6865 = vunpack.c.h.b16 %v6794
    %v6866 = vunpack.c.l.b16 %v6795
    %v6867 = vunpack.c.h.b16 %v6795
    %v6868 = vunpack.c.l.b16 %v6796
    %v6869 = vunpack.c.h.b16 %v6796
    %v6870 = vunpack.c.l.b16 %v6797
    %v6871 = vunpack.c.h.b16 %v6797
    %v6872 = vunpack.c.l.b16 %v6798
    %v6873 = vunpack.c.h.b16 %v6798
    %v6874 = vunpack.c.l.b16 %v6799
    %v6875 = vunpack.c.h.b16 %v6799
    %v6876 = vunpack.c.l.b16 %v6800
    %v6877 = vunpack.c.h.b16 %v6800
    %v6878 = vunpack.c.l.b16 %v6801
    %v6879 = vunpack.c.h.b16 %v6801
    %v6880 = vunpack.c.l.b16 %v6802
    %v6881 = vunpack.c.h.b16 %v6802
    %v6882 = vunpack.c.l.b16 %v6803
    %v6883 = vunpack.c.h.b16 %v6803
    %v6884 = vunpack.c.l.b16 %v6804
    %v6885 = vunpack.c.h.b16 %v6804
    %v6886 = vunpack.c.l.b16 %v6805
    %v6887 = vunpack.c.h.b16 %v6805
    %v6888 = vunpack.c.l.b16 %v6806
    %v6889 = vunpack.c.h.b16 %v6806
    %v6890 = vunpack.c.l.b16 %v6807
    %v6891 = vunpack.c.h.b16 %v6807
    %v6892 = vunpack.c.l.b16 %v6808
    %v6893 = vunpack.c.h.b16 %v6808
    %v6894 = vunpack.c.l.b16 %v6809
    %v6895 = vunpack.c.h.b16 %v6809
    %v6896 = vunpack.c.l.b16 %v6810
    %v6897 = vunpack.c.h.b16 %v6810
    %v6898 = vunpack.c.l.b16 %v6811
    %v6899 = vunpack.c.h.b16 %v6811
    %v6900 = vunpack.c.l.b16 %v6812
    %v6901 = vunpack.c.h.b16 %v6812
    %v6902 = vunpack.c.l.b16 %v6813
    %v6903 = vunpack.c.h.b16 %v6813
    %v6904 = vunpack.c.l.b16 %v6814
    %v6905 = vunpack.c.h.b16 %v6814
    %v6906 = vunpack.c.l.b16 %v6815
    %v6907 = vunpack.c.h.b16 %v6815
    %v6908 = vunpack.c.l.b16 %v6816
    %v6909 = vunpack.c.h.b16 %v6816
    %v6910 = vunpack.c.l.b16 %v6817
    %v6911 = vunpack.c.h.b16 %v6817
    %v6912 = vunpack.c.l.b16 %v6818
    %v6913 = vunpack.c.h.b16 %v6818
    %v6914 = vunpack.c.l.b16 %v6819
    %v6915 = vunpack.c.h.b16 %v6819
    %v6916 = vpack.c.b16 %v6856, %v6852
    %v6917 = vpack.c.b16 %v6857, %v6853
    %v6918 = vpack.c.b16 %v6858, %v6854
    %v6919 = vpack.c.b16 %v6859, %v6855
    %v6920 = vpack.c.b16 %v6864, %v6860
    %v6921 = vpack.c.b16 %v6865, %v6861
    %v6922 = vpack.c.b16 %v6866, %v6862
    %v6923 = vpack.c.b16 %v6867, %v6863
    %v6924 = vpack.c.b16 %v6872, %v6868
    %v6925 = vpack.c.b16 %v6873, %v6869
    %v6926 = vpack.c.b16 %v6874, %v6870
    %v6927 = vpack.c.b16 %v6875, %v6871
    %v6928 = vpack.c.b16 %v6880, %v6876
    %v6929 = vpack.c.b16 %v6881, %v6877
    %v6930 = vpack.c.b16 %v6882, %v6878
    %v6931 = vpack.c.b16 %v6883, %v6879
    %v6932 = vpack.c.b16 %v6888, %v6884
    %v6933 = vpack.c.b16 %v6889, %v6885
    %v6934 = vpack.c.b16 %v6890, %v6886
    %v6935 = vpack.c.b16 %v6891, %v6887
    %v6936 = vpack.c.b16 %v6896, %v6892
    %v6937 = vpack.c.b16 %v6897, %v6893
    %v6938 = vpack.c.b16 %v6898, %v6894
    %v6939 = vpack.c.b16 %v6899, %v6895
    %v6940 = vpack.c.b16 %v6904, %v6900
    %v6941 = vpack.c.b16 %v6905, %v6901
    %v6942 = vpack.c.b16 %v6906, %v6902
    %v6943 = vpack.c.b16 %v6907, %v6903
    %v6944 = vpack.c.b16 %v6912, %v6908
    %v6945 = vpack.c.b16 %v6913, %v6909
    %v6946 = vpack.c.b16 %v6914, %v6910
    %v6947 = vpack.c.b16 %v6915, %v6911
    %6980 = vmatprep.subr.bf16.mxu0 %v6917
    %6981 = vmatpush1.bf16.msra.mxu0 %v6916
    %6982 = vmatprep.subr.bf16.mxu0 %v6921
    %6983 = vmatpush1.bf16.msra.mxu0 %v6920
    %6984 = vmatprep.subr.bf16.mxu0 %v6925
    %6985 = vmatpush1.bf16.msra.mxu0 %v6924
    %6986 = vmatprep.subr.bf16.mxu0 %v6929
    %6987 = vmatpush1.bf16.msra.mxu0 %v6928
    %6988 = vmatprep.subr.bf16.mxu0 %v6933
    %6989 = vmatpush1.bf16.msra.mxu0 %v6932
    %6990 = vmatprep.subr.bf16.mxu0 %v6937
    %6991 = vmatpush1.bf16.msra.mxu0 %v6936
    %6992 = vmatprep.subr.bf16.mxu0 %v6941
    %6993 = vmatpush1.bf16.msra.mxu0 %v6940
    %6994 = vmatprep.subr.bf16.mxu0 %v6945
    %6995 = vmatpush1.bf16.msra.mxu0 %v6944
    %6996 = vmatprep.subr.bf16.mxu0 0
    %6997 = vmatpush1.bf16.msra.mxu0 0
    %6998 = vmatprep.subr.bf16.mxu0 0
    %6999 = vmatpush1.bf16.msra.mxu0 0
    %7000 = vmatprep.subr.bf16.mxu0 0
    %7001 = vmatpush1.bf16.msra.mxu0 0
    %7002 = vmatprep.subr.bf16.mxu0 0
    %7003 = vmatpush1.bf16.msra.mxu0 0
    %7004 = vmatprep.subr.bf16.mxu0 0
    %7005 = vmatpush1.bf16.msra.mxu0 0
    %7006 = vmatprep.subr.bf16.mxu0 0
    %7007 = vmatpush1.bf16.msra.mxu0 0
    %7008 = vmatprep.subr.bf16.mxu0 0
    %7009 = vmatpush1.bf16.msra.mxu0 0
    %7010 = vmatprep.subr.bf16.mxu0 0
    %7011 = vmatpush1.bf16.msra.mxu0 0
    %7012 = vmatprep.mubr.bf16.mxu0 0
    %7013 = vmatmul.mubr.bf16.gmra.mrb[0].mxu0 %v6787
    %v7014 = vpop.f32.mrb[0].mxu0
    %v7015 = vadd.f32 0.0, %v7014
    %v7016 = vpop.f32.mrb[0].mxu0
    %v7017 = vadd.f32 0.0, %v7016
    %v7018 = vpop.f32.mrb[0].mxu0
    %v7019 = vpop.f32.mrb[0].mxu0
    %7020 = vdwg.mxu0
    %7021 = vmatprep.subr.bf16.mxu0 %v6919
    %7022 = vmatpush1.bf16.msra.mxu0 %v6918
    %7023 = vmatprep.subr.bf16.mxu0 %v6923
    %7024 = vmatpush1.bf16.msra.mxu0 %v6922
    %7025 = vmatprep.subr.bf16.mxu0 %v6927
    %7026 = vmatpush1.bf16.msra.mxu0 %v6926
    %7027 = vmatprep.subr.bf16.mxu0 %v6931
    %7028 = vmatpush1.bf16.msra.mxu0 %v6930
    %7029 = vmatprep.subr.bf16.mxu0 %v6935
    %7030 = vmatpush1.bf16.msra.mxu0 %v6934
    %7031 = vmatprep.subr.bf16.mxu0 %v6939
    %7032 = vmatpush1.bf16.msra.mxu0 %v6938
    %7033 = vmatprep.subr.bf16.mxu0 %v6943
    %7034 = vmatpush1.bf16.msra.mxu0 %v6942
    %7035 = vmatprep.subr.bf16.mxu0 %v6947
    %7036 = vmatpush1.bf16.msra.mxu0 %v6946
    %7037 = vmatprep.subr.bf16.mxu0 0
    %7038 = vmatpush1.bf16.msra.mxu0 0
    %7039 = vmatprep.subr.bf16.mxu0 0
    %7040 = vmatpush1.bf16.msra.mxu0 0
    %7041 = vmatprep.subr.bf16.mxu0 0
    %7042 = vmatpush1.bf16.msra.mxu0 0
    %7043 = vmatprep.subr.bf16.mxu0 0
    %7044 = vmatpush1.bf16.msra.mxu0 0
    %7045 = vmatprep.subr.bf16.mxu0 0
    %7046 = vmatpush1.bf16.msra.mxu0 0
    %7047 = vmatprep.subr.bf16.mxu0 0
    %7048 = vmatpush1.bf16.msra.mxu0 0
    %7049 = vmatprep.subr.bf16.mxu0 0
    %7050 = vmatpush1.bf16.msra.mxu0 0
    %7051 = vmatprep.subr.bf16.mxu0 0
    %7052 = vmatpush1.bf16.msra.mxu0 0
    %7053 = vmatprep.mubr.bf16.mxu0 0
    %7054 = vmatmul.mubr.bf16.gmra.mrb[0].mxu0 %v6787
    %v7055 = vpop.f32.mrb[0].mxu0
    %v7056 = vadd.f32 0.0, %v7055
    %v7057 = vpop.f32.mrb[0].mxu0
    %v7058 = vadd.f32 0.0, %v7057
    %v7059 = vpop.f32.mrb[0].mxu0
    %v7060 = vpop.f32.mrb[0].mxu0
    %7061 = vdwg.mxu0
    %v7094 = vunpack.c.l.b16 %v6755
    %v7095 = vunpack.c.h.b16 %v6755
    %v7096 = vunpack.c.l.b16 %v6756
    %v7097 = vunpack.c.h.b16 %v6756
    %v7098 = vunpack.c.l.b16 %v6757
    %v7099 = vunpack.c.h.b16 %v6757
    %v7100 = vunpack.c.l.b16 %v6758
    %v7101 = vunpack.c.h.b16 %v6758
    %v7102 = vunpack.c.l.b16 %v6759
    %v7103 = vunpack.c.h.b16 %v6759
    %v7104 = vunpack.c.l.b16 %v6760
    %v7105 = vunpack.c.h.b16 %v6760
    %v7106 = vunpack.c.l.b16 %v6761
    %v7107 = vunpack.c.h.b16 %v6761
    %v7108 = vunpack.c.l.b16 %v6762
    %v7109 = vunpack.c.h.b16 %v6762
    %v7110 = vunpack.c.l.b16 %v6763
    %v7111 = vunpack.c.h.b16 %v6763
    %v7112 = vunpack.c.l.b16 %v6764
    %v7113 = vunpack.c.h.b16 %v6764
    %v7114 = vunpack.c.l.b16 %v6765
    %v7115 = vunpack.c.h.b16 %v6765
    %v7116 = vunpack.c.l.b16 %v6766
    %v7117 = vunpack.c.h.b16 %v6766
    %v7118 = vunpack.c.l.b16 %v6767
    %v7119 = vunpack.c.h.b16 %v6767
    %v7120 = vunpack.c.l.b16 %v6768
    %v7121 = vunpack.c.h.b16 %v6768
    %v7122 = vunpack.c.l.b16 %v6769
    %v7123 = vunpack.c.h.b16 %v6769
    %v7124 = vunpack.c.l.b16 %v6770
    %v7125 = vunpack.c.h.b16 %v6770
    %v7126 = vunpack.c.l.b16 %v6771
    %v7127 = vunpack.c.h.b16 %v6771
    %v7128 = vunpack.c.l.b16 %v6772
    %v7129 = vunpack.c.h.b16 %v6772
    %v7130 = vunpack.c.l.b16 %v6773
    %v7131 = vunpack.c.h.b16 %v6773
    %v7132 = vunpack.c.l.b16 %v6774
    %v7133 = vunpack.c.h.b16 %v6774
    %v7134 = vunpack.c.l.b16 %v6775
    %v7135 = vunpack.c.h.b16 %v6775
    %v7136 = vunpack.c.l.b16 %v6776
    %v7137 = vunpack.c.h.b16 %v6776
    %v7138 = vunpack.c.l.b16 %v6777
    %v7139 = vunpack.c.h.b16 %v6777
    %v7140 = vunpack.c.l.b16 %v6778
    %v7141 = vunpack.c.h.b16 %v6778
    %v7142 = vunpack.c.l.b16 %v6779
    %v7143 = vunpack.c.h.b16 %v6779
    %v7144 = vunpack.c.l.b16 %v6780
    %v7145 = vunpack.c.h.b16 %v6780
    %v7146 = vunpack.c.l.b16 %v6781
    %v7147 = vunpack.c.h.b16 %v6781
    %v7148 = vunpack.c.l.b16 %v6782
    %v7149 = vunpack.c.h.b16 %v6782
    %v7150 = vunpack.c.l.b16 %v6783
    %v7151 = vunpack.c.h.b16 %v6783
    %v7152 = vunpack.c.l.b16 %v6784
    %v7153 = vunpack.c.h.b16 %v6784
    %v7154 = vunpack.c.l.b16 %v6785
    %v7155 = vunpack.c.h.b16 %v6785
    %v7156 = vunpack.c.l.b16 %v6786
    %v7157 = vunpack.c.h.b16 %v6786
    %v7158 = vpack.c.b16 %v7098, %v7094
    %v7159 = vpack.c.b16 %v7099, %v7095
    %v7160 = vpack.c.b16 %v7100, %v7096
    %v7161 = vpack.c.b16 %v7101, %v7097
    %v7162 = vpack.c.b16 %v7106, %v7102
    %v7163 = vpack.c.b16 %v7107, %v7103
    %v7164 = vpack.c.b16 %v7108, %v7104
    %v7165 = vpack.c.b16 %v7109, %v7105
    %v7166 = vpack.c.b16 %v7114, %v7110
    %v7167 = vpack.c.b16 %v7115, %v7111
    %v7168 = vpack.c.b16 %v7116, %v7112
    %v7169 = vpack.c.b16 %v7117, %v7113
    %v7170 = vpack.c.b16 %v7122, %v7118
    %v7171 = vpack.c.b16 %v7123, %v7119
    %v7172 = vpack.c.b16 %v7124, %v7120
    %v7173 = vpack.c.b16 %v7125, %v7121
    %v7174 = vpack.c.b16 %v7130, %v7126
    %v7175 = vpack.c.b16 %v7131, %v7127
    %v7176 = vpack.c.b16 %v7132, %v7128
    %v7177 = vpack.c.b16 %v7133, %v7129
    %v7178 = vpack.c.b16 %v7138, %v7134
    %v7179 = vpack.c.b16 %v7139, %v7135
    %v7180 = vpack.c.b16 %v7140, %v7136
    %v7181 = vpack.c.b16 %v7141, %v7137
    %v7182 = vpack.c.b16 %v7146, %v7142
    %v7183 = vpack.c.b16 %v7147, %v7143
    %v7184 = vpack.c.b16 %v7148, %v7144
    %v7185 = vpack.c.b16 %v7149, %v7145
    %v7186 = vpack.c.b16 %v7154, %v7150
    %v7187 = vpack.c.b16 %v7155, %v7151
    %v7188 = vpack.c.b16 %v7156, %v7152
    %v7189 = vpack.c.b16 %v7157, %v7153
    %7222 = vmatprep.subr.bf16.mxu0 %v7159
    %7223 = vmatpush1.bf16.msra.mxu0 %v7158
    %7224 = vmatprep.subr.bf16.mxu0 %v7163
    %7225 = vmatpush1.bf16.msra.mxu0 %v7162
    %7226 = vmatprep.subr.bf16.mxu0 %v7167
    %7227 = vmatpush1.bf16.msra.mxu0 %v7166
    %7228 = vmatprep.subr.bf16.mxu0 %v7171
    %7229 = vmatpush1.bf16.msra.mxu0 %v7170
    %7230 = vmatprep.subr.bf16.mxu0 %v7175
    %7231 = vmatpush1.bf16.msra.mxu0 %v7174
    %7232 = vmatprep.subr.bf16.mxu0 %v7179
    %7233 = vmatpush1.bf16.msra.mxu0 %v7178
    %7234 = vmatprep.subr.bf16.mxu0 %v7183
    %7235 = vmatpush1.bf16.msra.mxu0 %v7182
    %7236 = vmatprep.subr.bf16.mxu0 %v7187
    %7237 = vmatpush1.bf16.msra.mxu0 %v7186
    %7238 = vmatprep.subr.bf16.mxu0 0
    %7239 = vmatpush1.bf16.msra.mxu0 0
    %7240 = vmatprep.subr.bf16.mxu0 0
    %7241 = vmatpush1.bf16.msra.mxu0 0
    %7242 = vmatprep.subr.bf16.mxu0 0
    %7243 = vmatpush1.bf16.msra.mxu0 0
    %7244 = vmatprep.subr.bf16.mxu0 0
    %7245 = vmatpush1.bf16.msra.mxu0 0
    %7246 = vmatprep.subr.bf16.mxu0 0
    %7247 = vmatpush1.bf16.msra.mxu0 0
    %7248 = vmatprep.subr.bf16.mxu0 0
    %7249 = vmatpush1.bf16.msra.mxu0 0
    %7250 = vmatprep.subr.bf16.mxu0 0
    %7251 = vmatpush1.bf16.msra.mxu0 0
    %7252 = vmatprep.subr.bf16.mxu0 0
    %7253 = vmatpush1.bf16.msra.mxu0 0
    %7254 = vmatprep.mubr.bf16.mxu0 0
    %7255 = vmatmul.mubr.bf16.gmra.mrb[0].mxu0 %v6754
    %v7256 = vpop.f32.mrb[0].mxu0
    %v7257 = vadd.f32 %v7015, %v7256
    %v7258 = vpop.f32.mrb[0].mxu0
    %v7259 = vadd.f32 %v7017, %v7258
    %v7260 = vpop.f32.mrb[0].mxu0
    %v7261 = vpop.f32.mrb[0].mxu0
    %7262 = vdwg.mxu0
    %7263 = vmatprep.subr.bf16.mxu0 %v7161
    %7264 = vmatpush1.bf16.msra.mxu0 %v7160
    %7265 = vmatprep.subr.bf16.mxu0 %v7165
    %7266 = vmatpush1.bf16.msra.mxu0 %v7164
    %7267 = vmatprep.subr.bf16.mxu0 %v7169
    %7268 = vmatpush1.bf16.msra.mxu0 %v7168
    %7269 = vmatprep.subr.bf16.mxu0 %v7173
    %7270 = vmatpush1.bf16.msra.mxu0 %v7172
    %7271 = vmatprep.subr.bf16.mxu0 %v7177
    %7272 = vmatpush1.bf16.msra.mxu0 %v7176
    %7273 = vmatprep.subr.bf16.mxu0 %v7181
    %7274 = vmatpush1.bf16.msra.mxu0 %v7180
    %7275 = vmatprep.subr.bf16.mxu0 %v7185
    %7276 = vmatpush1.bf16.msra.mxu0 %v7184
    %7277 = vmatprep.subr.bf16.mxu0 %v7189
    %7278 = vmatpush1.bf16.msra.mxu0 %v7188
    %7279 = vmatprep.subr.bf16.mxu0 0
    %7280 = vmatpush1.bf16.msra.mxu0 0
    %7281 = vmatprep.subr.bf16.mxu0 0
    %7282 = vmatpush1.bf16.msra.mxu0 0
    %7283 = vmatprep.subr.bf16.mxu0 0
    %7284 = vmatpush1.bf16.msra.mxu0 0
    %7285 = vmatprep.subr.bf16.mxu0 0
    %7286 = vmatpush1.bf16.msra.mxu0 0
    %7287 = vmatprep.subr.bf16.mxu0 0
    %7288 = vmatpush1.bf16.msra.mxu0 0
    %7289 = vmatprep.subr.bf16.mxu0 0
    %7290 = vmatpush1.bf16.msra.mxu0 0
    %7291 = vmatprep.subr.bf16.mxu0 0
    %7292 = vmatpush1.bf16.msra.mxu0 0
    %7293 = vmatprep.subr.bf16.mxu0 0
    %7294 = vmatpush1.bf16.msra.mxu0 0
    %7295 = vmatprep.mubr.bf16.mxu0 0
    %7296 = vmatmul.mubr.bf16.gmra.mrb[0].mxu0 %v6754
    %v7297 = vpop.f32.mrb[0].mxu0
    %v7298 = vadd.f32 %v7056, %v7297
    %v7299 = vpop.f32.mrb[0].mxu0
    %v7300 = vadd.f32 %v7058, %v7299
    %v7301 = vpop.f32.mrb[0].mxu0
    %v7302 = vpop.f32.mrb[0].mxu0
    %7303 = vdwg.mxu0
    %v7304 = vadd.f32 %v7257, %v117
    %v7305 = vadd.f32 %v7259, %v121
    %v7306 = vadd.f32 %v7298, %v125
    %v7307 = vadd.f32 %v7300, %v129
    %v7308 = vxor.u32 %v7304, 2147483648
    %v7309 = vmul.f32 %v7308, 1.442695
    %v7310 = vpow.pop %v7309
    %v7311 = vadd.f32 %v7310, 1.0
    %v7312 = vrcp.pop %v7311
    %v7313 = vmul.f32 1.0, %v7312
    %v7314 = vxor.u32 %v7305, 2147483648
    %v7315 = vmul.f32 %v7314, 1.442695
    %v7316 = vpow.pop %v7315
    %v7317 = vadd.f32 %v7316, 1.0
    %v7318 = vrcp.pop %v7317
    %v7319 = vmul.f32 1.0, %v7318
    %v7320 = vtanh.pop %v7306
    %v7321 = vxor.u32 %v7307, 2147483648
    %v7322 = vmul.f32 %v7321, 1.442695
    %v7323 = vpow.pop %v7322
    %v7324 = vadd.f32 %v7323, 1.0
    %v7325 = vrcp.pop %v7324
    %v7326 = vmul.f32 1.0, %v7325
    %v7327 = vmul.f32 %v7319, %v6433
    %v7328 = vmul.f32 %v7313, %v7320
    %v7329 = vadd.f32 %v7327, %v7328
    %v7330 = vtanh.pop %v7329
    %v7331 = vmul.f32 %v7326, %v7330
    %v7332 = vsel %vm6444, %v7331, %v6432
    %v7333 = vsel %vm6444, %v7329, %v6433
    %v7334 = vsel %vm6444, %v7331, 0.0
    %s7335 = scalar_lea.vmem [#allocation6], 56
    %7336 = vst [vmem:[%s7335] sm:$0xff] %v7334
    %7337 = vst [vmem:[#allocation2] sm:$0xff] %v6752
    %7338 = vst [vmem:[#allocation3] sm:$0xff] %v6753
    %7339 = vst [vmem:[#allocation4] sm:$0xff] %v7332
    %7340 = vst [vmem:[#allocation5] sm:$0xff] %v7333
    %v7341 = vld [vmem:[#allocation6] sm:$0xff]
    %v7342 = vld [vmem:[#allocation6 + $0x8] sm:$0xff]
    %v7343 = vld [vmem:[#allocation6 + $0x10] sm:$0xff]
    %v7344 = vld [vmem:[#allocation6 + $0x18] sm:$0xff]
    %v7345 = vld [vmem:[#allocation6 + $0x20] sm:$0xff]
    %v7346 = vld [vmem:[#allocation6 + $0x28] sm:$0xff]
    %v7347 = vld [vmem:[#allocation6 + $0x30] sm:$0xff]
    %v7348 = vld [vmem:[#allocation6 + $0x38] sm:$0xff]
    %v7349 = vld [vmem:[#allocation15] sm:$0xff]
    %v7350 = vld [vmem:[#allocation15 + $0x8] sm:$0xff]
    %v7351 = vld [vmem:[#allocation15 + $0x10] sm:$0xff]
    %v7352 = vld [vmem:[#allocation15 + $0x18] sm:$0xff]
    %v7353 = vld [vmem:[#allocation15 + $0x20] sm:$0xff]
    %v7354 = vld [vmem:[#allocation15 + $0x28] sm:$0xff]
    %v7355 = vld [vmem:[#allocation15 + $0x30] sm:$0xff]
    %v7356 = vld [vmem:[#allocation15 + $0x38] sm:$0xff]
    %v7357 = vld [vmem:[#allocation15 + $0x40] sm:$0xff]
    %v7358 = vld [vmem:[#allocation15 + $0x48] sm:$0xff]
    %v7359 = vld [vmem:[#allocation15 + $0x50] sm:$0xff]
    %v7360 = vld [vmem:[#allocation15 + $0x58] sm:$0xff]
    %v7361 = vld [vmem:[#allocation15 + $0x60] sm:$0xff]
    %v7362 = vld [vmem:[#allocation15 + $0x68] sm:$0xff]
    %v7363 = vld [vmem:[#allocation15 + $0x70] sm:$0xff]
    %v7364 = vld [vmem:[#allocation15 + $0x78] sm:$0xff]
    %v7365 = vld [vmem:[%s7] sm:$0x1]
    %v7367 = vlaneseq
    %v7368 = vshrl.u32 %v7367, 7
    %v7369 = vsub.s32 0, %v7368
    %v7370 = vrot.slane %v7365, %v7369
    %7372 = vmatprep.subr.mxu0 0.0
    %7373 = vmatpush1.msra.mxu0 %v7349
    %7374 = vmatprep.subr.mxu0 0.0
    %7375 = vmatpush1.msra.mxu0 %v7350
    %7376 = vmatprep.subr.mxu0 0.0
    %7377 = vmatpush1.msra.mxu0 %v7351
    %7378 = vmatprep.subr.mxu0 0.0
    %7379 = vmatpush1.msra.mxu0 %v7352
    %7380 = vmatprep.subr.mxu0 0.0
    %7381 = vmatpush1.msra.mxu0 %v7353
    %7382 = vmatprep.subr.mxu0 0.0
    %7383 = vmatpush1.msra.mxu0 %v7354
    %7384 = vmatprep.subr.mxu0 0.0
    %7385 = vmatpush1.msra.mxu0 %v7355
    %7386 = vmatprep.subr.mxu0 0.0
    %7387 = vmatpush1.msra.mxu0 %v7356
    %7388 = vmatprep.subr.mxu0 0.0
    %7389 = vmatpush1.msra.mxu0 %v7357
    %7390 = vmatprep.subr.mxu0 0.0
    %7391 = vmatpush1.msra.mxu0 %v7358
    %7392 = vmatprep.subr.mxu0 0.0
    %7393 = vmatpush1.msra.mxu0 %v7359
    %7394 = vmatprep.subr.mxu0 0.0
    %7395 = vmatpush1.msra.mxu0 %v7360
    %7396 = vmatprep.subr.mxu0 0.0
    %7397 = vmatpush1.msra.mxu0 %v7361
    %7398 = vmatprep.subr.mxu0 0.0
    %7399 = vmatpush1.msra.mxu0 %v7362
    %7400 = vmatprep.subr.mxu0 0.0
    %7401 = vmatpush1.msra.mxu0 %v7363
    %7402 = vmatprep.subr.mxu0 0.0
    %7403 = vmatpush1.msra.mxu0 %v7364
    %7404 = vmatprep.subr.mxu0 0.0
    %7405 = vmatpush1.msra.mxu0 0.0
    %7406 = vmatprep.subr.mxu0 0.0
    %7407 = vmatpush1.msra.mxu0 0.0
    %7408 = vmatprep.subr.mxu0 0.0
    %7409 = vmatpush1.msra.mxu0 0.0
    %7410 = vmatprep.subr.mxu0 0.0
    %7411 = vmatpush1.msra.mxu0 0.0
    %7412 = vmatprep.subr.mxu0 0.0
    %7413 = vmatpush1.msra.mxu0 0.0
    %7414 = vmatprep.subr.mxu0 0.0
    %7415 = vmatpush1.msra.mxu0 0.0
    %7416 = vmatprep.subr.mxu0 0.0
    %7417 = vmatpush1.msra.mxu0 0.0
    %7418 = vmatprep.subr.mxu0 0.0
    %7419 = vmatpush1.msra.mxu0 0.0
    %7420 = vmatprep.subr.mxu0 0.0
    %7421 = vmatpush1.msra.mxu0 0.0
    %7422 = vmatprep.subr.mxu0 0.0
    %7423 = vmatpush1.msra.mxu0 0.0
    %7424 = vmatprep.subr.mxu0 0.0
    %7425 = vmatpush1.msra.mxu0 0.0
    %7426 = vmatprep.subr.mxu0 0.0
    %7427 = vmatpush1.msra.mxu0 0.0
    %7428 = vmatprep.subr.mxu0 0.0
    %7429 = vmatpush1.msra.mxu0 0.0
    %7430 = vmatprep.subr.mxu0 0.0
    %7431 = vmatpush1.msra.mxu0 0.0
    %7432 = vmatprep.subr.mxu0 0.0
    %7433 = vmatpush1.msra.mxu0 0.0
    %7434 = vmatprep.subr.mxu0 0.0
    %7435 = vmatpush1.msra.mxu0 0.0
    %7436 = vmatprep.mubr.f32.mxu0 0.0
    %7437 = vmatmul.mubr.f32.gmra.mrb[0].mxu0 %v7341
    %v7438 = vpop.f32.mrb[0].mxu0
    %v7439 = vadd.f32 %v7370, %v7438
    %v7440 = vpop.f32.mrb[0].mxu0
    %7441 = vmatprep.mubr.f32.mxu0 0.0
    %7442 = vmatmul.mubr.f32.gmra.mrb[0].mxu0 %v7342
    %v7443 = vpop.f32.mrb[0].mxu0
    %v7444 = vadd.f32 %v7370, %v7443
    %v7445 = vpop.f32.mrb[0].mxu0
    %7446 = vmatprep.mubr.f32.mxu0 0.0
    %7447 = vmatmul.mubr.f32.gmra.mrb[0].mxu0 %v7343
    %v7448 = vpop.f32.mrb[0].mxu0
    %v7449 = vadd.f32 %v7370, %v7448
    %v7450 = vpop.f32.mrb[0].mxu0
    %7451 = vmatprep.mubr.f32.mxu0 0.0
    %7452 = vmatmul.mubr.f32.gmra.mrb[0].mxu0 %v7344
    %v7453 = vpop.f32.mrb[0].mxu0
    %v7454 = vadd.f32 %v7370, %v7453
    %v7455 = vpop.f32.mrb[0].mxu0
    %7456 = vmatprep.mubr.f32.mxu0 0.0
    %7457 = vmatmul.mubr.f32.gmra.mrb[0].mxu0 %v7345
    %v7458 = vpop.f32.mrb[0].mxu0
    %v7459 = vadd.f32 %v7370, %v7458
    %v7460 = vpop.f32.mrb[0].mxu0
    %7461 = vmatprep.mubr.f32.mxu0 0.0
    %7462 = vmatmul.mubr.f32.gmra.mrb[0].mxu0 %v7346
    %v7463 = vpop.f32.mrb[0].mxu0
    %v7464 = vadd.f32 %v7370, %v7463
    %v7465 = vpop.f32.mrb[0].mxu0
    %7466 = vmatprep.mubr.f32.mxu0 0.0
    %7467 = vmatmul.mubr.f32.gmra.mrb[0].mxu0 %v7347
    %v7468 = vpop.f32.mrb[0].mxu0
    %v7469 = vadd.f32 %v7370, %v7468
    %v7470 = vpop.f32.mrb[0].mxu0
    %7471 = vmatprep.mubr.f32.mxu0 0.0
    %7472 = vmatmul.mubr.f32.gmra.mrb[0].mxu0 %v7348
    %v7473 = vpop.f32.mrb[0].mxu0
    %v7474 = vadd.f32 %v7370, %v7473
    %v7475 = vpop.f32.mrb[0].mxu0
    %7476 = vdwg.mxu0
    %7477 = vst [vmem:[#allocation16] sm:$0xff] %v7439
    %7478 = vst [vmem:[#allocation16 + $0x8] sm:$0xff] %v7444
    %7479 = vst [vmem:[#allocation16 + $0x10] sm:$0xff] %v7449
    %7480 = vst [vmem:[#allocation16 + $0x18] sm:$0xff] %v7454
    %7481 = vst [vmem:[#allocation16 + $0x20] sm:$0xff] %v7459
    %7482 = vst [vmem:[#allocation16 + $0x28] sm:$0xff] %v7464
    %7483 = vst [vmem:[#allocation16 + $0x30] sm:$0xff] %v7469
    %7484 = vst [vmem:[#allocation16 + $0x38] sm:$0xff] %v7474
    %7485 = vst [vmem:[#allocation17] sm:$0xff] %v6752
    %s7486 = scalar_lea.vmem [#allocation17], 8
    %7487 = vst [vmem:[%s7486] sm:$0xff] %v7332
    %7488 = vst [vmem:[#allocation19] sm:$0xff] %v6753
    %s7489 = scalar_lea.vmem [#allocation19], 8
    %7490 = vst [vmem:[%s7489] sm:$0xff] %v7333
    // Predicated region
    $region58: #{tpu_custom_call.1} parent=1 // pred_check
      _
    $region59: #{tpu_custom_call.1} parent=1 // pred_check_branch
      %7492 = sbr.rel (0) target = $region61
    $region60: #{tpu_custom_call.1} parent=1 // pred_region
      %s7494 = ssub.s32 1024, 1024
      %7495 = vsyncadd [#allocation9], %s7494
      %s7496 = sshll.u32 [#allocation16], 4
      %s7497 = int_to_ptr.vmem [resolvable:$true] %s7496
      %7502 = dma.vmem_to_hbm [thread:$0]  %s7497, 1024, %s8, [#allocation9], 128, 128, 8
    $region61: #{tpu_custom_call.1} parent=1 // pred_fallthru
      _
    // Predicated region
    $region62: #{tpu_custom_call.1} parent=1 // pred_check
      _
    $region63: #{tpu_custom_call.1} parent=1 // pred_check_branch
      %7504 = sbr.rel (0) target = $region65
    $region64: #{tpu_custom_call.1} parent=1 // pred_region
      %s7506 = ssub.s32 256, 256
      %7507 = vsyncadd [#allocation18], %s7506
      %s7508 = sshll.u32 [#allocation17], 4
      %s7509 = int_to_ptr.vmem [resolvable:$true] %s7508
      %7514 = dma.vmem_to_hbm [thread:$0]  %s7509, 256, %s9, [#allocation18], 128, 128, 8
    $region65: #{tpu_custom_call.1} parent=1 // pred_fallthru
      _
    // Predicated region
    $region66: #{tpu_custom_call.1} parent=1 // pred_check
      _
    $region67: #{tpu_custom_call.1} parent=1 // pred_check_branch
      %7516 = sbr.rel (0) target = $region69
    $region68: #{tpu_custom_call.1} parent=1 // pred_region
      %s7518 = ssub.s32 256, 256
      %7519 = vsyncadd [#allocation18], %s7518
      %s7520 = sshll.u32 [#allocation19], 4
      %s7521 = int_to_ptr.vmem [resolvable:$true] %s7520
      %7526 = dma.vmem_to_hbm [thread:$0]  %s7521, 256, %s10, [#allocation18], 128, 128, 8
    $region69: #{tpu_custom_call.1} parent=1 // pred_fallthru
      _
    // Predicated region
    $region70: #{tpu_custom_call.1} parent=1 // pred_check
      _
    $region71: #{tpu_custom_call.1} parent=1 // pred_check_branch
      %7528 = sbr.rel (0) target = $region73
    $region72: #{tpu_custom_call.1} parent=1 // pred_region
      %7529 = dma.done [#allocation9], 1024
    $region73: #{tpu_custom_call.1} parent=1 // pred_fallthru
      _
    // Predicated region
    $region74: #{tpu_custom_call.1} parent=1 // pred_check
      _
    $region75: #{tpu_custom_call.1} parent=1 // pred_check_branch
      %7531 = sbr.rel (0) target = $region77
    $region76: #{tpu_custom_call.1} parent=1 // pred_region
      %7532 = dma.done [#allocation18], 256
    $region77: #{tpu_custom_call.1} parent=1 // pred_fallthru
      _
    // Predicated region
    $region78: #{tpu_custom_call.1} parent=1 // pred_check
      _
    $region79: #{tpu_custom_call.1} parent=1 // pred_check_branch
      %7534 = sbr.rel (0) target = $region81
    $region80: #{tpu_custom_call.1} parent=1 // pred_region
      %7535 = dma.done [#allocation18], 256
    $region81: #{tpu_custom_call.1} parent=1 // pred_fallthru
      _
    %7536 = vsyncpa [#allocation8], 1
    %7537 = vsyncpa [#allocation11], 1
    %7538 = vsyncpa [#allocation14], 1
    %7539 = vsyncpa [#allocation9], 1
    %7540 = vsyncpa [#allocation18], 1

</llo_original>
